<compile_context>
chip_gen: v7x
topology: tpu7x:2x2x1
jax: 0.10.0
libtpu: 0.0.40
codegen_flags: <defaults>
</compile_context>

<pallas_src>
import functools

import jax
import jax.numpy as jnp
from jax import lax
from jax.experimental import pallas as pl
from jax.experimental.pallas import tpu as pltpu

F32 = jnp.float32
BF16 = jnp.bfloat16
LANE = 128
EPS = 1e-5


def _tpu_generation_defaults():
    """(vmem_limit_bytes, max_row_tile) tuned per TPU generation."""
    try:
        info = pltpu.get_tpu_info()
        vmem = getattr(info, "vmem_capacity_bytes", None)
    except Exception:          # no TPU visible at import time -> conservative defaults
        vmem = None
    if vmem is not None and vmem >= 100 * 1024 * 1024:
        # v5e / v6e: 128 MiB physical VMEM -> big tiles, fewer grid steps.
        return 96 * 1024 * 1024, 1024
    # v7x (64 MiB physical VMEM) or unknown: keep headroom.
    return 48 * 1024 * 1024, 512


VMEM_LIMIT, MAX_ROW_TILE = _tpu_generation_defaults()


# -----------------------------------------------------------------------------
# small helpers
# -----------------------------------------------------------------------------
def _round_up(x, m):
    return (x + m - 1) // m * m


def _choose_row_tile(m):
    # Largest 16-row-aligned tile <= MAX_ROW_TILE (bf16 packs 16 rows per vreg);
    # cdiv grid + in-kernel masking handles ragged tails.
    return min(MAX_ROW_TILE, _round_up(m, 16))


def _pad_axis(a, axis, target):
    pad = target - a.shape[axis]
    if pad == 0:
        return a
    cfg = [(0, 0)] * a.ndim
    cfg[axis] = (0, pad)
    return jnp.pad(a, cfg)


def _compiler_params(n_axes=1):
    return pltpu.CompilerParams(
        dimension_semantics=("parallel",) * n_axes,
        vmem_limit_bytes=VMEM_LIMIT)


# -----------------------------------------------------------------------------
# kernel bodies
# -----------------------------------------------------------------------------
def _row_mask(m_total, tm):
    pid = pl.program_id(0)
    rows = lax.broadcasted_iota(jnp.int32, (tm, 1), 0) + pid * tm
    return rows < m_total                                            # bool (tm, 1)


def _partial_stats(y, mask, st_ref):
    """Per-tile shifted sum / centered sum-of-squares of y -> st_ref (1, 2, C)."""
    c = y.shape[-1]
    if mask is None:
        s = jnp.sum(y, axis=0, keepdims=True)                        # (1, C)
        mu = s * (1.0 / y.shape[0])
        d = y - mu
    else:
        ym = jnp.where(mask, y, 0.0)                                  # NaN-safe masking
        cnt = jnp.maximum(jnp.sum(mask.astype(F32), axis=0, keepdims=True), 1.0)
        s = jnp.sum(ym, axis=0, keepdims=True)
        mu = s / cnt
        d = jnp.where(mask, y - mu, 0.0)
    ss = jnp.sum(d * d, axis=0, keepdims=True)                        # (1, C)
    st_ref[...] = jnp.concatenate([s, ss], axis=0).reshape(1, 2, c)   # single store


def _layout_stats_kernel(x_ref, xb_ref, st_ref, *, m_total, tm):
    """Fused layout pass: f32 input tile -> bf16 HBM copy + partial bn1 stats."""
    x = x_ref[...].astype(F32)
    xb_ref[...] = x.astype(BF16)
    mask = _row_mask(m_total, tm) if (m_total % tm) else None
    _partial_stats(x, mask, st_ref)


def _fused_mm_kernel(*refs, m_total, tm, n_w, has_res, want_stats):
    """relu(x*scale+shift) @ W_k for each k (bf16 MXU, f32 accumulate); optional
    residual add on output 0; optional per-tile batch stats of raw output 0."""
    it = iter(refs)
    x_ref, s_ref, b_ref = next(it), next(it), next(it)
    w_refs = [next(it) for _ in range(n_w)]
    res_ref = next(it) if has_res else None
    y_refs = [next(it) for _ in range(n_w)]
    st_ref = next(it) if want_stats else None

    x = x_ref[...].astype(F32)
    a = jnp.maximum(x * s_ref[...] + b_ref[...], 0.0).astype(BF16)

    y0 = None
    for k in range(n_w):
        o = jnp.dot(a, w_refs[k][...], preferred_element_type=F32)
        if k == 0:
            if has_res:
                o = o + res_ref[...].astype(F32)
            y0 = o
        y_refs[k][...] = o.astype(y_refs[k].dtype)

    if want_stats:
        mask = _row_mask(m_total, tm) if (m_total % tm) else None
        _partial_stats(y0, mask, st_ref)


def _conv3x3_kernel(x_ref, s_ref, b_ref, w_ref, y_ref, st_ref, apad_ref,
                    *, h, w, ho, wo, stride):
    """Per-image fused bn2+relu -> 3x3 conv (9 shifted in-VMEM views, no HBM im2col)
    -> partial batch stats of the raw conv output.  Taps accumulate into a local f32
    value (single final store); only the 1-pixel halo of apad is zeroed."""
    cin = apad_ref.shape[-1]
    cout = w_ref.shape[-1]

    x = x_ref[0].astype(F32)                                         # (H, W, Cin)
    a = jnp.maximum(x * s_ref[...] + b_ref[...], 0.0).astype(BF16)

    # zero only the halo, then write the interior (interior overwrites nothing stale)
    apad_ref[pl.ds(0, 1), :, :] = jnp.zeros((1, w + 2, cin), BF16)
    apad_ref[pl.ds(h + 1, 1), :, :] = jnp.zeros((1, w + 2, cin), BF16)
    apad_ref[:, pl.ds(0, 1), :] = jnp.zeros((h + 2, 1, cin), BF16)
    apad_ref[:, pl.ds(w + 1, 1), :] = jnp.zeros((h + 2, 1, cin), BF16)
    apad_ref[pl.ds(1, h), pl.ds(1, w), :] = a

    acc = None
    for ky in range(3):
        for kx in range(3):
            if stride == 1:
                win = apad_ref[pl.ds(ky, ho), pl.ds(kx, wo), :]
            else:
                # TODO(synk): de-interleave even/odd columns once into scratch so each
                # tap is a unit-stride view instead of a per-tap strided sublane load.
                win = apad_ref[pl.ds(ky, ho, stride), pl.ds(kx, wo, stride), :]
            contrib = jnp.dot(win.reshape(ho * wo, cin), w_ref[ky * 3 + kx],
                              preferred_element_type=F32)
            acc = contrib if acc is None else acc + contrib

    y_ref[...] = acc.reshape(1, ho, wo, cout).astype(y_ref.dtype)
    _partial_stats(acc, None, st_ref)


def _shortcut_stride_kernel(x_ref, s_ref, b_ref, w_ref, o_ref, *, ho, wo, stride):
    """stride!=1 projection shortcut: per-image strided subsample in VMEM (no HBM
    gather), fused bn1+relu, 1x1 matmul."""
    cin = x_ref.shape[-1]
    cout = w_ref.shape[-1]
    xs = x_ref[pl.ds(0, 1), pl.ds(0, ho, stride), pl.ds(0, wo, stride), :]
    xs = xs.reshape(ho, wo, cin).astype(F32)
    a = jnp.maximum(xs * s_ref[...] + b_ref[...], 0.0).astype(BF16)
    o = jnp.dot(a.reshape(ho * wo, cin), w_ref[...], preferred_element_type=F32)
    o_ref[...] = o.reshape(1, ho, wo, cout).astype(o_ref.dtype)


# -----------------------------------------------------------------------------
# pallas_call wrappers
# -----------------------------------------------------------------------------
def _stats_combine(parts, counts, m_total):
    """Chan's parallel-variance combine of per-tile (sum, centered-SS)."""
    s = parts[:, 0, :]
    ss = parts[:, 1, :]
    counts = counts.astype(F32)[:, None]
    mean = jnp.sum(s, axis=0) / m_total
    mu_t = s / jnp.maximum(counts, 1.0)
    var = (jnp.sum(ss, axis=0)
           + jnp.sum(counts * (mu_t - mean[None, :]) ** 2, axis=0)) / m_total
    return mean, var


def layout_cast_and_stats(x2d):
    """One pass over the f32 input: emit bf16 copy + bn1 batch mean/var."""
    m, c = x2d.shape
    tm = _choose_row_tile(m)
    g = pl.cdiv(m, tm)
    xb, parts = pl.pallas_call(
        functools.partial(_layout_stats_kernel, m_total=m, tm=tm),
        out_shape=(jax.ShapeDtypeStruct((m, c), BF16),
                   jax.ShapeDtypeStruct((g, 2, c), F32)),
        grid=(g,),
        in_specs=[pl.BlockSpec((tm, c), lambda i: (i, 0))],
        out_specs=(pl.BlockSpec((tm, c), lambda i: (i, 0)),
                   pl.BlockSpec((1, 2, c), lambda i: (i, 0, 0))),
        compiler_params=_compiler_params(),
    )(x2d)
    counts = jnp.clip(m - jnp.arange(g) * tm, 0, tm)
    mean, var = _stats_combine(parts, counts, m)
    return xb, mean, var


def fused_bn_relu_matmul(x2d, scale, shift, weights, out_dtypes,
                         residual=None, want_stats=False):
    m, k = x2d.shape
    tm = _choose_row_tile(m)
    g = pl.cdiv(m, tm)
    n_w = len(weights)

    in_specs = [pl.BlockSpec((tm, k), lambda i: (i, 0)),
                pl.BlockSpec((1, k), lambda i: (0, 0)),
                pl.BlockSpec((1, k), lambda i: (0, 0))]
    inputs = [x2d, scale.reshape(1, k), shift.reshape(1, k)]
    for wgt in weights:
        in_specs.append(pl.BlockSpec(wgt.shape, lambda i: (0, 0)))
        inputs.append(wgt)
    if residual is not None:
        in_specs.append(pl.BlockSpec((tm, residual.shape[1]), lambda i: (i, 0)))
        inputs.append(residual)

    out_shapes, out_specs = [], []
    for wgt, dt in zip(weights, out_dtypes):
        nn_ = wgt.shape[1]
        out_shapes.append(jax.ShapeDtypeStruct((m, nn_), dt))
        out_specs.append(pl.BlockSpec((tm, nn_), lambda i: (i, 0)))
    if want_stats:
        n0 = weights[0].shape[1]
        out_shapes.append(jax.ShapeDtypeStruct((g, 2, n0), F32))
        out_specs.append(pl.BlockSpec((1, 2, n0), lambda i: (i, 0, 0)))

    kern = functools.partial(_fused_mm_kernel, m_total=m, tm=tm, n_w=n_w,
                             has_res=residual is not None, want_stats=want_stats)
    outs = pl.pallas_call(
        kern,
        out_shape=tuple(out_shapes),
        grid=(g,),
        in_specs=in_specs,
        out_specs=tuple(out_specs),
        compiler_params=_compiler_params(),
    )(*inputs)

    ys = outs[:n_w]
    stats = None
    if want_stats:
        counts = jnp.clip(m - jnp.arange(g) * tm, 0, tm)
        stats = _stats_combine(outs[n_w], counts, m)
    return ys, stats


def conv3x3_bn_relu(y1_4d, scale, shift, w2, stride):
    # TODO(synk): add a second grid axis over output-row slabs so v7x's 2 TensorCores
    # are both busy at small batch and apad fits 64 MiB VMEM at the 56x56 stages.
    n, h, w, cin = y1_4d.shape
    cout = w2.shape[-1]
    ho = (h + 2 - 3) // stride + 1
    wo = (w + 2 - 3) // stride + 1
    kern = functools.partial(_conv3x3_kernel, h=h, w=w, ho=ho, wo=wo, stride=stride)
    y2, parts = pl.pallas_call(
        kern,
        out_shape=(jax.ShapeDtypeStruct((n, ho, wo, cout), BF16),
                   jax.ShapeDtypeStruct((n, 2, cout), F32)),
        grid=(n,),
        in_specs=[pl.BlockSpec((1, h, w, cin), lambda i: (i, 0, 0, 0)),
                  pl.BlockSpec((1, 1, cin), lambda i: (0, 0, 0)),
                  pl.BlockSpec((1, 1, cin), lambda i: (0, 0, 0)),
                  pl.BlockSpec((9, cin, cout), lambda i: (0, 0, 0))],
        out_specs=(pl.BlockSpec((1, ho, wo, cout), lambda i: (i, 0, 0, 0)),
                   pl.BlockSpec((1, 2, cout), lambda i: (i, 0, 0))),
        scratch_shapes=[pltpu.VMEM((h + 2, w + 2, cin), BF16)],
        compiler_params=_compiler_params(),
    )(y1_4d, scale.reshape(1, 1, cin), shift.reshape(1, 1, cin), w2)
    counts = jnp.full((n,), ho * wo, F32)
    mean, var = _stats_combine(parts, counts, n * ho * wo)
    return y2, mean, var


def shortcut_strided(x_bf_4d, scale, shift, wsc, stride, ho, wo):
    n, h, w, cin = x_bf_4d.shape
    cout = wsc.shape[-1]
    kern = functools.partial(_shortcut_stride_kernel, ho=ho, wo=wo, stride=stride)
    sc = pl.pallas_call(
        kern,
        out_shape=jax.ShapeDtypeStruct((n, ho, wo, cout), BF16),
        grid=(n,),
        in_specs=[pl.BlockSpec((1, h, w, cin), lambda i: (i, 0, 0, 0)),
                  pl.BlockSpec((1, 1, cin), lambda i: (0, 0, 0)),
                  pl.BlockSpec((1, 1, cin), lambda i: (0, 0, 0)),
                  pl.BlockSpec((cin, cout), lambda i: (0, 0))],
        out_specs=pl.BlockSpec((1, ho, wo, cout), lambda i: (i, 0, 0, 0)),
        compiler_params=_compiler_params(),
    )(x_bf_4d, scale.reshape(1, 1, cin), shift.reshape(1, 1, cin), wsc)
    return sc.reshape(n * ho * wo, cout)


# -----------------------------------------------------------------------------
# PreActBottleneck forward
# -----------------------------------------------------------------------------
def _fold_bn(gamma, beta, mean, var):
    scale = gamma / jnp.sqrt(var + EPS)
    return scale, beta - mean * scale


@functools.partial(jax.jit, static_argnames=("stride",))
def preact_bottleneck_forward(x_nchw, params, stride=1):
    n, cin, h, w = x_nchw.shape
    planes = params["conv1_w"].shape[0]
    cout = 4 * planes
    ho = (h + 2 - 3) // stride + 1
    wo = (w + 2 - 3) // stride + 1
    has_sc = (stride != 1) or (cin != cout)

    cin_p = _round_up(cin, LANE)
    p_p = _round_up(planes, LANE)
    co_p = _round_up(cout, LANE)
    m = n * h * w
    m2 = n * ho * wo

    # activations: NHWC, channels zero-padded so kernel outputs are lane-dense.
    # (transpose+pad stay in the input dtype; the layout kernel emits the bf16 copy)
    x_nhwc = jnp.transpose(x_nchw, (0, 2, 3, 1))
    x_p = _pad_axis(x_nhwc, 3, cin_p)                                 # (N,H,W,Cin_p)
    x2d = x_p.reshape(m, cin_p)

    # masked, padded, bf16 weights (computed once, outside every kernel)
    w1 = (params["conv1_w"] * params["conv1_mask"])[:, :, 0, 0].T     # (Cin, P)
    w1 = _pad_axis(_pad_axis(w1, 0, cin_p), 1, p_p).astype(BF16)
    w2 = params["conv2_w"] * params["conv2_mask"]                     # (P, P, 3, 3)
    w2 = jnp.transpose(w2, (2, 3, 1, 0)).reshape(9, planes, planes)   # (tap, Cin, Cout)
    w2 = _pad_axis(_pad_axis(w2, 1, p_p), 2, p_p).astype(BF16)
    w3 = (params["conv3_w"] * params["conv3_mask"])[:, :, 0, 0].T     # (P, Cout)
    w3 = _pad_axis(_pad_axis(w3, 0, p_p), 1, co_p).astype(BF16)

    g1 = _pad_axis(params["bn1_gamma"], 0, cin_p)
    b1 = _pad_axis(params["bn1_beta"], 0, cin_p)
    g2 = _pad_axis(params["bn2_gamma"], 0, p_p)
    b2 = _pad_axis(params["bn2_beta"], 0, p_p)
    g3 = _pad_axis(params["bn3_gamma"], 0, p_p)
    b3 = _pad_axis(params["bn3_beta"], 0, p_p)

    # ---- bn1 batch stats fused with the bf16 layout pass ---------------------
    x_bf, m1, v1 = layout_cast_and_stats(x2d)                         # x_bf: (m, Cin_p) bf16
    s1, sh1 = _fold_bn(g1, b1, m1, v1)

    # ---- conv1 (1x1) [+ shortcut conv fused when stride == 1] ----------------
    if has_sc:
        wsc = (params["sc_w"] * params["sc_mask"])[:, :, 0, 0].T      # (Cin, Cout)
        wsc = _pad_axis(_pad_axis(wsc, 0, cin_p), 1, co_p).astype(BF16)
        if stride == 1:
            (y1, sc2d), st1 = fused_bn_relu_matmul(
                x_bf, s1, sh1, [w1, wsc], [BF16, BF16], want_stats=True)
        else:
            (y1,), st1 = fused_bn_relu_matmul(
                x_bf, s1, sh1, [w1], [BF16], want_stats=True)
            sc2d = shortcut_strided(x_bf.reshape(n, h, w, cin_p),
                                    s1, sh1, wsc, stride, ho, wo)
    else:
        (y1,), st1 = fused_bn_relu_matmul(
            x_bf, s1, sh1, [w1], [BF16], want_stats=True)
        sc2d = x_bf                     # identity shortcut (cin == cout, stride == 1)
    mean2, var2 = st1
    s2, sh2 = _fold_bn(g2, b2, mean2, var2)

    # ---- conv2 (3x3, pad=1, stride): fused bn2+relu, no HBM im2col ------------
    y1_4d = y1.reshape(n, h, w, p_p)
    y2_4d, mean3, var3 = conv3x3_bn_relu(y1_4d, s2, sh2, w2, stride)
    s3, sh3 = _fold_bn(g3, b3, mean3, var3)

    # ---- conv3 (1x1) with fused bn3+relu and residual add (bf16 residual) -----
    (out2d,), _ = fused_bn_relu_matmul(
        y2_4d.reshape(m2, p_p), s3, sh3, [w3], [F32], residual=sc2d)

    out = out2d.reshape(n, ho, wo, co_p)[:, :, :, :cout]
    return jnp.transpose(out, (0, 3, 1, 2))                           # back to NCHW


# -----------------------------------------------------------------------------
# Pure-JAX reference (mirrors the PyTorch forward, f32) for correctness check
# -----------------------------------------------------------------------------
def reference_forward(x, p, stride=1):
    def bn(t, g, b):
        mu = jnp.mean(t, axis=(0, 2, 3), keepdims=True)
        v = jnp.mean((t - mu) ** 2, axis=(0, 2, 3), keepdims=True)
        return g.reshape(1, -1, 1, 1) * (t - mu) / jnp.sqrt(v + 1e-5) \
            + b.reshape(1, -1, 1, 1)

    def conv(t, wgt, s, pad):
        return jax.lax.conv_general_dilated(
            t, wgt, (s, s), [(pad, pad), (pad, pad)],
            dimension_numbers=("NCHW", "OIHW", "NCHW"))

    cin = x.shape[1]
    planes = p["conv1_w"].shape[0]
    cout = 4 * planes
    out = jax.nn.relu(bn(x, p["bn1_gamma"], p["bn1_beta"]))
    if stride != 1 or cin != cout:
        shortcut = conv(out, p["sc_w"] * p["sc_mask"], stride, 0)
    else:
        shortcut = x
    out = conv(out, p["conv1_w"] * p["conv1_mask"], 1, 0)
    out = conv(jax.nn.relu(bn(out, p["bn2_gamma"], p["bn2_beta"])),
               p["conv2_w"] * p["conv2_mask"], stride, 1)
    out = conv(jax.nn.relu(bn(out, p["bn3_gamma"], p["bn3_beta"])),
               p["conv3_w"] * p["conv3_mask"], 1, 0)
    return out + shortcut


# -----------------------------------------------------------------------------
if __name__ == "__main__":
    key = jax.random.PRNGKey(0)
    ks = jax.random.split(key, 16)

    def make_params(in_planes, planes):
        cout = 4 * planes
        p = {
            "bn1_gamma": 1.0 + 0.1 * jax.random.normal(ks[0], (in_planes,), F32),
            "bn1_beta": 0.1 * jax.random.normal(ks[1], (in_planes,), F32),
            "bn2_gamma": 1.0 + 0.1 * jax.random.normal(ks[2], (planes,), F32),
            "bn2_beta": 0.1 * jax.random.normal(ks[3], (planes,), F32),
            "bn3_gamma": 1.0 + 0.1 * jax.random.normal(ks[4], (planes,), F32),
            "bn3_beta": 0.1 * jax.random.normal(ks[5], (planes,), F32),
            "conv1_w": 0.2 * jax.random.normal(ks[6], (planes, in_planes, 1, 1), F32),
            "conv2_w": 0.2 * jax.random.normal(ks[7], (planes, planes, 3, 3), F32),
            "conv3_w": 0.2 * jax.random.normal(ks[8], (cout, planes, 1, 1), F32),
            "sc_w": 0.2 * jax.random.normal(ks[9], (cout, in_planes, 1, 1), F32),
        }
        # MaskedConv2d masks are initialized to ones (as in the module __init__).
        p["conv1_mask"] = jnp.ones_like(p["conv1_w"])
        p["conv2_mask"] = jnp.ones_like(p["conv2_w"])
        p["conv3_mask"] = jnp.ones_like(p["conv3_w"])
        p["sc_mask"] = jnp.ones_like(p["sc_w"])
        return p

    # bf16 MXU operands / bf16 activations in HBM (f32 accumulation & BN math)
    TOL = dict(atol=1e-1, rtol=1e-1)

    # Case 1: projection shortcut (in_planes != 4*planes), stride 1.
    params = make_params(4, 4)
    x = jax.random.normal(ks[10], (2, 4, 16, 16), F32)
    out = preact_bottleneck_forward(x, params, stride=1)
    jax.block_until_ready(out)
    ref = reference_forward(x, params, stride=1)
    assert out.shape == ref.shape, (out.shape, ref.shape)
    assert jnp.allclose(out, ref, **TOL), float(jnp.max(jnp.abs(out - ref)))

    # Case 2: identity shortcut (in_planes == 4*planes), stride 1.
    params2 = make_params(16, 4)
    x2 = jax.random.normal(ks[11], (2, 16, 16, 16), F32)
    out2 = preact_bottleneck_forward(x2, params2, stride=1)
    jax.block_until_ready(out2)
    ref2 = reference_forward(x2, params2, stride=1)
    assert out2.shape == ref2.shape, (out2.shape, ref2.shape)
    assert jnp.allclose(out2, ref2, **TOL), float(jnp.max(jnp.abs(out2 - ref2)))

    # Case 3: downsampling block (projection shortcut, stride 2).
    params3 = make_params(16, 4)
    x3 = jax.random.normal(ks[12], (2, 16, 16, 16), F32)
    out3 = preact_bottleneck_forward(x3, params3, stride=2)
    jax.block_until_ready(out3)
    ref3 = reference_forward(x3, params3, stride=2)
    assert out3.shape == ref3.shape, (out3.shape, ref3.shape)
    assert jnp.allclose(out3, ref3, **TOL), float(jnp.max(jnp.abs(out3 - ref3)))

    print("KERNEL_OK")
</pallas_src>

<mosaic_0001>
module attributes {stable_mosaic.version = 11 : i64} {
  func.func @_layout_stats_kernel(%arg0: i32, %arg1: memref<512x128xf32, #tpu.memory_space<vmem>>, %arg2: memref<512x128xbf16, #tpu.memory_space<vmem>>, %arg3: memref<1x2x128xf32, #tpu.memory_space<vmem>>) attributes {dimension_semantics = [#tpu.dimension_semantics<parallel>], iteration_bounds = array<i64: 1>, scalar_prefetch = 0 : i64, scratch_operands = 0 : i64, tpu.core_type = #tpu.core_type<tc>, window_params = [{transform_indices = @transform_0, window_bounds = array<i64: 512, 128>}, {transform_indices = @transform_1, window_bounds = array<i64: 512, 128>}, {transform_indices = @transform_2, window_bounds = array<i64: 1, 2, 128>}]} {
    %c0 = arith.constant 0 : index
    %c0_0 = arith.constant 0 : index
    %0 = vector.load %arg1[%c0, %c0_0] : memref<512x128xf32, #tpu.memory_space<vmem>>, vector<512x128xf32>
    %1 = arith.truncf %0 : vector<512x128xf32> to vector<512x128xbf16>
    %c0_1 = arith.constant 0 : index
    %c0_2 = arith.constant 0 : index
    %2 = vector.load %arg2[%c0_1, %c0_2] : memref<512x128xbf16, #tpu.memory_space<vmem>>, vector<512x128xbf16>
    tpu.vector_store %arg2[%c0_1, %c0_2], %1 {strides = array<i32>} : memref<512x128xbf16, #tpu.memory_space<vmem>>, vector<512x128xbf16>,
    %cst = arith.constant dense<0.000000e+00> : vector<128xf32>
    %3 = vector.multi_reduction <add>, %0, %cst [0] : vector<512x128xf32> to vector<128xf32>
    %4 = vector.shape_cast %3 : vector<128xf32> to vector<1x128xf32>
    %cst_3 = arith.constant 0.001953125 : f32
    %5 = vector.broadcast %cst_3 : f32 to vector<1x128xf32>
    %6 = arith.mulf %4, %5 : vector<1x128xf32>
    %7 = vector.broadcast %6 : vector<1x128xf32> to vector<512x128xf32>
    %8 = arith.subf %0, %7 : vector<512x128xf32>
    %9 = arith.mulf %8, %8 : vector<512x128xf32>
    %cst_4 = arith.constant dense<0.000000e+00> : vector<128xf32>
    %10 = vector.multi_reduction <add>, %9, %cst_4 [0] : vector<512x128xf32> to vector<128xf32>
    %11 = vector.shape_cast %10 : vector<128xf32> to vector<1x128xf32>
    %12 = tpu.concatenate %4, %11 in 0 : vector<1x128xf32>, vector<1x128xf32> -> vector<2x128xf32>
    %13 = vector.shape_cast %12 : vector<2x128xf32> to vector<1x2x128xf32>
    %c0_5 = arith.constant 0 : index
    %c0_6 = arith.constant 0 : index
    %c0_7 = arith.constant 0 : index
    %14 = vector.load %arg3[%c0_5, %c0_6, %c0_7] : memref<1x2x128xf32, #tpu.memory_space<vmem>>, vector<1x2x128xf32>
    tpu.vector_store %arg3[%c0_5, %c0_6, %c0_7], %13 {strides = array<i32>} : memref<1x2x128xf32, #tpu.memory_space<vmem>>, vector<1x2x128xf32>,
    return
  }
  func.func @transform_0(%arg0: i32) -> (i32, i32) {
    %c0_i32 = arith.constant 0 : i32
    %c0_i32_0 = arith.constant 0 : i32
    return %arg0, %c0_i32 : i32, i32
  }
  func.func @transform_1(%arg0: i32) -> (i32, i32) {
    %c0_i32 = arith.constant 0 : i32
    %c0_i32_0 = arith.constant 0 : i32
    return %arg0, %c0_i32 : i32, i32
  }
  func.func @transform_2(%arg0: i32) -> (i32, i32, i32) {
    %c0_i32 = arith.constant 0 : i32
    %c0_i32_0 = arith.constant 0 : i32
    %c0_i32_1 = arith.constant 0 : i32
    return %arg0, %c0_i32, %c0_i32_0 : i32, i32, i32
  }
}

module attributes {stable_mosaic.version = 11 : i64} {
  func.func @_fused_mm_kernel(%arg0: i32, %arg1: memref<512x128xbf16, #tpu.memory_space<vmem>>, %arg2: memref<1x128xf32, #tpu.memory_space<vmem>>, %arg3: memref<1x128xf32, #tpu.memory_space<vmem>>, %arg4: memref<128x128xbf16, #tpu.memory_space<vmem>>, %arg5: memref<128x128xbf16, #tpu.memory_space<vmem>>, %arg6: memref<512x128xbf16, #tpu.memory_space<vmem>>, %arg7: memref<512x128xbf16, #tpu.memory_space<vmem>>, %arg8: memref<1x2x128xf32, #tpu.memory_space<vmem>>) attributes {dimension_semantics = [#tpu.dimension_semantics<parallel>], iteration_bounds = array<i64: 1>, scalar_prefetch = 0 : i64, scratch_operands = 0 : i64, tpu.core_type = #tpu.core_type<tc>, window_params = [{transform_indices = @transform_0, window_bounds = array<i64: 512, 128>}, {pipeline_mode = #tpu.pipeline_mode<synchronous>, transform_indices = @transform_1, window_bounds = array<i64: 1, 128>}, {pipeline_mode = #tpu.pipeline_mode<synchronous>, transform_indices = @transform_2, window_bounds = array<i64: 1, 128>}, {pipeline_mode = #tpu.pipeline_mode<synchronous>, transform_indices = @transform_3, window_bounds = array<i64: 128, 128>}, {pipeline_mode = #tpu.pipeline_mode<synchronous>, transform_indices = @transform_4, window_bounds = array<i64: 128, 128>}, {transform_indices = @transform_5, window_bounds = array<i64: 512, 128>}, {transform_indices = @transform_6, window_bounds = array<i64: 512, 128>}, {transform_indices = @transform_7, window_bounds = array<i64: 1, 2, 128>}]} {
    %c0 = arith.constant 0 : index
    %c0_0 = arith.constant 0 : index
    %0 = vector.load %arg1[%c0, %c0_0] : memref<512x128xbf16, #tpu.memory_space<vmem>>, vector<512x128xbf16>
    %1 = arith.extf %0 : vector<512x128xbf16> to vector<512x128xf32>
    %c0_1 = arith.constant 0 : index
    %c0_2 = arith.constant 0 : index
    %2 = vector.load %arg2[%c0_1, %c0_2] : memref<1x128xf32, #tpu.memory_space<vmem>>, vector<1x128xf32>
    %3 = vector.broadcast %2 : vector<1x128xf32> to vector<512x128xf32>
    %4 = arith.mulf %1, %3 : vector<512x128xf32>
    %c0_3 = arith.constant 0 : index
    %c0_4 = arith.constant 0 : index
    %5 = vector.load %arg3[%c0_3, %c0_4] : memref<1x128xf32, #tpu.memory_space<vmem>>, vector<1x128xf32>
    %6 = vector.broadcast %5 : vector<1x128xf32> to vector<512x128xf32>
    %7 = arith.addf %4, %6 : vector<512x128xf32>
    %cst = arith.constant 0.000000e+00 : f32
    %8 = vector.broadcast %cst : f32 to vector<512x128xf32>
    %9 = arith.maximumf %7, %8 : vector<512x128xf32>
    %10 = arith.truncf %9 : vector<512x128xf32> to vector<512x128xbf16>
    %c0_5 = arith.constant 0 : index
    %c0_6 = arith.constant 0 : index
    %11 = vector.load %arg4[%c0_5, %c0_6] : memref<128x128xbf16, #tpu.memory_space<vmem>>, vector<128x128xbf16>
    %cst_7 = arith.constant dense<0.000000e+00> : vector<512x128xf32>
    %12 = tpu.matmul %10, %11, %cst_7 {dimension_numbers = #tpu.dot_dimension_numbers<[1], [0], [0], [1], [0, 0, 1, 1], [], []>} : vector<512x128xbf16>, vector<128x128xbf16>, vector<512x128xf32> -> vector<512x128xf32>
    %13 = arith.truncf %12 : vector<512x128xf32> to vector<512x128xbf16>
    %c0_8 = arith.constant 0 : index
    %c0_9 = arith.constant 0 : index
    %14 = vector.load %arg6[%c0_8, %c0_9] : memref<512x128xbf16, #tpu.memory_space<vmem>>, vector<512x128xbf16>
    tpu.vector_store %arg6[%c0_8, %c0_9], %13 {strides = array<i32>} : memref<512x128xbf16, #tpu.memory_space<vmem>>, vector<512x128xbf16>,
    %c0_10 = arith.constant 0 : index
    %c0_11 = arith.constant 0 : index
    %15 = vector.load %arg5[%c0_10, %c0_11] : memref<128x128xbf16, #tpu.memory_space<vmem>>, vector<128x128xbf16>
    %cst_12 = arith.constant dense<0.000000e+00> : vector<512x128xf32>
    %16 = tpu.matmul %10, %15, %cst_12 {dimension_numbers = #tpu.dot_dimension_numbers<[1], [0], [0], [1], [0, 0, 1, 1], [], []>} : vector<512x128xbf16>, vector<128x128xbf16>, vector<512x128xf32> -> vector<512x128xf32>
    %17 = arith.truncf %16 : vector<512x128xf32> to vector<512x128xbf16>
    %c0_13 = arith.constant 0 : index
    %c0_14 = arith.constant 0 : index
    %18 = vector.load %arg7[%c0_13, %c0_14] : memref<512x128xbf16, #tpu.memory_space<vmem>>, vector<512x128xbf16>
    tpu.vector_store %arg7[%c0_13, %c0_14], %17 {strides = array<i32>} : memref<512x128xbf16, #tpu.memory_space<vmem>>, vector<512x128xbf16>,
    %cst_15 = arith.constant dense<0.000000e+00> : vector<128xf32>
    %19 = vector.multi_reduction <add>, %12, %cst_15 [0] : vector<512x128xf32> to vector<128xf32>
    %20 = vector.shape_cast %19 : vector<128xf32> to vector<1x128xf32>
    %cst_16 = arith.constant 0.001953125 : f32
    %21 = vector.broadcast %cst_16 : f32 to vector<1x128xf32>
    %22 = arith.mulf %20, %21 : vector<1x128xf32>
    %23 = vector.broadcast %22 : vector<1x128xf32> to vector<512x128xf32>
    %24 = arith.subf %12, %23 : vector<512x128xf32>
    %25 = arith.mulf %24, %24 : vector<512x128xf32>
    %cst_17 = arith.constant dense<0.000000e+00> : vector<128xf32>
    %26 = vector.multi_reduction <add>, %25, %cst_17 [0] : vector<512x128xf32> to vector<128xf32>
    %27 = vector.shape_cast %26 : vector<128xf32> to vector<1x128xf32>
    %28 = tpu.concatenate %20, %27 in 0 : vector<1x128xf32>, vector<1x128xf32> -> vector<2x128xf32>
    %29 = vector.shape_cast %28 : vector<2x128xf32> to vector<1x2x128xf32>
    %c0_18 = arith.constant 0 : index
    %c0_19 = arith.constant 0 : index
    %c0_20 = arith.constant 0 : index
    %30 = vector.load %arg8[%c0_18, %c0_19, %c0_20] : memref<1x2x128xf32, #tpu.memory_space<vmem>>, vector<1x2x128xf32>
    tpu.vector_store %arg8[%c0_18, %c0_19, %c0_20], %29 {strides = array<i32>} : memref<1x2x128xf32, #tpu.memory_space<vmem>>, vector<1x2x128xf32>,
    return
  }
  func.func @transform_0(%arg0: i32) -> (i32, i32) {
    %c0_i32 = arith.constant 0 : i32
    %c0_i32_0 = arith.constant 0 : i32
    return %arg0, %c0_i32 : i32, i32
  }
  func.func @transform_1(%arg0: i32) -> (i32, i32) {
    %c0_i32 = arith.constant 0 : i32
    %c0_i32_0 = arith.constant 0 : i32
    %c0_i32_1 = arith.constant 0 : i32
    return %c0_i32, %c0_i32_0 : i32, i32
  }
  func.func @transform_2(%arg0: i32) -> (i32, i32) {
    %c0_i32 = arith.constant 0 : i32
    %c0_i32_0 = arith.constant 0 : i32
    %c0_i32_1 = arith.constant 0 : i32
    return %c0_i32, %c0_i32_0 : i32, i32
  }
  func.func @transform_3(%arg0: i32) -> (i32, i32) {
    %c0_i32 = arith.constant 0 : i32
    %c0_i32_0 = arith.constant 0 : i32
    %c0_i32_1 = arith.constant 0 : i32
    return %c0_i32, %c0_i32_0 : i32, i32
  }
  func.func @transform_4(%arg0: i32) -> (i32, i32) {
    %c0_i32 = arith.constant 0 : i32
    %c0_i32_0 = arith.constant 0 : i32
    %c0_i32_1 = arith.constant 0 : i32
    return %c0_i32, %c0_i32_0 : i32, i32
  }
  func.func @transform_5(%arg0: i32) -> (i32, i32) {
    %c0_i32 = arith.constant 0 : i32
    %c0_i32_0 = arith.constant 0 : i32
    return %arg0, %c0_i32 : i32, i32
  }
  func.func @transform_6(%arg0: i32) -> (i32, i32) {
    %c0_i32 = arith.constant 0 : i32
    %c0_i32_0 = arith.constant 0 : i32
    return %arg0, %c0_i32 : i32, i32
  }
  func.func @transform_7(%arg0: i32) -> (i32, i32, i32) {
    %c0_i32 = arith.constant 0 : i32
    %c0_i32_0 = arith.constant 0 : i32
    %c0_i32_1 = arith.constant 0 : i32
    return %arg0, %c0_i32, %c0_i32_0 : i32, i32, i32
  }
}

module attributes {stable_mosaic.version = 11 : i64} {
  func.func @_conv3x3_kernel(%arg0: i32, %arg1: memref<1x16x16x128xbf16, #tpu.memory_space<vmem>>, %arg2: memref<1x1x128xf32, #tpu.memory_space<vmem>>, %arg3: memref<1x1x128xf32, #tpu.memory_space<vmem>>, %arg4: memref<9x128x128xbf16, #tpu.memory_space<vmem>>, %arg5: memref<1x16x16x128xbf16, #tpu.memory_space<vmem>>, %arg6: memref<1x2x128xf32, #tpu.memory_space<vmem>>, %arg7: memref<18x18x128xbf16, #tpu.memory_space<vmem>>) attributes {dimension_semantics = [#tpu.dimension_semantics<parallel>], iteration_bounds = array<i64: 2>, scalar_prefetch = 0 : i64, scratch_operands = 1 : i64, tpu.core_type = #tpu.core_type<tc>, window_params = [{transform_indices = @transform_0, window_bounds = array<i64: 1, 16, 16, 128>}, {pipeline_mode = #tpu.pipeline_mode<synchronous>, transform_indices = @transform_1, window_bounds = array<i64: 1, 1, 128>}, {pipeline_mode = #tpu.pipeline_mode<synchronous>, transform_indices = @transform_2, window_bounds = array<i64: 1, 1, 128>}, {pipeline_mode = #tpu.pipeline_mode<synchronous>, transform_indices = @transform_3, window_bounds = array<i64: 9, 128, 128>}, {transform_indices = @transform_4, window_bounds = array<i64: 1, 16, 16, 128>}, {transform_indices = @transform_5, window_bounds = array<i64: 1, 2, 128>}]} {
    %c0 = arith.constant 0 : index
    %c0_0 = arith.constant 0 : index
    %c0_1 = arith.constant 0 : index
    %c0_2 = arith.constant 0 : index
    %0 = vector.load %arg1[%c0, %c0_0, %c0_1, %c0_2] : memref<1x16x16x128xbf16, #tpu.memory_space<vmem>>, vector<1x16x16x128xbf16>
    %1 = vector.shape_cast %0 : vector<1x16x16x128xbf16> to vector<16x16x128xbf16>
    %2 = arith.extf %1 : vector<16x16x128xbf16> to vector<16x16x128xf32>
    %c0_3 = arith.constant 0 : index
    %c0_4 = arith.constant 0 : index
    %c0_5 = arith.constant 0 : index
    %3 = vector.load %arg2[%c0_3, %c0_4, %c0_5] : memref<1x1x128xf32, #tpu.memory_space<vmem>>, vector<1x1x128xf32>
    %4 = vector.broadcast %3 : vector<1x1x128xf32> to vector<16x16x128xf32>
    %5 = arith.mulf %2, %4 : vector<16x16x128xf32>
    %c0_6 = arith.constant 0 : index
    %c0_7 = arith.constant 0 : index
    %c0_8 = arith.constant 0 : index
    %6 = vector.load %arg3[%c0_6, %c0_7, %c0_8] : memref<1x1x128xf32, #tpu.memory_space<vmem>>, vector<1x1x128xf32>
    %7 = vector.broadcast %6 : vector<1x1x128xf32> to vector<16x16x128xf32>
    %8 = arith.addf %5, %7 : vector<16x16x128xf32>
    %cst = arith.constant 0.000000e+00 : f32
    %9 = vector.broadcast %cst : f32 to vector<16x16x128xf32>
    %10 = arith.maximumf %8, %9 : vector<16x16x128xf32>
    %11 = arith.truncf %10 : vector<16x16x128xf32> to vector<16x16x128xbf16>
    %cst_9 = arith.constant 0.000000e+00 : bf16
    %12 = vector.broadcast %cst_9 : bf16 to vector<1x18x128xbf16>
    %c0_10 = arith.constant 0 : index
    %c0_11 = arith.constant 0 : index
    %c0_12 = arith.constant 0 : index
    %13 = vector.load %arg7[%c0_10, %c0_11, %c0_12] : memref<18x18x128xbf16, #tpu.memory_space<vmem>>, vector<1x18x128xbf16>
    tpu.vector_store %arg7[%c0_10, %c0_11, %c0_12], %12 {strides = array<i32>} : memref<18x18x128xbf16, #tpu.memory_space<vmem>>, vector<1x18x128xbf16>,
    %cst_13 = arith.constant 0.000000e+00 : bf16
    %14 = vector.broadcast %cst_13 : bf16 to vector<1x18x128xbf16>
    %c17 = arith.constant 17 : index
    %c0_14 = arith.constant 0 : index
    %c0_15 = arith.constant 0 : index
    %15 = vector.load %arg7[%c17, %c0_14, %c0_15] : memref<18x18x128xbf16, #tpu.memory_space<vmem>>, vector<1x18x128xbf16>
    tpu.vector_store %arg7[%c17, %c0_14, %c0_15], %14 {strides = array<i32>} : memref<18x18x128xbf16, #tpu.memory_space<vmem>>, vector<1x18x128xbf16>,
    %cst_16 = arith.constant 0.000000e+00 : bf16
    %16 = vector.broadcast %cst_16 : bf16 to vector<18x1x128xbf16>
    %c0_17 = arith.constant 0 : index
    %c0_18 = arith.constant 0 : index
    %c0_19 = arith.constant 0 : index
    %17 = vector.load %arg7[%c0_17, %c0_18, %c0_19] : memref<18x18x128xbf16, #tpu.memory_space<vmem>>, vector<18x1x128xbf16>
    tpu.vector_store %arg7[%c0_17, %c0_18, %c0_19], %16 {strides = array<i32>} : memref<18x18x128xbf16, #tpu.memory_space<vmem>>, vector<18x1x128xbf16>,
    %cst_20 = arith.constant 0.000000e+00 : bf16
    %18 = vector.broadcast %cst_20 : bf16 to vector<18x1x128xbf16>
    %c0_21 = arith.constant 0 : index
    %c17_22 = arith.constant 17 : index
    %c0_23 = arith.constant 0 : index
    %19 = vector.load %arg7[%c0_21, %c17_22, %c0_23] : memref<18x18x128xbf16, #tpu.memory_space<vmem>>, vector<18x1x128xbf16>
    tpu.vector_store %arg7[%c0_21, %c17_22, %c0_23], %18 {strides = array<i32>} : memref<18x18x128xbf16, #tpu.memory_space<vmem>>, vector<18x1x128xbf16>,
    %c1 = arith.constant 1 : index
    %c1_24 = arith.constant 1 : index
    %c0_25 = arith.constant 0 : index
    %20 = vector.load %arg7[%c1, %c1_24, %c0_25] : memref<18x18x128xbf16, #tpu.memory_space<vmem>>, vector<16x16x128xbf16>
    tpu.vector_store %arg7[%c1, %c1_24, %c0_25], %11 {strides = array<i32>} : memref<18x18x128xbf16, #tpu.memory_space<vmem>>, vector<16x16x128xbf16>,
    %c0_26 = arith.constant 0 : index
    %c0_27 = arith.constant 0 : index
    %c0_28 = arith.constant 0 : index
    %21 = vector.load %arg7[%c0_26, %c0_27, %c0_28] : memref<18x18x128xbf16, #tpu.memory_space<vmem>>, vector<16x16x128xbf16>
    %22 = vector.shape_cast %21 : vector<16x16x128xbf16> to vector<256x128xbf16>
    %c0_29 = arith.constant 0 : index
    %c0_30 = arith.constant 0 : index
    %c0_31 = arith.constant 0 : index
    %23 = vector.load %arg4[%c0_29, %c0_30, %c0_31] : memref<9x128x128xbf16, #tpu.memory_space<vmem>>, vector<1x128x128xbf16>
    %24 = vector.shape_cast %23 : vector<1x128x128xbf16> to vector<128x128xbf16>
    %cst_32 = arith.constant dense<0.000000e+00> : vector<256x128xf32>
    %25 = tpu.matmul %22, %24, %cst_32 {dimension_numbers = #tpu.dot_dimension_numbers<[1], [0], [0], [1], [0, 0, 1, 1], [], []>} : vector<256x128xbf16>, vector<128x128xbf16>, vector<256x128xf32> -> vector<256x128xf32>
    %c0_33 = arith.constant 0 : index
    %c1_34 = arith.constant 1 : index
    %c0_35 = arith.constant 0 : index
    %26 = vector.load %arg7[%c0_33, %c1_34, %c0_35] : memref<18x18x128xbf16, #tpu.memory_space<vmem>>, vector<16x16x128xbf16>
    %27 = vector.shape_cast %26 : vector<16x16x128xbf16> to vector<256x128xbf16>
    %c1_36 = arith.constant 1 : index
    %c0_37 = arith.constant 0 : index
    %c0_38 = arith.constant 0 : index
    %28 = vector.load %arg4[%c1_36, %c0_37, %c0_38] : memref<9x128x128xbf16, #tpu.memory_space<vmem>>, vector<1x128x128xbf16>
    %29 = vector.shape_cast %28 : vector<1x128x128xbf16> to vector<128x128xbf16>
    %cst_39 = arith.constant dense<0.000000e+00> : vector<256x128xf32>
    %30 = tpu.matmul %27, %29, %cst_39 {dimension_numbers = #tpu.dot_dimension_numbers<[1], [0], [0], [1], [0, 0, 1, 1], [], []>} : vector<256x128xbf16>, vector<128x128xbf16>, vector<256x128xf32> -> vector<256x128xf32>
    %31 = arith.addf %25, %30 : vector<256x128xf32>
    %c0_40 = arith.constant 0 : index
    %c2 = arith.constant 2 : index
    %c0_41 = arith.constant 0 : index
    %32 = vector.load %arg7[%c0_40, %c2, %c0_41] : memref<18x18x128xbf16, #tpu.memory_space<vmem>>, vector<16x16x128xbf16>
    %33 = vector.shape_cast %32 : vector<16x16x128xbf16> to vector<256x128xbf16>
    %c2_42 = arith.constant 2 : index
    %c0_43 = arith.constant 0 : index
    %c0_44 = arith.constant 0 : index
    %34 = vector.load %arg4[%c2_42, %c0_43, %c0_44] : memref<9x128x128xbf16, #tpu.memory_space<vmem>>, vector<1x128x128xbf16>
    %35 = vector.shape_cast %34 : vector<1x128x128xbf16> to vector<128x128xbf16>
    %cst_45 = arith.constant dense<0.000000e+00> : vector<256x128xf32>
    %36 = tpu.matmul %33, %35, %cst_45 {dimension_numbers = #tpu.dot_dimension_numbers<[1], [0], [0], [1], [0, 0, 1, 1], [], []>} : vector<256x128xbf16>, vector<128x128xbf16>, vector<256x128xf32> -> vector<256x128xf32>
    %37 = arith.addf %31, %36 : vector<256x128xf32>
    %c1_46 = arith.constant 1 : index
    %c0_47 = arith.constant 0 : index
    %c0_48 = arith.constant 0 : index
    %38 = vector.load %arg7[%c1_46, %c0_47, %c0_48] : memref<18x18x128xbf16, #tpu.memory_space<vmem>>, vector<16x16x128xbf16>
    %39 = vector.shape_cast %38 : vector<16x16x128xbf16> to vector<256x128xbf16>
    %c3 = arith.constant 3 : index
    %c0_49 = arith.constant 0 : index
    %c0_50 = arith.constant 0 : index
    %40 = vector.load %arg4[%c3, %c0_49, %c0_50] : memref<9x128x128xbf16, #tpu.memory_space<vmem>>, vector<1x128x128xbf16>
    %41 = vector.shape_cast %40 : vector<1x128x128xbf16> to vector<128x128xbf16>
    %cst_51 = arith.constant dense<0.000000e+00> : vector<256x128xf32>
    %42 = tpu.matmul %39, %41, %cst_51 {dimension_numbers = #tpu.dot_dimension_numbers<[1], [0], [0], [1], [0, 0, 1, 1], [], []>} : vector<256x128xbf16>, vector<128x128xbf16>, vector<256x128xf32> -> vector<256x128xf32>
    %43 = arith.addf %37, %42 : vector<256x128xf32>
    %c1_52 = arith.constant 1 : index
    %c1_53 = arith.constant 1 : index
    %c0_54 = arith.constant 0 : index
    %44 = vector.load %arg7[%c1_52, %c1_53, %c0_54] : memref<18x18x128xbf16, #tpu.memory_space<vmem>>, vector<16x16x128xbf16>
    %45 = vector.shape_cast %44 : vector<16x16x128xbf16> to vector<256x128xbf16>
    %c4 = arith.constant 4 : index
    %c0_55 = arith.constant 0 : index
    %c0_56 = arith.constant 0 : index
    %46 = vector.load %arg4[%c4, %c0_55, %c0_56] : memref<9x128x128xbf16, #tpu.memory_space<vmem>>, vector<1x128x128xbf16>
    %47 = vector.shape_cast %46 : vector<1x128x128xbf16> to vector<128x128xbf16>
    %cst_57 = arith.constant dense<0.000000e+00> : vector<256x128xf32>
    %48 = tpu.matmul %45, %47, %cst_57 {dimension_numbers = #tpu.dot_dimension_numbers<[1], [0], [0], [1], [0, 0, 1, 1], [], []>} : vector<256x128xbf16>, vector<128x128xbf16>, vector<256x128xf32> -> vector<256x128xf32>
    %49 = arith.addf %43, %48 : vector<256x128xf32>
    %c1_58 = arith.constant 1 : index
    %c2_59 = arith.constant 2 : index
    %c0_60 = arith.constant 0 : index
    %50 = vector.load %arg7[%c1_58, %c2_59, %c0_60] : memref<18x18x128xbf16, #tpu.memory_space<vmem>>, vector<16x16x128xbf16>
    %51 = vector.shape_cast %50 : vector<16x16x128xbf16> to vector<256x128xbf16>
    %c5 = arith.constant 5 : index
    %c0_61 = arith.constant 0 : index
    %c0_62 = arith.constant 0 : index
    %52 = vector.load %arg4[%c5, %c0_61, %c0_62] : memref<9x128x128xbf16, #tpu.memory_space<vmem>>, vector<1x128x128xbf16>
    %53 = vector.shape_cast %52 : vector<1x128x128xbf16> to vector<128x128xbf16>
    %cst_63 = arith.constant dense<0.000000e+00> : vector<256x128xf32>
    %54 = tpu.matmul %51, %53, %cst_63 {dimension_numbers = #tpu.dot_dimension_numbers<[1], [0], [0], [1], [0, 0, 1, 1], [], []>} : vector<256x128xbf16>, vector<128x128xbf16>, vector<256x128xf32> -> vector<256x128xf32>
    %55 = arith.addf %49, %54 : vector<256x128xf32>
    %c2_64 = arith.constant 2 : index
    %c0_65 = arith.constant 0 : index
    %c0_66 = arith.constant 0 : index
    %56 = vector.load %arg7[%c2_64, %c0_65, %c0_66] : memref<18x18x128xbf16, #tpu.memory_space<vmem>>, vector<16x16x128xbf16>
    %57 = vector.shape_cast %56 : vector<16x16x128xbf16> to vector<256x128xbf16>
    %c6 = arith.constant 6 : index
    %c0_67 = arith.constant 0 : index
    %c0_68 = arith.constant 0 : index
    %58 = vector.load %arg4[%c6, %c0_67, %c0_68] : memref<9x128x128xbf16, #tpu.memory_space<vmem>>, vector<1x128x128xbf16>
    %59 = vector.shape_cast %58 : vector<1x128x128xbf16> to vector<128x128xbf16>
    %cst_69 = arith.constant dense<0.000000e+00> : vector<256x128xf32>
    %60 = tpu.matmul %57, %59, %cst_69 {dimension_numbers = #tpu.dot_dimension_numbers<[1], [0], [0], [1], [0, 0, 1, 1], [], []>} : vector<256x128xbf16>, vector<128x128xbf16>, vector<256x128xf32> -> vector<256x128xf32>
    %61 = arith.addf %55, %60 : vector<256x128xf32>
    %c2_70 = arith.constant 2 : index
    %c1_71 = arith.constant 1 : index
    %c0_72 = arith.constant 0 : index
    %62 = vector.load %arg7[%c2_70, %c1_71, %c0_72] : memref<18x18x128xbf16, #tpu.memory_space<vmem>>, vector<16x16x128xbf16>
    %63 = vector.shape_cast %62 : vector<16x16x128xbf16> to vector<256x128xbf16>
    %c7 = arith.constant 7 : index
    %c0_73 = arith.constant 0 : index
    %c0_74 = arith.constant 0 : index
    %64 = vector.load %arg4[%c7, %c0_73, %c0_74] : memref<9x128x128xbf16, #tpu.memory_space<vmem>>, vector<1x128x128xbf16>
    %65 = vector.shape_cast %64 : vector<1x128x128xbf16> to vector<128x128xbf16>
    %cst_75 = arith.constant dense<0.000000e+00> : vector<256x128xf32>
    %66 = tpu.matmul %63, %65, %cst_75 {dimension_numbers = #tpu.dot_dimension_numbers<[1], [0], [0], [1], [0, 0, 1, 1], [], []>} : vector<256x128xbf16>, vector<128x128xbf16>, vector<256x128xf32> -> vector<256x128xf32>
    %67 = arith.addf %61, %66 : vector<256x128xf32>
    %c2_76 = arith.constant 2 : index
    %c2_77 = arith.constant 2 : index
    %c0_78 = arith.constant 0 : index
    %68 = vector.load %arg7[%c2_76, %c2_77, %c0_78] : memref<18x18x128xbf16, #tpu.memory_space<vmem>>, vector<16x16x128xbf16>
    %69 = vector.shape_cast %68 : vector<16x16x128xbf16> to vector<256x128xbf16>
    %c8 = arith.constant 8 : index
    %c0_79 = arith.constant 0 : index
    %c0_80 = arith.constant 0 : index
    %70 = vector.load %arg4[%c8, %c0_79, %c0_80] : memref<9x128x128xbf16, #tpu.memory_space<vmem>>, vector<1x128x128xbf16>
    %71 = vector.shape_cast %70 : vector<1x128x128xbf16> to vector<128x128xbf16>
    %cst_81 = arith.constant dense<0.000000e+00> : vector<256x128xf32>
    %72 = tpu.matmul %69, %71, %cst_81 {dimension_numbers = #tpu.dot_dimension_numbers<[1], [0], [0], [1], [0, 0, 1, 1], [], []>} : vector<256x128xbf16>, vector<128x128xbf16>, vector<256x128xf32> -> vector<256x128xf32>
    %73 = arith.addf %67, %72 : vector<256x128xf32>
    %74 = vector.shape_cast %73 : vector<256x128xf32> to vector<1x16x16x128xf32>
    %75 = arith.truncf %74 : vector<1x16x16x128xf32> to vector<1x16x16x128xbf16>
    %c0_82 = arith.constant 0 : index
    %c0_83 = arith.constant 0 : index
    %c0_84 = arith.constant 0 : index
    %c0_85 = arith.constant 0 : index
    %76 = vector.load %arg5[%c0_82, %c0_83, %c0_84, %c0_85] : memref<1x16x16x128xbf16, #tpu.memory_space<vmem>>, vector<1x16x16x128xbf16>
    tpu.vector_store %arg5[%c0_82, %c0_83, %c0_84, %c0_85], %75 {strides = array<i32>} : memref<1x16x16x128xbf16, #tpu.memory_space<vmem>>, vector<1x16x16x128xbf16>,
    %cst_86 = arith.constant dense<0.000000e+00> : vector<128xf32>
    %77 = vector.multi_reduction <add>, %73, %cst_86 [0] : vector<256x128xf32> to vector<128xf32>
    %78 = vector.shape_cast %77 : vector<128xf32> to vector<1x128xf32>
    %cst_87 = arith.constant 3.906250e-03 : f32
    %79 = vector.broadcast %cst_87 : f32 to vector<1x128xf32>
    %80 = arith.mulf %78, %79 : vector<1x128xf32>
    %81 = vector.broadcast %80 : vector<1x128xf32> to vector<256x128xf32>
    %82 = arith.subf %73, %81 : vector<256x128xf32>
    %83 = arith.mulf %82, %82 : vector<256x128xf32>
    %cst_88 = arith.constant dense<0.000000e+00> : vector<128xf32>
    %84 = vector.multi_reduction <add>, %83, %cst_88 [0] : vector<256x128xf32> to vector<128xf32>
    %85 = vector.shape_cast %84 : vector<128xf32> to vector<1x128xf32>
    %86 = tpu.concatenate %78, %85 in 0 : vector<1x128xf32>, vector<1x128xf32> -> vector<2x128xf32>
    %87 = vector.shape_cast %86 : vector<2x128xf32> to vector<1x2x128xf32>
    %c0_89 = arith.constant 0 : index
    %c0_90 = arith.constant 0 : index
    %c0_91 = arith.constant 0 : index
    %88 = vector.load %arg6[%c0_89, %c0_90, %c0_91] : memref<1x2x128xf32, #tpu.memory_space<vmem>>, vector<1x2x128xf32>
    tpu.vector_store %arg6[%c0_89, %c0_90, %c0_91], %87 {strides = array<i32>} : memref<1x2x128xf32, #tpu.memory_space<vmem>>, vector<1x2x128xf32>,
    return
  }
  func.func @transform_0(%arg0: i32) -> (i32, i32, i32, i32) {
    %c0_i32 = arith.constant 0 : i32
    %c0_i32_0 = arith.constant 0 : i32
    %c0_i32_1 = arith.constant 0 : i32
    %c0_i32_2 = arith.constant 0 : i32
    return %arg0, %c0_i32, %c0_i32_0, %c0_i32_1 : i32, i32, i32, i32
  }
  func.func @transform_1(%arg0: i32) -> (i32, i32, i32) {
    %c0_i32 = arith.constant 0 : i32
    %c0_i32_0 = arith.constant 0 : i32
    %c0_i32_1 = arith.constant 0 : i32
    %c0_i32_2 = arith.constant 0 : i32
    return %c0_i32, %c0_i32_0, %c0_i32_1 : i32, i32, i32
  }
  func.func @transform_2(%arg0: i32) -> (i32, i32, i32) {
    %c0_i32 = arith.constant 0 : i32
    %c0_i32_0 = arith.constant 0 : i32
    %c0_i32_1 = arith.constant 0 : i32
    %c0_i32_2 = arith.constant 0 : i32
    return %c0_i32, %c0_i32_0, %c0_i32_1 : i32, i32, i32
  }
  func.func @transform_3(%arg0: i32) -> (i32, i32, i32) {
    %c0_i32 = arith.constant 0 : i32
    %c0_i32_0 = arith.constant 0 : i32
    %c0_i32_1 = arith.constant 0 : i32
    %c0_i32_2 = arith.constant 0 : i32
    return %c0_i32, %c0_i32_0, %c0_i32_1 : i32, i32, i32
  }
  func.func @transform_4(%arg0: i32) -> (i32, i32, i32, i32) {
    %c0_i32 = arith.constant 0 : i32
    %c0_i32_0 = arith.constant 0 : i32
    %c0_i32_1 = arith.constant 0 : i32
    %c0_i32_2 = arith.constant 0 : i32
    return %arg0, %c0_i32, %c0_i32_0, %c0_i32_1 : i32, i32, i32, i32
  }
  func.func @transform_5(%arg0: i32) -> (i32, i32, i32) {
    %c0_i32 = arith.constant 0 : i32
    %c0_i32_0 = arith.constant 0 : i32
    %c0_i32_1 = arith.constant 0 : i32
    return %arg0, %c0_i32, %c0_i32_0 : i32, i32, i32
  }
}

module attributes {stable_mosaic.version = 11 : i64} {
  func.func @_fused_mm_kernel(%arg0: i32, %arg1: memref<512x128xbf16, #tpu.memory_space<vmem>>, %arg2: memref<1x128xf32, #tpu.memory_space<vmem>>, %arg3: memref<1x128xf32, #tpu.memory_space<vmem>>, %arg4: memref<128x128xbf16, #tpu.memory_space<vmem>>, %arg5: memref<512x128xbf16, #tpu.memory_space<vmem>>, %arg6: memref<512x128xf32, #tpu.memory_space<vmem>>) attributes {dimension_semantics = [#tpu.dimension_semantics<parallel>], iteration_bounds = array<i64: 1>, scalar_prefetch = 0 : i64, scratch_operands = 0 : i64, tpu.core_type = #tpu.core_type<tc>, window_params = [{transform_indices = @transform_0, window_bounds = array<i64: 512, 128>}, {pipeline_mode = #tpu.pipeline_mode<synchronous>, transform_indices = @transform_1, window_bounds = array<i64: 1, 128>}, {pipeline_mode = #tpu.pipeline_mode<synchronous>, transform_indices = @transform_2, window_bounds = array<i64: 1, 128>}, {pipeline_mode = #tpu.pipeline_mode<synchronous>, transform_indices = @transform_3, window_bounds = array<i64: 128, 128>}, {transform_indices = @transform_4, window_bounds = array<i64: 512, 128>}, {transform_indices = @transform_5, window_bounds = array<i64: 512, 128>}]} {
    %c0 = arith.constant 0 : index
    %c0_0 = arith.constant 0 : index
    %0 = vector.load %arg1[%c0, %c0_0] : memref<512x128xbf16, #tpu.memory_space<vmem>>, vector<512x128xbf16>
    %1 = arith.extf %0 : vector<512x128xbf16> to vector<512x128xf32>
    %c0_1 = arith.constant 0 : index
    %c0_2 = arith.constant 0 : index
    %2 = vector.load %arg2[%c0_1, %c0_2] : memref<1x128xf32, #tpu.memory_space<vmem>>, vector<1x128xf32>
    %3 = vector.broadcast %2 : vector<1x128xf32> to vector<512x128xf32>
    %4 = arith.mulf %1, %3 : vector<512x128xf32>
    %c0_3 = arith.constant 0 : index
    %c0_4 = arith.constant 0 : index
    %5 = vector.load %arg3[%c0_3, %c0_4] : memref<1x128xf32, #tpu.memory_space<vmem>>, vector<1x128xf32>
    %6 = vector.broadcast %5 : vector<1x128xf32> to vector<512x128xf32>
    %7 = arith.addf %4, %6 : vector<512x128xf32>
    %cst = arith.constant 0.000000e+00 : f32
    %8 = vector.broadcast %cst : f32 to vector<512x128xf32>
    %9 = arith.maximumf %7, %8 : vector<512x128xf32>
    %10 = arith.truncf %9 : vector<512x128xf32> to vector<512x128xbf16>
    %c0_5 = arith.constant 0 : index
    %c0_6 = arith.constant 0 : index
    %11 = vector.load %arg4[%c0_5, %c0_6] : memref<128x128xbf16, #tpu.memory_space<vmem>>, vector<128x128xbf16>
    %cst_7 = arith.constant dense<0.000000e+00> : vector<512x128xf32>
    %12 = tpu.matmul %10, %11, %cst_7 {dimension_numbers = #tpu.dot_dimension_numbers<[1], [0], [0], [1], [0, 0, 1, 1], [], []>} : vector<512x128xbf16>, vector<128x128xbf16>, vector<512x128xf32> -> vector<512x128xf32>
    %c0_8 = arith.constant 0 : index
    %c0_9 = arith.constant 0 : index
    %13 = vector.load %arg5[%c0_8, %c0_9] : memref<512x128xbf16, #tpu.memory_space<vmem>>, vector<512x128xbf16>
    %14 = arith.extf %13 : vector<512x128xbf16> to vector<512x128xf32>
    %15 = arith.addf %12, %14 : vector<512x128xf32>
    %c0_10 = arith.constant 0 : index
    %c0_11 = arith.constant 0 : index
    %16 = vector.load %arg6[%c0_10, %c0_11] : memref<512x128xf32, #tpu.memory_space<vmem>>, vector<512x128xf32>
    tpu.vector_store %arg6[%c0_10, %c0_11], %15 {strides = array<i32>} : memref<512x128xf32, #tpu.memory_space<vmem>>, vector<512x128xf32>,
    return
  }
  func.func @transform_0(%arg0: i32) -> (i32, i32) {
    %c0_i32 = arith.constant 0 : i32
    %c0_i32_0 = arith.constant 0 : i32
    return %arg0, %c0_i32 : i32, i32
  }
  func.func @transform_1(%arg0: i32) -> (i32, i32) {
    %c0_i32 = arith.constant 0 : i32
    %c0_i32_0 = arith.constant 0 : i32
    %c0_i32_1 = arith.constant 0 : i32
    return %c0_i32, %c0_i32_0 : i32, i32
  }
  func.func @transform_2(%arg0: i32) -> (i32, i32) {
    %c0_i32 = arith.constant 0 : i32
    %c0_i32_0 = arith.constant 0 : i32
    %c0_i32_1 = arith.constant 0 : i32
    return %c0_i32, %c0_i32_0 : i32, i32
  }
  func.func @transform_3(%arg0: i32) -> (i32, i32) {
    %c0_i32 = arith.constant 0 : i32
    %c0_i32_0 = arith.constant 0 : i32
    %c0_i32_1 = arith.constant 0 : i32
    return %c0_i32, %c0_i32_0 : i32, i32
  }
  func.func @transform_4(%arg0: i32) -> (i32, i32) {
    %c0_i32 = arith.constant 0 : i32
    %c0_i32_0 = arith.constant 0 : i32
    return %arg0, %c0_i32 : i32, i32
  }
  func.func @transform_5(%arg0: i32) -> (i32, i32) {
    %c0_i32 = arith.constant 0 : i32
    %c0_i32_0 = arith.constant 0 : i32
    return %arg0, %c0_i32 : i32, i32
  }
}

</mosaic_0001>

<llo_original>
// kernel: preact_bottleneck_forward.4
$region0: #{preact_bottleneck_forward.4}
  #allocation0 [shape = 'u32[]', space=smem, size = 0x4, offset = 0x4, fixed_abs, tag = 'smem constant byte address 0x4 - core index']
  #allocation1 [shape = 'u32[144,128]{1,0:T(1,128)}', space=vmem, size = 0x12000, scoped, tag = 'internal scratch']
  %s0 = inlined_call_operand.vmem [shape: f32[512,128], index: 0, kind: input, shape index: {}]
  %s1 = inlined_call_operand.vmem [shape: bf16[512,128], index: 1, kind: output, shape index: {0}]
  %s2 = inlined_call_operand.vmem [shape: f32[1,2,128], index: 2, kind: output, shape index: {1}]
  %3 = xla_tuple %s1, %s2
  %s4 = sld [smem:[#allocation0]]
  $region22: #{preact_bottleneck_forward.4} parent=0
    _
  %s6 = ssub.s32 1, %s4
  %s7 = scalar_select 0, %s6, %s4
  // Predicated region
  $region2: #{preact_bottleneck_forward.4} parent=0 // pred_check
    _
  $region3: #{preact_bottleneck_forward.4} parent=0 // pred_check_branch
    %9 = sbr.rel (0) target = $region5
  $region4: #{preact_bottleneck_forward.4} parent=0 // pred_region
    _
  $region5: #{preact_bottleneck_forward.4} parent=0 // pred_fallthru
    _
  %v10 = vld [vmem:[%s0] sm:$0xff]
  %v11 = vld [vmem:[%s0 + $0x8] sm:$0xff]
  %v12 = vld [vmem:[%s0 + $0x10] sm:$0xff]
  %v13 = vld [vmem:[%s0 + $0x18] sm:$0xff]
  %v14 = vld [vmem:[%s0 + $0x20] sm:$0xff]
  %v15 = vld [vmem:[%s0 + $0x28] sm:$0xff]
  %v16 = vld [vmem:[%s0 + $0x30] sm:$0xff]
  %v17 = vld [vmem:[%s0 + $0x38] sm:$0xff]
  %v18 = vld [vmem:[%s0 + $0x40] sm:$0xff]
  %v19 = vld [vmem:[%s0 + $0x48] sm:$0xff]
  %v20 = vld [vmem:[%s0 + $0x50] sm:$0xff]
  %v21 = vld [vmem:[%s0 + $0x58] sm:$0xff]
  %v22 = vld [vmem:[%s0 + $0x60] sm:$0xff]
  %v23 = vld [vmem:[%s0 + $0x68] sm:$0xff]
  %v24 = vld [vmem:[%s0 + $0x70] sm:$0xff]
  %v25 = vld [vmem:[%s0 + $0x78] sm:$0xff]
  %v26 = vld [vmem:[%s0 + $0x80] sm:$0xff]
  %v27 = vld [vmem:[%s0 + $0x88] sm:$0xff]
  %v28 = vld [vmem:[%s0 + $0x90] sm:$0xff]
  %v29 = vld [vmem:[%s0 + $0x98] sm:$0xff]
  %v30 = vld [vmem:[%s0 + $0xa0] sm:$0xff]
  %v31 = vld [vmem:[%s0 + $0xa8] sm:$0xff]
  %v32 = vld [vmem:[%s0 + $0xb0] sm:$0xff]
  %v33 = vld [vmem:[%s0 + $0xb8] sm:$0xff]
  %v34 = vld [vmem:[%s0 + $0xc0] sm:$0xff]
  %v35 = vld [vmem:[%s0 + $0xc8] sm:$0xff]
  %v36 = vld [vmem:[%s0 + $0xd0] sm:$0xff]
  %v37 = vld [vmem:[%s0 + $0xd8] sm:$0xff]
  %v38 = vld [vmem:[%s0 + $0xe0] sm:$0xff]
  %v39 = vld [vmem:[%s0 + $0xe8] sm:$0xff]
  %v40 = vld [vmem:[%s0 + $0xf0] sm:$0xff]
  %v41 = vld [vmem:[%s0 + $0xf8] sm:$0xff]
  %v42 = vld [vmem:[%s0 + $0x100] sm:$0xff]
  %v43 = vld [vmem:[%s0 + $0x108] sm:$0xff]
  %v44 = vld [vmem:[%s0 + $0x110] sm:$0xff]
  %v45 = vld [vmem:[%s0 + $0x118] sm:$0xff]
  %v46 = vld [vmem:[%s0 + $0x120] sm:$0xff]
  %v47 = vld [vmem:[%s0 + $0x128] sm:$0xff]
  %v48 = vld [vmem:[%s0 + $0x130] sm:$0xff]
  %v49 = vld [vmem:[%s0 + $0x138] sm:$0xff]
  %v50 = vld [vmem:[%s0 + $0x140] sm:$0xff]
  %v51 = vld [vmem:[%s0 + $0x148] sm:$0xff]
  %v52 = vld [vmem:[%s0 + $0x150] sm:$0xff]
  %v53 = vld [vmem:[%s0 + $0x158] sm:$0xff]
  %v54 = vld [vmem:[%s0 + $0x160] sm:$0xff]
  %v55 = vld [vmem:[%s0 + $0x168] sm:$0xff]
  %v56 = vld [vmem:[%s0 + $0x170] sm:$0xff]
  %v57 = vld [vmem:[%s0 + $0x178] sm:$0xff]
  %v58 = vld [vmem:[%s0 + $0x180] sm:$0xff]
  %v59 = vld [vmem:[%s0 + $0x188] sm:$0xff]
  %v60 = vld [vmem:[%s0 + $0x190] sm:$0xff]
  %v61 = vld [vmem:[%s0 + $0x198] sm:$0xff]
  %v62 = vld [vmem:[%s0 + $0x1a0] sm:$0xff]
  %v63 = vld [vmem:[%s0 + $0x1a8] sm:$0xff]
  %v64 = vld [vmem:[%s0 + $0x1b0] sm:$0xff]
  %v65 = vld [vmem:[%s0 + $0x1b8] sm:$0xff]
  %v66 = vld [vmem:[%s0 + $0x1c0] sm:$0xff]
  %v67 = vld [vmem:[%s0 + $0x1c8] sm:$0xff]
  %v68 = vld [vmem:[%s0 + $0x1d0] sm:$0xff]
  %v69 = vld [vmem:[%s0 + $0x1d8] sm:$0xff]
  %v70 = vld [vmem:[%s0 + $0x1e0] sm:$0xff]
  %v71 = vld [vmem:[%s0 + $0x1e8] sm:$0xff]
  %v72 = vld [vmem:[%s0 + $0x1f0] sm:$0xff]
  %v73 = vld [vmem:[%s0 + $0x1f8] sm:$0xff]
  %v74 = vpack.c.bf16 %v11, %v10
  %v75 = vpack.c.bf16 %v13, %v12
  %v76 = vpack.c.bf16 %v15, %v14
  %v77 = vpack.c.bf16 %v17, %v16
  %v78 = vpack.c.bf16 %v19, %v18
  %v79 = vpack.c.bf16 %v21, %v20
  %v80 = vpack.c.bf16 %v23, %v22
  %v81 = vpack.c.bf16 %v25, %v24
  %v82 = vpack.c.bf16 %v27, %v26
  %v83 = vpack.c.bf16 %v29, %v28
  %v84 = vpack.c.bf16 %v31, %v30
  %v85 = vpack.c.bf16 %v33, %v32
  %v86 = vpack.c.bf16 %v35, %v34
  %v87 = vpack.c.bf16 %v37, %v36
  %v88 = vpack.c.bf16 %v39, %v38
  %v89 = vpack.c.bf16 %v41, %v40
  %v90 = vpack.c.bf16 %v43, %v42
  %v91 = vpack.c.bf16 %v45, %v44
  %v92 = vpack.c.bf16 %v47, %v46
  %v93 = vpack.c.bf16 %v49, %v48
  %v94 = vpack.c.bf16 %v51, %v50
  %v95 = vpack.c.bf16 %v53, %v52
  %v96 = vpack.c.bf16 %v55, %v54
  %v97 = vpack.c.bf16 %v57, %v56
  %v98 = vpack.c.bf16 %v59, %v58
  %v99 = vpack.c.bf16 %v61, %v60
  %v100 = vpack.c.bf16 %v63, %v62
  %v101 = vpack.c.bf16 %v65, %v64
  %v102 = vpack.c.bf16 %v67, %v66
  %v103 = vpack.c.bf16 %v69, %v68
  %v104 = vpack.c.bf16 %v71, %v70
  %v105 = vpack.c.bf16 %v73, %v72
  %v138 = vunpack.c.l.b16 %v74
  %v139 = vunpack.c.h.b16 %v74
  %v140 = vunpack.c.l.b16 %v75
  %v141 = vunpack.c.h.b16 %v75
  %v142 = vunpack.c.l.b16 %v76
  %v143 = vunpack.c.h.b16 %v76
  %v144 = vunpack.c.l.b16 %v77
  %v145 = vunpack.c.h.b16 %v77
  %v146 = vunpack.c.l.b16 %v78
  %v147 = vunpack.c.h.b16 %v78
  %v148 = vunpack.c.l.b16 %v79
  %v149 = vunpack.c.h.b16 %v79
  %v150 = vunpack.c.l.b16 %v80
  %v151 = vunpack.c.h.b16 %v80
  %v152 = vunpack.c.l.b16 %v81
  %v153 = vunpack.c.h.b16 %v81
  %v154 = vunpack.c.l.b16 %v82
  %v155 = vunpack.c.h.b16 %v82
  %v156 = vunpack.c.l.b16 %v83
  %v157 = vunpack.c.h.b16 %v83
  %v158 = vunpack.c.l.b16 %v84
  %v159 = vunpack.c.h.b16 %v84
  %v160 = vunpack.c.l.b16 %v85
  %v161 = vunpack.c.h.b16 %v85
  %v162 = vunpack.c.l.b16 %v86
  %v163 = vunpack.c.h.b16 %v86
  %v164 = vunpack.c.l.b16 %v87
  %v165 = vunpack.c.h.b16 %v87
  %v166 = vunpack.c.l.b16 %v88
  %v167 = vunpack.c.h.b16 %v88
  %v168 = vunpack.c.l.b16 %v89
  %v169 = vunpack.c.h.b16 %v89
  %v170 = vunpack.c.l.b16 %v90
  %v171 = vunpack.c.h.b16 %v90
  %v172 = vunpack.c.l.b16 %v91
  %v173 = vunpack.c.h.b16 %v91
  %v174 = vunpack.c.l.b16 %v92
  %v175 = vunpack.c.h.b16 %v92
  %v176 = vunpack.c.l.b16 %v93
  %v177 = vunpack.c.h.b16 %v93
  %v178 = vunpack.c.l.b16 %v94
  %v179 = vunpack.c.h.b16 %v94
  %v180 = vunpack.c.l.b16 %v95
  %v181 = vunpack.c.h.b16 %v95
  %v182 = vunpack.c.l.b16 %v96
  %v183 = vunpack.c.h.b16 %v96
  %v184 = vunpack.c.l.b16 %v97
  %v185 = vunpack.c.h.b16 %v97
  %v186 = vunpack.c.l.b16 %v98
  %v187 = vunpack.c.h.b16 %v98
  %v188 = vunpack.c.l.b16 %v99
  %v189 = vunpack.c.h.b16 %v99
  %v190 = vunpack.c.l.b16 %v100
  %v191 = vunpack.c.h.b16 %v100
  %v192 = vunpack.c.l.b16 %v101
  %v193 = vunpack.c.h.b16 %v101
  %v194 = vunpack.c.l.b16 %v102
  %v195 = vunpack.c.h.b16 %v102
  %v196 = vunpack.c.l.b16 %v103
  %v197 = vunpack.c.h.b16 %v103
  %v198 = vunpack.c.l.b16 %v104
  %v199 = vunpack.c.h.b16 %v104
  %v200 = vunpack.c.l.b16 %v105
  %v201 = vunpack.c.h.b16 %v105
  %v202 = vpack.c.b16 %v138, %v138
  %v203 = vpack.c.b16 %v139, %v139
  %v204 = vpack.c.b16 %v140, %v140
  %v205 = vpack.c.b16 %v141, %v141
  %v206 = vpack.c.b16 %v142, %v142
  %v207 = vpack.c.b16 %v143, %v143
  %v208 = vpack.c.b16 %v144, %v144
  %v209 = vpack.c.b16 %v145, %v145
  %v210 = vpack.c.b16 %v146, %v146
  %v211 = vpack.c.b16 %v147, %v147
  %v212 = vpack.c.b16 %v148, %v148
  %v213 = vpack.c.b16 %v149, %v149
  %v214 = vpack.c.b16 %v150, %v150
  %v215 = vpack.c.b16 %v151, %v151
  %v216 = vpack.c.b16 %v152, %v152
  %v217 = vpack.c.b16 %v153, %v153
  %v218 = vpack.c.b16 %v154, %v154
  %v219 = vpack.c.b16 %v155, %v155
  %v220 = vpack.c.b16 %v156, %v156
  %v221 = vpack.c.b16 %v157, %v157
  %v222 = vpack.c.b16 %v158, %v158
  %v223 = vpack.c.b16 %v159, %v159
  %v224 = vpack.c.b16 %v160, %v160
  %v225 = vpack.c.b16 %v161, %v161
  %v226 = vpack.c.b16 %v162, %v162
  %v227 = vpack.c.b16 %v163, %v163
  %v228 = vpack.c.b16 %v164, %v164
  %v229 = vpack.c.b16 %v165, %v165
  %v230 = vpack.c.b16 %v166, %v166
  %v231 = vpack.c.b16 %v167, %v167
  %v232 = vpack.c.b16 %v168, %v168
  %v233 = vpack.c.b16 %v169, %v169
  %v234 = vpack.c.b16 %v170, %v170
  %v235 = vpack.c.b16 %v171, %v171
  %v236 = vpack.c.b16 %v172, %v172
  %v237 = vpack.c.b16 %v173, %v173
  %v238 = vpack.c.b16 %v174, %v174
  %v239 = vpack.c.b16 %v175, %v175
  %v240 = vpack.c.b16 %v176, %v176
  %v241 = vpack.c.b16 %v177, %v177
  %v242 = vpack.c.b16 %v178, %v178
  %v243 = vpack.c.b16 %v179, %v179
  %v244 = vpack.c.b16 %v180, %v180
  %v245 = vpack.c.b16 %v181, %v181
  %v246 = vpack.c.b16 %v182, %v182
  %v247 = vpack.c.b16 %v183, %v183
  %v248 = vpack.c.b16 %v184, %v184
  %v249 = vpack.c.b16 %v185, %v185
  %v250 = vpack.c.b16 %v186, %v186
  %v251 = vpack.c.b16 %v187, %v187
  %v252 = vpack.c.b16 %v188, %v188
  %v253 = vpack.c.b16 %v189, %v189
  %v254 = vpack.c.b16 %v190, %v190
  %v255 = vpack.c.b16 %v191, %v191
  %v256 = vpack.c.b16 %v192, %v192
  %v257 = vpack.c.b16 %v193, %v193
  %v258 = vpack.c.b16 %v194, %v194
  %v259 = vpack.c.b16 %v195, %v195
  %v260 = vpack.c.b16 %v196, %v196
  %v261 = vpack.c.b16 %v197, %v197
  %v262 = vpack.c.b16 %v198, %v198
  %v263 = vpack.c.b16 %v199, %v199
  %v264 = vpack.c.b16 %v200, %v200
  %v265 = vpack.c.b16 %v201, %v201
  %330 = vst [vmem:[%s1] sm:$0xf] %v202
  %331 = vst [vmem:[%s1 + $0x4] sm:$0xf] %v203
  %332 = vst [vmem:[%s1 + $0x8] sm:$0xf] %v204
  %333 = vst [vmem:[%s1 + $0xc] sm:$0xf] %v205
  %334 = vst [vmem:[%s1 + $0x10] sm:$0xf] %v206
  %335 = vst [vmem:[%s1 + $0x14] sm:$0xf] %v207
  %336 = vst [vmem:[%s1 + $0x18] sm:$0xf] %v208
  %337 = vst [vmem:[%s1 + $0x1c] sm:$0xf] %v209
  %338 = vst [vmem:[%s1 + $0x20] sm:$0xf] %v210
  %339 = vst [vmem:[%s1 + $0x24] sm:$0xf] %v211
  %340 = vst [vmem:[%s1 + $0x28] sm:$0xf] %v212
  %341 = vst [vmem:[%s1 + $0x2c] sm:$0xf] %v213
  %342 = vst [vmem:[%s1 + $0x30] sm:$0xf] %v214
  %343 = vst [vmem:[%s1 + $0x34] sm:$0xf] %v215
  %344 = vst [vmem:[%s1 + $0x38] sm:$0xf] %v216
  %345 = vst [vmem:[%s1 + $0x3c] sm:$0xf] %v217
  %346 = vst [vmem:[%s1 + $0x40] sm:$0xf] %v218
  %347 = vst [vmem:[%s1 + $0x44] sm:$0xf] %v219
  %348 = vst [vmem:[%s1 + $0x48] sm:$0xf] %v220
  %349 = vst [vmem:[%s1 + $0x4c] sm:$0xf] %v221
  %350 = vst [vmem:[%s1 + $0x50] sm:$0xf] %v222
  %351 = vst [vmem:[%s1 + $0x54] sm:$0xf] %v223
  %352 = vst [vmem:[%s1 + $0x58] sm:$0xf] %v224
  %353 = vst [vmem:[%s1 + $0x5c] sm:$0xf] %v225
  %354 = vst [vmem:[%s1 + $0x60] sm:$0xf] %v226
  %355 = vst [vmem:[%s1 + $0x64] sm:$0xf] %v227
  %356 = vst [vmem:[%s1 + $0x68] sm:$0xf] %v228
  %357 = vst [vmem:[%s1 + $0x6c] sm:$0xf] %v229
  %358 = vst [vmem:[%s1 + $0x70] sm:$0xf] %v230
  %359 = vst [vmem:[%s1 + $0x74] sm:$0xf] %v231
  %360 = vst [vmem:[%s1 + $0x78] sm:$0xf] %v232
  %361 = vst [vmem:[%s1 + $0x7c] sm:$0xf] %v233
  %362 = vst [vmem:[%s1 + $0x80] sm:$0xf] %v234
  %363 = vst [vmem:[%s1 + $0x84] sm:$0xf] %v235
  %364 = vst [vmem:[%s1 + $0x88] sm:$0xf] %v236
  %365 = vst [vmem:[%s1 + $0x8c] sm:$0xf] %v237
  %366 = vst [vmem:[%s1 + $0x90] sm:$0xf] %v238
  %367 = vst [vmem:[%s1 + $0x94] sm:$0xf] %v239
  %368 = vst [vmem:[%s1 + $0x98] sm:$0xf] %v240
  %369 = vst [vmem:[%s1 + $0x9c] sm:$0xf] %v241
  %370 = vst [vmem:[%s1 + $0xa0] sm:$0xf] %v242
  %371 = vst [vmem:[%s1 + $0xa4] sm:$0xf] %v243
  %372 = vst [vmem:[%s1 + $0xa8] sm:$0xf] %v244
  %373 = vst [vmem:[%s1 + $0xac] sm:$0xf] %v245
  %374 = vst [vmem:[%s1 + $0xb0] sm:$0xf] %v246
  %375 = vst [vmem:[%s1 + $0xb4] sm:$0xf] %v247
  %376 = vst [vmem:[%s1 + $0xb8] sm:$0xf] %v248
  %377 = vst [vmem:[%s1 + $0xbc] sm:$0xf] %v249
  %378 = vst [vmem:[%s1 + $0xc0] sm:$0xf] %v250
  %379 = vst [vmem:[%s1 + $0xc4] sm:$0xf] %v251
  %380 = vst [vmem:[%s1 + $0xc8] sm:$0xf] %v252
  %381 = vst [vmem:[%s1 + $0xcc] sm:$0xf] %v253
  %382 = vst [vmem:[%s1 + $0xd0] sm:$0xf] %v254
  %383 = vst [vmem:[%s1 + $0xd4] sm:$0xf] %v255
  %384 = vst [vmem:[%s1 + $0xd8] sm:$0xf] %v256
  %385 = vst [vmem:[%s1 + $0xdc] sm:$0xf] %v257
  %386 = vst [vmem:[%s1 + $0xe0] sm:$0xf] %v258
  %387 = vst [vmem:[%s1 + $0xe4] sm:$0xf] %v259
  %388 = vst [vmem:[%s1 + $0xe8] sm:$0xf] %v260
  %389 = vst [vmem:[%s1 + $0xec] sm:$0xf] %v261
  %390 = vst [vmem:[%s1 + $0xf0] sm:$0xf] %v262
  %391 = vst [vmem:[%s1 + $0xf4] sm:$0xf] %v263
  %392 = vst [vmem:[%s1 + $0xf8] sm:$0xf] %v264
  %393 = vst [vmem:[%s1 + $0xfc] sm:$0xf] %v265
  %v394 = vadd.f32 %v10, %v11
  %v395 = vadd.f32 %v394, %v12
  %v396 = vadd.f32 %v395, %v13
  %v397 = vadd.f32 %v396, %v14
  %v398 = vadd.f32 %v397, %v15
  %v399 = vadd.f32 %v398, %v16
  %v400 = vadd.f32 %v399, %v17
  %v401 = vadd.f32 %v400, %v18
  %v402 = vadd.f32 %v401, %v19
  %v403 = vadd.f32 %v402, %v20
  %v404 = vadd.f32 %v403, %v21
  %v405 = vadd.f32 %v404, %v22
  %v406 = vadd.f32 %v405, %v23
  %v407 = vadd.f32 %v406, %v24
  %v408 = vadd.f32 %v407, %v25
  %v409 = vadd.f32 %v408, %v26
  %v410 = vadd.f32 %v409, %v27
  %v411 = vadd.f32 %v410, %v28
  %v412 = vadd.f32 %v411, %v29
  %v413 = vadd.f32 %v412, %v30
  %v414 = vadd.f32 %v413, %v31
  %v415 = vadd.f32 %v414, %v32
  %v416 = vadd.f32 %v415, %v33
  %v417 = vadd.f32 %v416, %v34
  %v418 = vadd.f32 %v417, %v35
  %v419 = vadd.f32 %v418, %v36
  %v420 = vadd.f32 %v419, %v37
  %v421 = vadd.f32 %v420, %v38
  %v422 = vadd.f32 %v421, %v39
  %v423 = vadd.f32 %v422, %v40
  %v424 = vadd.f32 %v423, %v41
  %v425 = vadd.f32 %v424, %v42
  %v426 = vadd.f32 %v425, %v43
  %v427 = vadd.f32 %v426, %v44
  %v428 = vadd.f32 %v427, %v45
  %v429 = vadd.f32 %v428, %v46
  %v430 = vadd.f32 %v429, %v47
  %v431 = vadd.f32 %v430, %v48
  %v432 = vadd.f32 %v431, %v49
  %v433 = vadd.f32 %v432, %v50
  %v434 = vadd.f32 %v433, %v51
  %v435 = vadd.f32 %v434, %v52
  %v436 = vadd.f32 %v435, %v53
  %v437 = vadd.f32 %v436, %v54
  %v438 = vadd.f32 %v437, %v55
  %v439 = vadd.f32 %v438, %v56
  %v440 = vadd.f32 %v439, %v57
  %v441 = vadd.f32 %v440, %v58
  %v442 = vadd.f32 %v441, %v59
  %v443 = vadd.f32 %v442, %v60
  %v444 = vadd.f32 %v443, %v61
  %v445 = vadd.f32 %v444, %v62
  %v446 = vadd.f32 %v445, %v63
  %v447 = vadd.f32 %v446, %v64
  %v448 = vadd.f32 %v447, %v65
  %v449 = vadd.f32 %v448, %v66
  %v450 = vadd.f32 %v449, %v67
  %v451 = vadd.f32 %v450, %v68
  %v452 = vadd.f32 %v451, %v69
  %v453 = vadd.f32 %v452, %v70
  %v454 = vadd.f32 %v453, %v71
  %v455 = vadd.f32 %v454, %v72
  %v456 = vadd.f32 %v455, %v73
  %v457 = vrot.slane %v456, 4
  %v458 = vadd.f32 %v456, %v457
  %v459 = vrot.slane %v458, 2
  %v460 = vadd.f32 %v458, %v459
  %v461 = vrot.slane %v460, 1
  %v462 = vadd.f32 %v460, %v461
  %v463 = vmul.f32 %v462, 0.001953125
  %v464 = vsub.f32 %v10, %v463
  %v465 = vsub.f32 %v11, %v463
  %v466 = vsub.f32 %v12, %v463
  %v467 = vsub.f32 %v13, %v463
  %v468 = vsub.f32 %v14, %v463
  %v469 = vsub.f32 %v15, %v463
  %v470 = vsub.f32 %v16, %v463
  %v471 = vsub.f32 %v17, %v463
  %v472 = vsub.f32 %v18, %v463
  %v473 = vsub.f32 %v19, %v463
  %v474 = vsub.f32 %v20, %v463
  %v475 = vsub.f32 %v21, %v463
  %v476 = vsub.f32 %v22, %v463
  %v477 = vsub.f32 %v23, %v463
  %v478 = vsub.f32 %v24, %v463
  %v479 = vsub.f32 %v25, %v463
  %v480 = vsub.f32 %v26, %v463
  %v481 = vsub.f32 %v27, %v463
  %v482 = vsub.f32 %v28, %v463
  %v483 = vsub.f32 %v29, %v463
  %v484 = vsub.f32 %v30, %v463
  %v485 = vsub.f32 %v31, %v463
  %v486 = vsub.f32 %v32, %v463
  %v487 = vsub.f32 %v33, %v463
  %v488 = vsub.f32 %v34, %v463
  %v489 = vsub.f32 %v35, %v463
  %v490 = vsub.f32 %v36, %v463
  %v491 = vsub.f32 %v37, %v463
  %v492 = vsub.f32 %v38, %v463
  %v493 = vsub.f32 %v39, %v463
  %v494 = vsub.f32 %v40, %v463
  %v495 = vsub.f32 %v41, %v463
  %v496 = vsub.f32 %v42, %v463
  %v497 = vsub.f32 %v43, %v463
  %v498 = vsub.f32 %v44, %v463
  %v499 = vsub.f32 %v45, %v463
  %v500 = vsub.f32 %v46, %v463
  %v501 = vsub.f32 %v47, %v463
  %v502 = vsub.f32 %v48, %v463
  %v503 = vsub.f32 %v49, %v463
  %v504 = vsub.f32 %v50, %v463
  %v505 = vsub.f32 %v51, %v463
  %v506 = vsub.f32 %v52, %v463
  %v507 = vsub.f32 %v53, %v463
  %v508 = vsub.f32 %v54, %v463
  %v509 = vsub.f32 %v55, %v463
  %v510 = vsub.f32 %v56, %v463
  %v511 = vsub.f32 %v57, %v463
  %v512 = vsub.f32 %v58, %v463
  %v513 = vsub.f32 %v59, %v463
  %v514 = vsub.f32 %v60, %v463
  %v515 = vsub.f32 %v61, %v463
  %v516 = vsub.f32 %v62, %v463
  %v517 = vsub.f32 %v63, %v463
  %v518 = vsub.f32 %v64, %v463
  %v519 = vsub.f32 %v65, %v463
  %v520 = vsub.f32 %v66, %v463
  %v521 = vsub.f32 %v67, %v463
  %v522 = vsub.f32 %v68, %v463
  %v523 = vsub.f32 %v69, %v463
  %v524 = vsub.f32 %v70, %v463
  %v525 = vsub.f32 %v71, %v463
  %v526 = vsub.f32 %v72, %v463
  %v527 = vsub.f32 %v73, %v463
  %v528 = vmul.f32 %v464, %v464
  %v529 = vmul.f32 %v465, %v465
  %v530 = vmul.f32 %v466, %v466
  %v531 = vmul.f32 %v467, %v467
  %v532 = vmul.f32 %v468, %v468
  %v533 = vmul.f32 %v469, %v469
  %v534 = vmul.f32 %v470, %v470
  %v535 = vmul.f32 %v471, %v471
  %v536 = vmul.f32 %v472, %v472
  %v537 = vmul.f32 %v473, %v473
  %v538 = vmul.f32 %v474, %v474
  %v539 = vmul.f32 %v475, %v475
  %v540 = vmul.f32 %v476, %v476
  %v541 = vmul.f32 %v477, %v477
  %v542 = vmul.f32 %v478, %v478
  %v543 = vmul.f32 %v479, %v479
  %v544 = vmul.f32 %v480, %v480
  %v545 = vmul.f32 %v481, %v481
  %v546 = vmul.f32 %v482, %v482
  %v547 = vmul.f32 %v483, %v483
  %v548 = vmul.f32 %v484, %v484
  %v549 = vmul.f32 %v485, %v485
  %v550 = vmul.f32 %v486, %v486
  %v551 = vmul.f32 %v487, %v487
  %v552 = vmul.f32 %v488, %v488
  %v553 = vmul.f32 %v489, %v489
  %v554 = vmul.f32 %v490, %v490
  %v555 = vmul.f32 %v491, %v491
  %v556 = vmul.f32 %v492, %v492
  %v557 = vmul.f32 %v493, %v493
  %v558 = vmul.f32 %v494, %v494
  %v559 = vmul.f32 %v495, %v495
  %v560 = vmul.f32 %v496, %v496
  %v561 = vmul.f32 %v497, %v497
  %v562 = vmul.f32 %v498, %v498
  %v563 = vmul.f32 %v499, %v499
  %v564 = vmul.f32 %v500, %v500
  %v565 = vmul.f32 %v501, %v501
  %v566 = vmul.f32 %v502, %v502
  %v567 = vmul.f32 %v503, %v503
  %v568 = vmul.f32 %v504, %v504
  %v569 = vmul.f32 %v505, %v505
  %v570 = vmul.f32 %v506, %v506
  %v571 = vmul.f32 %v507, %v507
  %v572 = vmul.f32 %v508, %v508
  %v573 = vmul.f32 %v509, %v509
  %v574 = vmul.f32 %v510, %v510
  %v575 = vmul.f32 %v511, %v511
  %v576 = vmul.f32 %v512, %v512
  %v577 = vmul.f32 %v513, %v513
  %v578 = vmul.f32 %v514, %v514
  %v579 = vmul.f32 %v515, %v515
  %v580 = vmul.f32 %v516, %v516
  %v581 = vmul.f32 %v517, %v517
  %v582 = vmul.f32 %v518, %v518
  %v583 = vmul.f32 %v519, %v519
  %v584 = vmul.f32 %v520, %v520
  %v585 = vmul.f32 %v521, %v521
  %v586 = vmul.f32 %v522, %v522
  %v587 = vmul.f32 %v523, %v523
  %v588 = vmul.f32 %v524, %v524
  %v589 = vmul.f32 %v525, %v525
  %v590 = vmul.f32 %v526, %v526
  %v591 = vmul.f32 %v527, %v527
  %v592 = vadd.f32 %v528, %v529
  %v593 = vadd.f32 %v592, %v530
  %v594 = vadd.f32 %v593, %v531
  %v595 = vadd.f32 %v594, %v532
  %v596 = vadd.f32 %v595, %v533
  %v597 = vadd.f32 %v596, %v534
  %v598 = vadd.f32 %v597, %v535
  %v599 = vadd.f32 %v598, %v536
  %v600 = vadd.f32 %v599, %v537
  %v601 = vadd.f32 %v600, %v538
  %v602 = vadd.f32 %v601, %v539
  %v603 = vadd.f32 %v602, %v540
  %v604 = vadd.f32 %v603, %v541
  %v605 = vadd.f32 %v604, %v542
  %v606 = vadd.f32 %v605, %v543
  %v607 = vadd.f32 %v606, %v544
  %v608 = vadd.f32 %v607, %v545
  %v609 = vadd.f32 %v608, %v546
  %v610 = vadd.f32 %v609, %v547
  %v611 = vadd.f32 %v610, %v548
  %v612 = vadd.f32 %v611, %v549
  %v613 = vadd.f32 %v612, %v550
  %v614 = vadd.f32 %v613, %v551
  %v615 = vadd.f32 %v614, %v552
  %v616 = vadd.f32 %v615, %v553
  %v617 = vadd.f32 %v616, %v554
  %v618 = vadd.f32 %v617, %v555
  %v619 = vadd.f32 %v618, %v556
  %v620 = vadd.f32 %v619, %v557
  %v621 = vadd.f32 %v620, %v558
  %v622 = vadd.f32 %v621, %v559
  %v623 = vadd.f32 %v622, %v560
  %v624 = vadd.f32 %v623, %v561
  %v625 = vadd.f32 %v624, %v562
  %v626 = vadd.f32 %v625, %v563
  %v627 = vadd.f32 %v626, %v564
  %v628 = vadd.f32 %v627, %v565
  %v629 = vadd.f32 %v628, %v566
  %v630 = vadd.f32 %v629, %v567
  %v631 = vadd.f32 %v630, %v568
  %v632 = vadd.f32 %v631, %v569
  %v633 = vadd.f32 %v632, %v570
  %v634 = vadd.f32 %v633, %v571
  %v635 = vadd.f32 %v634, %v572
  %v636 = vadd.f32 %v635, %v573
  %v637 = vadd.f32 %v636, %v574
  %v638 = vadd.f32 %v637, %v575
  %v639 = vadd.f32 %v638, %v576
  %v640 = vadd.f32 %v639, %v577
  %v641 = vadd.f32 %v640, %v578
  %v642 = vadd.f32 %v641, %v579
  %v643 = vadd.f32 %v642, %v580
  %v644 = vadd.f32 %v643, %v581
  %v645 = vadd.f32 %v644, %v582
  %v646 = vadd.f32 %v645, %v583
  %v647 = vadd.f32 %v646, %v584
  %v648 = vadd.f32 %v647, %v585
  %v649 = vadd.f32 %v648, %v586
  %v650 = vadd.f32 %v649, %v587
  %v651 = vadd.f32 %v650, %v588
  %v652 = vadd.f32 %v651, %v589
  %v653 = vadd.f32 %v652, %v590
  %v654 = vadd.f32 %v653, %v591
  %v655 = vrot.slane %v654, 4
  %v656 = vadd.f32 %v654, %v655
  %v657 = vrot.slane %v656, 2
  %v658 = vadd.f32 %v656, %v657
  %v659 = vrot.slane %v658, 1
  %v660 = vadd.f32 %v658, %v659
  %vm661 = vcmask 1040384
  %v662 = vsel %vm661, %v462, %v660
  %663 = vst [vmem:[%s2] sm:$0x3] %v662
  // Predicated region
  $region6: #{preact_bottleneck_forward.4} parent=0 // pred_check
    _
  $region7: #{preact_bottleneck_forward.4} parent=0 // pred_check_branch
    %665 = sbr.rel (0) target = $region9
  $region8: #{preact_bottleneck_forward.4} parent=0 // pred_region
    _
  $region9: #{preact_bottleneck_forward.4} parent=0 // pred_fallthru
    _
  // Predicated region
  $region10: #{preact_bottleneck_forward.4} parent=0 // pred_check
    _
  $region11: #{preact_bottleneck_forward.4} parent=0 // pred_check_branch
    %667 = sbr.rel (0) target = $region13
  $region12: #{preact_bottleneck_forward.4} parent=0 // pred_region
    _
  $region13: #{preact_bottleneck_forward.4} parent=0 // pred_fallthru
    _
  // Predicated region
  $region14: #{preact_bottleneck_forward.4} parent=0 // pred_check
    _
  $region15: #{preact_bottleneck_forward.4} parent=0 // pred_check_branch
    %669 = sbr.rel (0) target = $region17
  $region16: #{preact_bottleneck_forward.4} parent=0 // pred_region
    _
  $region17: #{preact_bottleneck_forward.4} parent=0 // pred_fallthru
    _
  // Predicated region
  $region18: #{preact_bottleneck_forward.4} parent=0 // pred_check
    _
  $region19: #{preact_bottleneck_forward.4} parent=0 // pred_check_branch
    %671 = sbr.rel (0) target = $region21
  $region20: #{preact_bottleneck_forward.4} parent=0 // pred_region
    _
  $region21: #{preact_bottleneck_forward.4} parent=0 // pred_fallthru
    _

// kernel: preact_bottleneck_forward.5
$region0: #{preact_bottleneck_forward.5}
  #allocation0 [shape = 'u32[]', space=smem, size = 0x4, offset = 0x4, fixed_abs, tag = 'smem constant byte address 0x4 - core index']
  #allocation1 [shape = 'u32[144,128]{1,0:T(1,128)}', space=vmem, size = 0x12000, scoped, tag = 'internal scratch']
  %s0 = inlined_call_operand.vmem [shape: bf16[512,128], index: 0, kind: input, shape index: {}]
  %s1 = inlined_call_operand.vmem [shape: f32[1,128], index: 1, kind: input, shape index: {}]
  %s2 = inlined_call_operand.vmem [shape: f32[1,128], index: 2, kind: input, shape index: {}]
  %s3 = inlined_call_operand.vmem [shape: bf16[128,128], index: 3, kind: input, shape index: {}]
  %s4 = inlined_call_operand.vmem [shape: bf16[128,128], index: 4, kind: input, shape index: {}]
  %s5 = inlined_call_operand.vmem [shape: bf16[512,128], index: 5, kind: output, shape index: {0}]
  %s6 = inlined_call_operand.vmem [shape: bf16[512,128], index: 6, kind: output, shape index: {1}]
  %s7 = inlined_call_operand.vmem [shape: f32[1,2,128], index: 7, kind: output, shape index: {2}]
  %8 = xla_tuple %s5, %s6, %s7
  %s9 = sld [smem:[#allocation0]]
  $region46: #{preact_bottleneck_forward.5} parent=0
    _
  %s11 = ssub.s32 1, %s9
  %s12 = scalar_select 0, %s11, %s9
  // Predicated region
  $region2: #{preact_bottleneck_forward.5} parent=0 // pred_check
    _
  $region3: #{preact_bottleneck_forward.5} parent=0 // pred_check_branch
    %14 = sbr.rel (0) target = $region5
  $region4: #{preact_bottleneck_forward.5} parent=0 // pred_region
    _
  $region5: #{preact_bottleneck_forward.5} parent=0 // pred_fallthru
    _
  // Predicated region
  $region6: #{preact_bottleneck_forward.5} parent=0 // pred_check
    _
  $region7: #{preact_bottleneck_forward.5} parent=0 // pred_check_branch
    %16 = sbr.rel (0) target = $region9
  $region8: #{preact_bottleneck_forward.5} parent=0 // pred_region
    _
  $region9: #{preact_bottleneck_forward.5} parent=0 // pred_fallthru
    _
  // Predicated region
  $region10: #{preact_bottleneck_forward.5} parent=0 // pred_check
    _
  $region11: #{preact_bottleneck_forward.5} parent=0 // pred_check_branch
    %18 = sbr.rel (0) target = $region13
  $region12: #{preact_bottleneck_forward.5} parent=0 // pred_region
    _
  $region13: #{preact_bottleneck_forward.5} parent=0 // pred_fallthru
    _
  // Predicated region
  $region14: #{preact_bottleneck_forward.5} parent=0 // pred_check
    _
  $region15: #{preact_bottleneck_forward.5} parent=0 // pred_check_branch
    %20 = sbr.rel (0) target = $region17
  $region16: #{preact_bottleneck_forward.5} parent=0 // pred_region
    _
  $region17: #{preact_bottleneck_forward.5} parent=0 // pred_fallthru
    _
  // Predicated region
  $region18: #{preact_bottleneck_forward.5} parent=0 // pred_check
    _
  $region19: #{preact_bottleneck_forward.5} parent=0 // pred_check_branch
    %22 = sbr.rel (0) target = $region21
  $region20: #{preact_bottleneck_forward.5} parent=0 // pred_region
    _
  $region21: #{preact_bottleneck_forward.5} parent=0 // pred_fallthru
    _
  %v24 = vld [vmem:[%s0] sm:$0xf]
  %v25 = vld [vmem:[%s0 + $0x4] sm:$0xf]
  %v26 = vld [vmem:[%s0 + $0x8] sm:$0xf]
  %v27 = vld [vmem:[%s0 + $0xc] sm:$0xf]
  %v28 = vld [vmem:[%s0 + $0x10] sm:$0xf]
  %v29 = vld [vmem:[%s0 + $0x14] sm:$0xf]
  %v30 = vld [vmem:[%s0 + $0x18] sm:$0xf]
  %v31 = vld [vmem:[%s0 + $0x1c] sm:$0xf]
  %v32 = vld [vmem:[%s0 + $0x20] sm:$0xf]
  %v33 = vld [vmem:[%s0 + $0x24] sm:$0xf]
  %v34 = vld [vmem:[%s0 + $0x28] sm:$0xf]
  %v35 = vld [vmem:[%s0 + $0x2c] sm:$0xf]
  %v36 = vld [vmem:[%s0 + $0x30] sm:$0xf]
  %v37 = vld [vmem:[%s0 + $0x34] sm:$0xf]
  %v38 = vld [vmem:[%s0 + $0x38] sm:$0xf]
  %v39 = vld [vmem:[%s0 + $0x3c] sm:$0xf]
  %v40 = vld [vmem:[%s0 + $0x40] sm:$0xf]
  %v41 = vld [vmem:[%s0 + $0x44] sm:$0xf]
  %v42 = vld [vmem:[%s0 + $0x48] sm:$0xf]
  %v43 = vld [vmem:[%s0 + $0x4c] sm:$0xf]
  %v44 = vld [vmem:[%s0 + $0x50] sm:$0xf]
  %v45 = vld [vmem:[%s0 + $0x54] sm:$0xf]
  %v46 = vld [vmem:[%s0 + $0x58] sm:$0xf]
  %v47 = vld [vmem:[%s0 + $0x5c] sm:$0xf]
  %v48 = vld [vmem:[%s0 + $0x60] sm:$0xf]
  %v49 = vld [vmem:[%s0 + $0x64] sm:$0xf]
  %v50 = vld [vmem:[%s0 + $0x68] sm:$0xf]
  %v51 = vld [vmem:[%s0 + $0x6c] sm:$0xf]
  %v52 = vld [vmem:[%s0 + $0x70] sm:$0xf]
  %v53 = vld [vmem:[%s0 + $0x74] sm:$0xf]
  %v54 = vld [vmem:[%s0 + $0x78] sm:$0xf]
  %v55 = vld [vmem:[%s0 + $0x7c] sm:$0xf]
  %v56 = vld [vmem:[%s0 + $0x80] sm:$0xf]
  %v57 = vld [vmem:[%s0 + $0x84] sm:$0xf]
  %v58 = vld [vmem:[%s0 + $0x88] sm:$0xf]
  %v59 = vld [vmem:[%s0 + $0x8c] sm:$0xf]
  %v60 = vld [vmem:[%s0 + $0x90] sm:$0xf]
  %v61 = vld [vmem:[%s0 + $0x94] sm:$0xf]
  %v62 = vld [vmem:[%s0 + $0x98] sm:$0xf]
  %v63 = vld [vmem:[%s0 + $0x9c] sm:$0xf]
  %v64 = vld [vmem:[%s0 + $0xa0] sm:$0xf]
  %v65 = vld [vmem:[%s0 + $0xa4] sm:$0xf]
  %v66 = vld [vmem:[%s0 + $0xa8] sm:$0xf]
  %v67 = vld [vmem:[%s0 + $0xac] sm:$0xf]
  %v68 = vld [vmem:[%s0 + $0xb0] sm:$0xf]
  %v69 = vld [vmem:[%s0 + $0xb4] sm:$0xf]
  %v70 = vld [vmem:[%s0 + $0xb8] sm:$0xf]
  %v71 = vld [vmem:[%s0 + $0xbc] sm:$0xf]
  %v72 = vld [vmem:[%s0 + $0xc0] sm:$0xf]
  %v73 = vld [vmem:[%s0 + $0xc4] sm:$0xf]
  %v74 = vld [vmem:[%s0 + $0xc8] sm:$0xf]
  %v75 = vld [vmem:[%s0 + $0xcc] sm:$0xf]
  %v76 = vld [vmem:[%s0 + $0xd0] sm:$0xf]
  %v77 = vld [vmem:[%s0 + $0xd4] sm:$0xf]
  %v78 = vld [vmem:[%s0 + $0xd8] sm:$0xf]
  %v79 = vld [vmem:[%s0 + $0xdc] sm:$0xf]
  %v80 = vld [vmem:[%s0 + $0xe0] sm:$0xf]
  %v81 = vld [vmem:[%s0 + $0xe4] sm:$0xf]
  %v82 = vld [vmem:[%s0 + $0xe8] sm:$0xf]
  %v83 = vld [vmem:[%s0 + $0xec] sm:$0xf]
  %v84 = vld [vmem:[%s0 + $0xf0] sm:$0xf]
  %v85 = vld [vmem:[%s0 + $0xf4] sm:$0xf]
  %v86 = vld [vmem:[%s0 + $0xf8] sm:$0xf]
  %v87 = vld [vmem:[%s0 + $0xfc] sm:$0xf]
  %v88 = vunpack.c.l.bf16 %v24
  %v89 = vunpack.c.l.bf16 %v25
  %v90 = vunpack.c.l.bf16 %v26
  %v91 = vunpack.c.l.bf16 %v27
  %v92 = vunpack.c.l.bf16 %v28
  %v93 = vunpack.c.l.bf16 %v29
  %v94 = vunpack.c.l.bf16 %v30
  %v95 = vunpack.c.l.bf16 %v31
  %v96 = vunpack.c.l.bf16 %v32
  %v97 = vunpack.c.l.bf16 %v33
  %v98 = vunpack.c.l.bf16 %v34
  %v99 = vunpack.c.l.bf16 %v35
  %v100 = vunpack.c.l.bf16 %v36
  %v101 = vunpack.c.l.bf16 %v37
  %v102 = vunpack.c.l.bf16 %v38
  %v103 = vunpack.c.l.bf16 %v39
  %v104 = vunpack.c.l.bf16 %v40
  %v105 = vunpack.c.l.bf16 %v41
  %v106 = vunpack.c.l.bf16 %v42
  %v107 = vunpack.c.l.bf16 %v43
  %v108 = vunpack.c.l.bf16 %v44
  %v109 = vunpack.c.l.bf16 %v45
  %v110 = vunpack.c.l.bf16 %v46
  %v111 = vunpack.c.l.bf16 %v47
  %v112 = vunpack.c.l.bf16 %v48
  %v113 = vunpack.c.l.bf16 %v49
  %v114 = vunpack.c.l.bf16 %v50
  %v115 = vunpack.c.l.bf16 %v51
  %v116 = vunpack.c.l.bf16 %v52
  %v117 = vunpack.c.l.bf16 %v53
  %v118 = vunpack.c.l.bf16 %v54
  %v119 = vunpack.c.l.bf16 %v55
  %v120 = vunpack.c.l.bf16 %v56
  %v121 = vunpack.c.l.bf16 %v57
  %v122 = vunpack.c.l.bf16 %v58
  %v123 = vunpack.c.l.bf16 %v59
  %v124 = vunpack.c.l.bf16 %v60
  %v125 = vunpack.c.l.bf16 %v61
  %v126 = vunpack.c.l.bf16 %v62
  %v127 = vunpack.c.l.bf16 %v63
  %v128 = vunpack.c.l.bf16 %v64
  %v129 = vunpack.c.l.bf16 %v65
  %v130 = vunpack.c.l.bf16 %v66
  %v131 = vunpack.c.l.bf16 %v67
  %v132 = vunpack.c.l.bf16 %v68
  %v133 = vunpack.c.l.bf16 %v69
  %v134 = vunpack.c.l.bf16 %v70
  %v135 = vunpack.c.l.bf16 %v71
  %v136 = vunpack.c.l.bf16 %v72
  %v137 = vunpack.c.l.bf16 %v73
  %v138 = vunpack.c.l.bf16 %v74
  %v139 = vunpack.c.l.bf16 %v75
  %v140 = vunpack.c.l.bf16 %v76
  %v141 = vunpack.c.l.bf16 %v77
  %v142 = vunpack.c.l.bf16 %v78
  %v143 = vunpack.c.l.bf16 %v79
  %v144 = vunpack.c.l.bf16 %v80
  %v145 = vunpack.c.l.bf16 %v81
  %v146 = vunpack.c.l.bf16 %v82
  %v147 = vunpack.c.l.bf16 %v83
  %v148 = vunpack.c.l.bf16 %v84
  %v149 = vunpack.c.l.bf16 %v85
  %v150 = vunpack.c.l.bf16 %v86
  %v151 = vunpack.c.l.bf16 %v87
  %v152 = vld [vmem:[%s1] sm:$0x1]
  %v154 = vlaneseq
  %v155 = vshrl.u32 %v154, 7
  %v156 = vsub.s32 0, %v155
  %v157 = vrot.slane %v152, %v156
  %v159 = vmul.f32 %v88, %v157
  %v160 = vmul.f32 %v89, %v157
  %v161 = vmul.f32 %v90, %v157
  %v162 = vmul.f32 %v91, %v157
  %v163 = vmul.f32 %v92, %v157
  %v164 = vmul.f32 %v93, %v157
  %v165 = vmul.f32 %v94, %v157
  %v166 = vmul.f32 %v95, %v157
  %v167 = vmul.f32 %v96, %v157
  %v168 = vmul.f32 %v97, %v157
  %v169 = vmul.f32 %v98, %v157
  %v170 = vmul.f32 %v99, %v157
  %v171 = vmul.f32 %v100, %v157
  %v172 = vmul.f32 %v101, %v157
  %v173 = vmul.f32 %v102, %v157
  %v174 = vmul.f32 %v103, %v157
  %v175 = vmul.f32 %v104, %v157
  %v176 = vmul.f32 %v105, %v157
  %v177 = vmul.f32 %v106, %v157
  %v178 = vmul.f32 %v107, %v157
  %v179 = vmul.f32 %v108, %v157
  %v180 = vmul.f32 %v109, %v157
  %v181 = vmul.f32 %v110, %v157
  %v182 = vmul.f32 %v111, %v157
  %v183 = vmul.f32 %v112, %v157
  %v184 = vmul.f32 %v113, %v157
  %v185 = vmul.f32 %v114, %v157
  %v186 = vmul.f32 %v115, %v157
  %v187 = vmul.f32 %v116, %v157
  %v188 = vmul.f32 %v117, %v157
  %v189 = vmul.f32 %v118, %v157
  %v190 = vmul.f32 %v119, %v157
  %v191 = vmul.f32 %v120, %v157
  %v192 = vmul.f32 %v121, %v157
  %v193 = vmul.f32 %v122, %v157
  %v194 = vmul.f32 %v123, %v157
  %v195 = vmul.f32 %v124, %v157
  %v196 = vmul.f32 %v125, %v157
  %v197 = vmul.f32 %v126, %v157
  %v198 = vmul.f32 %v127, %v157
  %v199 = vmul.f32 %v128, %v157
  %v200 = vmul.f32 %v129, %v157
  %v201 = vmul.f32 %v130, %v157
  %v202 = vmul.f32 %v131, %v157
  %v203 = vmul.f32 %v132, %v157
  %v204 = vmul.f32 %v133, %v157
  %v205 = vmul.f32 %v134, %v157
  %v206 = vmul.f32 %v135, %v157
  %v207 = vmul.f32 %v136, %v157
  %v208 = vmul.f32 %v137, %v157
  %v209 = vmul.f32 %v138, %v157
  %v210 = vmul.f32 %v139, %v157
  %v211 = vmul.f32 %v140, %v157
  %v212 = vmul.f32 %v141, %v157
  %v213 = vmul.f32 %v142, %v157
  %v214 = vmul.f32 %v143, %v157
  %v215 = vmul.f32 %v144, %v157
  %v216 = vmul.f32 %v145, %v157
  %v217 = vmul.f32 %v146, %v157
  %v218 = vmul.f32 %v147, %v157
  %v219 = vmul.f32 %v148, %v157
  %v220 = vmul.f32 %v149, %v157
  %v221 = vmul.f32 %v150, %v157
  %v222 = vmul.f32 %v151, %v157
  %v223 = vld [vmem:[%s2] sm:$0x1]
  %v225 = vlaneseq
  %v226 = vshrl.u32 %v225, 7
  %v227 = vsub.s32 0, %v226
  %v228 = vrot.slane %v223, %v227
  %v230 = vadd.f32 %v159, %v228
  %v231 = vadd.f32 %v160, %v228
  %v232 = vadd.f32 %v161, %v228
  %v233 = vadd.f32 %v162, %v228
  %v234 = vadd.f32 %v163, %v228
  %v235 = vadd.f32 %v164, %v228
  %v236 = vadd.f32 %v165, %v228
  %v237 = vadd.f32 %v166, %v228
  %v238 = vadd.f32 %v167, %v228
  %v239 = vadd.f32 %v168, %v228
  %v240 = vadd.f32 %v169, %v228
  %v241 = vadd.f32 %v170, %v228
  %v242 = vadd.f32 %v171, %v228
  %v243 = vadd.f32 %v172, %v228
  %v244 = vadd.f32 %v173, %v228
  %v245 = vadd.f32 %v174, %v228
  %v246 = vadd.f32 %v175, %v228
  %v247 = vadd.f32 %v176, %v228
  %v248 = vadd.f32 %v177, %v228
  %v249 = vadd.f32 %v178, %v228
  %v250 = vadd.f32 %v179, %v228
  %v251 = vadd.f32 %v180, %v228
  %v252 = vadd.f32 %v181, %v228
  %v253 = vadd.f32 %v182, %v228
  %v254 = vadd.f32 %v183, %v228
  %v255 = vadd.f32 %v184, %v228
  %v256 = vadd.f32 %v185, %v228
  %v257 = vadd.f32 %v186, %v228
  %v258 = vadd.f32 %v187, %v228
  %v259 = vadd.f32 %v188, %v228
  %v260 = vadd.f32 %v189, %v228
  %v261 = vadd.f32 %v190, %v228
  %v262 = vadd.f32 %v191, %v228
  %v263 = vadd.f32 %v192, %v228
  %v264 = vadd.f32 %v193, %v228
  %v265 = vadd.f32 %v194, %v228
  %v266 = vadd.f32 %v195, %v228
  %v267 = vadd.f32 %v196, %v228
  %v268 = vadd.f32 %v197, %v228
  %v269 = vadd.f32 %v198, %v228
  %v270 = vadd.f32 %v199, %v228
  %v271 = vadd.f32 %v200, %v228
  %v272 = vadd.f32 %v201, %v228
  %v273 = vadd.f32 %v202, %v228
  %v274 = vadd.f32 %v203, %v228
  %v275 = vadd.f32 %v204, %v228
  %v276 = vadd.f32 %v205, %v228
  %v277 = vadd.f32 %v206, %v228
  %v278 = vadd.f32 %v207, %v228
  %v279 = vadd.f32 %v208, %v228
  %v280 = vadd.f32 %v209, %v228
  %v281 = vadd.f32 %v210, %v228
  %v282 = vadd.f32 %v211, %v228
  %v283 = vadd.f32 %v212, %v228
  %v284 = vadd.f32 %v213, %v228
  %v285 = vadd.f32 %v214, %v228
  %v286 = vadd.f32 %v215, %v228
  %v287 = vadd.f32 %v216, %v228
  %v288 = vadd.f32 %v217, %v228
  %v289 = vadd.f32 %v218, %v228
  %v290 = vadd.f32 %v219, %v228
  %v291 = vadd.f32 %v220, %v228
  %v292 = vadd.f32 %v221, %v228
  %v293 = vadd.f32 %v222, %v228
  %v294 = vmax.f32 %v230, 0.0
  %v295 = vmax.f32 %v231, 0.0
  %v296 = vmax.f32 %v232, 0.0
  %v297 = vmax.f32 %v233, 0.0
  %v298 = vmax.f32 %v234, 0.0
  %v299 = vmax.f32 %v235, 0.0
  %v300 = vmax.f32 %v236, 0.0
  %v301 = vmax.f32 %v237, 0.0
  %v302 = vmax.f32 %v238, 0.0
  %v303 = vmax.f32 %v239, 0.0
  %v304 = vmax.f32 %v240, 0.0
  %v305 = vmax.f32 %v241, 0.0
  %v306 = vmax.f32 %v242, 0.0
  %v307 = vmax.f32 %v243, 0.0
  %v308 = vmax.f32 %v244, 0.0
  %v309 = vmax.f32 %v245, 0.0
  %v310 = vmax.f32 %v246, 0.0
  %v311 = vmax.f32 %v247, 0.0
  %v312 = vmax.f32 %v248, 0.0
  %v313 = vmax.f32 %v249, 0.0
  %v314 = vmax.f32 %v250, 0.0
  %v315 = vmax.f32 %v251, 0.0
  %v316 = vmax.f32 %v252, 0.0
  %v317 = vmax.f32 %v253, 0.0
  %v318 = vmax.f32 %v254, 0.0
  %v319 = vmax.f32 %v255, 0.0
  %v320 = vmax.f32 %v256, 0.0
  %v321 = vmax.f32 %v257, 0.0
  %v322 = vmax.f32 %v258, 0.0
  %v323 = vmax.f32 %v259, 0.0
  %v324 = vmax.f32 %v260, 0.0
  %v325 = vmax.f32 %v261, 0.0
  %v326 = vmax.f32 %v262, 0.0
  %v327 = vmax.f32 %v263, 0.0
  %v328 = vmax.f32 %v264, 0.0
  %v329 = vmax.f32 %v265, 0.0
  %v330 = vmax.f32 %v266, 0.0
  %v331 = vmax.f32 %v267, 0.0
  %v332 = vmax.f32 %v268, 0.0
  %v333 = vmax.f32 %v269, 0.0
  %v334 = vmax.f32 %v270, 0.0
  %v335 = vmax.f32 %v271, 0.0
  %v336 = vmax.f32 %v272, 0.0
  %v337 = vmax.f32 %v273, 0.0
  %v338 = vmax.f32 %v274, 0.0
  %v339 = vmax.f32 %v275, 0.0
  %v340 = vmax.f32 %v276, 0.0
  %v341 = vmax.f32 %v277, 0.0
  %v342 = vmax.f32 %v278, 0.0
  %v343 = vmax.f32 %v279, 0.0
  %v344 = vmax.f32 %v280, 0.0
  %v345 = vmax.f32 %v281, 0.0
  %v346 = vmax.f32 %v282, 0.0
  %v347 = vmax.f32 %v283, 0.0
  %v348 = vmax.f32 %v284, 0.0
  %v349 = vmax.f32 %v285, 0.0
  %v350 = vmax.f32 %v286, 0.0
  %v351 = vmax.f32 %v287, 0.0
  %v352 = vmax.f32 %v288, 0.0
  %v353 = vmax.f32 %v289, 0.0
  %v354 = vmax.f32 %v290, 0.0
  %v355 = vmax.f32 %v291, 0.0
  %v356 = vmax.f32 %v292, 0.0
  %v357 = vmax.f32 %v293, 0.0
  %v358 = vpack.c.bf16 %v295, %v294
  %v359 = vpack.c.bf16 %v297, %v296
  %v360 = vpack.c.bf16 %v299, %v298
  %v361 = vpack.c.bf16 %v301, %v300
  %v362 = vpack.c.bf16 %v303, %v302
  %v363 = vpack.c.bf16 %v305, %v304
  %v364 = vpack.c.bf16 %v307, %v306
  %v365 = vpack.c.bf16 %v309, %v308
  %v366 = vpack.c.bf16 %v311, %v310
  %v367 = vpack.c.bf16 %v313, %v312
  %v368 = vpack.c.bf16 %v315, %v314
  %v369 = vpack.c.bf16 %v317, %v316
  %v370 = vpack.c.bf16 %v319, %v318
  %v371 = vpack.c.bf16 %v321, %v320
  %v372 = vpack.c.bf16 %v323, %v322
  %v373 = vpack.c.bf16 %v325, %v324
  %v374 = vpack.c.bf16 %v327, %v326
  %v375 = vpack.c.bf16 %v329, %v328
  %v376 = vpack.c.bf16 %v331, %v330
  %v377 = vpack.c.bf16 %v333, %v332
  %v378 = vpack.c.bf16 %v335, %v334
  %v379 = vpack.c.bf16 %v337, %v336
  %v380 = vpack.c.bf16 %v339, %v338
  %v381 = vpack.c.bf16 %v341, %v340
  %v382 = vpack.c.bf16 %v343, %v342
  %v383 = vpack.c.bf16 %v345, %v344
  %v384 = vpack.c.bf16 %v347, %v346
  %v385 = vpack.c.bf16 %v349, %v348
  %v386 = vpack.c.bf16 %v351, %v350
  %v387 = vpack.c.bf16 %v353, %v352
  %v388 = vpack.c.bf16 %v355, %v354
  %v389 = vpack.c.bf16 %v357, %v356
  %v390 = vld [vmem:[%s3] sm:$0xf]
  %v391 = vld [vmem:[%s3 + $0x4] sm:$0xf]
  %v392 = vld [vmem:[%s3 + $0x8] sm:$0xf]
  %v393 = vld [vmem:[%s3 + $0xc] sm:$0xf]
  %v394 = vld [vmem:[%s3 + $0x10] sm:$0xf]
  %v395 = vld [vmem:[%s3 + $0x14] sm:$0xf]
  %v396 = vld [vmem:[%s3 + $0x18] sm:$0xf]
  %v397 = vld [vmem:[%s3 + $0x1c] sm:$0xf]
  %v398 = vld [vmem:[%s3 + $0x20] sm:$0xf]
  %v399 = vld [vmem:[%s3 + $0x24] sm:$0xf]
  %v400 = vld [vmem:[%s3 + $0x28] sm:$0xf]
  %v401 = vld [vmem:[%s3 + $0x2c] sm:$0xf]
  %v402 = vld [vmem:[%s3 + $0x30] sm:$0xf]
  %v403 = vld [vmem:[%s3 + $0x34] sm:$0xf]
  %v404 = vld [vmem:[%s3 + $0x38] sm:$0xf]
  %v405 = vld [vmem:[%s3 + $0x3c] sm:$0xf]
  %v422 = vunpack.c.l.b16 %v390
  %v423 = vunpack.c.l.b16 %v391
  %v424 = vunpack.c.l.b16 %v392
  %v425 = vunpack.c.l.b16 %v393
  %v426 = vunpack.c.l.b16 %v394
  %v427 = vunpack.c.l.b16 %v395
  %v428 = vunpack.c.l.b16 %v396
  %v429 = vunpack.c.l.b16 %v397
  %v430 = vunpack.c.l.b16 %v398
  %v431 = vunpack.c.l.b16 %v399
  %v432 = vunpack.c.l.b16 %v400
  %v433 = vunpack.c.l.b16 %v401
  %v434 = vunpack.c.l.b16 %v402
  %v435 = vunpack.c.l.b16 %v403
  %v436 = vunpack.c.l.b16 %v404
  %v437 = vunpack.c.l.b16 %v405
  %v438 = vpack.c.b16 %v423, %v422
  %v439 = vpack.c.b16 %v425, %v424
  %v440 = vpack.c.b16 %v427, %v426
  %v441 = vpack.c.b16 %v429, %v428
  %v442 = vpack.c.b16 %v431, %v430
  %v443 = vpack.c.b16 %v433, %v432
  %v444 = vpack.c.b16 %v435, %v434
  %v445 = vpack.c.b16 %v437, %v436
  %454 = vmatprep.subr.bf16.mxu0 0
  %455 = vmatpush1.bf16.msra.mxu0 %v438
  %456 = vmatprep.subr.bf16.mxu0 0
  %457 = vmatpush1.bf16.msra.mxu0 %v439
  %458 = vmatprep.subr.bf16.mxu0 0
  %459 = vmatpush1.bf16.msra.mxu0 %v440
  %460 = vmatprep.subr.bf16.mxu0 0
  %461 = vmatpush1.bf16.msra.mxu0 %v441
  %462 = vmatprep.subr.bf16.mxu0 0
  %463 = vmatpush1.bf16.msra.mxu0 %v442
  %464 = vmatprep.subr.bf16.mxu0 0
  %465 = vmatpush1.bf16.msra.mxu0 %v443
  %466 = vmatprep.subr.bf16.mxu0 0
  %467 = vmatpush1.bf16.msra.mxu0 %v444
  %468 = vmatprep.subr.bf16.mxu0 0
  %469 = vmatpush1.bf16.msra.mxu0 %v445
  %470 = vmatprep.subr.bf16.mxu0 0
  %471 = vmatpush1.bf16.msra.mxu0 0
  %472 = vmatprep.subr.bf16.mxu0 0
  %473 = vmatpush1.bf16.msra.mxu0 0
  %474 = vmatprep.subr.bf16.mxu0 0
  %475 = vmatpush1.bf16.msra.mxu0 0
  %476 = vmatprep.subr.bf16.mxu0 0
  %477 = vmatpush1.bf16.msra.mxu0 0
  %478 = vmatprep.subr.bf16.mxu0 0
  %479 = vmatpush1.bf16.msra.mxu0 0
  %480 = vmatprep.subr.bf16.mxu0 0
  %481 = vmatpush1.bf16.msra.mxu0 0
  %482 = vmatprep.subr.bf16.mxu0 0
  %483 = vmatpush1.bf16.msra.mxu0 0
  %484 = vmatprep.subr.bf16.mxu0 0
  %485 = vmatpush1.bf16.msra.mxu0 0
  %486 = vmatprep.mubr.bf16.mxu0 0
  %487 = vmatmul.mubr.bf16.gmra.mrb[0].mxu0 %v358
  %v488 = vpop.f32.mrb[0].mxu0
  %v489 = vadd.f32 0.0, %v488
  %v490 = vpop.f32.mrb[0].mxu0
  %v491 = vpop.f32.mrb[0].mxu0
  %v492 = vadd.f32 0.0, %v491
  %v493 = vpop.f32.mrb[0].mxu0
  %494 = vmatprep.mubr.bf16.mxu0 0
  %495 = vmatmul.mubr.bf16.gmra.mrb[0].mxu0 %v359
  %v496 = vpop.f32.mrb[0].mxu0
  %v497 = vadd.f32 0.0, %v496
  %v498 = vpop.f32.mrb[0].mxu0
  %v499 = vpop.f32.mrb[0].mxu0
  %v500 = vadd.f32 0.0, %v499
  %v501 = vpop.f32.mrb[0].mxu0
  %502 = vmatprep.mubr.bf16.mxu0 0
  %503 = vmatmul.mubr.bf16.gmra.mrb[0].mxu0 %v360
  %v504 = vpop.f32.mrb[0].mxu0
  %v505 = vadd.f32 0.0, %v504
  %v506 = vpop.f32.mrb[0].mxu0
  %v507 = vpop.f32.mrb[0].mxu0
  %v508 = vadd.f32 0.0, %v507
  %v509 = vpop.f32.mrb[0].mxu0
  %510 = vmatprep.mubr.bf16.mxu0 0
  %511 = vmatmul.mubr.bf16.gmra.mrb[0].mxu0 %v361
  %v512 = vpop.f32.mrb[0].mxu0
  %v513 = vadd.f32 0.0, %v512
  %v514 = vpop.f32.mrb[0].mxu0
  %v515 = vpop.f32.mrb[0].mxu0
  %v516 = vadd.f32 0.0, %v515
  %v517 = vpop.f32.mrb[0].mxu0
  %518 = vmatprep.mubr.bf16.mxu0 0
  %519 = vmatmul.mubr.bf16.gmra.mrb[0].mxu0 %v362
  %v520 = vpop.f32.mrb[0].mxu0
  %v521 = vadd.f32 0.0, %v520
  %v522 = vpop.f32.mrb[0].mxu0
  %v523 = vpop.f32.mrb[0].mxu0
  %v524 = vadd.f32 0.0, %v523
  %v525 = vpop.f32.mrb[0].mxu0
  %526 = vmatprep.mubr.bf16.mxu0 0
  %527 = vmatmul.mubr.bf16.gmra.mrb[0].mxu0 %v363
  %v528 = vpop.f32.mrb[0].mxu0
  %v529 = vadd.f32 0.0, %v528
  %v530 = vpop.f32.mrb[0].mxu0
  %v531 = vpop.f32.mrb[0].mxu0
  %v532 = vadd.f32 0.0, %v531
  %v533 = vpop.f32.mrb[0].mxu0
  %534 = vmatprep.mubr.bf16.mxu0 0
  %535 = vmatmul.mubr.bf16.gmra.mrb[0].mxu0 %v364
  %v536 = vpop.f32.mrb[0].mxu0
  %v537 = vadd.f32 0.0, %v536
  %v538 = vpop.f32.mrb[0].mxu0
  %v539 = vpop.f32.mrb[0].mxu0
  %v540 = vadd.f32 0.0, %v539
  %v541 = vpop.f32.mrb[0].mxu0
  %542 = vmatprep.mubr.bf16.mxu0 0
  %543 = vmatmul.mubr.bf16.gmra.mrb[0].mxu0 %v365
  %v544 = vpop.f32.mrb[0].mxu0
  %v545 = vadd.f32 0.0, %v544
  %v546 = vpop.f32.mrb[0].mxu0
  %v547 = vpop.f32.mrb[0].mxu0
  %v548 = vadd.f32 0.0, %v547
  %v549 = vpop.f32.mrb[0].mxu0
  %550 = vmatprep.mubr.bf16.mxu0 0
  %551 = vmatmul.mubr.bf16.gmra.mrb[0].mxu0 %v366
  %v552 = vpop.f32.mrb[0].mxu0
  %v553 = vadd.f32 0.0, %v552
  %v554 = vpop.f32.mrb[0].mxu0
  %v555 = vpop.f32.mrb[0].mxu0
  %v556 = vadd.f32 0.0, %v555
  %v557 = vpop.f32.mrb[0].mxu0
  %558 = vmatprep.mubr.bf16.mxu0 0
  %559 = vmatmul.mubr.bf16.gmra.mrb[0].mxu0 %v367
  %v560 = vpop.f32.mrb[0].mxu0
  %v561 = vadd.f32 0.0, %v560
  %v562 = vpop.f32.mrb[0].mxu0
  %v563 = vpop.f32.mrb[0].mxu0
  %v564 = vadd.f32 0.0, %v563
  %v565 = vpop.f32.mrb[0].mxu0
  %566 = vmatprep.mubr.bf16.mxu0 0
  %567 = vmatmul.mubr.bf16.gmra.mrb[0].mxu0 %v368
  %v568 = vpop.f32.mrb[0].mxu0
  %v569 = vadd.f32 0.0, %v568
  %v570 = vpop.f32.mrb[0].mxu0
  %v571 = vpop.f32.mrb[0].mxu0
  %v572 = vadd.f32 0.0, %v571
  %v573 = vpop.f32.mrb[0].mxu0
  %574 = vmatprep.mubr.bf16.mxu0 0
  %575 = vmatmul.mubr.bf16.gmra.mrb[0].mxu0 %v369
  %v576 = vpop.f32.mrb[0].mxu0
  %v577 = vadd.f32 0.0, %v576
  %v578 = vpop.f32.mrb[0].mxu0
  %v579 = vpop.f32.mrb[0].mxu0
  %v580 = vadd.f32 0.0, %v579
  %v581 = vpop.f32.mrb[0].mxu0
  %582 = vmatprep.mubr.bf16.mxu0 0
  %583 = vmatmul.mubr.bf16.gmra.mrb[0].mxu0 %v370
  %v584 = vpop.f32.mrb[0].mxu0
  %v585 = vadd.f32 0.0, %v584
  %v586 = vpop.f32.mrb[0].mxu0
  %v587 = vpop.f32.mrb[0].mxu0
  %v588 = vadd.f32 0.0, %v587
  %v589 = vpop.f32.mrb[0].mxu0
  %590 = vmatprep.mubr.bf16.mxu0 0
  %591 = vmatmul.mubr.bf16.gmra.mrb[0].mxu0 %v371
  %v592 = vpop.f32.mrb[0].mxu0
  %v593 = vadd.f32 0.0, %v592
  %v594 = vpop.f32.mrb[0].mxu0
  %v595 = vpop.f32.mrb[0].mxu0
  %v596 = vadd.f32 0.0, %v595
  %v597 = vpop.f32.mrb[0].mxu0
  %598 = vmatprep.mubr.bf16.mxu0 0
  %599 = vmatmul.mubr.bf16.gmra.mrb[0].mxu0 %v372
  %v600 = vpop.f32.mrb[0].mxu0
  %v601 = vadd.f32 0.0, %v600
  %v602 = vpop.f32.mrb[0].mxu0
  %v603 = vpop.f32.mrb[0].mxu0
  %v604 = vadd.f32 0.0, %v603
  %v605 = vpop.f32.mrb[0].mxu0
  %606 = vmatprep.mubr.bf16.mxu0 0
  %607 = vmatmul.mubr.bf16.gmra.mrb[0].mxu0 %v373
  %v608 = vpop.f32.mrb[0].mxu0
  %v609 = vadd.f32 0.0, %v608
  %v610 = vpop.f32.mrb[0].mxu0
  %v611 = vpop.f32.mrb[0].mxu0
  %v612 = vadd.f32 0.0, %v611
  %v613 = vpop.f32.mrb[0].mxu0
  %614 = vmatprep.mubr.bf16.mxu0 0
  %615 = vmatmul.mubr.bf16.gmra.mrb[0].mxu0 %v374
  %v616 = vpop.f32.mrb[0].mxu0
  %v617 = vadd.f32 0.0, %v616
  %v618 = vpop.f32.mrb[0].mxu0
  %v619 = vpop.f32.mrb[0].mxu0
  %v620 = vadd.f32 0.0, %v619
  %v621 = vpop.f32.mrb[0].mxu0
  %622 = vmatprep.mubr.bf16.mxu0 0
  %623 = vmatmul.mubr.bf16.gmra.mrb[0].mxu0 %v375
  %v624 = vpop.f32.mrb[0].mxu0
  %v625 = vadd.f32 0.0, %v624
  %v626 = vpop.f32.mrb[0].mxu0
  %v627 = vpop.f32.mrb[0].mxu0
  %v628 = vadd.f32 0.0, %v627
  %v629 = vpop.f32.mrb[0].mxu0
  %630 = vmatprep.mubr.bf16.mxu0 0
  %631 = vmatmul.mubr.bf16.gmra.mrb[0].mxu0 %v376
  %v632 = vpop.f32.mrb[0].mxu0
  %v633 = vadd.f32 0.0, %v632
  %v634 = vpop.f32.mrb[0].mxu0
  %v635 = vpop.f32.mrb[0].mxu0
  %v636 = vadd.f32 0.0, %v635
  %v637 = vpop.f32.mrb[0].mxu0
  %638 = vmatprep.mubr.bf16.mxu0 0
  %639 = vmatmul.mubr.bf16.gmra.mrb[0].mxu0 %v377
  %v640 = vpop.f32.mrb[0].mxu0
  %v641 = vadd.f32 0.0, %v640
  %v642 = vpop.f32.mrb[0].mxu0
  %v643 = vpop.f32.mrb[0].mxu0
  %v644 = vadd.f32 0.0, %v643
  %v645 = vpop.f32.mrb[0].mxu0
  %646 = vmatprep.mubr.bf16.mxu0 0
  %647 = vmatmul.mubr.bf16.gmra.mrb[0].mxu0 %v378
  %v648 = vpop.f32.mrb[0].mxu0
  %v649 = vadd.f32 0.0, %v648
  %v650 = vpop.f32.mrb[0].mxu0
  %v651 = vpop.f32.mrb[0].mxu0
  %v652 = vadd.f32 0.0, %v651
  %v653 = vpop.f32.mrb[0].mxu0
  %654 = vmatprep.mubr.bf16.mxu0 0
  %655 = vmatmul.mubr.bf16.gmra.mrb[0].mxu0 %v379
  %v656 = vpop.f32.mrb[0].mxu0
  %v657 = vadd.f32 0.0, %v656
  %v658 = vpop.f32.mrb[0].mxu0
  %v659 = vpop.f32.mrb[0].mxu0
  %v660 = vadd.f32 0.0, %v659
  %v661 = vpop.f32.mrb[0].mxu0
  %662 = vmatprep.mubr.bf16.mxu0 0
  %663 = vmatmul.mubr.bf16.gmra.mrb[0].mxu0 %v380
  %v664 = vpop.f32.mrb[0].mxu0
  %v665 = vadd.f32 0.0, %v664
  %v666 = vpop.f32.mrb[0].mxu0
  %v667 = vpop.f32.mrb[0].mxu0
  %v668 = vadd.f32 0.0, %v667
  %v669 = vpop.f32.mrb[0].mxu0
  %670 = vmatprep.mubr.bf16.mxu0 0
  %671 = vmatmul.mubr.bf16.gmra.mrb[0].mxu0 %v381
  %v672 = vpop.f32.mrb[0].mxu0
  %v673 = vadd.f32 0.0, %v672
  %v674 = vpop.f32.mrb[0].mxu0
  %v675 = vpop.f32.mrb[0].mxu0
  %v676 = vadd.f32 0.0, %v675
  %v677 = vpop.f32.mrb[0].mxu0
  %678 = vmatprep.mubr.bf16.mxu0 0
  %679 = vmatmul.mubr.bf16.gmra.mrb[0].mxu0 %v382
  %v680 = vpop.f32.mrb[0].mxu0
  %v681 = vadd.f32 0.0, %v680
  %v682 = vpop.f32.mrb[0].mxu0
  %v683 = vpop.f32.mrb[0].mxu0
  %v684 = vadd.f32 0.0, %v683
  %v685 = vpop.f32.mrb[0].mxu0
  %686 = vmatprep.mubr.bf16.mxu0 0
  %687 = vmatmul.mubr.bf16.gmra.mrb[0].mxu0 %v383
  %v688 = vpop.f32.mrb[0].mxu0
  %v689 = vadd.f32 0.0, %v688
  %v690 = vpop.f32.mrb[0].mxu0
  %v691 = vpop.f32.mrb[0].mxu0
  %v692 = vadd.f32 0.0, %v691
  %v693 = vpop.f32.mrb[0].mxu0
  %694 = vmatprep.mubr.bf16.mxu0 0
  %695 = vmatmul.mubr.bf16.gmra.mrb[0].mxu0 %v384
  %v696 = vpop.f32.mrb[0].mxu0
  %v697 = vadd.f32 0.0, %v696
  %v698 = vpop.f32.mrb[0].mxu0
  %v699 = vpop.f32.mrb[0].mxu0
  %v700 = vadd.f32 0.0, %v699
  %v701 = vpop.f32.mrb[0].mxu0
  %702 = vmatprep.mubr.bf16.mxu0 0
  %703 = vmatmul.mubr.bf16.gmra.mrb[0].mxu0 %v385
  %v704 = vpop.f32.mrb[0].mxu0
  %v705 = vadd.f32 0.0, %v704
  %v706 = vpop.f32.mrb[0].mxu0
  %v707 = vpop.f32.mrb[0].mxu0
  %v708 = vadd.f32 0.0, %v707
  %v709 = vpop.f32.mrb[0].mxu0
  %710 = vmatprep.mubr.bf16.mxu0 0
  %711 = vmatmul.mubr.bf16.gmra.mrb[0].mxu0 %v386
  %v712 = vpop.f32.mrb[0].mxu0
  %v713 = vadd.f32 0.0, %v712
  %v714 = vpop.f32.mrb[0].mxu0
  %v715 = vpop.f32.mrb[0].mxu0
  %v716 = vadd.f32 0.0, %v715
  %v717 = vpop.f32.mrb[0].mxu0
  %718 = vmatprep.mubr.bf16.mxu0 0
  %719 = vmatmul.mubr.bf16.gmra.mrb[0].mxu0 %v387
  %v720 = vpop.f32.mrb[0].mxu0
  %v721 = vadd.f32 0.0, %v720
  %v722 = vpop.f32.mrb[0].mxu0
  %v723 = vpop.f32.mrb[0].mxu0
  %v724 = vadd.f32 0.0, %v723
  %v725 = vpop.f32.mrb[0].mxu0
  %726 = vmatprep.mubr.bf16.mxu0 0
  %727 = vmatmul.mubr.bf16.gmra.mrb[0].mxu0 %v388
  %v728 = vpop.f32.mrb[0].mxu0
  %v729 = vadd.f32 0.0, %v728
  %v730 = vpop.f32.mrb[0].mxu0
  %v731 = vpop.f32.mrb[0].mxu0
  %v732 = vadd.f32 0.0, %v731
  %v733 = vpop.f32.mrb[0].mxu0
  %734 = vmatprep.mubr.bf16.mxu0 0
  %735 = vmatmul.mubr.bf16.gmra.mrb[0].mxu0 %v389
  %v736 = vpop.f32.mrb[0].mxu0
  %v737 = vadd.f32 0.0, %v736
  %v738 = vpop.f32.mrb[0].mxu0
  %v739 = vpop.f32.mrb[0].mxu0
  %v740 = vadd.f32 0.0, %v739
  %v741 = vpop.f32.mrb[0].mxu0
  %742 = vdwg.mxu0
  %v743 = vpack.c.bf16 %v492, %v489
  %v744 = vpack.c.bf16 %v500, %v497
  %v745 = vpack.c.bf16 %v508, %v505
  %v746 = vpack.c.bf16 %v516, %v513
  %v747 = vpack.c.bf16 %v524, %v521
  %v748 = vpack.c.bf16 %v532, %v529
  %v749 = vpack.c.bf16 %v540, %v537
  %v750 = vpack.c.bf16 %v548, %v545
  %v751 = vpack.c.bf16 %v556, %v553
  %v752 = vpack.c.bf16 %v564, %v561
  %v753 = vpack.c.bf16 %v572, %v569
  %v754 = vpack.c.bf16 %v580, %v577
  %v755 = vpack.c.bf16 %v588, %v585
  %v756 = vpack.c.bf16 %v596, %v593
  %v757 = vpack.c.bf16 %v604, %v601
  %v758 = vpack.c.bf16 %v612, %v609
  %v759 = vpack.c.bf16 %v620, %v617
  %v760 = vpack.c.bf16 %v628, %v625
  %v761 = vpack.c.bf16 %v636, %v633
  %v762 = vpack.c.bf16 %v644, %v641
  %v763 = vpack.c.bf16 %v652, %v649
  %v764 = vpack.c.bf16 %v660, %v657
  %v765 = vpack.c.bf16 %v668, %v665
  %v766 = vpack.c.bf16 %v676, %v673
  %v767 = vpack.c.bf16 %v684, %v681
  %v768 = vpack.c.bf16 %v692, %v689
  %v769 = vpack.c.bf16 %v700, %v697
  %v770 = vpack.c.bf16 %v708, %v705
  %v771 = vpack.c.bf16 %v716, %v713
  %v772 = vpack.c.bf16 %v724, %v721
  %v773 = vpack.c.bf16 %v732, %v729
  %v774 = vpack.c.bf16 %v740, %v737
  %v807 = vunpack.c.l.b16 %v743
  %v808 = vunpack.c.h.b16 %v743
  %v809 = vunpack.c.l.b16 %v744
  %v810 = vunpack.c.h.b16 %v744
  %v811 = vunpack.c.l.b16 %v745
  %v812 = vunpack.c.h.b16 %v745
  %v813 = vunpack.c.l.b16 %v746
  %v814 = vunpack.c.h.b16 %v746
  %v815 = vunpack.c.l.b16 %v747
  %v816 = vunpack.c.h.b16 %v747
  %v817 = vunpack.c.l.b16 %v748
  %v818 = vunpack.c.h.b16 %v748
  %v819 = vunpack.c.l.b16 %v749
  %v820 = vunpack.c.h.b16 %v749
  %v821 = vunpack.c.l.b16 %v750
  %v822 = vunpack.c.h.b16 %v750
  %v823 = vunpack.c.l.b16 %v751
  %v824 = vunpack.c.h.b16 %v751
  %v825 = vunpack.c.l.b16 %v752
  %v826 = vunpack.c.h.b16 %v752
  %v827 = vunpack.c.l.b16 %v753
  %v828 = vunpack.c.h.b16 %v753
  %v829 = vunpack.c.l.b16 %v754
  %v830 = vunpack.c.h.b16 %v754
  %v831 = vunpack.c.l.b16 %v755
  %v832 = vunpack.c.h.b16 %v755
  %v833 = vunpack.c.l.b16 %v756
  %v834 = vunpack.c.h.b16 %v756
  %v835 = vunpack.c.l.b16 %v757
  %v836 = vunpack.c.h.b16 %v757
  %v837 = vunpack.c.l.b16 %v758
  %v838 = vunpack.c.h.b16 %v758
  %v839 = vunpack.c.l.b16 %v759
  %v840 = vunpack.c.h.b16 %v759
  %v841 = vunpack.c.l.b16 %v760
  %v842 = vunpack.c.h.b16 %v760
  %v843 = vunpack.c.l.b16 %v761
  %v844 = vunpack.c.h.b16 %v761
  %v845 = vunpack.c.l.b16 %v762
  %v846 = vunpack.c.h.b16 %v762
  %v847 = vunpack.c.l.b16 %v763
  %v848 = vunpack.c.h.b16 %v763
  %v849 = vunpack.c.l.b16 %v764
  %v850 = vunpack.c.h.b16 %v764
  %v851 = vunpack.c.l.b16 %v765
  %v852 = vunpack.c.h.b16 %v765
  %v853 = vunpack.c.l.b16 %v766
  %v854 = vunpack.c.h.b16 %v766
  %v855 = vunpack.c.l.b16 %v767
  %v856 = vunpack.c.h.b16 %v767
  %v857 = vunpack.c.l.b16 %v768
  %v858 = vunpack.c.h.b16 %v768
  %v859 = vunpack.c.l.b16 %v769
  %v860 = vunpack.c.h.b16 %v769
  %v861 = vunpack.c.l.b16 %v770
  %v862 = vunpack.c.h.b16 %v770
  %v863 = vunpack.c.l.b16 %v771
  %v864 = vunpack.c.h.b16 %v771
  %v865 = vunpack.c.l.b16 %v772
  %v866 = vunpack.c.h.b16 %v772
  %v867 = vunpack.c.l.b16 %v773
  %v868 = vunpack.c.h.b16 %v773
  %v869 = vunpack.c.l.b16 %v774
  %v870 = vunpack.c.h.b16 %v774
  %v871 = vpack.c.b16 %v807, %v807
  %v872 = vpack.c.b16 %v808, %v808
  %v873 = vpack.c.b16 %v809, %v809
  %v874 = vpack.c.b16 %v810, %v810
  %v875 = vpack.c.b16 %v811, %v811
  %v876 = vpack.c.b16 %v812, %v812
  %v877 = vpack.c.b16 %v813, %v813
  %v878 = vpack.c.b16 %v814, %v814
  %v879 = vpack.c.b16 %v815, %v815
  %v880 = vpack.c.b16 %v816, %v816
  %v881 = vpack.c.b16 %v817, %v817
  %v882 = vpack.c.b16 %v818, %v818
  %v883 = vpack.c.b16 %v819, %v819
  %v884 = vpack.c.b16 %v820, %v820
  %v885 = vpack.c.b16 %v821, %v821
  %v886 = vpack.c.b16 %v822, %v822
  %v887 = vpack.c.b16 %v823, %v823
  %v888 = vpack.c.b16 %v824, %v824
  %v889 = vpack.c.b16 %v825, %v825
  %v890 = vpack.c.b16 %v826, %v826
  %v891 = vpack.c.b16 %v827, %v827
  %v892 = vpack.c.b16 %v828, %v828
  %v893 = vpack.c.b16 %v829, %v829
  %v894 = vpack.c.b16 %v830, %v830
  %v895 = vpack.c.b16 %v831, %v831
  %v896 = vpack.c.b16 %v832, %v832
  %v897 = vpack.c.b16 %v833, %v833
  %v898 = vpack.c.b16 %v834, %v834
  %v899 = vpack.c.b16 %v835, %v835
  %v900 = vpack.c.b16 %v836, %v836
  %v901 = vpack.c.b16 %v837, %v837
  %v902 = vpack.c.b16 %v838, %v838
  %v903 = vpack.c.b16 %v839, %v839
  %v904 = vpack.c.b16 %v840, %v840
  %v905 = vpack.c.b16 %v841, %v841
  %v906 = vpack.c.b16 %v842, %v842
  %v907 = vpack.c.b16 %v843, %v843
  %v908 = vpack.c.b16 %v844, %v844
  %v909 = vpack.c.b16 %v845, %v845
  %v910 = vpack.c.b16 %v846, %v846
  %v911 = vpack.c.b16 %v847, %v847
  %v912 = vpack.c.b16 %v848, %v848
  %v913 = vpack.c.b16 %v849, %v849
  %v914 = vpack.c.b16 %v850, %v850
  %v915 = vpack.c.b16 %v851, %v851
  %v916 = vpack.c.b16 %v852, %v852
  %v917 = vpack.c.b16 %v853, %v853
  %v918 = vpack.c.b16 %v854, %v854
  %v919 = vpack.c.b16 %v855, %v855
  %v920 = vpack.c.b16 %v856, %v856
  %v921 = vpack.c.b16 %v857, %v857
  %v922 = vpack.c.b16 %v858, %v858
  %v923 = vpack.c.b16 %v859, %v859
  %v924 = vpack.c.b16 %v860, %v860
  %v925 = vpack.c.b16 %v861, %v861
  %v926 = vpack.c.b16 %v862, %v862
  %v927 = vpack.c.b16 %v863, %v863
  %v928 = vpack.c.b16 %v864, %v864
  %v929 = vpack.c.b16 %v865, %v865
  %v930 = vpack.c.b16 %v866, %v866
  %v931 = vpack.c.b16 %v867, %v867
  %v932 = vpack.c.b16 %v868, %v868
  %v933 = vpack.c.b16 %v869, %v869
  %v934 = vpack.c.b16 %v870, %v870
  %999 = vst [vmem:[%s5] sm:$0xf] %v871
  %1000 = vst [vmem:[%s5 + $0x4] sm:$0xf] %v872
  %1001 = vst [vmem:[%s5 + $0x8] sm:$0xf] %v873
  %1002 = vst [vmem:[%s5 + $0xc] sm:$0xf] %v874
  %1003 = vst [vmem:[%s5 + $0x10] sm:$0xf] %v875
  %1004 = vst [vmem:[%s5 + $0x14] sm:$0xf] %v876
  %1005 = vst [vmem:[%s5 + $0x18] sm:$0xf] %v877
  %1006 = vst [vmem:[%s5 + $0x1c] sm:$0xf] %v878
  %1007 = vst [vmem:[%s5 + $0x20] sm:$0xf] %v879
  %1008 = vst [vmem:[%s5 + $0x24] sm:$0xf] %v880
  %1009 = vst [vmem:[%s5 + $0x28] sm:$0xf] %v881
  %1010 = vst [vmem:[%s5 + $0x2c] sm:$0xf] %v882
  %1011 = vst [vmem:[%s5 + $0x30] sm:$0xf] %v883
  %1012 = vst [vmem:[%s5 + $0x34] sm:$0xf] %v884
  %1013 = vst [vmem:[%s5 + $0x38] sm:$0xf] %v885
  %1014 = vst [vmem:[%s5 + $0x3c] sm:$0xf] %v886
  %1015 = vst [vmem:[%s5 + $0x40] sm:$0xf] %v887
  %1016 = vst [vmem:[%s5 + $0x44] sm:$0xf] %v888
  %1017 = vst [vmem:[%s5 + $0x48] sm:$0xf] %v889
  %1018 = vst [vmem:[%s5 + $0x4c] sm:$0xf] %v890
  %1019 = vst [vmem:[%s5 + $0x50] sm:$0xf] %v891
  %1020 = vst [vmem:[%s5 + $0x54] sm:$0xf] %v892
  %1021 = vst [vmem:[%s5 + $0x58] sm:$0xf] %v893
  %1022 = vst [vmem:[%s5 + $0x5c] sm:$0xf] %v894
  %1023 = vst [vmem:[%s5 + $0x60] sm:$0xf] %v895
  %1024 = vst [vmem:[%s5 + $0x64] sm:$0xf] %v896
  %1025 = vst [vmem:[%s5 + $0x68] sm:$0xf] %v897
  %1026 = vst [vmem:[%s5 + $0x6c] sm:$0xf] %v898
  %1027 = vst [vmem:[%s5 + $0x70] sm:$0xf] %v899
  %1028 = vst [vmem:[%s5 + $0x74] sm:$0xf] %v900
  %1029 = vst [vmem:[%s5 + $0x78] sm:$0xf] %v901
  %1030 = vst [vmem:[%s5 + $0x7c] sm:$0xf] %v902
  %1031 = vst [vmem:[%s5 + $0x80] sm:$0xf] %v903
  %1032 = vst [vmem:[%s5 + $0x84] sm:$0xf] %v904
  %1033 = vst [vmem:[%s5 + $0x88] sm:$0xf] %v905
  %1034 = vst [vmem:[%s5 + $0x8c] sm:$0xf] %v906
  %1035 = vst [vmem:[%s5 + $0x90] sm:$0xf] %v907
  %1036 = vst [vmem:[%s5 + $0x94] sm:$0xf] %v908
  %1037 = vst [vmem:[%s5 + $0x98] sm:$0xf] %v909
  %1038 = vst [vmem:[%s5 + $0x9c] sm:$0xf] %v910
  %1039 = vst [vmem:[%s5 + $0xa0] sm:$0xf] %v911
  %1040 = vst [vmem:[%s5 + $0xa4] sm:$0xf] %v912
  %1041 = vst [vmem:[%s5 + $0xa8] sm:$0xf] %v913
  %1042 = vst [vmem:[%s5 + $0xac] sm:$0xf] %v914
  %1043 = vst [vmem:[%s5 + $0xb0] sm:$0xf] %v915
  %1044 = vst [vmem:[%s5 + $0xb4] sm:$0xf] %v916
  %1045 = vst [vmem:[%s5 + $0xb8] sm:$0xf] %v917
  %1046 = vst [vmem:[%s5 + $0xbc] sm:$0xf] %v918
  %1047 = vst [vmem:[%s5 + $0xc0] sm:$0xf] %v919
  %1048 = vst [vmem:[%s5 + $0xc4] sm:$0xf] %v920
  %1049 = vst [vmem:[%s5 + $0xc8] sm:$0xf] %v921
  %1050 = vst [vmem:[%s5 + $0xcc] sm:$0xf] %v922
  %1051 = vst [vmem:[%s5 + $0xd0] sm:$0xf] %v923
  %1052 = vst [vmem:[%s5 + $0xd4] sm:$0xf] %v924
  %1053 = vst [vmem:[%s5 + $0xd8] sm:$0xf] %v925
  %1054 = vst [vmem:[%s5 + $0xdc] sm:$0xf] %v926
  %1055 = vst [vmem:[%s5 + $0xe0] sm:$0xf] %v927
  %1056 = vst [vmem:[%s5 + $0xe4] sm:$0xf] %v928
  %1057 = vst [vmem:[%s5 + $0xe8] sm:$0xf] %v929
  %1058 = vst [vmem:[%s5 + $0xec] sm:$0xf] %v930
  %1059 = vst [vmem:[%s5 + $0xf0] sm:$0xf] %v931
  %1060 = vst [vmem:[%s5 + $0xf4] sm:$0xf] %v932
  %1061 = vst [vmem:[%s5 + $0xf8] sm:$0xf] %v933
  %1062 = vst [vmem:[%s5 + $0xfc] sm:$0xf] %v934
  %v1063 = vld [vmem:[%s4] sm:$0xf]
  %v1064 = vld [vmem:[%s4 + $0x4] sm:$0xf]
  %v1065 = vld [vmem:[%s4 + $0x8] sm:$0xf]
  %v1066 = vld [vmem:[%s4 + $0xc] sm:$0xf]
  %v1067 = vld [vmem:[%s4 + $0x10] sm:$0xf]
  %v1068 = vld [vmem:[%s4 + $0x14] sm:$0xf]
  %v1069 = vld [vmem:[%s4 + $0x18] sm:$0xf]
  %v1070 = vld [vmem:[%s4 + $0x1c] sm:$0xf]
  %v1071 = vld [vmem:[%s4 + $0x20] sm:$0xf]
  %v1072 = vld [vmem:[%s4 + $0x24] sm:$0xf]
  %v1073 = vld [vmem:[%s4 + $0x28] sm:$0xf]
  %v1074 = vld [vmem:[%s4 + $0x2c] sm:$0xf]
  %v1075 = vld [vmem:[%s4 + $0x30] sm:$0xf]
  %v1076 = vld [vmem:[%s4 + $0x34] sm:$0xf]
  %v1077 = vld [vmem:[%s4 + $0x38] sm:$0xf]
  %v1078 = vld [vmem:[%s4 + $0x3c] sm:$0xf]
  %v1095 = vunpack.c.l.b16 %v1063
  %v1096 = vunpack.c.l.b16 %v1064
  %v1097 = vunpack.c.l.b16 %v1065
  %v1098 = vunpack.c.l.b16 %v1066
  %v1099 = vunpack.c.l.b16 %v1067
  %v1100 = vunpack.c.l.b16 %v1068
  %v1101 = vunpack.c.l.b16 %v1069
  %v1102 = vunpack.c.l.b16 %v1070
  %v1103 = vunpack.c.l.b16 %v1071
  %v1104 = vunpack.c.l.b16 %v1072
  %v1105 = vunpack.c.l.b16 %v1073
  %v1106 = vunpack.c.l.b16 %v1074
  %v1107 = vunpack.c.l.b16 %v1075
  %v1108 = vunpack.c.l.b16 %v1076
  %v1109 = vunpack.c.l.b16 %v1077
  %v1110 = vunpack.c.l.b16 %v1078
  %v1111 = vpack.c.b16 %v1096, %v1095
  %v1112 = vpack.c.b16 %v1098, %v1097
  %v1113 = vpack.c.b16 %v1100, %v1099
  %v1114 = vpack.c.b16 %v1102, %v1101
  %v1115 = vpack.c.b16 %v1104, %v1103
  %v1116 = vpack.c.b16 %v1106, %v1105
  %v1117 = vpack.c.b16 %v1108, %v1107
  %v1118 = vpack.c.b16 %v1110, %v1109
  %1127 = vmatprep.subr.bf16.mxu0 0
  %1128 = vmatpush1.bf16.msra.mxu0 %v1111
  %1129 = vmatprep.subr.bf16.mxu0 0
  %1130 = vmatpush1.bf16.msra.mxu0 %v1112
  %1131 = vmatprep.subr.bf16.mxu0 0
  %1132 = vmatpush1.bf16.msra.mxu0 %v1113
  %1133 = vmatprep.subr.bf16.mxu0 0
  %1134 = vmatpush1.bf16.msra.mxu0 %v1114
  %1135 = vmatprep.subr.bf16.mxu0 0
  %1136 = vmatpush1.bf16.msra.mxu0 %v1115
  %1137 = vmatprep.subr.bf16.mxu0 0
  %1138 = vmatpush1.bf16.msra.mxu0 %v1116
  %1139 = vmatprep.subr.bf16.mxu0 0
  %1140 = vmatpush1.bf16.msra.mxu0 %v1117
  %1141 = vmatprep.subr.bf16.mxu0 0
  %1142 = vmatpush1.bf16.msra.mxu0 %v1118
  %1143 = vmatprep.subr.bf16.mxu0 0
  %1144 = vmatpush1.bf16.msra.mxu0 0
  %1145 = vmatprep.subr.bf16.mxu0 0
  %1146 = vmatpush1.bf16.msra.mxu0 0
  %1147 = vmatprep.subr.bf16.mxu0 0
  %1148 = vmatpush1.bf16.msra.mxu0 0
  %1149 = vmatprep.subr.bf16.mxu0 0
  %1150 = vmatpush1.bf16.msra.mxu0 0
  %1151 = vmatprep.subr.bf16.mxu0 0
  %1152 = vmatpush1.bf16.msra.mxu0 0
  %1153 = vmatprep.subr.bf16.mxu0 0
  %1154 = vmatpush1.bf16.msra.mxu0 0
  %1155 = vmatprep.subr.bf16.mxu0 0
  %1156 = vmatpush1.bf16.msra.mxu0 0
  %1157 = vmatprep.subr.bf16.mxu0 0
  %1158 = vmatpush1.bf16.msra.mxu0 0
  %1159 = vmatprep.mubr.bf16.mxu0 0
  %1160 = vmatmul.mubr.bf16.gmra.mrb[0].mxu0 %v358
  %v1161 = vpop.f32.mrb[0].mxu0
  %v1162 = vadd.f32 0.0, %v1161
  %v1163 = vpop.f32.mrb[0].mxu0
  %v1164 = vpop.f32.mrb[0].mxu0
  %v1165 = vadd.f32 0.0, %v1164
  %v1166 = vpop.f32.mrb[0].mxu0
  %1167 = vmatprep.mubr.bf16.mxu0 0
  %1168 = vmatmul.mubr.bf16.gmra.mrb[0].mxu0 %v359
  %v1169 = vpop.f32.mrb[0].mxu0
  %v1170 = vadd.f32 0.0, %v1169
  %v1171 = vpop.f32.mrb[0].mxu0
  %v1172 = vpop.f32.mrb[0].mxu0
  %v1173 = vadd.f32 0.0, %v1172
  %v1174 = vpop.f32.mrb[0].mxu0
  %1175 = vmatprep.mubr.bf16.mxu0 0
  %1176 = vmatmul.mubr.bf16.gmra.mrb[0].mxu0 %v360
  %v1177 = vpop.f32.mrb[0].mxu0
  %v1178 = vadd.f32 0.0, %v1177
  %v1179 = vpop.f32.mrb[0].mxu0
  %v1180 = vpop.f32.mrb[0].mxu0
  %v1181 = vadd.f32 0.0, %v1180
  %v1182 = vpop.f32.mrb[0].mxu0
  %1183 = vmatprep.mubr.bf16.mxu0 0
  %1184 = vmatmul.mubr.bf16.gmra.mrb[0].mxu0 %v361
  %v1185 = vpop.f32.mrb[0].mxu0
  %v1186 = vadd.f32 0.0, %v1185
  %v1187 = vpop.f32.mrb[0].mxu0
  %v1188 = vpop.f32.mrb[0].mxu0
  %v1189 = vadd.f32 0.0, %v1188
  %v1190 = vpop.f32.mrb[0].mxu0
  %1191 = vmatprep.mubr.bf16.mxu0 0
  %1192 = vmatmul.mubr.bf16.gmra.mrb[0].mxu0 %v362
  %v1193 = vpop.f32.mrb[0].mxu0
  %v1194 = vadd.f32 0.0, %v1193
  %v1195 = vpop.f32.mrb[0].mxu0
  %v1196 = vpop.f32.mrb[0].mxu0
  %v1197 = vadd.f32 0.0, %v1196
  %v1198 = vpop.f32.mrb[0].mxu0
  %1199 = vmatprep.mubr.bf16.mxu0 0
  %1200 = vmatmul.mubr.bf16.gmra.mrb[0].mxu0 %v363
  %v1201 = vpop.f32.mrb[0].mxu0
  %v1202 = vadd.f32 0.0, %v1201
  %v1203 = vpop.f32.mrb[0].mxu0
  %v1204 = vpop.f32.mrb[0].mxu0
  %v1205 = vadd.f32 0.0, %v1204
  %v1206 = vpop.f32.mrb[0].mxu0
  %1207 = vmatprep.mubr.bf16.mxu0 0
  %1208 = vmatmul.mubr.bf16.gmra.mrb[0].mxu0 %v364
  %v1209 = vpop.f32.mrb[0].mxu0
  %v1210 = vadd.f32 0.0, %v1209
  %v1211 = vpop.f32.mrb[0].mxu0
  %v1212 = vpop.f32.mrb[0].mxu0
  %v1213 = vadd.f32 0.0, %v1212
  %v1214 = vpop.f32.mrb[0].mxu0
  %1215 = vmatprep.mubr.bf16.mxu0 0
  %1216 = vmatmul.mubr.bf16.gmra.mrb[0].mxu0 %v365
  %v1217 = vpop.f32.mrb[0].mxu0
  %v1218 = vadd.f32 0.0, %v1217
  %v1219 = vpop.f32.mrb[0].mxu0
  %v1220 = vpop.f32.mrb[0].mxu0
  %v1221 = vadd.f32 0.0, %v1220
  %v1222 = vpop.f32.mrb[0].mxu0
  %1223 = vmatprep.mubr.bf16.mxu0 0
  %1224 = vmatmul.mubr.bf16.gmra.mrb[0].mxu0 %v366
  %v1225 = vpop.f32.mrb[0].mxu0
  %v1226 = vadd.f32 0.0, %v1225
  %v1227 = vpop.f32.mrb[0].mxu0
  %v1228 = vpop.f32.mrb[0].mxu0
  %v1229 = vadd.f32 0.0, %v1228
  %v1230 = vpop.f32.mrb[0].mxu0
  %1231 = vmatprep.mubr.bf16.mxu0 0
  %1232 = vmatmul.mubr.bf16.gmra.mrb[0].mxu0 %v367
  %v1233 = vpop.f32.mrb[0].mxu0
  %v1234 = vadd.f32 0.0, %v1233
  %v1235 = vpop.f32.mrb[0].mxu0
  %v1236 = vpop.f32.mrb[0].mxu0
  %v1237 = vadd.f32 0.0, %v1236
  %v1238 = vpop.f32.mrb[0].mxu0
  %1239 = vmatprep.mubr.bf16.mxu0 0
  %1240 = vmatmul.mubr.bf16.gmra.mrb[0].mxu0 %v368
  %v1241 = vpop.f32.mrb[0].mxu0
  %v1242 = vadd.f32 0.0, %v1241
  %v1243 = vpop.f32.mrb[0].mxu0
  %v1244 = vpop.f32.mrb[0].mxu0
  %v1245 = vadd.f32 0.0, %v1244
  %v1246 = vpop.f32.mrb[0].mxu0
  %1247 = vmatprep.mubr.bf16.mxu0 0
  %1248 = vmatmul.mubr.bf16.gmra.mrb[0].mxu0 %v369
  %v1249 = vpop.f32.mrb[0].mxu0
  %v1250 = vadd.f32 0.0, %v1249
  %v1251 = vpop.f32.mrb[0].mxu0
  %v1252 = vpop.f32.mrb[0].mxu0
  %v1253 = vadd.f32 0.0, %v1252
  %v1254 = vpop.f32.mrb[0].mxu0
  %1255 = vmatprep.mubr.bf16.mxu0 0
  %1256 = vmatmul.mubr.bf16.gmra.mrb[0].mxu0 %v370
  %v1257 = vpop.f32.mrb[0].mxu0
  %v1258 = vadd.f32 0.0, %v1257
  %v1259 = vpop.f32.mrb[0].mxu0
  %v1260 = vpop.f32.mrb[0].mxu0
  %v1261 = vadd.f32 0.0, %v1260
  %v1262 = vpop.f32.mrb[0].mxu0
  %1263 = vmatprep.mubr.bf16.mxu0 0
  %1264 = vmatmul.mubr.bf16.gmra.mrb[0].mxu0 %v371
  %v1265 = vpop.f32.mrb[0].mxu0
  %v1266 = vadd.f32 0.0, %v1265
  %v1267 = vpop.f32.mrb[0].mxu0
  %v1268 = vpop.f32.mrb[0].mxu0
  %v1269 = vadd.f32 0.0, %v1268
  %v1270 = vpop.f32.mrb[0].mxu0
  %1271 = vmatprep.mubr.bf16.mxu0 0
  %1272 = vmatmul.mubr.bf16.gmra.mrb[0].mxu0 %v372
  %v1273 = vpop.f32.mrb[0].mxu0
  %v1274 = vadd.f32 0.0, %v1273
  %v1275 = vpop.f32.mrb[0].mxu0
  %v1276 = vpop.f32.mrb[0].mxu0
  %v1277 = vadd.f32 0.0, %v1276
  %v1278 = vpop.f32.mrb[0].mxu0
  %1279 = vmatprep.mubr.bf16.mxu0 0
  %1280 = vmatmul.mubr.bf16.gmra.mrb[0].mxu0 %v373
  %v1281 = vpop.f32.mrb[0].mxu0
  %v1282 = vadd.f32 0.0, %v1281
  %v1283 = vpop.f32.mrb[0].mxu0
  %v1284 = vpop.f32.mrb[0].mxu0
  %v1285 = vadd.f32 0.0, %v1284
  %v1286 = vpop.f32.mrb[0].mxu0
  %1287 = vmatprep.mubr.bf16.mxu0 0
  %1288 = vmatmul.mubr.bf16.gmra.mrb[0].mxu0 %v374
  %v1289 = vpop.f32.mrb[0].mxu0
  %v1290 = vadd.f32 0.0, %v1289
  %v1291 = vpop.f32.mrb[0].mxu0
  %v1292 = vpop.f32.mrb[0].mxu0
  %v1293 = vadd.f32 0.0, %v1292
  %v1294 = vpop.f32.mrb[0].mxu0
  %1295 = vmatprep.mubr.bf16.mxu0 0
  %1296 = vmatmul.mubr.bf16.gmra.mrb[0].mxu0 %v375
  %v1297 = vpop.f32.mrb[0].mxu0
  %v1298 = vadd.f32 0.0, %v1297
  %v1299 = vpop.f32.mrb[0].mxu0
  %v1300 = vpop.f32.mrb[0].mxu0
  %v1301 = vadd.f32 0.0, %v1300
  %v1302 = vpop.f32.mrb[0].mxu0
  %1303 = vmatprep.mubr.bf16.mxu0 0
  %1304 = vmatmul.mubr.bf16.gmra.mrb[0].mxu0 %v376
  %v1305 = vpop.f32.mrb[0].mxu0
  %v1306 = vadd.f32 0.0, %v1305
  %v1307 = vpop.f32.mrb[0].mxu0
  %v1308 = vpop.f32.mrb[0].mxu0
  %v1309 = vadd.f32 0.0, %v1308
  %v1310 = vpop.f32.mrb[0].mxu0
  %1311 = vmatprep.mubr.bf16.mxu0 0
  %1312 = vmatmul.mubr.bf16.gmra.mrb[0].mxu0 %v377
  %v1313 = vpop.f32.mrb[0].mxu0
  %v1314 = vadd.f32 0.0, %v1313
  %v1315 = vpop.f32.mrb[0].mxu0
  %v1316 = vpop.f32.mrb[0].mxu0
  %v1317 = vadd.f32 0.0, %v1316
  %v1318 = vpop.f32.mrb[0].mxu0
  %1319 = vmatprep.mubr.bf16.mxu0 0
  %1320 = vmatmul.mubr.bf16.gmra.mrb[0].mxu0 %v378
  %v1321 = vpop.f32.mrb[0].mxu0
  %v1322 = vadd.f32 0.0, %v1321
  %v1323 = vpop.f32.mrb[0].mxu0
  %v1324 = vpop.f32.mrb[0].mxu0
  %v1325 = vadd.f32 0.0, %v1324
  %v1326 = vpop.f32.mrb[0].mxu0
  %1327 = vmatprep.mubr.bf16.mxu0 0
  %1328 = vmatmul.mubr.bf16.gmra.mrb[0].mxu0 %v379
  %v1329 = vpop.f32.mrb[0].mxu0
  %v1330 = vadd.f32 0.0, %v1329
  %v1331 = vpop.f32.mrb[0].mxu0
  %v1332 = vpop.f32.mrb[0].mxu0
  %v1333 = vadd.f32 0.0, %v1332
  %v1334 = vpop.f32.mrb[0].mxu0
  %1335 = vmatprep.mubr.bf16.mxu0 0
  %1336 = vmatmul.mubr.bf16.gmra.mrb[0].mxu0 %v380
  %v1337 = vpop.f32.mrb[0].mxu0
  %v1338 = vadd.f32 0.0, %v1337
  %v1339 = vpop.f32.mrb[0].mxu0
  %v1340 = vpop.f32.mrb[0].mxu0
  %v1341 = vadd.f32 0.0, %v1340
  %v1342 = vpop.f32.mrb[0].mxu0
  %1343 = vmatprep.mubr.bf16.mxu0 0
  %1344 = vmatmul.mubr.bf16.gmra.mrb[0].mxu0 %v381
  %v1345 = vpop.f32.mrb[0].mxu0
  %v1346 = vadd.f32 0.0, %v1345
  %v1347 = vpop.f32.mrb[0].mxu0
  %v1348 = vpop.f32.mrb[0].mxu0
  %v1349 = vadd.f32 0.0, %v1348
  %v1350 = vpop.f32.mrb[0].mxu0
  %1351 = vmatprep.mubr.bf16.mxu0 0
  %1352 = vmatmul.mubr.bf16.gmra.mrb[0].mxu0 %v382
  %v1353 = vpop.f32.mrb[0].mxu0
  %v1354 = vadd.f32 0.0, %v1353
  %v1355 = vpop.f32.mrb[0].mxu0
  %v1356 = vpop.f32.mrb[0].mxu0
  %v1357 = vadd.f32 0.0, %v1356
  %v1358 = vpop.f32.mrb[0].mxu0
  %1359 = vmatprep.mubr.bf16.mxu0 0
  %1360 = vmatmul.mubr.bf16.gmra.mrb[0].mxu0 %v383
  %v1361 = vpop.f32.mrb[0].mxu0
  %v1362 = vadd.f32 0.0, %v1361
  %v1363 = vpop.f32.mrb[0].mxu0
  %v1364 = vpop.f32.mrb[0].mxu0
  %v1365 = vadd.f32 0.0, %v1364
  %v1366 = vpop.f32.mrb[0].mxu0
  %1367 = vmatprep.mubr.bf16.mxu0 0
  %1368 = vmatmul.mubr.bf16.gmra.mrb[0].mxu0 %v384
  %v1369 = vpop.f32.mrb[0].mxu0
  %v1370 = vadd.f32 0.0, %v1369
  %v1371 = vpop.f32.mrb[0].mxu0
  %v1372 = vpop.f32.mrb[0].mxu0
  %v1373 = vadd.f32 0.0, %v1372
  %v1374 = vpop.f32.mrb[0].mxu0
  %1375 = vmatprep.mubr.bf16.mxu0 0
  %1376 = vmatmul.mubr.bf16.gmra.mrb[0].mxu0 %v385
  %v1377 = vpop.f32.mrb[0].mxu0
  %v1378 = vadd.f32 0.0, %v1377
  %v1379 = vpop.f32.mrb[0].mxu0
  %v1380 = vpop.f32.mrb[0].mxu0
  %v1381 = vadd.f32 0.0, %v1380
  %v1382 = vpop.f32.mrb[0].mxu0
  %1383 = vmatprep.mubr.bf16.mxu0 0
  %1384 = vmatmul.mubr.bf16.gmra.mrb[0].mxu0 %v386
  %v1385 = vpop.f32.mrb[0].mxu0
  %v1386 = vadd.f32 0.0, %v1385
  %v1387 = vpop.f32.mrb[0].mxu0
  %v1388 = vpop.f32.mrb[0].mxu0
  %v1389 = vadd.f32 0.0, %v1388
  %v1390 = vpop.f32.mrb[0].mxu0
  %1391 = vmatprep.mubr.bf16.mxu0 0
  %1392 = vmatmul.mubr.bf16.gmra.mrb[0].mxu0 %v387
  %v1393 = vpop.f32.mrb[0].mxu0
  %v1394 = vadd.f32 0.0, %v1393
  %v1395 = vpop.f32.mrb[0].mxu0
  %v1396 = vpop.f32.mrb[0].mxu0
  %v1397 = vadd.f32 0.0, %v1396
  %v1398 = vpop.f32.mrb[0].mxu0
  %1399 = vmatprep.mubr.bf16.mxu0 0
  %1400 = vmatmul.mubr.bf16.gmra.mrb[0].mxu0 %v388
  %v1401 = vpop.f32.mrb[0].mxu0
  %v1402 = vadd.f32 0.0, %v1401
  %v1403 = vpop.f32.mrb[0].mxu0
  %v1404 = vpop.f32.mrb[0].mxu0
  %v1405 = vadd.f32 0.0, %v1404
  %v1406 = vpop.f32.mrb[0].mxu0
  %1407 = vmatprep.mubr.bf16.mxu0 0
  %1408 = vmatmul.mubr.bf16.gmra.mrb[0].mxu0 %v389
  %v1409 = vpop.f32.mrb[0].mxu0
  %v1410 = vadd.f32 0.0, %v1409
  %v1411 = vpop.f32.mrb[0].mxu0
  %v1412 = vpop.f32.mrb[0].mxu0
  %v1413 = vadd.f32 0.0, %v1412
  %v1414 = vpop.f32.mrb[0].mxu0
  %1415 = vdwg.mxu0
  %v1416 = vpack.c.bf16 %v1165, %v1162
  %v1417 = vpack.c.bf16 %v1173, %v1170
  %v1418 = vpack.c.bf16 %v1181, %v1178
  %v1419 = vpack.c.bf16 %v1189, %v1186
  %v1420 = vpack.c.bf16 %v1197, %v1194
  %v1421 = vpack.c.bf16 %v1205, %v1202
  %v1422 = vpack.c.bf16 %v1213, %v1210
  %v1423 = vpack.c.bf16 %v1221, %v1218
  %v1424 = vpack.c.bf16 %v1229, %v1226
  %v1425 = vpack.c.bf16 %v1237, %v1234
  %v1426 = vpack.c.bf16 %v1245, %v1242
  %v1427 = vpack.c.bf16 %v1253, %v1250
  %v1428 = vpack.c.bf16 %v1261, %v1258
  %v1429 = vpack.c.bf16 %v1269, %v1266
  %v1430 = vpack.c.bf16 %v1277, %v1274
  %v1431 = vpack.c.bf16 %v1285, %v1282
  %v1432 = vpack.c.bf16 %v1293, %v1290
  %v1433 = vpack.c.bf16 %v1301, %v1298
  %v1434 = vpack.c.bf16 %v1309, %v1306
  %v1435 = vpack.c.bf16 %v1317, %v1314
  %v1436 = vpack.c.bf16 %v1325, %v1322
  %v1437 = vpack.c.bf16 %v1333, %v1330
  %v1438 = vpack.c.bf16 %v1341, %v1338
  %v1439 = vpack.c.bf16 %v1349, %v1346
  %v1440 = vpack.c.bf16 %v1357, %v1354
  %v1441 = vpack.c.bf16 %v1365, %v1362
  %v1442 = vpack.c.bf16 %v1373, %v1370
  %v1443 = vpack.c.bf16 %v1381, %v1378
  %v1444 = vpack.c.bf16 %v1389, %v1386
  %v1445 = vpack.c.bf16 %v1397, %v1394
  %v1446 = vpack.c.bf16 %v1405, %v1402
  %v1447 = vpack.c.bf16 %v1413, %v1410
  %v1480 = vunpack.c.l.b16 %v1416
  %v1481 = vunpack.c.h.b16 %v1416
  %v1482 = vunpack.c.l.b16 %v1417
  %v1483 = vunpack.c.h.b16 %v1417
  %v1484 = vunpack.c.l.b16 %v1418
  %v1485 = vunpack.c.h.b16 %v1418
  %v1486 = vunpack.c.l.b16 %v1419
  %v1487 = vunpack.c.h.b16 %v1419
  %v1488 = vunpack.c.l.b16 %v1420
  %v1489 = vunpack.c.h.b16 %v1420
  %v1490 = vunpack.c.l.b16 %v1421
  %v1491 = vunpack.c.h.b16 %v1421
  %v1492 = vunpack.c.l.b16 %v1422
  %v1493 = vunpack.c.h.b16 %v1422
  %v1494 = vunpack.c.l.b16 %v1423
  %v1495 = vunpack.c.h.b16 %v1423
  %v1496 = vunpack.c.l.b16 %v1424
  %v1497 = vunpack.c.h.b16 %v1424
  %v1498 = vunpack.c.l.b16 %v1425
  %v1499 = vunpack.c.h.b16 %v1425
  %v1500 = vunpack.c.l.b16 %v1426
  %v1501 = vunpack.c.h.b16 %v1426
  %v1502 = vunpack.c.l.b16 %v1427
  %v1503 = vunpack.c.h.b16 %v1427
  %v1504 = vunpack.c.l.b16 %v1428
  %v1505 = vunpack.c.h.b16 %v1428
  %v1506 = vunpack.c.l.b16 %v1429
  %v1507 = vunpack.c.h.b16 %v1429
  %v1508 = vunpack.c.l.b16 %v1430
  %v1509 = vunpack.c.h.b16 %v1430
  %v1510 = vunpack.c.l.b16 %v1431
  %v1511 = vunpack.c.h.b16 %v1431
  %v1512 = vunpack.c.l.b16 %v1432
  %v1513 = vunpack.c.h.b16 %v1432
  %v1514 = vunpack.c.l.b16 %v1433
  %v1515 = vunpack.c.h.b16 %v1433
  %v1516 = vunpack.c.l.b16 %v1434
  %v1517 = vunpack.c.h.b16 %v1434
  %v1518 = vunpack.c.l.b16 %v1435
  %v1519 = vunpack.c.h.b16 %v1435
  %v1520 = vunpack.c.l.b16 %v1436
  %v1521 = vunpack.c.h.b16 %v1436
  %v1522 = vunpack.c.l.b16 %v1437
  %v1523 = vunpack.c.h.b16 %v1437
  %v1524 = vunpack.c.l.b16 %v1438
  %v1525 = vunpack.c.h.b16 %v1438
  %v1526 = vunpack.c.l.b16 %v1439
  %v1527 = vunpack.c.h.b16 %v1439
  %v1528 = vunpack.c.l.b16 %v1440
  %v1529 = vunpack.c.h.b16 %v1440
  %v1530 = vunpack.c.l.b16 %v1441
  %v1531 = vunpack.c.h.b16 %v1441
  %v1532 = vunpack.c.l.b16 %v1442
  %v1533 = vunpack.c.h.b16 %v1442
  %v1534 = vunpack.c.l.b16 %v1443
  %v1535 = vunpack.c.h.b16 %v1443
  %v1536 = vunpack.c.l.b16 %v1444
  %v1537 = vunpack.c.h.b16 %v1444
  %v1538 = vunpack.c.l.b16 %v1445
  %v1539 = vunpack.c.h.b16 %v1445
  %v1540 = vunpack.c.l.b16 %v1446
  %v1541 = vunpack.c.h.b16 %v1446
  %v1542 = vunpack.c.l.b16 %v1447
  %v1543 = vunpack.c.h.b16 %v1447
  %v1544 = vpack.c.b16 %v1480, %v1480
  %v1545 = vpack.c.b16 %v1481, %v1481
  %v1546 = vpack.c.b16 %v1482, %v1482
  %v1547 = vpack.c.b16 %v1483, %v1483
  %v1548 = vpack.c.b16 %v1484, %v1484
  %v1549 = vpack.c.b16 %v1485, %v1485
  %v1550 = vpack.c.b16 %v1486, %v1486
  %v1551 = vpack.c.b16 %v1487, %v1487
  %v1552 = vpack.c.b16 %v1488, %v1488
  %v1553 = vpack.c.b16 %v1489, %v1489
  %v1554 = vpack.c.b16 %v1490, %v1490
  %v1555 = vpack.c.b16 %v1491, %v1491
  %v1556 = vpack.c.b16 %v1492, %v1492
  %v1557 = vpack.c.b16 %v1493, %v1493
  %v1558 = vpack.c.b16 %v1494, %v1494
  %v1559 = vpack.c.b16 %v1495, %v1495
  %v1560 = vpack.c.b16 %v1496, %v1496
  %v1561 = vpack.c.b16 %v1497, %v1497
  %v1562 = vpack.c.b16 %v1498, %v1498
  %v1563 = vpack.c.b16 %v1499, %v1499
  %v1564 = vpack.c.b16 %v1500, %v1500
  %v1565 = vpack.c.b16 %v1501, %v1501
  %v1566 = vpack.c.b16 %v1502, %v1502
  %v1567 = vpack.c.b16 %v1503, %v1503
  %v1568 = vpack.c.b16 %v1504, %v1504
  %v1569 = vpack.c.b16 %v1505, %v1505
  %v1570 = vpack.c.b16 %v1506, %v1506
  %v1571 = vpack.c.b16 %v1507, %v1507
  %v1572 = vpack.c.b16 %v1508, %v1508
  %v1573 = vpack.c.b16 %v1509, %v1509
  %v1574 = vpack.c.b16 %v1510, %v1510
  %v1575 = vpack.c.b16 %v1511, %v1511
  %v1576 = vpack.c.b16 %v1512, %v1512
  %v1577 = vpack.c.b16 %v1513, %v1513
  %v1578 = vpack.c.b16 %v1514, %v1514
  %v1579 = vpack.c.b16 %v1515, %v1515
  %v1580 = vpack.c.b16 %v1516, %v1516
  %v1581 = vpack.c.b16 %v1517, %v1517
  %v1582 = vpack.c.b16 %v1518, %v1518
  %v1583 = vpack.c.b16 %v1519, %v1519
  %v1584 = vpack.c.b16 %v1520, %v1520
  %v1585 = vpack.c.b16 %v1521, %v1521
  %v1586 = vpack.c.b16 %v1522, %v1522
  %v1587 = vpack.c.b16 %v1523, %v1523
  %v1588 = vpack.c.b16 %v1524, %v1524
  %v1589 = vpack.c.b16 %v1525, %v1525
  %v1590 = vpack.c.b16 %v1526, %v1526
  %v1591 = vpack.c.b16 %v1527, %v1527
  %v1592 = vpack.c.b16 %v1528, %v1528
  %v1593 = vpack.c.b16 %v1529, %v1529
  %v1594 = vpack.c.b16 %v1530, %v1530
  %v1595 = vpack.c.b16 %v1531, %v1531
  %v1596 = vpack.c.b16 %v1532, %v1532
  %v1597 = vpack.c.b16 %v1533, %v1533
  %v1598 = vpack.c.b16 %v1534, %v1534
  %v1599 = vpack.c.b16 %v1535, %v1535
  %v1600 = vpack.c.b16 %v1536, %v1536
  %v1601 = vpack.c.b16 %v1537, %v1537
  %v1602 = vpack.c.b16 %v1538, %v1538
  %v1603 = vpack.c.b16 %v1539, %v1539
  %v1604 = vpack.c.b16 %v1540, %v1540
  %v1605 = vpack.c.b16 %v1541, %v1541
  %v1606 = vpack.c.b16 %v1542, %v1542
  %v1607 = vpack.c.b16 %v1543, %v1543
  %1672 = vst [vmem:[%s6] sm:$0xf] %v1544
  %1673 = vst [vmem:[%s6 + $0x4] sm:$0xf] %v1545
  %1674 = vst [vmem:[%s6 + $0x8] sm:$0xf] %v1546
  %1675 = vst [vmem:[%s6 + $0xc] sm:$0xf] %v1547
  %1676 = vst [vmem:[%s6 + $0x10] sm:$0xf] %v1548
  %1677 = vst [vmem:[%s6 + $0x14] sm:$0xf] %v1549
  %1678 = vst [vmem:[%s6 + $0x18] sm:$0xf] %v1550
  %1679 = vst [vmem:[%s6 + $0x1c] sm:$0xf] %v1551
  %1680 = vst [vmem:[%s6 + $0x20] sm:$0xf] %v1552
  %1681 = vst [vmem:[%s6 + $0x24] sm:$0xf] %v1553
  %1682 = vst [vmem:[%s6 + $0x28] sm:$0xf] %v1554
  %1683 = vst [vmem:[%s6 + $0x2c] sm:$0xf] %v1555
  %1684 = vst [vmem:[%s6 + $0x30] sm:$0xf] %v1556
  %1685 = vst [vmem:[%s6 + $0x34] sm:$0xf] %v1557
  %1686 = vst [vmem:[%s6 + $0x38] sm:$0xf] %v1558
  %1687 = vst [vmem:[%s6 + $0x3c] sm:$0xf] %v1559
  %1688 = vst [vmem:[%s6 + $0x40] sm:$0xf] %v1560
  %1689 = vst [vmem:[%s6 + $0x44] sm:$0xf] %v1561
  %1690 = vst [vmem:[%s6 + $0x48] sm:$0xf] %v1562
  %1691 = vst [vmem:[%s6 + $0x4c] sm:$0xf] %v1563
  %1692 = vst [vmem:[%s6 + $0x50] sm:$0xf] %v1564
  %1693 = vst [vmem:[%s6 + $0x54] sm:$0xf] %v1565
  %1694 = vst [vmem:[%s6 + $0x58] sm:$0xf] %v1566
  %1695 = vst [vmem:[%s6 + $0x5c] sm:$0xf] %v1567
  %1696 = vst [vmem:[%s6 + $0x60] sm:$0xf] %v1568
  %1697 = vst [vmem:[%s6 + $0x64] sm:$0xf] %v1569
  %1698 = vst [vmem:[%s6 + $0x68] sm:$0xf] %v1570
  %1699 = vst [vmem:[%s6 + $0x6c] sm:$0xf] %v1571
  %1700 = vst [vmem:[%s6 + $0x70] sm:$0xf] %v1572
  %1701 = vst [vmem:[%s6 + $0x74] sm:$0xf] %v1573
  %1702 = vst [vmem:[%s6 + $0x78] sm:$0xf] %v1574
  %1703 = vst [vmem:[%s6 + $0x7c] sm:$0xf] %v1575
  %1704 = vst [vmem:[%s6 + $0x80] sm:$0xf] %v1576
  %1705 = vst [vmem:[%s6 + $0x84] sm:$0xf] %v1577
  %1706 = vst [vmem:[%s6 + $0x88] sm:$0xf] %v1578
  %1707 = vst [vmem:[%s6 + $0x8c] sm:$0xf] %v1579
  %1708 = vst [vmem:[%s6 + $0x90] sm:$0xf] %v1580
  %1709 = vst [vmem:[%s6 + $0x94] sm:$0xf] %v1581
  %1710 = vst [vmem:[%s6 + $0x98] sm:$0xf] %v1582
  %1711 = vst [vmem:[%s6 + $0x9c] sm:$0xf] %v1583
  %1712 = vst [vmem:[%s6 + $0xa0] sm:$0xf] %v1584
  %1713 = vst [vmem:[%s6 + $0xa4] sm:$0xf] %v1585
  %1714 = vst [vmem:[%s6 + $0xa8] sm:$0xf] %v1586
  %1715 = vst [vmem:[%s6 + $0xac] sm:$0xf] %v1587
  %1716 = vst [vmem:[%s6 + $0xb0] sm:$0xf] %v1588
  %1717 = vst [vmem:[%s6 + $0xb4] sm:$0xf] %v1589
  %1718 = vst [vmem:[%s6 + $0xb8] sm:$0xf] %v1590
  %1719 = vst [vmem:[%s6 + $0xbc] sm:$0xf] %v1591
  %1720 = vst [vmem:[%s6 + $0xc0] sm:$0xf] %v1592
  %1721 = vst [vmem:[%s6 + $0xc4] sm:$0xf] %v1593
  %1722 = vst [vmem:[%s6 + $0xc8] sm:$0xf] %v1594
  %1723 = vst [vmem:[%s6 + $0xcc] sm:$0xf] %v1595
  %1724 = vst [vmem:[%s6 + $0xd0] sm:$0xf] %v1596
  %1725 = vst [vmem:[%s6 + $0xd4] sm:$0xf] %v1597
  %1726 = vst [vmem:[%s6 + $0xd8] sm:$0xf] %v1598
  %1727 = vst [vmem:[%s6 + $0xdc] sm:$0xf] %v1599
  %1728 = vst [vmem:[%s6 + $0xe0] sm:$0xf] %v1600
  %1729 = vst [vmem:[%s6 + $0xe4] sm:$0xf] %v1601
  %1730 = vst [vmem:[%s6 + $0xe8] sm:$0xf] %v1602
  %1731 = vst [vmem:[%s6 + $0xec] sm:$0xf] %v1603
  %1732 = vst [vmem:[%s6 + $0xf0] sm:$0xf] %v1604
  %1733 = vst [vmem:[%s6 + $0xf4] sm:$0xf] %v1605
  %1734 = vst [vmem:[%s6 + $0xf8] sm:$0xf] %v1606
  %1735 = vst [vmem:[%s6 + $0xfc] sm:$0xf] %v1607
  %v1736 = vadd.f32 %v489, %v492
  %v1737 = vadd.f32 %v1736, %v497
  %v1738 = vadd.f32 %v1737, %v500
  %v1739 = vadd.f32 %v1738, %v505
  %v1740 = vadd.f32 %v1739, %v508
  %v1741 = vadd.f32 %v1740, %v513
  %v1742 = vadd.f32 %v1741, %v516
  %v1743 = vadd.f32 %v1742, %v521
  %v1744 = vadd.f32 %v1743, %v524
  %v1745 = vadd.f32 %v1744, %v529
  %v1746 = vadd.f32 %v1745, %v532
  %v1747 = vadd.f32 %v1746, %v537
  %v1748 = vadd.f32 %v1747, %v540
  %v1749 = vadd.f32 %v1748, %v545
  %v1750 = vadd.f32 %v1749, %v548
  %v1751 = vadd.f32 %v1750, %v553
  %v1752 = vadd.f32 %v1751, %v556
  %v1753 = vadd.f32 %v1752, %v561
  %v1754 = vadd.f32 %v1753, %v564
  %v1755 = vadd.f32 %v1754, %v569
  %v1756 = vadd.f32 %v1755, %v572
  %v1757 = vadd.f32 %v1756, %v577
  %v1758 = vadd.f32 %v1757, %v580
  %v1759 = vadd.f32 %v1758, %v585
  %v1760 = vadd.f32 %v1759, %v588
  %v1761 = vadd.f32 %v1760, %v593
  %v1762 = vadd.f32 %v1761, %v596
  %v1763 = vadd.f32 %v1762, %v601
  %v1764 = vadd.f32 %v1763, %v604
  %v1765 = vadd.f32 %v1764, %v609
  %v1766 = vadd.f32 %v1765, %v612
  %v1767 = vadd.f32 %v1766, %v617
  %v1768 = vadd.f32 %v1767, %v620
  %v1769 = vadd.f32 %v1768, %v625
  %v1770 = vadd.f32 %v1769, %v628
  %v1771 = vadd.f32 %v1770, %v633
  %v1772 = vadd.f32 %v1771, %v636
  %v1773 = vadd.f32 %v1772, %v641
  %v1774 = vadd.f32 %v1773, %v644
  %v1775 = vadd.f32 %v1774, %v649
  %v1776 = vadd.f32 %v1775, %v652
  %v1777 = vadd.f32 %v1776, %v657
  %v1778 = vadd.f32 %v1777, %v660
  %v1779 = vadd.f32 %v1778, %v665
  %v1780 = vadd.f32 %v1779, %v668
  %v1781 = vadd.f32 %v1780, %v673
  %v1782 = vadd.f32 %v1781, %v676
  %v1783 = vadd.f32 %v1782, %v681
  %v1784 = vadd.f32 %v1783, %v684
  %v1785 = vadd.f32 %v1784, %v689
  %v1786 = vadd.f32 %v1785, %v692
  %v1787 = vadd.f32 %v1786, %v697
  %v1788 = vadd.f32 %v1787, %v700
  %v1789 = vadd.f32 %v1788, %v705
  %v1790 = vadd.f32 %v1789, %v708
  %v1791 = vadd.f32 %v1790, %v713
  %v1792 = vadd.f32 %v1791, %v716
  %v1793 = vadd.f32 %v1792, %v721
  %v1794 = vadd.f32 %v1793, %v724
  %v1795 = vadd.f32 %v1794, %v729
  %v1796 = vadd.f32 %v1795, %v732
  %v1797 = vadd.f32 %v1796, %v737
  %v1798 = vadd.f32 %v1797, %v740
  %v1799 = vrot.slane %v1798, 4
  %v1800 = vadd.f32 %v1798, %v1799
  %v1801 = vrot.slane %v1800, 2
  %v1802 = vadd.f32 %v1800, %v1801
  %v1803 = vrot.slane %v1802, 1
  %v1804 = vadd.f32 %v1802, %v1803
  %v1805 = vmul.f32 %v1804, 0.001953125
  %v1806 = vsub.f32 %v489, %v1805
  %v1807 = vsub.f32 %v492, %v1805
  %v1808 = vsub.f32 %v497, %v1805
  %v1809 = vsub.f32 %v500, %v1805
  %v1810 = vsub.f32 %v505, %v1805
  %v1811 = vsub.f32 %v508, %v1805
  %v1812 = vsub.f32 %v513, %v1805
  %v1813 = vsub.f32 %v516, %v1805
  %v1814 = vsub.f32 %v521, %v1805
  %v1815 = vsub.f32 %v524, %v1805
  %v1816 = vsub.f32 %v529, %v1805
  %v1817 = vsub.f32 %v532, %v1805
  %v1818 = vsub.f32 %v537, %v1805
  %v1819 = vsub.f32 %v540, %v1805
  %v1820 = vsub.f32 %v545, %v1805
  %v1821 = vsub.f32 %v548, %v1805
  %v1822 = vsub.f32 %v553, %v1805
  %v1823 = vsub.f32 %v556, %v1805
  %v1824 = vsub.f32 %v561, %v1805
  %v1825 = vsub.f32 %v564, %v1805
  %v1826 = vsub.f32 %v569, %v1805
  %v1827 = vsub.f32 %v572, %v1805
  %v1828 = vsub.f32 %v577, %v1805
  %v1829 = vsub.f32 %v580, %v1805
  %v1830 = vsub.f32 %v585, %v1805
  %v1831 = vsub.f32 %v588, %v1805
  %v1832 = vsub.f32 %v593, %v1805
  %v1833 = vsub.f32 %v596, %v1805
  %v1834 = vsub.f32 %v601, %v1805
  %v1835 = vsub.f32 %v604, %v1805
  %v1836 = vsub.f32 %v609, %v1805
  %v1837 = vsub.f32 %v612, %v1805
  %v1838 = vsub.f32 %v617, %v1805
  %v1839 = vsub.f32 %v620, %v1805
  %v1840 = vsub.f32 %v625, %v1805
  %v1841 = vsub.f32 %v628, %v1805
  %v1842 = vsub.f32 %v633, %v1805
  %v1843 = vsub.f32 %v636, %v1805
  %v1844 = vsub.f32 %v641, %v1805
  %v1845 = vsub.f32 %v644, %v1805
  %v1846 = vsub.f32 %v649, %v1805
  %v1847 = vsub.f32 %v652, %v1805
  %v1848 = vsub.f32 %v657, %v1805
  %v1849 = vsub.f32 %v660, %v1805
  %v1850 = vsub.f32 %v665, %v1805
  %v1851 = vsub.f32 %v668, %v1805
  %v1852 = vsub.f32 %v673, %v1805
  %v1853 = vsub.f32 %v676, %v1805
  %v1854 = vsub.f32 %v681, %v1805
  %v1855 = vsub.f32 %v684, %v1805
  %v1856 = vsub.f32 %v689, %v1805
  %v1857 = vsub.f32 %v692, %v1805
  %v1858 = vsub.f32 %v697, %v1805
  %v1859 = vsub.f32 %v700, %v1805
  %v1860 = vsub.f32 %v705, %v1805
  %v1861 = vsub.f32 %v708, %v1805
  %v1862 = vsub.f32 %v713, %v1805
  %v1863 = vsub.f32 %v716, %v1805
  %v1864 = vsub.f32 %v721, %v1805
  %v1865 = vsub.f32 %v724, %v1805
  %v1866 = vsub.f32 %v729, %v1805
  %v1867 = vsub.f32 %v732, %v1805
  %v1868 = vsub.f32 %v737, %v1805
  %v1869 = vsub.f32 %v740, %v1805
  %v1870 = vmul.f32 %v1806, %v1806
  %v1871 = vmul.f32 %v1807, %v1807
  %v1872 = vmul.f32 %v1808, %v1808
  %v1873 = vmul.f32 %v1809, %v1809
  %v1874 = vmul.f32 %v1810, %v1810
  %v1875 = vmul.f32 %v1811, %v1811
  %v1876 = vmul.f32 %v1812, %v1812
  %v1877 = vmul.f32 %v1813, %v1813
  %v1878 = vmul.f32 %v1814, %v1814
  %v1879 = vmul.f32 %v1815, %v1815
  %v1880 = vmul.f32 %v1816, %v1816
  %v1881 = vmul.f32 %v1817, %v1817
  %v1882 = vmul.f32 %v1818, %v1818
  %v1883 = vmul.f32 %v1819, %v1819
  %v1884 = vmul.f32 %v1820, %v1820
  %v1885 = vmul.f32 %v1821, %v1821
  %v1886 = vmul.f32 %v1822, %v1822
  %v1887 = vmul.f32 %v1823, %v1823
  %v1888 = vmul.f32 %v1824, %v1824
  %v1889 = vmul.f32 %v1825, %v1825
  %v1890 = vmul.f32 %v1826, %v1826
  %v1891 = vmul.f32 %v1827, %v1827
  %v1892 = vmul.f32 %v1828, %v1828
  %v1893 = vmul.f32 %v1829, %v1829
  %v1894 = vmul.f32 %v1830, %v1830
  %v1895 = vmul.f32 %v1831, %v1831
  %v1896 = vmul.f32 %v1832, %v1832
  %v1897 = vmul.f32 %v1833, %v1833
  %v1898 = vmul.f32 %v1834, %v1834
  %v1899 = vmul.f32 %v1835, %v1835
  %v1900 = vmul.f32 %v1836, %v1836
  %v1901 = vmul.f32 %v1837, %v1837
  %v1902 = vmul.f32 %v1838, %v1838
  %v1903 = vmul.f32 %v1839, %v1839
  %v1904 = vmul.f32 %v1840, %v1840
  %v1905 = vmul.f32 %v1841, %v1841
  %v1906 = vmul.f32 %v1842, %v1842
  %v1907 = vmul.f32 %v1843, %v1843
  %v1908 = vmul.f32 %v1844, %v1844
  %v1909 = vmul.f32 %v1845, %v1845
  %v1910 = vmul.f32 %v1846, %v1846
  %v1911 = vmul.f32 %v1847, %v1847
  %v1912 = vmul.f32 %v1848, %v1848
  %v1913 = vmul.f32 %v1849, %v1849
  %v1914 = vmul.f32 %v1850, %v1850
  %v1915 = vmul.f32 %v1851, %v1851
  %v1916 = vmul.f32 %v1852, %v1852
  %v1917 = vmul.f32 %v1853, %v1853
  %v1918 = vmul.f32 %v1854, %v1854
  %v1919 = vmul.f32 %v1855, %v1855
  %v1920 = vmul.f32 %v1856, %v1856
  %v1921 = vmul.f32 %v1857, %v1857
  %v1922 = vmul.f32 %v1858, %v1858
  %v1923 = vmul.f32 %v1859, %v1859
  %v1924 = vmul.f32 %v1860, %v1860
  %v1925 = vmul.f32 %v1861, %v1861
  %v1926 = vmul.f32 %v1862, %v1862
  %v1927 = vmul.f32 %v1863, %v1863
  %v1928 = vmul.f32 %v1864, %v1864
  %v1929 = vmul.f32 %v1865, %v1865
  %v1930 = vmul.f32 %v1866, %v1866
  %v1931 = vmul.f32 %v1867, %v1867
  %v1932 = vmul.f32 %v1868, %v1868
  %v1933 = vmul.f32 %v1869, %v1869
  %v1934 = vadd.f32 %v1870, %v1871
  %v1935 = vadd.f32 %v1934, %v1872
  %v1936 = vadd.f32 %v1935, %v1873
  %v1937 = vadd.f32 %v1936, %v1874
  %v1938 = vadd.f32 %v1937, %v1875
  %v1939 = vadd.f32 %v1938, %v1876
  %v1940 = vadd.f32 %v1939, %v1877
  %v1941 = vadd.f32 %v1940, %v1878
  %v1942 = vadd.f32 %v1941, %v1879
  %v1943 = vadd.f32 %v1942, %v1880
  %v1944 = vadd.f32 %v1943, %v1881
  %v1945 = vadd.f32 %v1944, %v1882
  %v1946 = vadd.f32 %v1945, %v1883
  %v1947 = vadd.f32 %v1946, %v1884
  %v1948 = vadd.f32 %v1947, %v1885
  %v1949 = vadd.f32 %v1948, %v1886
  %v1950 = vadd.f32 %v1949, %v1887
  %v1951 = vadd.f32 %v1950, %v1888
  %v1952 = vadd.f32 %v1951, %v1889
  %v1953 = vadd.f32 %v1952, %v1890
  %v1954 = vadd.f32 %v1953, %v1891
  %v1955 = vadd.f32 %v1954, %v1892
  %v1956 = vadd.f32 %v1955, %v1893
  %v1957 = vadd.f32 %v1956, %v1894
  %v1958 = vadd.f32 %v1957, %v1895
  %v1959 = vadd.f32 %v1958, %v1896
  %v1960 = vadd.f32 %v1959, %v1897
  %v1961 = vadd.f32 %v1960, %v1898
  %v1962 = vadd.f32 %v1961, %v1899
  %v1963 = vadd.f32 %v1962, %v1900
  %v1964 = vadd.f32 %v1963, %v1901
  %v1965 = vadd.f32 %v1964, %v1902
  %v1966 = vadd.f32 %v1965, %v1903
  %v1967 = vadd.f32 %v1966, %v1904
  %v1968 = vadd.f32 %v1967, %v1905
  %v1969 = vadd.f32 %v1968, %v1906
  %v1970 = vadd.f32 %v1969, %v1907
  %v1971 = vadd.f32 %v1970, %v1908
  %v1972 = vadd.f32 %v1971, %v1909
  %v1973 = vadd.f32 %v1972, %v1910
  %v1974 = vadd.f32 %v1973, %v1911
  %v1975 = vadd.f32 %v1974, %v1912
  %v1976 = vadd.f32 %v1975, %v1913
  %v1977 = vadd.f32 %v1976, %v1914
  %v1978 = vadd.f32 %v1977, %v1915
  %v1979 = vadd.f32 %v1978, %v1916
  %v1980 = vadd.f32 %v1979, %v1917
  %v1981 = vadd.f32 %v1980, %v1918
  %v1982 = vadd.f32 %v1981, %v1919
  %v1983 = vadd.f32 %v1982, %v1920
  %v1984 = vadd.f32 %v1983, %v1921
  %v1985 = vadd.f32 %v1984, %v1922
  %v1986 = vadd.f32 %v1985, %v1923
  %v1987 = vadd.f32 %v1986, %v1924
  %v1988 = vadd.f32 %v1987, %v1925
  %v1989 = vadd.f32 %v1988, %v1926
  %v1990 = vadd.f32 %v1989, %v1927
  %v1991 = vadd.f32 %v1990, %v1928
  %v1992 = vadd.f32 %v1991, %v1929
  %v1993 = vadd.f32 %v1992, %v1930
  %v1994 = vadd.f32 %v1993, %v1931
  %v1995 = vadd.f32 %v1994, %v1932
  %v1996 = vadd.f32 %v1995, %v1933
  %v1997 = vrot.slane %v1996, 4
  %v1998 = vadd.f32 %v1996, %v1997
  %v1999 = vrot.slane %v1998, 2
  %v2000 = vadd.f32 %v1998, %v1999
  %v2001 = vrot.slane %v2000, 1
  %v2002 = vadd.f32 %v2000, %v2001
  %vm2003 = vcmask 1040384
  %v2004 = vsel %vm2003, %v1804, %v2002
  %2005 = vst [vmem:[%s7] sm:$0x3] %v2004
  // Predicated region
  $region22: #{preact_bottleneck_forward.5} parent=0 // pred_check
    _
  $region23: #{preact_bottleneck_forward.5} parent=0 // pred_check_branch
    %2007 = sbr.rel (0) target = $region25
  $region24: #{preact_bottleneck_forward.5} parent=0 // pred_region
    _
  $region25: #{preact_bottleneck_forward.5} parent=0 // pred_fallthru
    _
  // Predicated region
  $region26: #{preact_bottleneck_forward.5} parent=0 // pred_check
    _
  $region27: #{preact_bottleneck_forward.5} parent=0 // pred_check_branch
    %2009 = sbr.rel (0) target = $region29
  $region28: #{preact_bottleneck_forward.5} parent=0 // pred_region
    _
  $region29: #{preact_bottleneck_forward.5} parent=0 // pred_fallthru
    _
  // Predicated region
  $region30: #{preact_bottleneck_forward.5} parent=0 // pred_check
    _
  $region31: #{preact_bottleneck_forward.5} parent=0 // pred_check_branch
    %2011 = sbr.rel (0) target = $region33
  $region32: #{preact_bottleneck_forward.5} parent=0 // pred_region
    _
  $region33: #{preact_bottleneck_forward.5} parent=0 // pred_fallthru
    _
  // Predicated region
  $region34: #{preact_bottleneck_forward.5} parent=0 // pred_check
    _
  $region35: #{preact_bottleneck_forward.5} parent=0 // pred_check_branch
    %2013 = sbr.rel (0) target = $region37
  $region36: #{preact_bottleneck_forward.5} parent=0 // pred_region
    _
  $region37: #{preact_bottleneck_forward.5} parent=0 // pred_fallthru
    _
  // Predicated region
  $region38: #{preact_bottleneck_forward.5} parent=0 // pred_check
    _
  $region39: #{preact_bottleneck_forward.5} parent=0 // pred_check_branch
    %2015 = sbr.rel (0) target = $region41
  $region40: #{preact_bottleneck_forward.5} parent=0 // pred_region
    _
  $region41: #{preact_bottleneck_forward.5} parent=0 // pred_fallthru
    _
  // Predicated region
  $region42: #{preact_bottleneck_forward.5} parent=0 // pred_check
    _
  $region43: #{preact_bottleneck_forward.5} parent=0 // pred_check_branch
    %2017 = sbr.rel (0) target = $region45
  $region44: #{preact_bottleneck_forward.5} parent=0 // pred_region
    _
  $region45: #{preact_bottleneck_forward.5} parent=0 // pred_fallthru
    _

// kernel: preact_bottleneck_forward.7
$region0: #{preact_bottleneck_forward.7}
  #allocation0 [shape = 'u32[]', space=smem, size = 0x4, offset = 0x4, fixed_abs, tag = 'smem constant byte address 0x4 - core index']
  #allocation1 [shape = 'u32[144,128]{1,0:T(1,128)}', space=vmem, size = 0x12000, scoped, tag = 'internal scratch']
  %s0 = inlined_call_operand.vmem [shape: bf16[512,128], index: 0, kind: input, shape index: {}]
  %s1 = inlined_call_operand.vmem [shape: f32[1,128], index: 1, kind: input, shape index: {}]
  %s2 = inlined_call_operand.vmem [shape: f32[1,128], index: 2, kind: input, shape index: {}]
  %s3 = inlined_call_operand.vmem [shape: bf16[128,128], index: 3, kind: input, shape index: {}]
  %s4 = inlined_call_operand.vmem [shape: bf16[512,128], index: 4, kind: input, shape index: {}]
  %s5 = inlined_call_operand.vmem [shape: f32[512,128], index: 5, kind: output, shape index: {}]
  %s6 = sld [smem:[#allocation0]]
  $region30: #{preact_bottleneck_forward.7} parent=0
    _
  %s8 = ssub.s32 1, %s6
  %s9 = scalar_select 0, %s8, %s6
  // Predicated region
  $region2: #{preact_bottleneck_forward.7} parent=0 // pred_check
    _
  $region3: #{preact_bottleneck_forward.7} parent=0 // pred_check_branch
    %11 = sbr.rel (0) target = $region5
  $region4: #{preact_bottleneck_forward.7} parent=0 // pred_region
    _
  $region5: #{preact_bottleneck_forward.7} parent=0 // pred_fallthru
    _
  // Predicated region
  $region6: #{preact_bottleneck_forward.7} parent=0 // pred_check
    _
  $region7: #{preact_bottleneck_forward.7} parent=0 // pred_check_branch
    %13 = sbr.rel (0) target = $region9
  $region8: #{preact_bottleneck_forward.7} parent=0 // pred_region
    _
  $region9: #{preact_bottleneck_forward.7} parent=0 // pred_fallthru
    _
  // Predicated region
  $region10: #{preact_bottleneck_forward.7} parent=0 // pred_check
    _
  $region11: #{preact_bottleneck_forward.7} parent=0 // pred_check_branch
    %15 = sbr.rel (0) target = $region13
  $region12: #{preact_bottleneck_forward.7} parent=0 // pred_region
    _
  $region13: #{preact_bottleneck_forward.7} parent=0 // pred_fallthru
    _
  // Predicated region
  $region14: #{preact_bottleneck_forward.7} parent=0 // pred_check
    _
  $region15: #{preact_bottleneck_forward.7} parent=0 // pred_check_branch
    %17 = sbr.rel (0) target = $region17
  $region16: #{preact_bottleneck_forward.7} parent=0 // pred_region
    _
  $region17: #{preact_bottleneck_forward.7} parent=0 // pred_fallthru
    _
  // Predicated region
  $region18: #{preact_bottleneck_forward.7} parent=0 // pred_check
    _
  $region19: #{preact_bottleneck_forward.7} parent=0 // pred_check_branch
    %19 = sbr.rel (0) target = $region21
  $region20: #{preact_bottleneck_forward.7} parent=0 // pred_region
    _
  $region21: #{preact_bottleneck_forward.7} parent=0 // pred_fallthru
    _
  %v21 = vld [vmem:[%s0] sm:$0xf]
  %v22 = vld [vmem:[%s0 + $0x4] sm:$0xf]
  %v23 = vld [vmem:[%s0 + $0x8] sm:$0xf]
  %v24 = vld [vmem:[%s0 + $0xc] sm:$0xf]
  %v25 = vld [vmem:[%s0 + $0x10] sm:$0xf]
  %v26 = vld [vmem:[%s0 + $0x14] sm:$0xf]
  %v27 = vld [vmem:[%s0 + $0x18] sm:$0xf]
  %v28 = vld [vmem:[%s0 + $0x1c] sm:$0xf]
  %v29 = vld [vmem:[%s0 + $0x20] sm:$0xf]
  %v30 = vld [vmem:[%s0 + $0x24] sm:$0xf]
  %v31 = vld [vmem:[%s0 + $0x28] sm:$0xf]
  %v32 = vld [vmem:[%s0 + $0x2c] sm:$0xf]
  %v33 = vld [vmem:[%s0 + $0x30] sm:$0xf]
  %v34 = vld [vmem:[%s0 + $0x34] sm:$0xf]
  %v35 = vld [vmem:[%s0 + $0x38] sm:$0xf]
  %v36 = vld [vmem:[%s0 + $0x3c] sm:$0xf]
  %v37 = vld [vmem:[%s0 + $0x40] sm:$0xf]
  %v38 = vld [vmem:[%s0 + $0x44] sm:$0xf]
  %v39 = vld [vmem:[%s0 + $0x48] sm:$0xf]
  %v40 = vld [vmem:[%s0 + $0x4c] sm:$0xf]
  %v41 = vld [vmem:[%s0 + $0x50] sm:$0xf]
  %v42 = vld [vmem:[%s0 + $0x54] sm:$0xf]
  %v43 = vld [vmem:[%s0 + $0x58] sm:$0xf]
  %v44 = vld [vmem:[%s0 + $0x5c] sm:$0xf]
  %v45 = vld [vmem:[%s0 + $0x60] sm:$0xf]
  %v46 = vld [vmem:[%s0 + $0x64] sm:$0xf]
  %v47 = vld [vmem:[%s0 + $0x68] sm:$0xf]
  %v48 = vld [vmem:[%s0 + $0x6c] sm:$0xf]
  %v49 = vld [vmem:[%s0 + $0x70] sm:$0xf]
  %v50 = vld [vmem:[%s0 + $0x74] sm:$0xf]
  %v51 = vld [vmem:[%s0 + $0x78] sm:$0xf]
  %v52 = vld [vmem:[%s0 + $0x7c] sm:$0xf]
  %v53 = vld [vmem:[%s0 + $0x80] sm:$0xf]
  %v54 = vld [vmem:[%s0 + $0x84] sm:$0xf]
  %v55 = vld [vmem:[%s0 + $0x88] sm:$0xf]
  %v56 = vld [vmem:[%s0 + $0x8c] sm:$0xf]
  %v57 = vld [vmem:[%s0 + $0x90] sm:$0xf]
  %v58 = vld [vmem:[%s0 + $0x94] sm:$0xf]
  %v59 = vld [vmem:[%s0 + $0x98] sm:$0xf]
  %v60 = vld [vmem:[%s0 + $0x9c] sm:$0xf]
  %v61 = vld [vmem:[%s0 + $0xa0] sm:$0xf]
  %v62 = vld [vmem:[%s0 + $0xa4] sm:$0xf]
  %v63 = vld [vmem:[%s0 + $0xa8] sm:$0xf]
  %v64 = vld [vmem:[%s0 + $0xac] sm:$0xf]
  %v65 = vld [vmem:[%s0 + $0xb0] sm:$0xf]
  %v66 = vld [vmem:[%s0 + $0xb4] sm:$0xf]
  %v67 = vld [vmem:[%s0 + $0xb8] sm:$0xf]
  %v68 = vld [vmem:[%s0 + $0xbc] sm:$0xf]
  %v69 = vld [vmem:[%s0 + $0xc0] sm:$0xf]
  %v70 = vld [vmem:[%s0 + $0xc4] sm:$0xf]
  %v71 = vld [vmem:[%s0 + $0xc8] sm:$0xf]
  %v72 = vld [vmem:[%s0 + $0xcc] sm:$0xf]
  %v73 = vld [vmem:[%s0 + $0xd0] sm:$0xf]
  %v74 = vld [vmem:[%s0 + $0xd4] sm:$0xf]
  %v75 = vld [vmem:[%s0 + $0xd8] sm:$0xf]
  %v76 = vld [vmem:[%s0 + $0xdc] sm:$0xf]
  %v77 = vld [vmem:[%s0 + $0xe0] sm:$0xf]
  %v78 = vld [vmem:[%s0 + $0xe4] sm:$0xf]
  %v79 = vld [vmem:[%s0 + $0xe8] sm:$0xf]
  %v80 = vld [vmem:[%s0 + $0xec] sm:$0xf]
  %v81 = vld [vmem:[%s0 + $0xf0] sm:$0xf]
  %v82 = vld [vmem:[%s0 + $0xf4] sm:$0xf]
  %v83 = vld [vmem:[%s0 + $0xf8] sm:$0xf]
  %v84 = vld [vmem:[%s0 + $0xfc] sm:$0xf]
  %v85 = vunpack.c.l.bf16 %v21
  %v86 = vunpack.c.l.bf16 %v22
  %v87 = vunpack.c.l.bf16 %v23
  %v88 = vunpack.c.l.bf16 %v24
  %v89 = vunpack.c.l.bf16 %v25
  %v90 = vunpack.c.l.bf16 %v26
  %v91 = vunpack.c.l.bf16 %v27
  %v92 = vunpack.c.l.bf16 %v28
  %v93 = vunpack.c.l.bf16 %v29
  %v94 = vunpack.c.l.bf16 %v30
  %v95 = vunpack.c.l.bf16 %v31
  %v96 = vunpack.c.l.bf16 %v32
  %v97 = vunpack.c.l.bf16 %v33
  %v98 = vunpack.c.l.bf16 %v34
  %v99 = vunpack.c.l.bf16 %v35
  %v100 = vunpack.c.l.bf16 %v36
  %v101 = vunpack.c.l.bf16 %v37
  %v102 = vunpack.c.l.bf16 %v38
  %v103 = vunpack.c.l.bf16 %v39
  %v104 = vunpack.c.l.bf16 %v40
  %v105 = vunpack.c.l.bf16 %v41
  %v106 = vunpack.c.l.bf16 %v42
  %v107 = vunpack.c.l.bf16 %v43
  %v108 = vunpack.c.l.bf16 %v44
  %v109 = vunpack.c.l.bf16 %v45
  %v110 = vunpack.c.l.bf16 %v46
  %v111 = vunpack.c.l.bf16 %v47
  %v112 = vunpack.c.l.bf16 %v48
  %v113 = vunpack.c.l.bf16 %v49
  %v114 = vunpack.c.l.bf16 %v50
  %v115 = vunpack.c.l.bf16 %v51
  %v116 = vunpack.c.l.bf16 %v52
  %v117 = vunpack.c.l.bf16 %v53
  %v118 = vunpack.c.l.bf16 %v54
  %v119 = vunpack.c.l.bf16 %v55
  %v120 = vunpack.c.l.bf16 %v56
  %v121 = vunpack.c.l.bf16 %v57
  %v122 = vunpack.c.l.bf16 %v58
  %v123 = vunpack.c.l.bf16 %v59
  %v124 = vunpack.c.l.bf16 %v60
  %v125 = vunpack.c.l.bf16 %v61
  %v126 = vunpack.c.l.bf16 %v62
  %v127 = vunpack.c.l.bf16 %v63
  %v128 = vunpack.c.l.bf16 %v64
  %v129 = vunpack.c.l.bf16 %v65
  %v130 = vunpack.c.l.bf16 %v66
  %v131 = vunpack.c.l.bf16 %v67
  %v132 = vunpack.c.l.bf16 %v68
  %v133 = vunpack.c.l.bf16 %v69
  %v134 = vunpack.c.l.bf16 %v70
  %v135 = vunpack.c.l.bf16 %v71
  %v136 = vunpack.c.l.bf16 %v72
  %v137 = vunpack.c.l.bf16 %v73
  %v138 = vunpack.c.l.bf16 %v74
  %v139 = vunpack.c.l.bf16 %v75
  %v140 = vunpack.c.l.bf16 %v76
  %v141 = vunpack.c.l.bf16 %v77
  %v142 = vunpack.c.l.bf16 %v78
  %v143 = vunpack.c.l.bf16 %v79
  %v144 = vunpack.c.l.bf16 %v80
  %v145 = vunpack.c.l.bf16 %v81
  %v146 = vunpack.c.l.bf16 %v82
  %v147 = vunpack.c.l.bf16 %v83
  %v148 = vunpack.c.l.bf16 %v84
  %v149 = vld [vmem:[%s1] sm:$0x1]
  %v151 = vlaneseq
  %v152 = vshrl.u32 %v151, 7
  %v153 = vsub.s32 0, %v152
  %v154 = vrot.slane %v149, %v153
  %v156 = vmul.f32 %v85, %v154
  %v157 = vmul.f32 %v86, %v154
  %v158 = vmul.f32 %v87, %v154
  %v159 = vmul.f32 %v88, %v154
  %v160 = vmul.f32 %v89, %v154
  %v161 = vmul.f32 %v90, %v154
  %v162 = vmul.f32 %v91, %v154
  %v163 = vmul.f32 %v92, %v154
  %v164 = vmul.f32 %v93, %v154
  %v165 = vmul.f32 %v94, %v154
  %v166 = vmul.f32 %v95, %v154
  %v167 = vmul.f32 %v96, %v154
  %v168 = vmul.f32 %v97, %v154
  %v169 = vmul.f32 %v98, %v154
  %v170 = vmul.f32 %v99, %v154
  %v171 = vmul.f32 %v100, %v154
  %v172 = vmul.f32 %v101, %v154
  %v173 = vmul.f32 %v102, %v154
  %v174 = vmul.f32 %v103, %v154
  %v175 = vmul.f32 %v104, %v154
  %v176 = vmul.f32 %v105, %v154
  %v177 = vmul.f32 %v106, %v154
  %v178 = vmul.f32 %v107, %v154
  %v179 = vmul.f32 %v108, %v154
  %v180 = vmul.f32 %v109, %v154
  %v181 = vmul.f32 %v110, %v154
  %v182 = vmul.f32 %v111, %v154
  %v183 = vmul.f32 %v112, %v154
  %v184 = vmul.f32 %v113, %v154
  %v185 = vmul.f32 %v114, %v154
  %v186 = vmul.f32 %v115, %v154
  %v187 = vmul.f32 %v116, %v154
  %v188 = vmul.f32 %v117, %v154
  %v189 = vmul.f32 %v118, %v154
  %v190 = vmul.f32 %v119, %v154
  %v191 = vmul.f32 %v120, %v154
  %v192 = vmul.f32 %v121, %v154
  %v193 = vmul.f32 %v122, %v154
  %v194 = vmul.f32 %v123, %v154
  %v195 = vmul.f32 %v124, %v154
  %v196 = vmul.f32 %v125, %v154
  %v197 = vmul.f32 %v126, %v154
  %v198 = vmul.f32 %v127, %v154
  %v199 = vmul.f32 %v128, %v154
  %v200 = vmul.f32 %v129, %v154
  %v201 = vmul.f32 %v130, %v154
  %v202 = vmul.f32 %v131, %v154
  %v203 = vmul.f32 %v132, %v154
  %v204 = vmul.f32 %v133, %v154
  %v205 = vmul.f32 %v134, %v154
  %v206 = vmul.f32 %v135, %v154
  %v207 = vmul.f32 %v136, %v154
  %v208 = vmul.f32 %v137, %v154
  %v209 = vmul.f32 %v138, %v154
  %v210 = vmul.f32 %v139, %v154
  %v211 = vmul.f32 %v140, %v154
  %v212 = vmul.f32 %v141, %v154
  %v213 = vmul.f32 %v142, %v154
  %v214 = vmul.f32 %v143, %v154
  %v215 = vmul.f32 %v144, %v154
  %v216 = vmul.f32 %v145, %v154
  %v217 = vmul.f32 %v146, %v154
  %v218 = vmul.f32 %v147, %v154
  %v219 = vmul.f32 %v148, %v154
  %v220 = vld [vmem:[%s2] sm:$0x1]
  %v222 = vlaneseq
  %v223 = vshrl.u32 %v222, 7
  %v224 = vsub.s32 0, %v223
  %v225 = vrot.slane %v220, %v224
  %v227 = vadd.f32 %v156, %v225
  %v228 = vadd.f32 %v157, %v225
  %v229 = vadd.f32 %v158, %v225
  %v230 = vadd.f32 %v159, %v225
  %v231 = vadd.f32 %v160, %v225
  %v232 = vadd.f32 %v161, %v225
  %v233 = vadd.f32 %v162, %v225
  %v234 = vadd.f32 %v163, %v225
  %v235 = vadd.f32 %v164, %v225
  %v236 = vadd.f32 %v165, %v225
  %v237 = vadd.f32 %v166, %v225
  %v238 = vadd.f32 %v167, %v225
  %v239 = vadd.f32 %v168, %v225
  %v240 = vadd.f32 %v169, %v225
  %v241 = vadd.f32 %v170, %v225
  %v242 = vadd.f32 %v171, %v225
  %v243 = vadd.f32 %v172, %v225
  %v244 = vadd.f32 %v173, %v225
  %v245 = vadd.f32 %v174, %v225
  %v246 = vadd.f32 %v175, %v225
  %v247 = vadd.f32 %v176, %v225
  %v248 = vadd.f32 %v177, %v225
  %v249 = vadd.f32 %v178, %v225
  %v250 = vadd.f32 %v179, %v225
  %v251 = vadd.f32 %v180, %v225
  %v252 = vadd.f32 %v181, %v225
  %v253 = vadd.f32 %v182, %v225
  %v254 = vadd.f32 %v183, %v225
  %v255 = vadd.f32 %v184, %v225
  %v256 = vadd.f32 %v185, %v225
  %v257 = vadd.f32 %v186, %v225
  %v258 = vadd.f32 %v187, %v225
  %v259 = vadd.f32 %v188, %v225
  %v260 = vadd.f32 %v189, %v225
  %v261 = vadd.f32 %v190, %v225
  %v262 = vadd.f32 %v191, %v225
  %v263 = vadd.f32 %v192, %v225
  %v264 = vadd.f32 %v193, %v225
  %v265 = vadd.f32 %v194, %v225
  %v266 = vadd.f32 %v195, %v225
  %v267 = vadd.f32 %v196, %v225
  %v268 = vadd.f32 %v197, %v225
  %v269 = vadd.f32 %v198, %v225
  %v270 = vadd.f32 %v199, %v225
  %v271 = vadd.f32 %v200, %v225
  %v272 = vadd.f32 %v201, %v225
  %v273 = vadd.f32 %v202, %v225
  %v274 = vadd.f32 %v203, %v225
  %v275 = vadd.f32 %v204, %v225
  %v276 = vadd.f32 %v205, %v225
  %v277 = vadd.f32 %v206, %v225
  %v278 = vadd.f32 %v207, %v225
  %v279 = vadd.f32 %v208, %v225
  %v280 = vadd.f32 %v209, %v225
  %v281 = vadd.f32 %v210, %v225
  %v282 = vadd.f32 %v211, %v225
  %v283 = vadd.f32 %v212, %v225
  %v284 = vadd.f32 %v213, %v225
  %v285 = vadd.f32 %v214, %v225
  %v286 = vadd.f32 %v215, %v225
  %v287 = vadd.f32 %v216, %v225
  %v288 = vadd.f32 %v217, %v225
  %v289 = vadd.f32 %v218, %v225
  %v290 = vadd.f32 %v219, %v225
  %v291 = vmax.f32 %v227, 0.0
  %v292 = vmax.f32 %v228, 0.0
  %v293 = vmax.f32 %v229, 0.0
  %v294 = vmax.f32 %v230, 0.0
  %v295 = vmax.f32 %v231, 0.0
  %v296 = vmax.f32 %v232, 0.0
  %v297 = vmax.f32 %v233, 0.0
  %v298 = vmax.f32 %v234, 0.0
  %v299 = vmax.f32 %v235, 0.0
  %v300 = vmax.f32 %v236, 0.0
  %v301 = vmax.f32 %v237, 0.0
  %v302 = vmax.f32 %v238, 0.0
  %v303 = vmax.f32 %v239, 0.0
  %v304 = vmax.f32 %v240, 0.0
  %v305 = vmax.f32 %v241, 0.0
  %v306 = vmax.f32 %v242, 0.0
  %v307 = vmax.f32 %v243, 0.0
  %v308 = vmax.f32 %v244, 0.0
  %v309 = vmax.f32 %v245, 0.0
  %v310 = vmax.f32 %v246, 0.0
  %v311 = vmax.f32 %v247, 0.0
  %v312 = vmax.f32 %v248, 0.0
  %v313 = vmax.f32 %v249, 0.0
  %v314 = vmax.f32 %v250, 0.0
  %v315 = vmax.f32 %v251, 0.0
  %v316 = vmax.f32 %v252, 0.0
  %v317 = vmax.f32 %v253, 0.0
  %v318 = vmax.f32 %v254, 0.0
  %v319 = vmax.f32 %v255, 0.0
  %v320 = vmax.f32 %v256, 0.0
  %v321 = vmax.f32 %v257, 0.0
  %v322 = vmax.f32 %v258, 0.0
  %v323 = vmax.f32 %v259, 0.0
  %v324 = vmax.f32 %v260, 0.0
  %v325 = vmax.f32 %v261, 0.0
  %v326 = vmax.f32 %v262, 0.0
  %v327 = vmax.f32 %v263, 0.0
  %v328 = vmax.f32 %v264, 0.0
  %v329 = vmax.f32 %v265, 0.0
  %v330 = vmax.f32 %v266, 0.0
  %v331 = vmax.f32 %v267, 0.0
  %v332 = vmax.f32 %v268, 0.0
  %v333 = vmax.f32 %v269, 0.0
  %v334 = vmax.f32 %v270, 0.0
  %v335 = vmax.f32 %v271, 0.0
  %v336 = vmax.f32 %v272, 0.0
  %v337 = vmax.f32 %v273, 0.0
  %v338 = vmax.f32 %v274, 0.0
  %v339 = vmax.f32 %v275, 0.0
  %v340 = vmax.f32 %v276, 0.0
  %v341 = vmax.f32 %v277, 0.0
  %v342 = vmax.f32 %v278, 0.0
  %v343 = vmax.f32 %v279, 0.0
  %v344 = vmax.f32 %v280, 0.0
  %v345 = vmax.f32 %v281, 0.0
  %v346 = vmax.f32 %v282, 0.0
  %v347 = vmax.f32 %v283, 0.0
  %v348 = vmax.f32 %v284, 0.0
  %v349 = vmax.f32 %v285, 0.0
  %v350 = vmax.f32 %v286, 0.0
  %v351 = vmax.f32 %v287, 0.0
  %v352 = vmax.f32 %v288, 0.0
  %v353 = vmax.f32 %v289, 0.0
  %v354 = vmax.f32 %v290, 0.0
  %v355 = vpack.c.bf16 %v292, %v291
  %v356 = vpack.c.bf16 %v294, %v293
  %v357 = vpack.c.bf16 %v296, %v295
  %v358 = vpack.c.bf16 %v298, %v297
  %v359 = vpack.c.bf16 %v300, %v299
  %v360 = vpack.c.bf16 %v302, %v301
  %v361 = vpack.c.bf16 %v304, %v303
  %v362 = vpack.c.bf16 %v306, %v305
  %v363 = vpack.c.bf16 %v308, %v307
  %v364 = vpack.c.bf16 %v310, %v309
  %v365 = vpack.c.bf16 %v312, %v311
  %v366 = vpack.c.bf16 %v314, %v313
  %v367 = vpack.c.bf16 %v316, %v315
  %v368 = vpack.c.bf16 %v318, %v317
  %v369 = vpack.c.bf16 %v320, %v319
  %v370 = vpack.c.bf16 %v322, %v321
  %v371 = vpack.c.bf16 %v324, %v323
  %v372 = vpack.c.bf16 %v326, %v325
  %v373 = vpack.c.bf16 %v328, %v327
  %v374 = vpack.c.bf16 %v330, %v329
  %v375 = vpack.c.bf16 %v332, %v331
  %v376 = vpack.c.bf16 %v334, %v333
  %v377 = vpack.c.bf16 %v336, %v335
  %v378 = vpack.c.bf16 %v338, %v337
  %v379 = vpack.c.bf16 %v340, %v339
  %v380 = vpack.c.bf16 %v342, %v341
  %v381 = vpack.c.bf16 %v344, %v343
  %v382 = vpack.c.bf16 %v346, %v345
  %v383 = vpack.c.bf16 %v348, %v347
  %v384 = vpack.c.bf16 %v350, %v349
  %v385 = vpack.c.bf16 %v352, %v351
  %v386 = vpack.c.bf16 %v354, %v353
  %v387 = vld [vmem:[%s3] sm:$0xf]
  %v388 = vld [vmem:[%s3 + $0x4] sm:$0xf]
  %v389 = vld [vmem:[%s3 + $0x8] sm:$0xf]
  %v390 = vld [vmem:[%s3 + $0xc] sm:$0xf]
  %v391 = vld [vmem:[%s3 + $0x10] sm:$0xf]
  %v392 = vld [vmem:[%s3 + $0x14] sm:$0xf]
  %v393 = vld [vmem:[%s3 + $0x18] sm:$0xf]
  %v394 = vld [vmem:[%s3 + $0x1c] sm:$0xf]
  %v395 = vld [vmem:[%s3 + $0x20] sm:$0xf]
  %v396 = vld [vmem:[%s3 + $0x24] sm:$0xf]
  %v397 = vld [vmem:[%s3 + $0x28] sm:$0xf]
  %v398 = vld [vmem:[%s3 + $0x2c] sm:$0xf]
  %v399 = vld [vmem:[%s3 + $0x30] sm:$0xf]
  %v400 = vld [vmem:[%s3 + $0x34] sm:$0xf]
  %v401 = vld [vmem:[%s3 + $0x38] sm:$0xf]
  %v402 = vld [vmem:[%s3 + $0x3c] sm:$0xf]
  %v403 = vld [vmem:[%s4] sm:$0xf]
  %v404 = vld [vmem:[%s4 + $0x4] sm:$0xf]
  %v405 = vld [vmem:[%s4 + $0x8] sm:$0xf]
  %v406 = vld [vmem:[%s4 + $0xc] sm:$0xf]
  %v407 = vld [vmem:[%s4 + $0x10] sm:$0xf]
  %v408 = vld [vmem:[%s4 + $0x14] sm:$0xf]
  %v409 = vld [vmem:[%s4 + $0x18] sm:$0xf]
  %v410 = vld [vmem:[%s4 + $0x1c] sm:$0xf]
  %v411 = vld [vmem:[%s4 + $0x20] sm:$0xf]
  %v412 = vld [vmem:[%s4 + $0x24] sm:$0xf]
  %v413 = vld [vmem:[%s4 + $0x28] sm:$0xf]
  %v414 = vld [vmem:[%s4 + $0x2c] sm:$0xf]
  %v415 = vld [vmem:[%s4 + $0x30] sm:$0xf]
  %v416 = vld [vmem:[%s4 + $0x34] sm:$0xf]
  %v417 = vld [vmem:[%s4 + $0x38] sm:$0xf]
  %v418 = vld [vmem:[%s4 + $0x3c] sm:$0xf]
  %v419 = vld [vmem:[%s4 + $0x40] sm:$0xf]
  %v420 = vld [vmem:[%s4 + $0x44] sm:$0xf]
  %v421 = vld [vmem:[%s4 + $0x48] sm:$0xf]
  %v422 = vld [vmem:[%s4 + $0x4c] sm:$0xf]
  %v423 = vld [vmem:[%s4 + $0x50] sm:$0xf]
  %v424 = vld [vmem:[%s4 + $0x54] sm:$0xf]
  %v425 = vld [vmem:[%s4 + $0x58] sm:$0xf]
  %v426 = vld [vmem:[%s4 + $0x5c] sm:$0xf]
  %v427 = vld [vmem:[%s4 + $0x60] sm:$0xf]
  %v428 = vld [vmem:[%s4 + $0x64] sm:$0xf]
  %v429 = vld [vmem:[%s4 + $0x68] sm:$0xf]
  %v430 = vld [vmem:[%s4 + $0x6c] sm:$0xf]
  %v431 = vld [vmem:[%s4 + $0x70] sm:$0xf]
  %v432 = vld [vmem:[%s4 + $0x74] sm:$0xf]
  %v433 = vld [vmem:[%s4 + $0x78] sm:$0xf]
  %v434 = vld [vmem:[%s4 + $0x7c] sm:$0xf]
  %v435 = vld [vmem:[%s4 + $0x80] sm:$0xf]
  %v436 = vld [vmem:[%s4 + $0x84] sm:$0xf]
  %v437 = vld [vmem:[%s4 + $0x88] sm:$0xf]
  %v438 = vld [vmem:[%s4 + $0x8c] sm:$0xf]
  %v439 = vld [vmem:[%s4 + $0x90] sm:$0xf]
  %v440 = vld [vmem:[%s4 + $0x94] sm:$0xf]
  %v441 = vld [vmem:[%s4 + $0x98] sm:$0xf]
  %v442 = vld [vmem:[%s4 + $0x9c] sm:$0xf]
  %v443 = vld [vmem:[%s4 + $0xa0] sm:$0xf]
  %v444 = vld [vmem:[%s4 + $0xa4] sm:$0xf]
  %v445 = vld [vmem:[%s4 + $0xa8] sm:$0xf]
  %v446 = vld [vmem:[%s4 + $0xac] sm:$0xf]
  %v447 = vld [vmem:[%s4 + $0xb0] sm:$0xf]
  %v448 = vld [vmem:[%s4 + $0xb4] sm:$0xf]
  %v449 = vld [vmem:[%s4 + $0xb8] sm:$0xf]
  %v450 = vld [vmem:[%s4 + $0xbc] sm:$0xf]
  %v451 = vld [vmem:[%s4 + $0xc0] sm:$0xf]
  %v452 = vld [vmem:[%s4 + $0xc4] sm:$0xf]
  %v453 = vld [vmem:[%s4 + $0xc8] sm:$0xf]
  %v454 = vld [vmem:[%s4 + $0xcc] sm:$0xf]
  %v455 = vld [vmem:[%s4 + $0xd0] sm:$0xf]
  %v456 = vld [vmem:[%s4 + $0xd4] sm:$0xf]
  %v457 = vld [vmem:[%s4 + $0xd8] sm:$0xf]
  %v458 = vld [vmem:[%s4 + $0xdc] sm:$0xf]
  %v459 = vld [vmem:[%s4 + $0xe0] sm:$0xf]
  %v460 = vld [vmem:[%s4 + $0xe4] sm:$0xf]
  %v461 = vld [vmem:[%s4 + $0xe8] sm:$0xf]
  %v462 = vld [vmem:[%s4 + $0xec] sm:$0xf]
  %v463 = vld [vmem:[%s4 + $0xf0] sm:$0xf]
  %v464 = vld [vmem:[%s4 + $0xf4] sm:$0xf]
  %v465 = vld [vmem:[%s4 + $0xf8] sm:$0xf]
  %v466 = vld [vmem:[%s4 + $0xfc] sm:$0xf]
  %v467 = vunpack.c.l.bf16 %v403
  %v468 = vunpack.c.l.bf16 %v404
  %v469 = vunpack.c.l.bf16 %v405
  %v470 = vunpack.c.l.bf16 %v406
  %v471 = vunpack.c.l.bf16 %v407
  %v472 = vunpack.c.l.bf16 %v408
  %v473 = vunpack.c.l.bf16 %v409
  %v474 = vunpack.c.l.bf16 %v410
  %v475 = vunpack.c.l.bf16 %v411
  %v476 = vunpack.c.l.bf16 %v412
  %v477 = vunpack.c.l.bf16 %v413
  %v478 = vunpack.c.l.bf16 %v414
  %v479 = vunpack.c.l.bf16 %v415
  %v480 = vunpack.c.l.bf16 %v416
  %v481 = vunpack.c.l.bf16 %v417
  %v482 = vunpack.c.l.bf16 %v418
  %v483 = vunpack.c.l.bf16 %v419
  %v484 = vunpack.c.l.bf16 %v420
  %v485 = vunpack.c.l.bf16 %v421
  %v486 = vunpack.c.l.bf16 %v422
  %v487 = vunpack.c.l.bf16 %v423
  %v488 = vunpack.c.l.bf16 %v424
  %v489 = vunpack.c.l.bf16 %v425
  %v490 = vunpack.c.l.bf16 %v426
  %v491 = vunpack.c.l.bf16 %v427
  %v492 = vunpack.c.l.bf16 %v428
  %v493 = vunpack.c.l.bf16 %v429
  %v494 = vunpack.c.l.bf16 %v430
  %v495 = vunpack.c.l.bf16 %v431
  %v496 = vunpack.c.l.bf16 %v432
  %v497 = vunpack.c.l.bf16 %v433
  %v498 = vunpack.c.l.bf16 %v434
  %v499 = vunpack.c.l.bf16 %v435
  %v500 = vunpack.c.l.bf16 %v436
  %v501 = vunpack.c.l.bf16 %v437
  %v502 = vunpack.c.l.bf16 %v438
  %v503 = vunpack.c.l.bf16 %v439
  %v504 = vunpack.c.l.bf16 %v440
  %v505 = vunpack.c.l.bf16 %v441
  %v506 = vunpack.c.l.bf16 %v442
  %v507 = vunpack.c.l.bf16 %v443
  %v508 = vunpack.c.l.bf16 %v444
  %v509 = vunpack.c.l.bf16 %v445
  %v510 = vunpack.c.l.bf16 %v446
  %v511 = vunpack.c.l.bf16 %v447
  %v512 = vunpack.c.l.bf16 %v448
  %v513 = vunpack.c.l.bf16 %v449
  %v514 = vunpack.c.l.bf16 %v450
  %v515 = vunpack.c.l.bf16 %v451
  %v516 = vunpack.c.l.bf16 %v452
  %v517 = vunpack.c.l.bf16 %v453
  %v518 = vunpack.c.l.bf16 %v454
  %v519 = vunpack.c.l.bf16 %v455
  %v520 = vunpack.c.l.bf16 %v456
  %v521 = vunpack.c.l.bf16 %v457
  %v522 = vunpack.c.l.bf16 %v458
  %v523 = vunpack.c.l.bf16 %v459
  %v524 = vunpack.c.l.bf16 %v460
  %v525 = vunpack.c.l.bf16 %v461
  %v526 = vunpack.c.l.bf16 %v462
  %v527 = vunpack.c.l.bf16 %v463
  %v528 = vunpack.c.l.bf16 %v464
  %v529 = vunpack.c.l.bf16 %v465
  %v530 = vunpack.c.l.bf16 %v466
  %v547 = vunpack.c.l.b16 %v387
  %v548 = vunpack.c.l.b16 %v388
  %v549 = vunpack.c.l.b16 %v389
  %v550 = vunpack.c.l.b16 %v390
  %v551 = vunpack.c.l.b16 %v391
  %v552 = vunpack.c.l.b16 %v392
  %v553 = vunpack.c.l.b16 %v393
  %v554 = vunpack.c.l.b16 %v394
  %v555 = vunpack.c.l.b16 %v395
  %v556 = vunpack.c.l.b16 %v396
  %v557 = vunpack.c.l.b16 %v397
  %v558 = vunpack.c.l.b16 %v398
  %v559 = vunpack.c.l.b16 %v399
  %v560 = vunpack.c.l.b16 %v400
  %v561 = vunpack.c.l.b16 %v401
  %v562 = vunpack.c.l.b16 %v402
  %v563 = vpack.c.b16 %v548, %v547
  %v564 = vpack.c.b16 %v550, %v549
  %v565 = vpack.c.b16 %v552, %v551
  %v566 = vpack.c.b16 %v554, %v553
  %v567 = vpack.c.b16 %v556, %v555
  %v568 = vpack.c.b16 %v558, %v557
  %v569 = vpack.c.b16 %v560, %v559
  %v570 = vpack.c.b16 %v562, %v561
  %579 = vmatprep.subr.bf16.mxu0 0
  %580 = vmatpush1.bf16.msra.mxu0 %v563
  %581 = vmatprep.subr.bf16.mxu0 0
  %582 = vmatpush1.bf16.msra.mxu0 %v564
  %583 = vmatprep.subr.bf16.mxu0 0
  %584 = vmatpush1.bf16.msra.mxu0 %v565
  %585 = vmatprep.subr.bf16.mxu0 0
  %586 = vmatpush1.bf16.msra.mxu0 %v566
  %587 = vmatprep.subr.bf16.mxu0 0
  %588 = vmatpush1.bf16.msra.mxu0 %v567
  %589 = vmatprep.subr.bf16.mxu0 0
  %590 = vmatpush1.bf16.msra.mxu0 %v568
  %591 = vmatprep.subr.bf16.mxu0 0
  %592 = vmatpush1.bf16.msra.mxu0 %v569
  %593 = vmatprep.subr.bf16.mxu0 0
  %594 = vmatpush1.bf16.msra.mxu0 %v570
  %595 = vmatprep.subr.bf16.mxu0 0
  %596 = vmatpush1.bf16.msra.mxu0 0
  %597 = vmatprep.subr.bf16.mxu0 0
  %598 = vmatpush1.bf16.msra.mxu0 0
  %599 = vmatprep.subr.bf16.mxu0 0
  %600 = vmatpush1.bf16.msra.mxu0 0
  %601 = vmatprep.subr.bf16.mxu0 0
  %602 = vmatpush1.bf16.msra.mxu0 0
  %603 = vmatprep.subr.bf16.mxu0 0
  %604 = vmatpush1.bf16.msra.mxu0 0
  %605 = vmatprep.subr.bf16.mxu0 0
  %606 = vmatpush1.bf16.msra.mxu0 0
  %607 = vmatprep.subr.bf16.mxu0 0
  %608 = vmatpush1.bf16.msra.mxu0 0
  %609 = vmatprep.subr.bf16.mxu0 0
  %610 = vmatpush1.bf16.msra.mxu0 0
  %611 = vmatprep.mubr.bf16.mxu0 0
  %612 = vmatmul.mubr.bf16.gmra.mrb[0].mxu0 %v355
  %v613 = vpop.f32.mrb[0].mxu0
  %v614 = vadd.f32 %v467, %v613
  %v615 = vpop.f32.mrb[0].mxu0
  %v616 = vpop.f32.mrb[0].mxu0
  %v617 = vadd.f32 %v468, %v616
  %v618 = vpop.f32.mrb[0].mxu0
  %619 = vmatprep.mubr.bf16.mxu0 0
  %620 = vmatmul.mubr.bf16.gmra.mrb[0].mxu0 %v356
  %v621 = vpop.f32.mrb[0].mxu0
  %v622 = vadd.f32 %v469, %v621
  %v623 = vpop.f32.mrb[0].mxu0
  %v624 = vpop.f32.mrb[0].mxu0
  %v625 = vadd.f32 %v470, %v624
  %v626 = vpop.f32.mrb[0].mxu0
  %627 = vmatprep.mubr.bf16.mxu0 0
  %628 = vmatmul.mubr.bf16.gmra.mrb[0].mxu0 %v357
  %v629 = vpop.f32.mrb[0].mxu0
  %v630 = vadd.f32 %v471, %v629
  %v631 = vpop.f32.mrb[0].mxu0
  %v632 = vpop.f32.mrb[0].mxu0
  %v633 = vadd.f32 %v472, %v632
  %v634 = vpop.f32.mrb[0].mxu0
  %635 = vmatprep.mubr.bf16.mxu0 0
  %636 = vmatmul.mubr.bf16.gmra.mrb[0].mxu0 %v358
  %v637 = vpop.f32.mrb[0].mxu0
  %v638 = vadd.f32 %v473, %v637
  %v639 = vpop.f32.mrb[0].mxu0
  %v640 = vpop.f32.mrb[0].mxu0
  %v641 = vadd.f32 %v474, %v640
  %v642 = vpop.f32.mrb[0].mxu0
  %643 = vmatprep.mubr.bf16.mxu0 0
  %644 = vmatmul.mubr.bf16.gmra.mrb[0].mxu0 %v359
  %v645 = vpop.f32.mrb[0].mxu0
  %v646 = vadd.f32 %v475, %v645
  %v647 = vpop.f32.mrb[0].mxu0
  %v648 = vpop.f32.mrb[0].mxu0
  %v649 = vadd.f32 %v476, %v648
  %v650 = vpop.f32.mrb[0].mxu0
  %651 = vmatprep.mubr.bf16.mxu0 0
  %652 = vmatmul.mubr.bf16.gmra.mrb[0].mxu0 %v360
  %v653 = vpop.f32.mrb[0].mxu0
  %v654 = vadd.f32 %v477, %v653
  %v655 = vpop.f32.mrb[0].mxu0
  %v656 = vpop.f32.mrb[0].mxu0
  %v657 = vadd.f32 %v478, %v656
  %v658 = vpop.f32.mrb[0].mxu0
  %659 = vmatprep.mubr.bf16.mxu0 0
  %660 = vmatmul.mubr.bf16.gmra.mrb[0].mxu0 %v361
  %v661 = vpop.f32.mrb[0].mxu0
  %v662 = vadd.f32 %v479, %v661
  %v663 = vpop.f32.mrb[0].mxu0
  %v664 = vpop.f32.mrb[0].mxu0
  %v665 = vadd.f32 %v480, %v664
  %v666 = vpop.f32.mrb[0].mxu0
  %667 = vmatprep.mubr.bf16.mxu0 0
  %668 = vmatmul.mubr.bf16.gmra.mrb[0].mxu0 %v362
  %v669 = vpop.f32.mrb[0].mxu0
  %v670 = vadd.f32 %v481, %v669
  %v671 = vpop.f32.mrb[0].mxu0
  %v672 = vpop.f32.mrb[0].mxu0
  %v673 = vadd.f32 %v482, %v672
  %v674 = vpop.f32.mrb[0].mxu0
  %675 = vmatprep.mubr.bf16.mxu0 0
  %676 = vmatmul.mubr.bf16.gmra.mrb[0].mxu0 %v363
  %v677 = vpop.f32.mrb[0].mxu0
  %v678 = vadd.f32 %v483, %v677
  %v679 = vpop.f32.mrb[0].mxu0
  %v680 = vpop.f32.mrb[0].mxu0
  %v681 = vadd.f32 %v484, %v680
  %v682 = vpop.f32.mrb[0].mxu0
  %683 = vmatprep.mubr.bf16.mxu0 0
  %684 = vmatmul.mubr.bf16.gmra.mrb[0].mxu0 %v364
  %v685 = vpop.f32.mrb[0].mxu0
  %v686 = vadd.f32 %v485, %v685
  %v687 = vpop.f32.mrb[0].mxu0
  %v688 = vpop.f32.mrb[0].mxu0
  %v689 = vadd.f32 %v486, %v688
  %v690 = vpop.f32.mrb[0].mxu0
  %691 = vmatprep.mubr.bf16.mxu0 0
  %692 = vmatmul.mubr.bf16.gmra.mrb[0].mxu0 %v365
  %v693 = vpop.f32.mrb[0].mxu0
  %v694 = vadd.f32 %v487, %v693
  %v695 = vpop.f32.mrb[0].mxu0
  %v696 = vpop.f32.mrb[0].mxu0
  %v697 = vadd.f32 %v488, %v696
  %v698 = vpop.f32.mrb[0].mxu0
  %699 = vmatprep.mubr.bf16.mxu0 0
  %700 = vmatmul.mubr.bf16.gmra.mrb[0].mxu0 %v366
  %v701 = vpop.f32.mrb[0].mxu0
  %v702 = vadd.f32 %v489, %v701
  %v703 = vpop.f32.mrb[0].mxu0
  %v704 = vpop.f32.mrb[0].mxu0
  %v705 = vadd.f32 %v490, %v704
  %v706 = vpop.f32.mrb[0].mxu0
  %707 = vmatprep.mubr.bf16.mxu0 0
  %708 = vmatmul.mubr.bf16.gmra.mrb[0].mxu0 %v367
  %v709 = vpop.f32.mrb[0].mxu0
  %v710 = vadd.f32 %v491, %v709
  %v711 = vpop.f32.mrb[0].mxu0
  %v712 = vpop.f32.mrb[0].mxu0
  %v713 = vadd.f32 %v492, %v712
  %v714 = vpop.f32.mrb[0].mxu0
  %715 = vmatprep.mubr.bf16.mxu0 0
  %716 = vmatmul.mubr.bf16.gmra.mrb[0].mxu0 %v368
  %v717 = vpop.f32.mrb[0].mxu0
  %v718 = vadd.f32 %v493, %v717
  %v719 = vpop.f32.mrb[0].mxu0
  %v720 = vpop.f32.mrb[0].mxu0
  %v721 = vadd.f32 %v494, %v720
  %v722 = vpop.f32.mrb[0].mxu0
  %723 = vmatprep.mubr.bf16.mxu0 0
  %724 = vmatmul.mubr.bf16.gmra.mrb[0].mxu0 %v369
  %v725 = vpop.f32.mrb[0].mxu0
  %v726 = vadd.f32 %v495, %v725
  %v727 = vpop.f32.mrb[0].mxu0
  %v728 = vpop.f32.mrb[0].mxu0
  %v729 = vadd.f32 %v496, %v728
  %v730 = vpop.f32.mrb[0].mxu0
  %731 = vmatprep.mubr.bf16.mxu0 0
  %732 = vmatmul.mubr.bf16.gmra.mrb[0].mxu0 %v370
  %v733 = vpop.f32.mrb[0].mxu0
  %v734 = vadd.f32 %v497, %v733
  %v735 = vpop.f32.mrb[0].mxu0
  %v736 = vpop.f32.mrb[0].mxu0
  %v737 = vadd.f32 %v498, %v736
  %v738 = vpop.f32.mrb[0].mxu0
  %739 = vmatprep.mubr.bf16.mxu0 0
  %740 = vmatmul.mubr.bf16.gmra.mrb[0].mxu0 %v371
  %v741 = vpop.f32.mrb[0].mxu0
  %v742 = vadd.f32 %v499, %v741
  %v743 = vpop.f32.mrb[0].mxu0
  %v744 = vpop.f32.mrb[0].mxu0
  %v745 = vadd.f32 %v500, %v744
  %v746 = vpop.f32.mrb[0].mxu0
  %747 = vmatprep.mubr.bf16.mxu0 0
  %748 = vmatmul.mubr.bf16.gmra.mrb[0].mxu0 %v372
  %v749 = vpop.f32.mrb[0].mxu0
  %v750 = vadd.f32 %v501, %v749
  %v751 = vpop.f32.mrb[0].mxu0
  %v752 = vpop.f32.mrb[0].mxu0
  %v753 = vadd.f32 %v502, %v752
  %v754 = vpop.f32.mrb[0].mxu0
  %755 = vmatprep.mubr.bf16.mxu0 0
  %756 = vmatmul.mubr.bf16.gmra.mrb[0].mxu0 %v373
  %v757 = vpop.f32.mrb[0].mxu0
  %v758 = vadd.f32 %v503, %v757
  %v759 = vpop.f32.mrb[0].mxu0
  %v760 = vpop.f32.mrb[0].mxu0
  %v761 = vadd.f32 %v504, %v760
  %v762 = vpop.f32.mrb[0].mxu0
  %763 = vmatprep.mubr.bf16.mxu0 0
  %764 = vmatmul.mubr.bf16.gmra.mrb[0].mxu0 %v374
  %v765 = vpop.f32.mrb[0].mxu0
  %v766 = vadd.f32 %v505, %v765
  %v767 = vpop.f32.mrb[0].mxu0
  %v768 = vpop.f32.mrb[0].mxu0
  %v769 = vadd.f32 %v506, %v768
  %v770 = vpop.f32.mrb[0].mxu0
  %771 = vmatprep.mubr.bf16.mxu0 0
  %772 = vmatmul.mubr.bf16.gmra.mrb[0].mxu0 %v375
  %v773 = vpop.f32.mrb[0].mxu0
  %v774 = vadd.f32 %v507, %v773
  %v775 = vpop.f32.mrb[0].mxu0
  %v776 = vpop.f32.mrb[0].mxu0
  %v777 = vadd.f32 %v508, %v776
  %v778 = vpop.f32.mrb[0].mxu0
  %779 = vmatprep.mubr.bf16.mxu0 0
  %780 = vmatmul.mubr.bf16.gmra.mrb[0].mxu0 %v376
  %v781 = vpop.f32.mrb[0].mxu0
  %v782 = vadd.f32 %v509, %v781
  %v783 = vpop.f32.mrb[0].mxu0
  %v784 = vpop.f32.mrb[0].mxu0
  %v785 = vadd.f32 %v510, %v784
  %v786 = vpop.f32.mrb[0].mxu0
  %787 = vmatprep.mubr.bf16.mxu0 0
  %788 = vmatmul.mubr.bf16.gmra.mrb[0].mxu0 %v377
  %v789 = vpop.f32.mrb[0].mxu0
  %v790 = vadd.f32 %v511, %v789
  %v791 = vpop.f32.mrb[0].mxu0
  %v792 = vpop.f32.mrb[0].mxu0
  %v793 = vadd.f32 %v512, %v792
  %v794 = vpop.f32.mrb[0].mxu0
  %795 = vmatprep.mubr.bf16.mxu0 0
  %796 = vmatmul.mubr.bf16.gmra.mrb[0].mxu0 %v378
  %v797 = vpop.f32.mrb[0].mxu0
  %v798 = vadd.f32 %v513, %v797
  %v799 = vpop.f32.mrb[0].mxu0
  %v800 = vpop.f32.mrb[0].mxu0
  %v801 = vadd.f32 %v514, %v800
  %v802 = vpop.f32.mrb[0].mxu0
  %803 = vmatprep.mubr.bf16.mxu0 0
  %804 = vmatmul.mubr.bf16.gmra.mrb[0].mxu0 %v379
  %v805 = vpop.f32.mrb[0].mxu0
  %v806 = vadd.f32 %v515, %v805
  %v807 = vpop.f32.mrb[0].mxu0
  %v808 = vpop.f32.mrb[0].mxu0
  %v809 = vadd.f32 %v516, %v808
  %v810 = vpop.f32.mrb[0].mxu0
  %811 = vmatprep.mubr.bf16.mxu0 0
  %812 = vmatmul.mubr.bf16.gmra.mrb[0].mxu0 %v380
  %v813 = vpop.f32.mrb[0].mxu0
  %v814 = vadd.f32 %v517, %v813
  %v815 = vpop.f32.mrb[0].mxu0
  %v816 = vpop.f32.mrb[0].mxu0
  %v817 = vadd.f32 %v518, %v816
  %v818 = vpop.f32.mrb[0].mxu0
  %819 = vmatprep.mubr.bf16.mxu0 0
  %820 = vmatmul.mubr.bf16.gmra.mrb[0].mxu0 %v381
  %v821 = vpop.f32.mrb[0].mxu0
  %v822 = vadd.f32 %v519, %v821
  %v823 = vpop.f32.mrb[0].mxu0
  %v824 = vpop.f32.mrb[0].mxu0
  %v825 = vadd.f32 %v520, %v824
  %v826 = vpop.f32.mrb[0].mxu0
  %827 = vmatprep.mubr.bf16.mxu0 0
  %828 = vmatmul.mubr.bf16.gmra.mrb[0].mxu0 %v382
  %v829 = vpop.f32.mrb[0].mxu0
  %v830 = vadd.f32 %v521, %v829
  %v831 = vpop.f32.mrb[0].mxu0
  %v832 = vpop.f32.mrb[0].mxu0
  %v833 = vadd.f32 %v522, %v832
  %v834 = vpop.f32.mrb[0].mxu0
  %835 = vmatprep.mubr.bf16.mxu0 0
  %836 = vmatmul.mubr.bf16.gmra.mrb[0].mxu0 %v383
  %v837 = vpop.f32.mrb[0].mxu0
  %v838 = vadd.f32 %v523, %v837
  %v839 = vpop.f32.mrb[0].mxu0
  %v840 = vpop.f32.mrb[0].mxu0
  %v841 = vadd.f32 %v524, %v840
  %v842 = vpop.f32.mrb[0].mxu0
  %843 = vmatprep.mubr.bf16.mxu0 0
  %844 = vmatmul.mubr.bf16.gmra.mrb[0].mxu0 %v384
  %v845 = vpop.f32.mrb[0].mxu0
  %v846 = vadd.f32 %v525, %v845
  %v847 = vpop.f32.mrb[0].mxu0
  %v848 = vpop.f32.mrb[0].mxu0
  %v849 = vadd.f32 %v526, %v848
  %v850 = vpop.f32.mrb[0].mxu0
  %851 = vmatprep.mubr.bf16.mxu0 0
  %852 = vmatmul.mubr.bf16.gmra.mrb[0].mxu0 %v385
  %v853 = vpop.f32.mrb[0].mxu0
  %v854 = vadd.f32 %v527, %v853
  %v855 = vpop.f32.mrb[0].mxu0
  %v856 = vpop.f32.mrb[0].mxu0
  %v857 = vadd.f32 %v528, %v856
  %v858 = vpop.f32.mrb[0].mxu0
  %859 = vmatprep.mubr.bf16.mxu0 0
  %860 = vmatmul.mubr.bf16.gmra.mrb[0].mxu0 %v386
  %v861 = vpop.f32.mrb[0].mxu0
  %v862 = vadd.f32 %v529, %v861
  %v863 = vpop.f32.mrb[0].mxu0
  %v864 = vpop.f32.mrb[0].mxu0
  %v865 = vadd.f32 %v530, %v864
  %v866 = vpop.f32.mrb[0].mxu0
  %867 = vdwg.mxu0
  %868 = vst [vmem:[%s5] sm:$0xff] %v614
  %869 = vst [vmem:[%s5 + $0x8] sm:$0xff] %v617
  %870 = vst [vmem:[%s5 + $0x10] sm:$0xff] %v622
  %871 = vst [vmem:[%s5 + $0x18] sm:$0xff] %v625
  %872 = vst [vmem:[%s5 + $0x20] sm:$0xff] %v630
  %873 = vst [vmem:[%s5 + $0x28] sm:$0xff] %v633
  %874 = vst [vmem:[%s5 + $0x30] sm:$0xff] %v638
  %875 = vst [vmem:[%s5 + $0x38] sm:$0xff] %v641
  %876 = vst [vmem:[%s5 + $0x40] sm:$0xff] %v646
  %877 = vst [vmem:[%s5 + $0x48] sm:$0xff] %v649
  %878 = vst [vmem:[%s5 + $0x50] sm:$0xff] %v654
  %879 = vst [vmem:[%s5 + $0x58] sm:$0xff] %v657
  %880 = vst [vmem:[%s5 + $0x60] sm:$0xff] %v662
  %881 = vst [vmem:[%s5 + $0x68] sm:$0xff] %v665
  %882 = vst [vmem:[%s5 + $0x70] sm:$0xff] %v670
  %883 = vst [vmem:[%s5 + $0x78] sm:$0xff] %v673
  %884 = vst [vmem:[%s5 + $0x80] sm:$0xff] %v678
  %885 = vst [vmem:[%s5 + $0x88] sm:$0xff] %v681
  %886 = vst [vmem:[%s5 + $0x90] sm:$0xff] %v686
  %887 = vst [vmem:[%s5 + $0x98] sm:$0xff] %v689
  %888 = vst [vmem:[%s5 + $0xa0] sm:$0xff] %v694
  %889 = vst [vmem:[%s5 + $0xa8] sm:$0xff] %v697
  %890 = vst [vmem:[%s5 + $0xb0] sm:$0xff] %v702
  %891 = vst [vmem:[%s5 + $0xb8] sm:$0xff] %v705
  %892 = vst [vmem:[%s5 + $0xc0] sm:$0xff] %v710
  %893 = vst [vmem:[%s5 + $0xc8] sm:$0xff] %v713
  %894 = vst [vmem:[%s5 + $0xd0] sm:$0xff] %v718
  %895 = vst [vmem:[%s5 + $0xd8] sm:$0xff] %v721
  %896 = vst [vmem:[%s5 + $0xe0] sm:$0xff] %v726
  %897 = vst [vmem:[%s5 + $0xe8] sm:$0xff] %v729
  %898 = vst [vmem:[%s5 + $0xf0] sm:$0xff] %v734
  %899 = vst [vmem:[%s5 + $0xf8] sm:$0xff] %v737
  %900 = vst [vmem:[%s5 + $0x100] sm:$0xff] %v742
  %901 = vst [vmem:[%s5 + $0x108] sm:$0xff] %v745
  %902 = vst [vmem:[%s5 + $0x110] sm:$0xff] %v750
  %903 = vst [vmem:[%s5 + $0x118] sm:$0xff] %v753
  %904 = vst [vmem:[%s5 + $0x120] sm:$0xff] %v758
  %905 = vst [vmem:[%s5 + $0x128] sm:$0xff] %v761
  %906 = vst [vmem:[%s5 + $0x130] sm:$0xff] %v766
  %907 = vst [vmem:[%s5 + $0x138] sm:$0xff] %v769
  %908 = vst [vmem:[%s5 + $0x140] sm:$0xff] %v774
  %909 = vst [vmem:[%s5 + $0x148] sm:$0xff] %v777
  %910 = vst [vmem:[%s5 + $0x150] sm:$0xff] %v782
  %911 = vst [vmem:[%s5 + $0x158] sm:$0xff] %v785
  %912 = vst [vmem:[%s5 + $0x160] sm:$0xff] %v790
  %913 = vst [vmem:[%s5 + $0x168] sm:$0xff] %v793
  %914 = vst [vmem:[%s5 + $0x170] sm:$0xff] %v798
  %915 = vst [vmem:[%s5 + $0x178] sm:$0xff] %v801
  %916 = vst [vmem:[%s5 + $0x180] sm:$0xff] %v806
  %917 = vst [vmem:[%s5 + $0x188] sm:$0xff] %v809
  %918 = vst [vmem:[%s5 + $0x190] sm:$0xff] %v814
  %919 = vst [vmem:[%s5 + $0x198] sm:$0xff] %v817
  %920 = vst [vmem:[%s5 + $0x1a0] sm:$0xff] %v822
  %921 = vst [vmem:[%s5 + $0x1a8] sm:$0xff] %v825
  %922 = vst [vmem:[%s5 + $0x1b0] sm:$0xff] %v830
  %923 = vst [vmem:[%s5 + $0x1b8] sm:$0xff] %v833
  %924 = vst [vmem:[%s5 + $0x1c0] sm:$0xff] %v838
  %925 = vst [vmem:[%s5 + $0x1c8] sm:$0xff] %v841
  %926 = vst [vmem:[%s5 + $0x1d0] sm:$0xff] %v846
  %927 = vst [vmem:[%s5 + $0x1d8] sm:$0xff] %v849
  %928 = vst [vmem:[%s5 + $0x1e0] sm:$0xff] %v854
  %929 = vst [vmem:[%s5 + $0x1e8] sm:$0xff] %v857
  %930 = vst [vmem:[%s5 + $0x1f0] sm:$0xff] %v862
  %931 = vst [vmem:[%s5 + $0x1f8] sm:$0xff] %v865
  // Predicated region
  $region22: #{preact_bottleneck_forward.7} parent=0 // pred_check
    _
  $region23: #{preact_bottleneck_forward.7} parent=0 // pred_check_branch
    %933 = sbr.rel (0) target = $region25
  $region24: #{preact_bottleneck_forward.7} parent=0 // pred_region
    _
  $region25: #{preact_bottleneck_forward.7} parent=0 // pred_fallthru
    _
  // Predicated region
  $region26: #{preact_bottleneck_forward.7} parent=0 // pred_check
    _
  $region27: #{preact_bottleneck_forward.7} parent=0 // pred_check_branch
    %935 = sbr.rel (0) target = $region29
  $region28: #{preact_bottleneck_forward.7} parent=0 // pred_region
    _
  $region29: #{preact_bottleneck_forward.7} parent=0 // pred_fallthru
    _

// kernel: preact_bottleneck_forward.6
$region0: #{preact_bottleneck_forward.6}
  #allocation0 [shape = 'u32[]', space=smem, size = 0x4, offset = 0x4, fixed_abs, tag = 'smem constant byte address 0x4 - core index']
  #allocation1 [shape = 'u32[144,128]{1,0:T(1,128)}', space=vmem, size = 0x12000, scoped, tag = 'internal scratch']
  #allocation2 [shape = 'bf16[18,18,128]{2,1,0:T(8,128)(2,1)}', space=vmem, size = 0x1b000, scoped, tag = 'scratch operand']
  %s0 = inlined_call_operand.vmem [shape: bf16[2,16,16,128], index: 0, kind: input, shape index: {}]
  %s1 = inlined_call_operand.vmem [shape: f32[1,1,128], index: 1, kind: input, shape index: {}]
  %s2 = inlined_call_operand.vmem [shape: f32[1,1,128], index: 2, kind: input, shape index: {}]
  %s3 = inlined_call_operand.vmem [shape: bf16[9,128,128], index: 3, kind: input, shape index: {}]
  %s4 = inlined_call_operand.vmem [shape: bf16[2,16,16,128], index: 4, kind: output, shape index: {0}]
  %s5 = inlined_call_operand.vmem [shape: f32[2,2,128], index: 5, kind: output, shape index: {1}]
  %6 = xla_tuple %s4, %s5
  %s7 = sld [smem:[#allocation0]]
  $region57: #{preact_bottleneck_forward.6} parent=0
    _
  %s9 = ssub.s32 1, %s7
  %s10 = scalar_select 0, %s9, %s7
  loop: start=0, step=1, limit=4
  $region2: #{preact_bottleneck_forward.6} parent=0 // loop_pre_header
    _
  $region3: #{preact_bottleneck_forward.6} parent=0 // loop_header
    %s12 = sphi 0, %s16
    %p13 = scmp.ge.s32.totalorder %s12, 4
    %s22 = sphi 0, %s24
    %s25 = sphi 0, %s22
    %s26 = sphi 0, %s25
    %s42 = sphi 0, %s26
    %s46 = sphi 0, %s46
    %s48 = sphi 0, %s46
    %s49 = sphi 0, %s48
    %s63 = sphi 0, %s49
    %s67 = sphi 0, %s67
    %s69 = sphi 0, %s67
    %s70 = sphi 0, %s69
    %s84 = sphi 0, %s70
    %s88 = sphi 0, %s88
    %s90 = sphi 0, %s88
    %s91 = sphi 0, %s90
    %s105 = sphi 0, %s91
    %s111 = sphi 0, %s113
    %s114 = sphi 0, %s111
    %s115 = sphi 0, %s114
    %s131 = sphi 0, %s115
    %s137 = sphi 0, %s139
    %s140 = sphi 0, %s137
    %s141 = sphi 0, %s140
    %s157 = sphi 0, %s141
  $region4: #{preact_bottleneck_forward.6} parent=0 // loop_header_branch
    %15 = sbr.rel (%p13) target = $region8
  $region5: #{preact_bottleneck_forward.6} parent=0 // loop_body
    %s17 = ssub.s32 %s12, 1
    %s18 = ssub.s32 %s12, 2
    %s19 = sadd.s32 %s12, 1
    %s20 = ssub.s32 %s12, %s19
    %p21 = scmp.eq.s32.totalorder %s20, 0
    %s23 = sadd.s32 %s22, 1
    %s24 = scalar_select %p21, %s22, %s23
    %p27 = pneg %p21
    %p28 = scmp.eq.s32.totalorder %s12, 1
    %p29 = por %p27, %p28
    %p30 = scmp.ne.s32.totalorder %s22, %s25
    %p31 = scmp.eq.s32.totalorder %s12, 0
    %p32 = por %p30, %p31
    %p33 = scmp.ne.s32.totalorder %s22, %s25
    %p34 = scmp.eq.s32.totalorder %s17, 1
    %p35 = por %p33, %p34
    %p36 = scmp.ne.s32.totalorder %s25, %s26
    %p37 = scmp.eq.s32.totalorder %s17, 0
    %p38 = por %p36, %p37
    %p39 = scmp.ne.s32.totalorder %s25, %s26
    %p40 = scmp.eq.s32.totalorder %s18, 1
    %p41 = por %p39, %p40
    %p43 = scmp.ne.s32.totalorder %s26, %s42
    %p44 = scmp.eq.s32.totalorder %s18, 0
    %p45 = por %p43, %p44
    %s47 = sadd.s32 %s46, 1
    %p50 = scmp.eq.s32.totalorder %s12, 1
    %p51 = scmp.ne.s32.totalorder %s46, %s48
    %p52 = scmp.eq.s32.totalorder %s12, 0
    %p53 = por %p51, %p52
    %p54 = scmp.ne.s32.totalorder %s46, %s48
    %p55 = scmp.eq.s32.totalorder %s17, 1
    %p56 = por %p54, %p55
    %p57 = scmp.ne.s32.totalorder %s48, %s49
    %p58 = scmp.eq.s32.totalorder %s17, 0
    %p59 = por %p57, %p58
    %p60 = scmp.ne.s32.totalorder %s48, %s49
    %p61 = scmp.eq.s32.totalorder %s18, 1
    %p62 = por %p60, %p61
    %p64 = scmp.ne.s32.totalorder %s49, %s63
    %p65 = scmp.eq.s32.totalorder %s18, 0
    %p66 = por %p64, %p65
    %s68 = sadd.s32 %s67, 1
    %p71 = scmp.eq.s32.totalorder %s12, 1
    %p72 = scmp.ne.s32.totalorder %s67, %s69
    %p73 = scmp.eq.s32.totalorder %s12, 0
    %p74 = por %p72, %p73
    %p75 = scmp.ne.s32.totalorder %s67, %s69
    %p76 = scmp.eq.s32.totalorder %s17, 1
    %p77 = por %p75, %p76
    %p78 = scmp.ne.s32.totalorder %s69, %s70
    %p79 = scmp.eq.s32.totalorder %s17, 0
    %p80 = por %p78, %p79
    %p81 = scmp.ne.s32.totalorder %s69, %s70
    %p82 = scmp.eq.s32.totalorder %s18, 1
    %p83 = por %p81, %p82
    %p85 = scmp.ne.s32.totalorder %s70, %s84
    %p86 = scmp.eq.s32.totalorder %s18, 0
    %p87 = por %p85, %p86
    %s89 = sadd.s32 %s88, 1
    %p92 = scmp.eq.s32.totalorder %s12, 1
    %p93 = scmp.ne.s32.totalorder %s88, %s90
    %p94 = scmp.eq.s32.totalorder %s12, 0
    %p95 = por %p93, %p94
    %p96 = scmp.ne.s32.totalorder %s88, %s90
    %p97 = scmp.eq.s32.totalorder %s17, 1
    %p98 = por %p96, %p97
    %p99 = scmp.ne.s32.totalorder %s90, %s91
    %p100 = scmp.eq.s32.totalorder %s17, 0
    %p101 = por %p99, %p100
    %p102 = scmp.ne.s32.totalorder %s90, %s91
    %p103 = scmp.eq.s32.totalorder %s18, 1
    %p104 = por %p102, %p103
    %p106 = scmp.ne.s32.totalorder %s91, %s105
    %p107 = scmp.eq.s32.totalorder %s18, 0
    %p108 = por %p106, %p107
    %s109 = ssub.s32 %s12, %s19
    %p110 = scmp.eq.s32.totalorder %s109, 0
    %s112 = sadd.s32 %s111, 1
    %s113 = scalar_select %p110, %s111, %s112
    %p116 = pneg %p110
    %p117 = scmp.eq.s32.totalorder %s12, 1
    %p118 = por %p116, %p117
    %p119 = scmp.ne.s32.totalorder %s111, %s114
    %p120 = scmp.eq.s32.totalorder %s12, 0
    %p121 = por %p119, %p120
    %p122 = scmp.ne.s32.totalorder %s111, %s114
    %p123 = scmp.eq.s32.totalorder %s17, 1
    %p124 = por %p122, %p123
    %p125 = scmp.ne.s32.totalorder %s114, %s115
    %p126 = scmp.eq.s32.totalorder %s17, 0
    %p127 = por %p125, %p126
    %p128 = scmp.ne.s32.totalorder %s114, %s115
    %p129 = scmp.eq.s32.totalorder %s18, 1
    %p130 = por %p128, %p129
    %p132 = scmp.ne.s32.totalorder %s115, %s131
    %p133 = scmp.eq.s32.totalorder %s18, 0
    %p134 = por %p132, %p133
    %s135 = ssub.s32 %s12, %s19
    %p136 = scmp.eq.s32.totalorder %s135, 0
    %s138 = sadd.s32 %s137, 1
    %s139 = scalar_select %p136, %s137, %s138
    %p142 = pneg %p136
    %p143 = scmp.eq.s32.totalorder %s12, 1
    %p144 = por %p142, %p143
    %p145 = scmp.ne.s32.totalorder %s137, %s140
    %p146 = scmp.eq.s32.totalorder %s12, 0
    %p147 = por %p145, %p146
    %p148 = scmp.ne.s32.totalorder %s137, %s140
    %p149 = scmp.eq.s32.totalorder %s17, 1
    %p150 = por %p148, %p149
    %p151 = scmp.ne.s32.totalorder %s140, %s141
    %p152 = scmp.eq.s32.totalorder %s17, 0
    %p153 = por %p151, %p152
    %p154 = scmp.ne.s32.totalorder %s140, %s141
    %p155 = scmp.eq.s32.totalorder %s18, 1
    %p156 = por %p154, %p155
    %p158 = scmp.ne.s32.totalorder %s141, %s157
    %p159 = scmp.eq.s32.totalorder %s18, 0
    %p160 = por %p158, %p159
    %p161 = scmp.le.s32.totalorder 1, %s12
    %p162 = scmp.lt.s32.totalorder %s12, 3
    %p163 = pnand %p161, %p162
    %p164 = pneg %p163
    // Predicated region
    $region9: #{preact_bottleneck_forward.6} parent=5 // pred_check
      _
    $region10: #{preact_bottleneck_forward.6} parent=5 // pred_check_branch
      %166 = sbr.rel (%p163) target = $region12
    $region11: #{preact_bottleneck_forward.6} parent=5 // pred_region
      %s167 = ssub.s32 %s12, 1
      // Predicated region
      $region13: #{preact_bottleneck_forward.6} parent=11 // pred_check
        %p168 = pneg %p59
      $region14: #{preact_bottleneck_forward.6} parent=11 // pred_check_branch
        %170 = sbr.rel (%p168) target = $region16
      $region15: #{preact_bottleneck_forward.6} parent=11 // pred_region
        _
      $region16: #{preact_bottleneck_forward.6} parent=11 // pred_fallthru
        _
      // Predicated region
      $region17: #{preact_bottleneck_forward.6} parent=11 // pred_check
        %p171 = pneg %p80
      $region18: #{preact_bottleneck_forward.6} parent=11 // pred_check_branch
        %173 = sbr.rel (%p171) target = $region20
      $region19: #{preact_bottleneck_forward.6} parent=11 // pred_region
        _
      $region20: #{preact_bottleneck_forward.6} parent=11 // pred_fallthru
        _
      // Predicated region
      $region21: #{preact_bottleneck_forward.6} parent=11 // pred_check
        %p174 = pneg %p101
      $region22: #{preact_bottleneck_forward.6} parent=11 // pred_check_branch
        %176 = sbr.rel (%p174) target = $region24
      $region23: #{preact_bottleneck_forward.6} parent=11 // pred_region
        _
      $region24: #{preact_bottleneck_forward.6} parent=11 // pred_fallthru
        _
    $region12: #{preact_bottleneck_forward.6} parent=5 // pred_fallthru
      _
    %p177 = scmp.lt.s32.totalorder %s12, 2
    // Predicated region
    $region25: #{preact_bottleneck_forward.6} parent=5 // pred_check
      %p178 = pneg %p177
    $region26: #{preact_bottleneck_forward.6} parent=5 // pred_check_branch
      %180 = sbr.rel (%p178) target = $region28
    $region27: #{preact_bottleneck_forward.6} parent=5 // pred_region
      // Predicated region
      $region29: #{preact_bottleneck_forward.6} parent=27 // pred_check
        %p181 = pneg %p32
      $region30: #{preact_bottleneck_forward.6} parent=27 // pred_check_branch
        %183 = sbr.rel (%p181) target = $region32
      $region31: #{preact_bottleneck_forward.6} parent=27 // pred_region
        %p184 = scmp.lt.s32.totalorder %s12, 1
        %s185 = scalar_select %p184, %s12, 1
        %s186 = smul.addr %s185, 32
        %s187 = smul.addr %s186, 4
        %s188 = scalar_lea.vmem %s0, %s187
      $region32: #{preact_bottleneck_forward.6} parent=27 // pred_fallthru
        _
    $region28: #{preact_bottleneck_forward.6} parent=5 // pred_fallthru
      _
    %p189 = scmp.le.s32.totalorder 1, %s12
    %p190 = scmp.lt.s32.totalorder %s12, 3
    %p191 = pnand %p189, %p190
    %p192 = pneg %p191
    // Predicated region
    $region33: #{preact_bottleneck_forward.6} parent=5 // pred_check
      _
    $region34: #{preact_bottleneck_forward.6} parent=5 // pred_check_branch
      %194 = sbr.rel (%p191) target = $region36
    $region35: #{preact_bottleneck_forward.6} parent=5 // pred_region
      %s195 = ssub.s32 %s12, 1
      %p196 = scmp.lt.s32.totalorder %s17, 1
      %s197 = scalar_select %p196, %s17, 1
      %s198 = smul.addr %s197, 32
      %s199 = smul.addr %s198, 4
      %s200 = scalar_lea.vmem %s0, %s199
      %p201 = pneg %p38
      %p202 = pneg %p35
      %p203 = pneg %p59
      %p204 = pneg %p56
      %p205 = pneg %p80
      %p206 = pneg %p77
      %p207 = pneg %p101
      %p208 = pneg %p98
      %p209 = pneg %p127
      %p210 = pneg %p124
      %p211 = scmp.lt.s32.totalorder %s17, 1
      %s212 = scalar_select %p211, %s17, 1
      %s213 = smul.addr %s212, 32
      %s214 = smul.addr %s213, 4
      %s215 = scalar_lea.vmem %s4, %s214
      %p216 = pneg %p153
      %p217 = pneg %p150
      %p218 = scmp.lt.s32.totalorder %s17, 1
      %s219 = scalar_select %p218, %s17, 1
      %s220 = smul.addr %s219, 2
      %s221 = scalar_lea.vmem %s5, %s220
      %p222 = scmp.lt.s32.totalorder %s17, 1
      %s223 = scalar_select %p222, %s17, 1
      %s224 = smul.addr %s223, 32
      %s225 = smul.addr %s224, 4
      %s226 = scalar_lea.vmem %s0, %s225
      %p227 = scmp.lt.s32.totalorder %s17, 1
      %s228 = scalar_select %p227, %s17, 1
      %s229 = smul.addr %s228, 32
      %s230 = smul.addr %s229, 4
      %s231 = scalar_lea.vmem %s4, %s230
      %p232 = scmp.lt.s32.totalorder %s17, 1
      %s233 = scalar_select %p232, %s17, 1
      %s234 = smul.addr %s233, 2
      %s235 = scalar_lea.vmem %s5, %s234
      %v237 = vld [vmem:[%s226] sm:$0xf]
      %v238 = vld [vmem:[%s226 + $0x4] sm:$0xf]
      %v239 = vld [vmem:[%s226 + $0x8] sm:$0xf]
      %v240 = vld [vmem:[%s226 + $0xc] sm:$0xf]
      %v241 = vld [vmem:[%s226 + $0x10] sm:$0xf]
      %v242 = vld [vmem:[%s226 + $0x14] sm:$0xf]
      %v243 = vld [vmem:[%s226 + $0x18] sm:$0xf]
      %v244 = vld [vmem:[%s226 + $0x1c] sm:$0xf]
      %v245 = vld [vmem:[%s226 + $0x20] sm:$0xf]
      %v246 = vld [vmem:[%s226 + $0x24] sm:$0xf]
      %v247 = vld [vmem:[%s226 + $0x28] sm:$0xf]
      %v248 = vld [vmem:[%s226 + $0x2c] sm:$0xf]
      %v249 = vld [vmem:[%s226 + $0x30] sm:$0xf]
      %v250 = vld [vmem:[%s226 + $0x34] sm:$0xf]
      %v251 = vld [vmem:[%s226 + $0x38] sm:$0xf]
      %v252 = vld [vmem:[%s226 + $0x3c] sm:$0xf]
      %v253 = vld [vmem:[%s226 + $0x40] sm:$0xf]
      %v254 = vld [vmem:[%s226 + $0x44] sm:$0xf]
      %v255 = vld [vmem:[%s226 + $0x48] sm:$0xf]
      %v256 = vld [vmem:[%s226 + $0x4c] sm:$0xf]
      %v257 = vld [vmem:[%s226 + $0x50] sm:$0xf]
      %v258 = vld [vmem:[%s226 + $0x54] sm:$0xf]
      %v259 = vld [vmem:[%s226 + $0x58] sm:$0xf]
      %v260 = vld [vmem:[%s226 + $0x5c] sm:$0xf]
      %v261 = vld [vmem:[%s226 + $0x60] sm:$0xf]
      %v262 = vld [vmem:[%s226 + $0x64] sm:$0xf]
      %v263 = vld [vmem:[%s226 + $0x68] sm:$0xf]
      %v264 = vld [vmem:[%s226 + $0x6c] sm:$0xf]
      %v265 = vld [vmem:[%s226 + $0x70] sm:$0xf]
      %v266 = vld [vmem:[%s226 + $0x74] sm:$0xf]
      %v267 = vld [vmem:[%s226 + $0x78] sm:$0xf]
      %v268 = vld [vmem:[%s226 + $0x7c] sm:$0xf]
      %v269 = vunpack.c.l.bf16 %v237
      %v270 = vunpack.c.l.bf16 %v238
      %v271 = vunpack.c.l.bf16 %v239
      %v272 = vunpack.c.l.bf16 %v240
      %v273 = vunpack.c.l.bf16 %v241
      %v274 = vunpack.c.l.bf16 %v242
      %v275 = vunpack.c.l.bf16 %v243
      %v276 = vunpack.c.l.bf16 %v244
      %v277 = vunpack.c.l.bf16 %v245
      %v278 = vunpack.c.l.bf16 %v246
      %v279 = vunpack.c.l.bf16 %v247
      %v280 = vunpack.c.l.bf16 %v248
      %v281 = vunpack.c.l.bf16 %v249
      %v282 = vunpack.c.l.bf16 %v250
      %v283 = vunpack.c.l.bf16 %v251
      %v284 = vunpack.c.l.bf16 %v252
      %v285 = vunpack.c.l.bf16 %v253
      %v286 = vunpack.c.l.bf16 %v254
      %v287 = vunpack.c.l.bf16 %v255
      %v288 = vunpack.c.l.bf16 %v256
      %v289 = vunpack.c.l.bf16 %v257
      %v290 = vunpack.c.l.bf16 %v258
      %v291 = vunpack.c.l.bf16 %v259
      %v292 = vunpack.c.l.bf16 %v260
      %v293 = vunpack.c.l.bf16 %v261
      %v294 = vunpack.c.l.bf16 %v262
      %v295 = vunpack.c.l.bf16 %v263
      %v296 = vunpack.c.l.bf16 %v264
      %v297 = vunpack.c.l.bf16 %v265
      %v298 = vunpack.c.l.bf16 %v266
      %v299 = vunpack.c.l.bf16 %v267
      %v300 = vunpack.c.l.bf16 %v268
      %v301 = vld [vmem:[%s1] sm:$0x1]
      %v303 = vlaneseq
      %v304 = vshrl.u32 %v303, 7
      %v305 = vsub.s32 0, %v304
      %v306 = vrot.slane %v301, %v305
      %v308 = vmul.f32 %v269, %v306
      %v309 = vmul.f32 %v270, %v306
      %v310 = vmul.f32 %v271, %v306
      %v311 = vmul.f32 %v272, %v306
      %v312 = vmul.f32 %v273, %v306
      %v313 = vmul.f32 %v274, %v306
      %v314 = vmul.f32 %v275, %v306
      %v315 = vmul.f32 %v276, %v306
      %v316 = vmul.f32 %v277, %v306
      %v317 = vmul.f32 %v278, %v306
      %v318 = vmul.f32 %v279, %v306
      %v319 = vmul.f32 %v280, %v306
      %v320 = vmul.f32 %v281, %v306
      %v321 = vmul.f32 %v282, %v306
      %v322 = vmul.f32 %v283, %v306
      %v323 = vmul.f32 %v284, %v306
      %v324 = vmul.f32 %v285, %v306
      %v325 = vmul.f32 %v286, %v306
      %v326 = vmul.f32 %v287, %v306
      %v327 = vmul.f32 %v288, %v306
      %v328 = vmul.f32 %v289, %v306
      %v329 = vmul.f32 %v290, %v306
      %v330 = vmul.f32 %v291, %v306
      %v331 = vmul.f32 %v292, %v306
      %v332 = vmul.f32 %v293, %v306
      %v333 = vmul.f32 %v294, %v306
      %v334 = vmul.f32 %v295, %v306
      %v335 = vmul.f32 %v296, %v306
      %v336 = vmul.f32 %v297, %v306
      %v337 = vmul.f32 %v298, %v306
      %v338 = vmul.f32 %v299, %v306
      %v339 = vmul.f32 %v300, %v306
      %v340 = vld [vmem:[%s2] sm:$0x1]
      %v342 = vlaneseq
      %v343 = vshrl.u32 %v342, 7
      %v344 = vsub.s32 0, %v343
      %v345 = vrot.slane %v340, %v344
      %v347 = vadd.f32 %v308, %v345
      %v348 = vadd.f32 %v309, %v345
      %v349 = vadd.f32 %v310, %v345
      %v350 = vadd.f32 %v311, %v345
      %v351 = vadd.f32 %v312, %v345
      %v352 = vadd.f32 %v313, %v345
      %v353 = vadd.f32 %v314, %v345
      %v354 = vadd.f32 %v315, %v345
      %v355 = vadd.f32 %v316, %v345
      %v356 = vadd.f32 %v317, %v345
      %v357 = vadd.f32 %v318, %v345
      %v358 = vadd.f32 %v319, %v345
      %v359 = vadd.f32 %v320, %v345
      %v360 = vadd.f32 %v321, %v345
      %v361 = vadd.f32 %v322, %v345
      %v362 = vadd.f32 %v323, %v345
      %v363 = vadd.f32 %v324, %v345
      %v364 = vadd.f32 %v325, %v345
      %v365 = vadd.f32 %v326, %v345
      %v366 = vadd.f32 %v327, %v345
      %v367 = vadd.f32 %v328, %v345
      %v368 = vadd.f32 %v329, %v345
      %v369 = vadd.f32 %v330, %v345
      %v370 = vadd.f32 %v331, %v345
      %v371 = vadd.f32 %v332, %v345
      %v372 = vadd.f32 %v333, %v345
      %v373 = vadd.f32 %v334, %v345
      %v374 = vadd.f32 %v335, %v345
      %v375 = vadd.f32 %v336, %v345
      %v376 = vadd.f32 %v337, %v345
      %v377 = vadd.f32 %v338, %v345
      %v378 = vadd.f32 %v339, %v345
      %v379 = vmax.f32 %v347, 0.0
      %v380 = vmax.f32 %v348, 0.0
      %v381 = vmax.f32 %v349, 0.0
      %v382 = vmax.f32 %v350, 0.0
      %v383 = vmax.f32 %v351, 0.0
      %v384 = vmax.f32 %v352, 0.0
      %v385 = vmax.f32 %v353, 0.0
      %v386 = vmax.f32 %v354, 0.0
      %v387 = vmax.f32 %v355, 0.0
      %v388 = vmax.f32 %v356, 0.0
      %v389 = vmax.f32 %v357, 0.0
      %v390 = vmax.f32 %v358, 0.0
      %v391 = vmax.f32 %v359, 0.0
      %v392 = vmax.f32 %v360, 0.0
      %v393 = vmax.f32 %v361, 0.0
      %v394 = vmax.f32 %v362, 0.0
      %v395 = vmax.f32 %v363, 0.0
      %v396 = vmax.f32 %v364, 0.0
      %v397 = vmax.f32 %v365, 0.0
      %v398 = vmax.f32 %v366, 0.0
      %v399 = vmax.f32 %v367, 0.0
      %v400 = vmax.f32 %v368, 0.0
      %v401 = vmax.f32 %v369, 0.0
      %v402 = vmax.f32 %v370, 0.0
      %v403 = vmax.f32 %v371, 0.0
      %v404 = vmax.f32 %v372, 0.0
      %v405 = vmax.f32 %v373, 0.0
      %v406 = vmax.f32 %v374, 0.0
      %v407 = vmax.f32 %v375, 0.0
      %v408 = vmax.f32 %v376, 0.0
      %v409 = vmax.f32 %v377, 0.0
      %v410 = vmax.f32 %v378, 0.0
      %v411 = vpack.c.bf16 %v380, %v379
      %v412 = vpack.c.bf16 %v382, %v381
      %v413 = vpack.c.bf16 %v384, %v383
      %v414 = vpack.c.bf16 %v386, %v385
      %v415 = vpack.c.bf16 %v388, %v387
      %v416 = vpack.c.bf16 %v390, %v389
      %v417 = vpack.c.bf16 %v392, %v391
      %v418 = vpack.c.bf16 %v394, %v393
      %v419 = vpack.c.bf16 %v396, %v395
      %v420 = vpack.c.bf16 %v398, %v397
      %v421 = vpack.c.bf16 %v400, %v399
      %v422 = vpack.c.bf16 %v402, %v401
      %v423 = vpack.c.bf16 %v404, %v403
      %v424 = vpack.c.bf16 %v406, %v405
      %v425 = vpack.c.bf16 %v408, %v407
      %v426 = vpack.c.bf16 %v410, %v409
      %427 = vst [vmem:[#allocation2] sm:$0xf] 0
      %428 = vst [vmem:[#allocation2 + $0x4] sm:$0xf] 0
      %429 = vst [vmem:[#allocation2 + $0x8] sm:$0x1] 0
      %s430 = scalar_lea.vmem [#allocation2], 204
      %431 = vst [vmem:[%s430] sm:$0xf] 0
      %432 = vst [vmem:[%s430 + $0x4] sm:$0xf] 0
      %433 = vst [vmem:[%s430 + $0x8] sm:$0x1] 0
      %vm434 = vcmask 1040384
      %vm435 = vsmask.f32 256
      %vm436 = vmand %vm434, %vm435
      %v437 = vld [vmem:[#allocation2] sm:$0x1]
      %v438 = vsel %vm436, 0, %v437
      %439 = vst [vmem:[#allocation2] sm:$0x1] %v438
      %v440 = vld [vmem:[#allocation2 + $0xc] sm:$0x1]
      %v441 = vsel %vm436, 0, %v440
      %442 = vst [vmem:[#allocation2 + $0xc] sm:$0x1] %v441
      %v443 = vld [vmem:[#allocation2 + $0x18] sm:$0x1]
      %v444 = vsel %vm436, 0, %v443
      %445 = vst [vmem:[#allocation2 + $0x18] sm:$0x1] %v444
      %v446 = vld [vmem:[#allocation2 + $0x24] sm:$0x1]
      %v447 = vsel %vm436, 0, %v446
      %448 = vst [vmem:[#allocation2 + $0x24] sm:$0x1] %v447
      %v449 = vld [vmem:[#allocation2 + $0x30] sm:$0x1]
      %v450 = vsel %vm436, 0, %v449
      %451 = vst [vmem:[#allocation2 + $0x30] sm:$0x1] %v450
      %v452 = vld [vmem:[#allocation2 + $0x3c] sm:$0x1]
      %v453 = vsel %vm436, 0, %v452
      %454 = vst [vmem:[#allocation2 + $0x3c] sm:$0x1] %v453
      %v455 = vld [vmem:[#allocation2 + $0x48] sm:$0x1]
      %v456 = vsel %vm436, 0, %v455
      %457 = vst [vmem:[#allocation2 + $0x48] sm:$0x1] %v456
      %v458 = vld [vmem:[#allocation2 + $0x54] sm:$0x1]
      %v459 = vsel %vm436, 0, %v458
      %460 = vst [vmem:[#allocation2 + $0x54] sm:$0x1] %v459
      %v461 = vld [vmem:[#allocation2 + $0x60] sm:$0x1]
      %v462 = vsel %vm436, 0, %v461
      %463 = vst [vmem:[#allocation2 + $0x60] sm:$0x1] %v462
      %v464 = vld [vmem:[#allocation2 + $0x6c] sm:$0x1]
      %v465 = vsel %vm436, 0, %v464
      %466 = vst [vmem:[#allocation2 + $0x6c] sm:$0x1] %v465
      %v467 = vld [vmem:[#allocation2 + $0x78] sm:$0x1]
      %v468 = vsel %vm436, 0, %v467
      %469 = vst [vmem:[#allocation2 + $0x78] sm:$0x1] %v468
      %v470 = vld [vmem:[#allocation2 + $0x84] sm:$0x1]
      %v471 = vsel %vm436, 0, %v470
      %472 = vst [vmem:[#allocation2 + $0x84] sm:$0x1] %v471
      %v473 = vld [vmem:[#allocation2 + $0x90] sm:$0x1]
      %v474 = vsel %vm436, 0, %v473
      %475 = vst [vmem:[#allocation2 + $0x90] sm:$0x1] %v474
      %v476 = vld [vmem:[#allocation2 + $0x9c] sm:$0x1]
      %v477 = vsel %vm436, 0, %v476
      %478 = vst [vmem:[#allocation2 + $0x9c] sm:$0x1] %v477
      %v479 = vld [vmem:[#allocation2 + $0xa8] sm:$0x1]
      %v480 = vsel %vm436, 0, %v479
      %481 = vst [vmem:[#allocation2 + $0xa8] sm:$0x1] %v480
      %v482 = vld [vmem:[#allocation2 + $0xb4] sm:$0x1]
      %v483 = vsel %vm436, 0, %v482
      %484 = vst [vmem:[#allocation2 + $0xb4] sm:$0x1] %v483
      %v485 = vld [vmem:[#allocation2 + $0xc0] sm:$0x1]
      %v486 = vsel %vm436, 0, %v485
      %487 = vst [vmem:[#allocation2 + $0xc0] sm:$0x1] %v486
      %v488 = vld [vmem:[#allocation2 + $0xcc] sm:$0x1]
      %v489 = vsel %vm436, 0, %v488
      %490 = vst [vmem:[#allocation2 + $0xcc] sm:$0x1] %v489
      %vm491 = vsmask.f32 7938
      %vm492 = vmand %vm434, %vm491
      %v493 = vld [vmem:[#allocation2 + $0x8] sm:$0x1]
      %v494 = vsel %vm492, 0, %v493
      %495 = vst [vmem:[#allocation2 + $0x8] sm:$0x1] %v494
      %v496 = vld [vmem:[#allocation2 + $0x14] sm:$0x1]
      %v497 = vsel %vm492, 0, %v496
      %498 = vst [vmem:[#allocation2 + $0x14] sm:$0x1] %v497
      %v499 = vld [vmem:[#allocation2 + $0x20] sm:$0x1]
      %v500 = vsel %vm492, 0, %v499
      %501 = vst [vmem:[#allocation2 + $0x20] sm:$0x1] %v500
      %v502 = vld [vmem:[#allocation2 + $0x2c] sm:$0x1]
      %v503 = vsel %vm492, 0, %v502
      %504 = vst [vmem:[#allocation2 + $0x2c] sm:$0x1] %v503
      %v505 = vld [vmem:[#allocation2 + $0x38] sm:$0x1]
      %v506 = vsel %vm492, 0, %v505
      %507 = vst [vmem:[#allocation2 + $0x38] sm:$0x1] %v506
      %v508 = vld [vmem:[#allocation2 + $0x44] sm:$0x1]
      %v509 = vsel %vm492, 0, %v508
      %510 = vst [vmem:[#allocation2 + $0x44] sm:$0x1] %v509
      %v511 = vld [vmem:[#allocation2 + $0x50] sm:$0x1]
      %v512 = vsel %vm492, 0, %v511
      %513 = vst [vmem:[#allocation2 + $0x50] sm:$0x1] %v512
      %v514 = vld [vmem:[#allocation2 + $0x5c] sm:$0x1]
      %v515 = vsel %vm492, 0, %v514
      %516 = vst [vmem:[#allocation2 + $0x5c] sm:$0x1] %v515
      %v517 = vld [vmem:[#allocation2 + $0x68] sm:$0x1]
      %v518 = vsel %vm492, 0, %v517
      %519 = vst [vmem:[#allocation2 + $0x68] sm:$0x1] %v518
      %v520 = vld [vmem:[#allocation2 + $0x74] sm:$0x1]
      %v521 = vsel %vm492, 0, %v520
      %522 = vst [vmem:[#allocation2 + $0x74] sm:$0x1] %v521
      %v523 = vld [vmem:[#allocation2 + $0x80] sm:$0x1]
      %v524 = vsel %vm492, 0, %v523
      %525 = vst [vmem:[#allocation2 + $0x80] sm:$0x1] %v524
      %v526 = vld [vmem:[#allocation2 + $0x8c] sm:$0x1]
      %v527 = vsel %vm492, 0, %v526
      %528 = vst [vmem:[#allocation2 + $0x8c] sm:$0x1] %v527
      %v529 = vld [vmem:[#allocation2 + $0x98] sm:$0x1]
      %v530 = vsel %vm492, 0, %v529
      %531 = vst [vmem:[#allocation2 + $0x98] sm:$0x1] %v530
      %v532 = vld [vmem:[#allocation2 + $0xa4] sm:$0x1]
      %v533 = vsel %vm492, 0, %v532
      %534 = vst [vmem:[#allocation2 + $0xa4] sm:$0x1] %v533
      %v535 = vld [vmem:[#allocation2 + $0xb0] sm:$0x1]
      %v536 = vsel %vm492, 0, %v535
      %537 = vst [vmem:[#allocation2 + $0xb0] sm:$0x1] %v536
      %v538 = vld [vmem:[#allocation2 + $0xbc] sm:$0x1]
      %v539 = vsel %vm492, 0, %v538
      %540 = vst [vmem:[#allocation2 + $0xbc] sm:$0x1] %v539
      %v541 = vld [vmem:[#allocation2 + $0xc8] sm:$0x1]
      %v542 = vsel %vm492, 0, %v541
      %543 = vst [vmem:[#allocation2 + $0xc8] sm:$0x1] %v542
      %v544 = vld [vmem:[#allocation2 + $0xd4] sm:$0x1]
      %v545 = vsel %vm492, 0, %v544
      %546 = vst [vmem:[#allocation2 + $0xd4] sm:$0x1] %v545
      %v563 = vunpack.c.l.b16 %v411
      %v564 = vunpack.c.h.b16 %v411
      %v565 = vunpack.c.l.b16 %v412
      %v566 = vunpack.c.h.b16 %v412
      %v567 = vunpack.c.l.b16 %v413
      %v568 = vunpack.c.h.b16 %v413
      %v569 = vunpack.c.l.b16 %v414
      %v570 = vunpack.c.h.b16 %v414
      %v571 = vunpack.c.l.b16 %v415
      %v572 = vunpack.c.h.b16 %v415
      %v573 = vunpack.c.l.b16 %v416
      %v574 = vunpack.c.h.b16 %v416
      %v575 = vunpack.c.l.b16 %v417
      %v576 = vunpack.c.h.b16 %v417
      %v577 = vunpack.c.l.b16 %v418
      %v578 = vunpack.c.h.b16 %v418
      %v579 = vunpack.c.l.b16 %v419
      %v580 = vunpack.c.h.b16 %v419
      %v581 = vunpack.c.l.b16 %v420
      %v582 = vunpack.c.h.b16 %v420
      %v583 = vunpack.c.l.b16 %v421
      %v584 = vunpack.c.h.b16 %v421
      %v585 = vunpack.c.l.b16 %v422
      %v586 = vunpack.c.h.b16 %v422
      %v587 = vunpack.c.l.b16 %v423
      %v588 = vunpack.c.h.b16 %v423
      %v589 = vunpack.c.l.b16 %v424
      %v590 = vunpack.c.h.b16 %v424
      %v591 = vunpack.c.l.b16 %v425
      %v592 = vunpack.c.h.b16 %v425
      %v593 = vunpack.c.l.b16 %v426
      %v594 = vunpack.c.h.b16 %v426
      %v595 = vpack.c.b16 %v563, %v563
      %v596 = vpack.c.b16 %v564, %v564
      %v597 = vpack.c.b16 %v565, %v565
      %v598 = vpack.c.b16 %v566, %v566
      %v599 = vpack.c.b16 %v567, %v567
      %v600 = vpack.c.b16 %v568, %v568
      %v601 = vpack.c.b16 %v569, %v569
      %v602 = vpack.c.b16 %v570, %v570
      %v603 = vpack.c.b16 %v571, %v571
      %v604 = vpack.c.b16 %v572, %v572
      %v605 = vpack.c.b16 %v573, %v573
      %v606 = vpack.c.b16 %v574, %v574
      %v607 = vpack.c.b16 %v575, %v575
      %v608 = vpack.c.b16 %v576, %v576
      %v609 = vpack.c.b16 %v577, %v577
      %v610 = vpack.c.b16 %v578, %v578
      %v611 = vpack.c.b16 %v579, %v579
      %v612 = vpack.c.b16 %v580, %v580
      %v613 = vpack.c.b16 %v581, %v581
      %v614 = vpack.c.b16 %v582, %v582
      %v615 = vpack.c.b16 %v583, %v583
      %v616 = vpack.c.b16 %v584, %v584
      %v617 = vpack.c.b16 %v585, %v585
      %v618 = vpack.c.b16 %v586, %v586
      %v619 = vpack.c.b16 %v587, %v587
      %v620 = vpack.c.b16 %v588, %v588
      %v621 = vpack.c.b16 %v589, %v589
      %v622 = vpack.c.b16 %v590, %v590
      %v623 = vpack.c.b16 %v591, %v591
      %v624 = vpack.c.b16 %v592, %v592
      %v625 = vpack.c.b16 %v593, %v593
      %v626 = vpack.c.b16 %v594, %v594
      %vm627 = vsmask.f32 4368
      %vm628 = vmor %vm435, %vm627
      %v630 = vshrl.u32 %v595, 16
      %v632 = vrot.slane %v630, 7
      %v633 = vshll.u32 %v595, 16
      %v635 = vor.u32 %v632, %v633
      %v636 = vrot.slane %v632, 4
      %v638 = vshrl.u32 %v596, 16
      %v640 = vrot.slane %v638, 7
      %v641 = vshll.u32 %v596, 16
      %v643 = vor.u32 %v640, %v641
      %v644 = vsel %vm628, %v636, %v643
      %v645 = vrot.slane %v640, 4
      %v647 = vshrl.u32 %v597, 16
      %v649 = vrot.slane %v647, 7
      %v650 = vshll.u32 %v597, 16
      %v652 = vor.u32 %v649, %v650
      %v653 = vrot.slane %v649, 4
      %v655 = vshrl.u32 %v598, 16
      %v657 = vrot.slane %v655, 7
      %v658 = vshll.u32 %v598, 16
      %v660 = vor.u32 %v657, %v658
      %v661 = vsel %vm628, %v653, %v660
      %v662 = vrot.slane %v657, 4
      %v664 = vshrl.u32 %v599, 16
      %v666 = vrot.slane %v664, 7
      %v667 = vshll.u32 %v599, 16
      %v669 = vor.u32 %v666, %v667
      %v670 = vrot.slane %v666, 4
      %v672 = vshrl.u32 %v600, 16
      %v674 = vrot.slane %v672, 7
      %v675 = vshll.u32 %v600, 16
      %v677 = vor.u32 %v674, %v675
      %v678 = vsel %vm628, %v670, %v677
      %v679 = vrot.slane %v674, 4
      %v681 = vshrl.u32 %v601, 16
      %v683 = vrot.slane %v681, 7
      %v684 = vshll.u32 %v601, 16
      %v686 = vor.u32 %v683, %v684
      %v687 = vrot.slane %v683, 4
      %v689 = vshrl.u32 %v602, 16
      %v691 = vrot.slane %v689, 7
      %v692 = vshll.u32 %v602, 16
      %v694 = vor.u32 %v691, %v692
      %v695 = vsel %vm628, %v687, %v694
      %v696 = vrot.slane %v691, 4
      %v698 = vshrl.u32 %v603, 16
      %v700 = vrot.slane %v698, 7
      %v701 = vshll.u32 %v603, 16
      %v703 = vor.u32 %v700, %v701
      %v704 = vrot.slane %v700, 4
      %v706 = vshrl.u32 %v604, 16
      %v708 = vrot.slane %v706, 7
      %v709 = vshll.u32 %v604, 16
      %v711 = vor.u32 %v708, %v709
      %v712 = vsel %vm628, %v704, %v711
      %v713 = vrot.slane %v708, 4
      %v715 = vshrl.u32 %v605, 16
      %v717 = vrot.slane %v715, 7
      %v718 = vshll.u32 %v605, 16
      %v720 = vor.u32 %v717, %v718
      %v721 = vrot.slane %v717, 4
      %v723 = vshrl.u32 %v606, 16
      %v725 = vrot.slane %v723, 7
      %v726 = vshll.u32 %v606, 16
      %v728 = vor.u32 %v725, %v726
      %v729 = vsel %vm628, %v721, %v728
      %v730 = vrot.slane %v725, 4
      %v732 = vshrl.u32 %v607, 16
      %v734 = vrot.slane %v732, 7
      %v735 = vshll.u32 %v607, 16
      %v737 = vor.u32 %v734, %v735
      %v738 = vrot.slane %v734, 4
      %v740 = vshrl.u32 %v608, 16
      %v742 = vrot.slane %v740, 7
      %v743 = vshll.u32 %v608, 16
      %v745 = vor.u32 %v742, %v743
      %v746 = vsel %vm628, %v738, %v745
      %v747 = vrot.slane %v742, 4
      %v749 = vshrl.u32 %v609, 16
      %v751 = vrot.slane %v749, 7
      %v752 = vshll.u32 %v609, 16
      %v754 = vor.u32 %v751, %v752
      %v755 = vrot.slane %v751, 4
      %v757 = vshrl.u32 %v610, 16
      %v759 = vrot.slane %v757, 7
      %v760 = vshll.u32 %v610, 16
      %v762 = vor.u32 %v759, %v760
      %v763 = vsel %vm628, %v755, %v762
      %v764 = vrot.slane %v759, 4
      %v766 = vshrl.u32 %v611, 16
      %v768 = vrot.slane %v766, 7
      %v769 = vshll.u32 %v611, 16
      %v771 = vor.u32 %v768, %v769
      %v772 = vrot.slane %v768, 4
      %v774 = vshrl.u32 %v612, 16
      %v776 = vrot.slane %v774, 7
      %v777 = vshll.u32 %v612, 16
      %v779 = vor.u32 %v776, %v777
      %v780 = vsel %vm628, %v772, %v779
      %v781 = vrot.slane %v776, 4
      %v783 = vshrl.u32 %v613, 16
      %v785 = vrot.slane %v783, 7
      %v786 = vshll.u32 %v613, 16
      %v788 = vor.u32 %v785, %v786
      %v789 = vrot.slane %v785, 4
      %v791 = vshrl.u32 %v614, 16
      %v793 = vrot.slane %v791, 7
      %v794 = vshll.u32 %v614, 16
      %v796 = vor.u32 %v793, %v794
      %v797 = vsel %vm628, %v789, %v796
      %v798 = vrot.slane %v793, 4
      %v800 = vshrl.u32 %v615, 16
      %v802 = vrot.slane %v800, 7
      %v803 = vshll.u32 %v615, 16
      %v805 = vor.u32 %v802, %v803
      %v806 = vrot.slane %v802, 4
      %v808 = vshrl.u32 %v616, 16
      %v810 = vrot.slane %v808, 7
      %v811 = vshll.u32 %v616, 16
      %v813 = vor.u32 %v810, %v811
      %v814 = vsel %vm628, %v806, %v813
      %v815 = vrot.slane %v810, 4
      %v817 = vshrl.u32 %v617, 16
      %v819 = vrot.slane %v817, 7
      %v820 = vshll.u32 %v617, 16
      %v822 = vor.u32 %v819, %v820
      %v823 = vrot.slane %v819, 4
      %v825 = vshrl.u32 %v618, 16
      %v827 = vrot.slane %v825, 7
      %v828 = vshll.u32 %v618, 16
      %v830 = vor.u32 %v827, %v828
      %v831 = vsel %vm628, %v823, %v830
      %v832 = vrot.slane %v827, 4
      %v834 = vshrl.u32 %v619, 16
      %v836 = vrot.slane %v834, 7
      %v837 = vshll.u32 %v619, 16
      %v839 = vor.u32 %v836, %v837
      %v840 = vrot.slane %v836, 4
      %v842 = vshrl.u32 %v620, 16
      %v844 = vrot.slane %v842, 7
      %v845 = vshll.u32 %v620, 16
      %v847 = vor.u32 %v844, %v845
      %v848 = vsel %vm628, %v840, %v847
      %v849 = vrot.slane %v844, 4
      %v851 = vshrl.u32 %v621, 16
      %v853 = vrot.slane %v851, 7
      %v854 = vshll.u32 %v621, 16
      %v856 = vor.u32 %v853, %v854
      %v857 = vrot.slane %v853, 4
      %v859 = vshrl.u32 %v622, 16
      %v861 = vrot.slane %v859, 7
      %v862 = vshll.u32 %v622, 16
      %v864 = vor.u32 %v861, %v862
      %v865 = vsel %vm628, %v857, %v864
      %v866 = vrot.slane %v861, 4
      %v868 = vshrl.u32 %v623, 16
      %v870 = vrot.slane %v868, 7
      %v871 = vshll.u32 %v623, 16
      %v873 = vor.u32 %v870, %v871
      %v874 = vrot.slane %v870, 4
      %v876 = vshrl.u32 %v624, 16
      %v878 = vrot.slane %v876, 7
      %v879 = vshll.u32 %v624, 16
      %v881 = vor.u32 %v878, %v879
      %v882 = vsel %vm628, %v874, %v881
      %v883 = vrot.slane %v878, 4
      %v885 = vshrl.u32 %v625, 16
      %v887 = vrot.slane %v885, 7
      %v888 = vshll.u32 %v625, 16
      %v890 = vor.u32 %v887, %v888
      %v891 = vrot.slane %v887, 4
      %v893 = vshrl.u32 %v626, 16
      %v895 = vrot.slane %v893, 7
      %v896 = vshll.u32 %v626, 16
      %v898 = vor.u32 %v895, %v896
      %v899 = vsel %vm628, %v891, %v898
      %v900 = vrot.slane %v895, 4
      %s949 = scalar_lea.vmem [#allocation2], 12
      %vm950 = vcmask 1043456
      %vm951 = vmand %vm950, %vm491
      %v952 = vld [vmem:[%s949] sm:$0xf]
      %v953 = vsel %vm951, %v635, %v952
      %954 = vst [vmem:[%s949] sm:$0xf] %v953
      %955 = vst [vmem:[%s949 + $0x4] sm:$0xf] %v644
      %v956 = vld [vmem:[%s949 + $0x8] sm:$0x1]
      %v957 = vsel %vm436, %v645, %v956
      %958 = vst [vmem:[%s949 + $0x8] sm:$0x1] %v957
      %v959 = vld [vmem:[%s949 + $0xc] sm:$0xf]
      %v960 = vsel %vm951, %v652, %v959
      %961 = vst [vmem:[%s949 + $0xc] sm:$0xf] %v960
      %962 = vst [vmem:[%s949 + $0x10] sm:$0xf] %v661
      %v963 = vld [vmem:[%s949 + $0x14] sm:$0x1]
      %v964 = vsel %vm436, %v662, %v963
      %965 = vst [vmem:[%s949 + $0x14] sm:$0x1] %v964
      %v966 = vld [vmem:[%s949 + $0x18] sm:$0xf]
      %v967 = vsel %vm951, %v669, %v966
      %968 = vst [vmem:[%s949 + $0x18] sm:$0xf] %v967
      %969 = vst [vmem:[%s949 + $0x1c] sm:$0xf] %v678
      %v970 = vld [vmem:[%s949 + $0x20] sm:$0x1]
      %v971 = vsel %vm436, %v679, %v970
      %972 = vst [vmem:[%s949 + $0x20] sm:$0x1] %v971
      %v973 = vld [vmem:[%s949 + $0x24] sm:$0xf]
      %v974 = vsel %vm951, %v686, %v973
      %975 = vst [vmem:[%s949 + $0x24] sm:$0xf] %v974
      %976 = vst [vmem:[%s949 + $0x28] sm:$0xf] %v695
      %v977 = vld [vmem:[%s949 + $0x2c] sm:$0x1]
      %v978 = vsel %vm436, %v696, %v977
      %979 = vst [vmem:[%s949 + $0x2c] sm:$0x1] %v978
      %v980 = vld [vmem:[%s949 + $0x30] sm:$0xf]
      %v981 = vsel %vm951, %v703, %v980
      %982 = vst [vmem:[%s949 + $0x30] sm:$0xf] %v981
      %983 = vst [vmem:[%s949 + $0x34] sm:$0xf] %v712
      %v984 = vld [vmem:[%s949 + $0x38] sm:$0x1]
      %v985 = vsel %vm436, %v713, %v984
      %986 = vst [vmem:[%s949 + $0x38] sm:$0x1] %v985
      %v987 = vld [vmem:[%s949 + $0x3c] sm:$0xf]
      %v988 = vsel %vm951, %v720, %v987
      %989 = vst [vmem:[%s949 + $0x3c] sm:$0xf] %v988
      %990 = vst [vmem:[%s949 + $0x40] sm:$0xf] %v729
      %v991 = vld [vmem:[%s949 + $0x44] sm:$0x1]
      %v992 = vsel %vm436, %v730, %v991
      %993 = vst [vmem:[%s949 + $0x44] sm:$0x1] %v992
      %v994 = vld [vmem:[%s949 + $0x48] sm:$0xf]
      %v995 = vsel %vm951, %v737, %v994
      %996 = vst [vmem:[%s949 + $0x48] sm:$0xf] %v995
      %997 = vst [vmem:[%s949 + $0x4c] sm:$0xf] %v746
      %v998 = vld [vmem:[%s949 + $0x50] sm:$0x1]
      %v999 = vsel %vm436, %v747, %v998
      %1000 = vst [vmem:[%s949 + $0x50] sm:$0x1] %v999
      %v1001 = vld [vmem:[%s949 + $0x54] sm:$0xf]
      %v1002 = vsel %vm951, %v754, %v1001
      %1003 = vst [vmem:[%s949 + $0x54] sm:$0xf] %v1002
      %1004 = vst [vmem:[%s949 + $0x58] sm:$0xf] %v763
      %v1005 = vld [vmem:[%s949 + $0x5c] sm:$0x1]
      %v1006 = vsel %vm436, %v764, %v1005
      %1007 = vst [vmem:[%s949 + $0x5c] sm:$0x1] %v1006
      %v1008 = vld [vmem:[%s949 + $0x60] sm:$0xf]
      %v1009 = vsel %vm951, %v771, %v1008
      %1010 = vst [vmem:[%s949 + $0x60] sm:$0xf] %v1009
      %1011 = vst [vmem:[%s949 + $0x64] sm:$0xf] %v780
      %v1012 = vld [vmem:[%s949 + $0x68] sm:$0x1]
      %v1013 = vsel %vm436, %v781, %v1012
      %1014 = vst [vmem:[%s949 + $0x68] sm:$0x1] %v1013
      %v1015 = vld [vmem:[%s949 + $0x6c] sm:$0xf]
      %v1016 = vsel %vm951, %v788, %v1015
      %1017 = vst [vmem:[%s949 + $0x6c] sm:$0xf] %v1016
      %1018 = vst [vmem:[%s949 + $0x70] sm:$0xf] %v797
      %v1019 = vld [vmem:[%s949 + $0x74] sm:$0x1]
      %v1020 = vsel %vm436, %v798, %v1019
      %1021 = vst [vmem:[%s949 + $0x74] sm:$0x1] %v1020
      %v1022 = vld [vmem:[%s949 + $0x78] sm:$0xf]
      %v1023 = vsel %vm951, %v805, %v1022
      %1024 = vst [vmem:[%s949 + $0x78] sm:$0xf] %v1023
      %1025 = vst [vmem:[%s949 + $0x7c] sm:$0xf] %v814
      %v1026 = vld [vmem:[%s949 + $0x80] sm:$0x1]
      %v1027 = vsel %vm436, %v815, %v1026
      %1028 = vst [vmem:[%s949 + $0x80] sm:$0x1] %v1027
      %v1029 = vld [vmem:[%s949 + $0x84] sm:$0xf]
      %v1030 = vsel %vm951, %v822, %v1029
      %1031 = vst [vmem:[%s949 + $0x84] sm:$0xf] %v1030
      %1032 = vst [vmem:[%s949 + $0x88] sm:$0xf] %v831
      %v1033 = vld [vmem:[%s949 + $0x8c] sm:$0x1]
      %v1034 = vsel %vm436, %v832, %v1033
      %1035 = vst [vmem:[%s949 + $0x8c] sm:$0x1] %v1034
      %v1036 = vld [vmem:[%s949 + $0x90] sm:$0xf]
      %v1037 = vsel %vm951, %v839, %v1036
      %1038 = vst [vmem:[%s949 + $0x90] sm:$0xf] %v1037
      %1039 = vst [vmem:[%s949 + $0x94] sm:$0xf] %v848
      %v1040 = vld [vmem:[%s949 + $0x98] sm:$0x1]
      %v1041 = vsel %vm436, %v849, %v1040
      %1042 = vst [vmem:[%s949 + $0x98] sm:$0x1] %v1041
      %v1043 = vld [vmem:[%s949 + $0x9c] sm:$0xf]
      %v1044 = vsel %vm951, %v856, %v1043
      %1045 = vst [vmem:[%s949 + $0x9c] sm:$0xf] %v1044
      %1046 = vst [vmem:[%s949 + $0xa0] sm:$0xf] %v865
      %v1047 = vld [vmem:[%s949 + $0xa4] sm:$0x1]
      %v1048 = vsel %vm436, %v866, %v1047
      %1049 = vst [vmem:[%s949 + $0xa4] sm:$0x1] %v1048
      %v1050 = vld [vmem:[%s949 + $0xa8] sm:$0xf]
      %v1051 = vsel %vm951, %v873, %v1050
      %1052 = vst [vmem:[%s949 + $0xa8] sm:$0xf] %v1051
      %1053 = vst [vmem:[%s949 + $0xac] sm:$0xf] %v882
      %v1054 = vld [vmem:[%s949 + $0xb0] sm:$0x1]
      %v1055 = vsel %vm436, %v883, %v1054
      %1056 = vst [vmem:[%s949 + $0xb0] sm:$0x1] %v1055
      %v1057 = vld [vmem:[%s949 + $0xb4] sm:$0xf]
      %v1058 = vsel %vm951, %v890, %v1057
      %1059 = vst [vmem:[%s949 + $0xb4] sm:$0xf] %v1058
      %1060 = vst [vmem:[%s949 + $0xb8] sm:$0xf] %v899
      %v1061 = vld [vmem:[%s949 + $0xbc] sm:$0x1]
      %v1062 = vsel %vm436, %v900, %v1061
      %1063 = vst [vmem:[%s949 + $0xbc] sm:$0x1] %v1062
      %v1064 = vld [vmem:[#allocation2] sm:$0xf]
      %v1065 = vld [vmem:[#allocation2 + $0x4] sm:$0xf]
      %v1066 = vld [vmem:[#allocation2 + $0xc] sm:$0xf]
      %v1067 = vld [vmem:[#allocation2 + $0x10] sm:$0xf]
      %v1068 = vld [vmem:[#allocation2 + $0x18] sm:$0xf]
      %v1069 = vld [vmem:[#allocation2 + $0x1c] sm:$0xf]
      %v1070 = vld [vmem:[#allocation2 + $0x24] sm:$0xf]
      %v1071 = vld [vmem:[#allocation2 + $0x28] sm:$0xf]
      %v1072 = vld [vmem:[#allocation2 + $0x30] sm:$0xf]
      %v1073 = vld [vmem:[#allocation2 + $0x34] sm:$0xf]
      %v1074 = vld [vmem:[#allocation2 + $0x3c] sm:$0xf]
      %v1075 = vld [vmem:[#allocation2 + $0x40] sm:$0xf]
      %v1076 = vld [vmem:[#allocation2 + $0x48] sm:$0xf]
      %v1077 = vld [vmem:[#allocation2 + $0x4c] sm:$0xf]
      %v1078 = vld [vmem:[#allocation2 + $0x54] sm:$0xf]
      %v1079 = vld [vmem:[#allocation2 + $0x58] sm:$0xf]
      %v1080 = vld [vmem:[#allocation2 + $0x60] sm:$0xf]
      %v1081 = vld [vmem:[#allocation2 + $0x64] sm:$0xf]
      %v1082 = vld [vmem:[#allocation2 + $0x6c] sm:$0xf]
      %v1083 = vld [vmem:[#allocation2 + $0x70] sm:$0xf]
      %v1084 = vld [vmem:[#allocation2 + $0x78] sm:$0xf]
      %v1085 = vld [vmem:[#allocation2 + $0x7c] sm:$0xf]
      %v1086 = vld [vmem:[#allocation2 + $0x84] sm:$0xf]
      %v1087 = vld [vmem:[#allocation2 + $0x88] sm:$0xf]
      %v1088 = vld [vmem:[#allocation2 + $0x90] sm:$0xf]
      %v1089 = vld [vmem:[#allocation2 + $0x94] sm:$0xf]
      %v1090 = vld [vmem:[#allocation2 + $0x9c] sm:$0xf]
      %v1091 = vld [vmem:[#allocation2 + $0xa0] sm:$0xf]
      %v1092 = vld [vmem:[#allocation2 + $0xa8] sm:$0xf]
      %v1093 = vld [vmem:[#allocation2 + $0xac] sm:$0xf]
      %v1094 = vld [vmem:[#allocation2 + $0xb4] sm:$0xf]
      %v1095 = vld [vmem:[#allocation2 + $0xb8] sm:$0xf]
      %v1096 = vld [vmem:[%s3] sm:$0xf]
      %v1097 = vld [vmem:[%s3 + $0x4] sm:$0xf]
      %v1098 = vld [vmem:[%s3 + $0x8] sm:$0xf]
      %v1099 = vld [vmem:[%s3 + $0xc] sm:$0xf]
      %v1100 = vld [vmem:[%s3 + $0x10] sm:$0xf]
      %v1101 = vld [vmem:[%s3 + $0x14] sm:$0xf]
      %v1102 = vld [vmem:[%s3 + $0x18] sm:$0xf]
      %v1103 = vld [vmem:[%s3 + $0x1c] sm:$0xf]
      %v1104 = vld [vmem:[%s3 + $0x20] sm:$0xf]
      %v1105 = vld [vmem:[%s3 + $0x24] sm:$0xf]
      %v1106 = vld [vmem:[%s3 + $0x28] sm:$0xf]
      %v1107 = vld [vmem:[%s3 + $0x2c] sm:$0xf]
      %v1108 = vld [vmem:[%s3 + $0x30] sm:$0xf]
      %v1109 = vld [vmem:[%s3 + $0x34] sm:$0xf]
      %v1110 = vld [vmem:[%s3 + $0x38] sm:$0xf]
      %v1111 = vld [vmem:[%s3 + $0x3c] sm:$0xf]
      %v1112 = vld [vmem:[#allocation2 + $0x8] sm:$0x1]
      %v1113 = vld [vmem:[#allocation2 + $0x14] sm:$0x1]
      %v1114 = vld [vmem:[#allocation2 + $0x20] sm:$0x1]
      %v1115 = vld [vmem:[#allocation2 + $0x2c] sm:$0x1]
      %v1116 = vld [vmem:[#allocation2 + $0x38] sm:$0x1]
      %v1117 = vld [vmem:[#allocation2 + $0x44] sm:$0x1]
      %v1118 = vld [vmem:[#allocation2 + $0x50] sm:$0x1]
      %v1119 = vld [vmem:[#allocation2 + $0x5c] sm:$0x1]
      %v1120 = vld [vmem:[#allocation2 + $0x68] sm:$0x1]
      %v1121 = vld [vmem:[#allocation2 + $0x74] sm:$0x1]
      %v1122 = vld [vmem:[#allocation2 + $0x80] sm:$0x1]
      %v1123 = vld [vmem:[#allocation2 + $0x8c] sm:$0x1]
      %v1124 = vld [vmem:[#allocation2 + $0x98] sm:$0x1]
      %v1125 = vld [vmem:[#allocation2 + $0xa4] sm:$0x1]
      %v1126 = vld [vmem:[#allocation2 + $0xb0] sm:$0x1]
      %v1127 = vld [vmem:[#allocation2 + $0xbc] sm:$0x1]
      %vm1128 = vsmask.f32 3328
      %vm1129 = vsmask.f32 7440
      %vm1130 = vmor %vm1128, %vm1129
      %v1132 = vshrl.u32 %v1064, 16
      %v1134 = vrot.slane %v1132, 4
      %v1135 = vshll.u32 %v1064, 16
      %v1137 = vrot.slane %v1135, 5
      %v1138 = vor.u32 %v1134, %v1137
      %v1139 = vrot.slane %v1138, 4
      %v1141 = vshll.u32 %v1065, 16
      %v1143 = vrot.slane %v1141, 5
      %v1144 = vsel %vm1130, %v1139, %v1143
      %v1145 = vshrl.u32 %v1065, 16
      %v1147 = vrot.slane %v1145, 4
      %v1148 = vor.u32 %v1147, %v1143
      %v1149 = vrot.slane %v1148, 4
      %v1151 = vshll.u32 %v1112, 16
      %v1153 = vrot.slane %v1151, 5
      %v1154 = vsel %vm1130, %v1149, %v1153
      %v1156 = vshrl.u32 %v1066, 16
      %v1158 = vrot.slane %v1156, 4
      %v1159 = vshll.u32 %v1066, 16
      %v1161 = vrot.slane %v1159, 5
      %v1162 = vor.u32 %v1158, %v1161
      %v1163 = vrot.slane %v1162, 4
      %v1165 = vshll.u32 %v1067, 16
      %v1167 = vrot.slane %v1165, 5
      %v1168 = vsel %vm1130, %v1163, %v1167
      %v1169 = vshrl.u32 %v1067, 16
      %v1171 = vrot.slane %v1169, 4
      %v1172 = vor.u32 %v1171, %v1167
      %v1173 = vrot.slane %v1172, 4
      %v1175 = vshll.u32 %v1113, 16
      %v1177 = vrot.slane %v1175, 5
      %v1178 = vsel %vm1130, %v1173, %v1177
      %v1180 = vshrl.u32 %v1068, 16
      %v1182 = vrot.slane %v1180, 4
      %v1183 = vshll.u32 %v1068, 16
      %v1185 = vrot.slane %v1183, 5
      %v1186 = vor.u32 %v1182, %v1185
      %v1187 = vrot.slane %v1186, 4
      %v1189 = vshll.u32 %v1069, 16
      %v1191 = vrot.slane %v1189, 5
      %v1192 = vsel %vm1130, %v1187, %v1191
      %v1193 = vshrl.u32 %v1069, 16
      %v1195 = vrot.slane %v1193, 4
      %v1196 = vor.u32 %v1195, %v1191
      %v1197 = vrot.slane %v1196, 4
      %v1199 = vshll.u32 %v1114, 16
      %v1201 = vrot.slane %v1199, 5
      %v1202 = vsel %vm1130, %v1197, %v1201
      %v1204 = vshrl.u32 %v1070, 16
      %v1206 = vrot.slane %v1204, 4
      %v1207 = vshll.u32 %v1070, 16
      %v1209 = vrot.slane %v1207, 5
      %v1210 = vor.u32 %v1206, %v1209
      %v1211 = vrot.slane %v1210, 4
      %v1213 = vshll.u32 %v1071, 16
      %v1215 = vrot.slane %v1213, 5
      %v1216 = vsel %vm1130, %v1211, %v1215
      %v1217 = vshrl.u32 %v1071, 16
      %v1219 = vrot.slane %v1217, 4
      %v1220 = vor.u32 %v1219, %v1215
      %v1221 = vrot.slane %v1220, 4
      %v1223 = vshll.u32 %v1115, 16
      %v1225 = vrot.slane %v1223, 5
      %v1226 = vsel %vm1130, %v1221, %v1225
      %v1228 = vshrl.u32 %v1072, 16
      %v1230 = vrot.slane %v1228, 4
      %v1231 = vshll.u32 %v1072, 16
      %v1233 = vrot.slane %v1231, 5
      %v1234 = vor.u32 %v1230, %v1233
      %v1235 = vrot.slane %v1234, 4
      %v1237 = vshll.u32 %v1073, 16
      %v1239 = vrot.slane %v1237, 5
      %v1240 = vsel %vm1130, %v1235, %v1239
      %v1241 = vshrl.u32 %v1073, 16
      %v1243 = vrot.slane %v1241, 4
      %v1244 = vor.u32 %v1243, %v1239
      %v1245 = vrot.slane %v1244, 4
      %v1247 = vshll.u32 %v1116, 16
      %v1249 = vrot.slane %v1247, 5
      %v1250 = vsel %vm1130, %v1245, %v1249
      %v1252 = vshrl.u32 %v1074, 16
      %v1254 = vrot.slane %v1252, 4
      %v1255 = vshll.u32 %v1074, 16
      %v1257 = vrot.slane %v1255, 5
      %v1258 = vor.u32 %v1254, %v1257
      %v1259 = vrot.slane %v1258, 4
      %v1261 = vshll.u32 %v1075, 16
      %v1263 = vrot.slane %v1261, 5
      %v1264 = vsel %vm1130, %v1259, %v1263
      %v1265 = vshrl.u32 %v1075, 16
      %v1267 = vrot.slane %v1265, 4
      %v1268 = vor.u32 %v1267, %v1263
      %v1269 = vrot.slane %v1268, 4
      %v1271 = vshll.u32 %v1117, 16
      %v1273 = vrot.slane %v1271, 5
      %v1274 = vsel %vm1130, %v1269, %v1273
      %v1276 = vshrl.u32 %v1076, 16
      %v1278 = vrot.slane %v1276, 4
      %v1279 = vshll.u32 %v1076, 16
      %v1281 = vrot.slane %v1279, 5
      %v1282 = vor.u32 %v1278, %v1281
      %v1283 = vrot.slane %v1282, 4
      %v1285 = vshll.u32 %v1077, 16
      %v1287 = vrot.slane %v1285, 5
      %v1288 = vsel %vm1130, %v1283, %v1287
      %v1289 = vshrl.u32 %v1077, 16
      %v1291 = vrot.slane %v1289, 4
      %v1292 = vor.u32 %v1291, %v1287
      %v1293 = vrot.slane %v1292, 4
      %v1295 = vshll.u32 %v1118, 16
      %v1297 = vrot.slane %v1295, 5
      %v1298 = vsel %vm1130, %v1293, %v1297
      %v1300 = vshrl.u32 %v1078, 16
      %v1302 = vrot.slane %v1300, 4
      %v1303 = vshll.u32 %v1078, 16
      %v1305 = vrot.slane %v1303, 5
      %v1306 = vor.u32 %v1302, %v1305
      %v1307 = vrot.slane %v1306, 4
      %v1309 = vshll.u32 %v1079, 16
      %v1311 = vrot.slane %v1309, 5
      %v1312 = vsel %vm1130, %v1307, %v1311
      %v1313 = vshrl.u32 %v1079, 16
      %v1315 = vrot.slane %v1313, 4
      %v1316 = vor.u32 %v1315, %v1311
      %v1317 = vrot.slane %v1316, 4
      %v1319 = vshll.u32 %v1119, 16
      %v1321 = vrot.slane %v1319, 5
      %v1322 = vsel %vm1130, %v1317, %v1321
      %v1324 = vshrl.u32 %v1080, 16
      %v1326 = vrot.slane %v1324, 4
      %v1327 = vshll.u32 %v1080, 16
      %v1329 = vrot.slane %v1327, 5
      %v1330 = vor.u32 %v1326, %v1329
      %v1331 = vrot.slane %v1330, 4
      %v1333 = vshll.u32 %v1081, 16
      %v1335 = vrot.slane %v1333, 5
      %v1336 = vsel %vm1130, %v1331, %v1335
      %v1337 = vshrl.u32 %v1081, 16
      %v1339 = vrot.slane %v1337, 4
      %v1340 = vor.u32 %v1339, %v1335
      %v1341 = vrot.slane %v1340, 4
      %v1343 = vshll.u32 %v1120, 16
      %v1345 = vrot.slane %v1343, 5
      %v1346 = vsel %vm1130, %v1341, %v1345
      %v1348 = vshrl.u32 %v1082, 16
      %v1350 = vrot.slane %v1348, 4
      %v1351 = vshll.u32 %v1082, 16
      %v1353 = vrot.slane %v1351, 5
      %v1354 = vor.u32 %v1350, %v1353
      %v1355 = vrot.slane %v1354, 4
      %v1357 = vshll.u32 %v1083, 16
      %v1359 = vrot.slane %v1357, 5
      %v1360 = vsel %vm1130, %v1355, %v1359
      %v1361 = vshrl.u32 %v1083, 16
      %v1363 = vrot.slane %v1361, 4
      %v1364 = vor.u32 %v1363, %v1359
      %v1365 = vrot.slane %v1364, 4
      %v1367 = vshll.u32 %v1121, 16
      %v1369 = vrot.slane %v1367, 5
      %v1370 = vsel %vm1130, %v1365, %v1369
      %v1372 = vshrl.u32 %v1084, 16
      %v1374 = vrot.slane %v1372, 4
      %v1375 = vshll.u32 %v1084, 16
      %v1377 = vrot.slane %v1375, 5
      %v1378 = vor.u32 %v1374, %v1377
      %v1379 = vrot.slane %v1378, 4
      %v1381 = vshll.u32 %v1085, 16
      %v1383 = vrot.slane %v1381, 5
      %v1384 = vsel %vm1130, %v1379, %v1383
      %v1385 = vshrl.u32 %v1085, 16
      %v1387 = vrot.slane %v1385, 4
      %v1388 = vor.u32 %v1387, %v1383
      %v1389 = vrot.slane %v1388, 4
      %v1391 = vshll.u32 %v1122, 16
      %v1393 = vrot.slane %v1391, 5
      %v1394 = vsel %vm1130, %v1389, %v1393
      %v1396 = vshrl.u32 %v1086, 16
      %v1398 = vrot.slane %v1396, 4
      %v1399 = vshll.u32 %v1086, 16
      %v1401 = vrot.slane %v1399, 5
      %v1402 = vor.u32 %v1398, %v1401
      %v1403 = vrot.slane %v1402, 4
      %v1405 = vshll.u32 %v1087, 16
      %v1407 = vrot.slane %v1405, 5
      %v1408 = vsel %vm1130, %v1403, %v1407
      %v1409 = vshrl.u32 %v1087, 16
      %v1411 = vrot.slane %v1409, 4
      %v1412 = vor.u32 %v1411, %v1407
      %v1413 = vrot.slane %v1412, 4
      %v1415 = vshll.u32 %v1123, 16
      %v1417 = vrot.slane %v1415, 5
      %v1418 = vsel %vm1130, %v1413, %v1417
      %v1420 = vshrl.u32 %v1088, 16
      %v1422 = vrot.slane %v1420, 4
      %v1423 = vshll.u32 %v1088, 16
      %v1425 = vrot.slane %v1423, 5
      %v1426 = vor.u32 %v1422, %v1425
      %v1427 = vrot.slane %v1426, 4
      %v1429 = vshll.u32 %v1089, 16
      %v1431 = vrot.slane %v1429, 5
      %v1432 = vsel %vm1130, %v1427, %v1431
      %v1433 = vshrl.u32 %v1089, 16
      %v1435 = vrot.slane %v1433, 4
      %v1436 = vor.u32 %v1435, %v1431
      %v1437 = vrot.slane %v1436, 4
      %v1439 = vshll.u32 %v1124, 16
      %v1441 = vrot.slane %v1439, 5
      %v1442 = vsel %vm1130, %v1437, %v1441
      %v1444 = vshrl.u32 %v1090, 16
      %v1446 = vrot.slane %v1444, 4
      %v1447 = vshll.u32 %v1090, 16
      %v1449 = vrot.slane %v1447, 5
      %v1450 = vor.u32 %v1446, %v1449
      %v1451 = vrot.slane %v1450, 4
      %v1453 = vshll.u32 %v1091, 16
      %v1455 = vrot.slane %v1453, 5
      %v1456 = vsel %vm1130, %v1451, %v1455
      %v1457 = vshrl.u32 %v1091, 16
      %v1459 = vrot.slane %v1457, 4
      %v1460 = vor.u32 %v1459, %v1455
      %v1461 = vrot.slane %v1460, 4
      %v1463 = vshll.u32 %v1125, 16
      %v1465 = vrot.slane %v1463, 5
      %v1466 = vsel %vm1130, %v1461, %v1465
      %v1468 = vshrl.u32 %v1092, 16
      %v1470 = vrot.slane %v1468, 4
      %v1471 = vshll.u32 %v1092, 16
      %v1473 = vrot.slane %v1471, 5
      %v1474 = vor.u32 %v1470, %v1473
      %v1475 = vrot.slane %v1474, 4
      %v1477 = vshll.u32 %v1093, 16
      %v1479 = vrot.slane %v1477, 5
      %v1480 = vsel %vm1130, %v1475, %v1479
      %v1481 = vshrl.u32 %v1093, 16
      %v1483 = vrot.slane %v1481, 4
      %v1484 = vor.u32 %v1483, %v1479
      %v1485 = vrot.slane %v1484, 4
      %v1487 = vshll.u32 %v1126, 16
      %v1489 = vrot.slane %v1487, 5
      %v1490 = vsel %vm1130, %v1485, %v1489
      %v1492 = vshrl.u32 %v1094, 16
      %v1494 = vrot.slane %v1492, 4
      %v1495 = vshll.u32 %v1094, 16
      %v1497 = vrot.slane %v1495, 5
      %v1498 = vor.u32 %v1494, %v1497
      %v1499 = vrot.slane %v1498, 4
      %v1501 = vshll.u32 %v1095, 16
      %v1503 = vrot.slane %v1501, 5
      %v1504 = vsel %vm1130, %v1499, %v1503
      %v1505 = vshrl.u32 %v1095, 16
      %v1507 = vrot.slane %v1505, 4
      %v1508 = vor.u32 %v1507, %v1503
      %v1509 = vrot.slane %v1508, 4
      %v1511 = vshll.u32 %v1127, 16
      %v1513 = vrot.slane %v1511, 5
      %v1514 = vsel %vm1130, %v1509, %v1513
      %s1515 = scalar_lea.vmem %s3, 64
      %v1516 = vld [vmem:[%s1515] sm:$0xf]
      %v1517 = vld [vmem:[%s1515 + $0x4] sm:$0xf]
      %v1518 = vld [vmem:[%s1515 + $0x8] sm:$0xf]
      %v1519 = vld [vmem:[%s1515 + $0xc] sm:$0xf]
      %v1520 = vld [vmem:[%s1515 + $0x10] sm:$0xf]
      %v1521 = vld [vmem:[%s1515 + $0x14] sm:$0xf]
      %v1522 = vld [vmem:[%s1515 + $0x18] sm:$0xf]
      %v1523 = vld [vmem:[%s1515 + $0x1c] sm:$0xf]
      %v1524 = vld [vmem:[%s1515 + $0x20] sm:$0xf]
      %v1525 = vld [vmem:[%s1515 + $0x24] sm:$0xf]
      %v1526 = vld [vmem:[%s1515 + $0x28] sm:$0xf]
      %v1527 = vld [vmem:[%s1515 + $0x2c] sm:$0xf]
      %v1528 = vld [vmem:[%s1515 + $0x30] sm:$0xf]
      %v1529 = vld [vmem:[%s1515 + $0x34] sm:$0xf]
      %v1530 = vld [vmem:[%s1515 + $0x38] sm:$0xf]
      %v1531 = vld [vmem:[%s1515 + $0x3c] sm:$0xf]
      %v1532 = vunpack.c.l.b16 %v1144
      %v1533 = vunpack.c.l.b16 %v1154
      %v1534 = vunpack.c.l.b16 %v1168
      %v1535 = vunpack.c.l.b16 %v1178
      %v1536 = vunpack.c.l.b16 %v1192
      %v1537 = vunpack.c.l.b16 %v1202
      %v1538 = vunpack.c.l.b16 %v1216
      %v1539 = vunpack.c.l.b16 %v1226
      %v1540 = vunpack.c.l.b16 %v1240
      %v1541 = vunpack.c.l.b16 %v1250
      %v1542 = vunpack.c.l.b16 %v1264
      %v1543 = vunpack.c.l.b16 %v1274
      %v1544 = vunpack.c.l.b16 %v1288
      %v1545 = vunpack.c.l.b16 %v1298
      %v1546 = vunpack.c.l.b16 %v1312
      %v1547 = vunpack.c.l.b16 %v1322
      %v1548 = vunpack.c.l.b16 %v1336
      %v1549 = vunpack.c.l.b16 %v1346
      %v1550 = vunpack.c.l.b16 %v1360
      %v1551 = vunpack.c.l.b16 %v1370
      %v1552 = vunpack.c.l.b16 %v1384
      %v1553 = vunpack.c.l.b16 %v1394
      %v1554 = vunpack.c.l.b16 %v1408
      %v1555 = vunpack.c.l.b16 %v1418
      %v1556 = vunpack.c.l.b16 %v1432
      %v1557 = vunpack.c.l.b16 %v1442
      %v1558 = vunpack.c.l.b16 %v1456
      %v1559 = vunpack.c.l.b16 %v1466
      %v1560 = vunpack.c.l.b16 %v1480
      %v1561 = vunpack.c.l.b16 %v1490
      %v1562 = vunpack.c.l.b16 %v1504
      %v1563 = vunpack.c.l.b16 %v1514
      %v1564 = vpack.c.b16 %v1533, %v1532
      %v1565 = vpack.c.b16 %v1535, %v1534
      %v1566 = vpack.c.b16 %v1537, %v1536
      %v1567 = vpack.c.b16 %v1539, %v1538
      %v1568 = vpack.c.b16 %v1541, %v1540
      %v1569 = vpack.c.b16 %v1543, %v1542
      %v1570 = vpack.c.b16 %v1545, %v1544
      %v1571 = vpack.c.b16 %v1547, %v1546
      %v1572 = vpack.c.b16 %v1549, %v1548
      %v1573 = vpack.c.b16 %v1551, %v1550
      %v1574 = vpack.c.b16 %v1553, %v1552
      %v1575 = vpack.c.b16 %v1555, %v1554
      %v1576 = vpack.c.b16 %v1557, %v1556
      %v1577 = vpack.c.b16 %v1559, %v1558
      %v1578 = vpack.c.b16 %v1561, %v1560
      %v1579 = vpack.c.b16 %v1563, %v1562
      %v1612 = vunpack.c.l.b16 %v1516
      %v1613 = vunpack.c.l.b16 %v1517
      %v1614 = vunpack.c.l.b16 %v1518
      %v1615 = vunpack.c.l.b16 %v1519
      %v1616 = vunpack.c.l.b16 %v1520
      %v1617 = vunpack.c.l.b16 %v1521
      %v1618 = vunpack.c.l.b16 %v1522
      %v1619 = vunpack.c.l.b16 %v1523
      %v1620 = vunpack.c.l.b16 %v1524
      %v1621 = vunpack.c.l.b16 %v1525
      %v1622 = vunpack.c.l.b16 %v1526
      %v1623 = vunpack.c.l.b16 %v1527
      %v1624 = vunpack.c.l.b16 %v1528
      %v1625 = vunpack.c.l.b16 %v1529
      %v1626 = vunpack.c.l.b16 %v1530
      %v1627 = vunpack.c.l.b16 %v1531
      %v1628 = vpack.c.b16 %v1613, %v1612
      %v1629 = vpack.c.b16 %v1615, %v1614
      %v1630 = vpack.c.b16 %v1617, %v1616
      %v1631 = vpack.c.b16 %v1619, %v1618
      %v1632 = vpack.c.b16 %v1621, %v1620
      %v1633 = vpack.c.b16 %v1623, %v1622
      %v1634 = vpack.c.b16 %v1625, %v1624
      %v1635 = vpack.c.b16 %v1627, %v1626
      %1644 = vmatprep.subr.bf16.mxu0 0
      %1645 = vmatpush1.bf16.msra.mxu0 %v1628
      %1646 = vmatprep.subr.bf16.mxu0 0
      %1647 = vmatpush1.bf16.msra.mxu0 %v1629
      %1648 = vmatprep.subr.bf16.mxu0 0
      %1649 = vmatpush1.bf16.msra.mxu0 %v1630
      %1650 = vmatprep.subr.bf16.mxu0 0
      %1651 = vmatpush1.bf16.msra.mxu0 %v1631
      %1652 = vmatprep.subr.bf16.mxu0 0
      %1653 = vmatpush1.bf16.msra.mxu0 %v1632
      %1654 = vmatprep.subr.bf16.mxu0 0
      %1655 = vmatpush1.bf16.msra.mxu0 %v1633
      %1656 = vmatprep.subr.bf16.mxu0 0
      %1657 = vmatpush1.bf16.msra.mxu0 %v1634
      %1658 = vmatprep.subr.bf16.mxu0 0
      %1659 = vmatpush1.bf16.msra.mxu0 %v1635
      %1660 = vmatprep.subr.bf16.mxu0 0
      %1661 = vmatpush1.bf16.msra.mxu0 0
      %1662 = vmatprep.subr.bf16.mxu0 0
      %1663 = vmatpush1.bf16.msra.mxu0 0
      %1664 = vmatprep.subr.bf16.mxu0 0
      %1665 = vmatpush1.bf16.msra.mxu0 0
      %1666 = vmatprep.subr.bf16.mxu0 0
      %1667 = vmatpush1.bf16.msra.mxu0 0
      %1668 = vmatprep.subr.bf16.mxu0 0
      %1669 = vmatpush1.bf16.msra.mxu0 0
      %1670 = vmatprep.subr.bf16.mxu0 0
      %1671 = vmatpush1.bf16.msra.mxu0 0
      %1672 = vmatprep.subr.bf16.mxu0 0
      %1673 = vmatpush1.bf16.msra.mxu0 0
      %1674 = vmatprep.subr.bf16.mxu0 0
      %1675 = vmatpush1.bf16.msra.mxu0 0
      %1676 = vmatprep.mubr.bf16.mxu0 0
      %1677 = vmatmul.mubr.bf16.gmra.mrb[0].mxu0 %v1564
      %v1678 = vpop.f32.mrb[0].mxu0
      %v1679 = vadd.f32 0.0, %v1678
      %v1680 = vpop.f32.mrb[0].mxu0
      %v1681 = vpop.f32.mrb[0].mxu0
      %v1682 = vadd.f32 0.0, %v1681
      %v1683 = vpop.f32.mrb[0].mxu0
      %1684 = vmatprep.mubr.bf16.mxu0 0
      %1685 = vmatmul.mubr.bf16.gmra.mrb[0].mxu0 %v1565
      %v1686 = vpop.f32.mrb[0].mxu0
      %v1687 = vadd.f32 0.0, %v1686
      %v1688 = vpop.f32.mrb[0].mxu0
      %v1689 = vpop.f32.mrb[0].mxu0
      %v1690 = vadd.f32 0.0, %v1689
      %v1691 = vpop.f32.mrb[0].mxu0
      %1692 = vmatprep.mubr.bf16.mxu0 0
      %1693 = vmatmul.mubr.bf16.gmra.mrb[0].mxu0 %v1566
      %v1694 = vpop.f32.mrb[0].mxu0
      %v1695 = vadd.f32 0.0, %v1694
      %v1696 = vpop.f32.mrb[0].mxu0
      %v1697 = vpop.f32.mrb[0].mxu0
      %v1698 = vadd.f32 0.0, %v1697
      %v1699 = vpop.f32.mrb[0].mxu0
      %1700 = vmatprep.mubr.bf16.mxu0 0
      %1701 = vmatmul.mubr.bf16.gmra.mrb[0].mxu0 %v1567
      %v1702 = vpop.f32.mrb[0].mxu0
      %v1703 = vadd.f32 0.0, %v1702
      %v1704 = vpop.f32.mrb[0].mxu0
      %v1705 = vpop.f32.mrb[0].mxu0
      %v1706 = vadd.f32 0.0, %v1705
      %v1707 = vpop.f32.mrb[0].mxu0
      %1708 = vmatprep.mubr.bf16.mxu0 0
      %1709 = vmatmul.mubr.bf16.gmra.mrb[0].mxu0 %v1568
      %v1710 = vpop.f32.mrb[0].mxu0
      %v1711 = vadd.f32 0.0, %v1710
      %v1712 = vpop.f32.mrb[0].mxu0
      %v1713 = vpop.f32.mrb[0].mxu0
      %v1714 = vadd.f32 0.0, %v1713
      %v1715 = vpop.f32.mrb[0].mxu0
      %1716 = vmatprep.mubr.bf16.mxu0 0
      %1717 = vmatmul.mubr.bf16.gmra.mrb[0].mxu0 %v1569
      %v1718 = vpop.f32.mrb[0].mxu0
      %v1719 = vadd.f32 0.0, %v1718
      %v1720 = vpop.f32.mrb[0].mxu0
      %v1721 = vpop.f32.mrb[0].mxu0
      %v1722 = vadd.f32 0.0, %v1721
      %v1723 = vpop.f32.mrb[0].mxu0
      %1724 = vmatprep.mubr.bf16.mxu0 0
      %1725 = vmatmul.mubr.bf16.gmra.mrb[0].mxu0 %v1570
      %v1726 = vpop.f32.mrb[0].mxu0
      %v1727 = vadd.f32 0.0, %v1726
      %v1728 = vpop.f32.mrb[0].mxu0
      %v1729 = vpop.f32.mrb[0].mxu0
      %v1730 = vadd.f32 0.0, %v1729
      %v1731 = vpop.f32.mrb[0].mxu0
      %1732 = vmatprep.mubr.bf16.mxu0 0
      %1733 = vmatmul.mubr.bf16.gmra.mrb[0].mxu0 %v1571
      %v1734 = vpop.f32.mrb[0].mxu0
      %v1735 = vadd.f32 0.0, %v1734
      %v1736 = vpop.f32.mrb[0].mxu0
      %v1737 = vpop.f32.mrb[0].mxu0
      %v1738 = vadd.f32 0.0, %v1737
      %v1739 = vpop.f32.mrb[0].mxu0
      %1740 = vmatprep.mubr.bf16.mxu0 0
      %1741 = vmatmul.mubr.bf16.gmra.mrb[0].mxu0 %v1572
      %v1742 = vpop.f32.mrb[0].mxu0
      %v1743 = vadd.f32 0.0, %v1742
      %v1744 = vpop.f32.mrb[0].mxu0
      %v1745 = vpop.f32.mrb[0].mxu0
      %v1746 = vadd.f32 0.0, %v1745
      %v1747 = vpop.f32.mrb[0].mxu0
      %1748 = vmatprep.mubr.bf16.mxu0 0
      %1749 = vmatmul.mubr.bf16.gmra.mrb[0].mxu0 %v1573
      %v1750 = vpop.f32.mrb[0].mxu0
      %v1751 = vadd.f32 0.0, %v1750
      %v1752 = vpop.f32.mrb[0].mxu0
      %v1753 = vpop.f32.mrb[0].mxu0
      %v1754 = vadd.f32 0.0, %v1753
      %v1755 = vpop.f32.mrb[0].mxu0
      %1756 = vmatprep.mubr.bf16.mxu0 0
      %1757 = vmatmul.mubr.bf16.gmra.mrb[0].mxu0 %v1574
      %v1758 = vpop.f32.mrb[0].mxu0
      %v1759 = vadd.f32 0.0, %v1758
      %v1760 = vpop.f32.mrb[0].mxu0
      %v1761 = vpop.f32.mrb[0].mxu0
      %v1762 = vadd.f32 0.0, %v1761
      %v1763 = vpop.f32.mrb[0].mxu0
      %1764 = vmatprep.mubr.bf16.mxu0 0
      %1765 = vmatmul.mubr.bf16.gmra.mrb[0].mxu0 %v1575
      %v1766 = vpop.f32.mrb[0].mxu0
      %v1767 = vadd.f32 0.0, %v1766
      %v1768 = vpop.f32.mrb[0].mxu0
      %v1769 = vpop.f32.mrb[0].mxu0
      %v1770 = vadd.f32 0.0, %v1769
      %v1771 = vpop.f32.mrb[0].mxu0
      %1772 = vmatprep.mubr.bf16.mxu0 0
      %1773 = vmatmul.mubr.bf16.gmra.mrb[0].mxu0 %v1576
      %v1774 = vpop.f32.mrb[0].mxu0
      %v1775 = vadd.f32 0.0, %v1774
      %v1776 = vpop.f32.mrb[0].mxu0
      %v1777 = vpop.f32.mrb[0].mxu0
      %v1778 = vadd.f32 0.0, %v1777
      %v1779 = vpop.f32.mrb[0].mxu0
      %1780 = vmatprep.mubr.bf16.mxu0 0
      %1781 = vmatmul.mubr.bf16.gmra.mrb[0].mxu0 %v1577
      %v1782 = vpop.f32.mrb[0].mxu0
      %v1783 = vadd.f32 0.0, %v1782
      %v1784 = vpop.f32.mrb[0].mxu0
      %v1785 = vpop.f32.mrb[0].mxu0
      %v1786 = vadd.f32 0.0, %v1785
      %v1787 = vpop.f32.mrb[0].mxu0
      %1788 = vmatprep.mubr.bf16.mxu0 0
      %1789 = vmatmul.mubr.bf16.gmra.mrb[0].mxu0 %v1578
      %v1790 = vpop.f32.mrb[0].mxu0
      %v1791 = vadd.f32 0.0, %v1790
      %v1792 = vpop.f32.mrb[0].mxu0
      %v1793 = vpop.f32.mrb[0].mxu0
      %v1794 = vadd.f32 0.0, %v1793
      %v1795 = vpop.f32.mrb[0].mxu0
      %1796 = vmatprep.mubr.bf16.mxu0 0
      %1797 = vmatmul.mubr.bf16.gmra.mrb[0].mxu0 %v1579
      %v1798 = vpop.f32.mrb[0].mxu0
      %v1799 = vadd.f32 0.0, %v1798
      %v1800 = vpop.f32.mrb[0].mxu0
      %v1801 = vpop.f32.mrb[0].mxu0
      %v1802 = vadd.f32 0.0, %v1801
      %v1803 = vpop.f32.mrb[0].mxu0
      %1804 = vdwg.mxu0
      %v1837 = vunpack.c.l.b16 %v1064
      %v1838 = vunpack.c.l.b16 %v1065
      %v1839 = vunpack.c.l.b16 %v1066
      %v1840 = vunpack.c.l.b16 %v1067
      %v1841 = vunpack.c.l.b16 %v1068
      %v1842 = vunpack.c.l.b16 %v1069
      %v1843 = vunpack.c.l.b16 %v1070
      %v1844 = vunpack.c.l.b16 %v1071
      %v1845 = vunpack.c.l.b16 %v1072
      %v1846 = vunpack.c.l.b16 %v1073
      %v1847 = vunpack.c.l.b16 %v1074
      %v1848 = vunpack.c.l.b16 %v1075
      %v1849 = vunpack.c.l.b16 %v1076
      %v1850 = vunpack.c.l.b16 %v1077
      %v1851 = vunpack.c.l.b16 %v1078
      %v1852 = vunpack.c.l.b16 %v1079
      %v1853 = vunpack.c.l.b16 %v1080
      %v1854 = vunpack.c.l.b16 %v1081
      %v1855 = vunpack.c.l.b16 %v1082
      %v1856 = vunpack.c.l.b16 %v1083
      %v1857 = vunpack.c.l.b16 %v1084
      %v1858 = vunpack.c.l.b16 %v1085
      %v1859 = vunpack.c.l.b16 %v1086
      %v1860 = vunpack.c.l.b16 %v1087
      %v1861 = vunpack.c.l.b16 %v1088
      %v1862 = vunpack.c.l.b16 %v1089
      %v1863 = vunpack.c.l.b16 %v1090
      %v1864 = vunpack.c.l.b16 %v1091
      %v1865 = vunpack.c.l.b16 %v1092
      %v1866 = vunpack.c.l.b16 %v1093
      %v1867 = vunpack.c.l.b16 %v1094
      %v1868 = vunpack.c.l.b16 %v1095
      %v1869 = vpack.c.b16 %v1838, %v1837
      %v1870 = vpack.c.b16 %v1840, %v1839
      %v1871 = vpack.c.b16 %v1842, %v1841
      %v1872 = vpack.c.b16 %v1844, %v1843
      %v1873 = vpack.c.b16 %v1846, %v1845
      %v1874 = vpack.c.b16 %v1848, %v1847
      %v1875 = vpack.c.b16 %v1850, %v1849
      %v1876 = vpack.c.b16 %v1852, %v1851
      %v1877 = vpack.c.b16 %v1854, %v1853
      %v1878 = vpack.c.b16 %v1856, %v1855
      %v1879 = vpack.c.b16 %v1858, %v1857
      %v1880 = vpack.c.b16 %v1860, %v1859
      %v1881 = vpack.c.b16 %v1862, %v1861
      %v1882 = vpack.c.b16 %v1864, %v1863
      %v1883 = vpack.c.b16 %v1866, %v1865
      %v1884 = vpack.c.b16 %v1868, %v1867
      %v1917 = vunpack.c.l.b16 %v1096
      %v1918 = vunpack.c.l.b16 %v1097
      %v1919 = vunpack.c.l.b16 %v1098
      %v1920 = vunpack.c.l.b16 %v1099
      %v1921 = vunpack.c.l.b16 %v1100
      %v1922 = vunpack.c.l.b16 %v1101
      %v1923 = vunpack.c.l.b16 %v1102
      %v1924 = vunpack.c.l.b16 %v1103
      %v1925 = vunpack.c.l.b16 %v1104
      %v1926 = vunpack.c.l.b16 %v1105
      %v1927 = vunpack.c.l.b16 %v1106
      %v1928 = vunpack.c.l.b16 %v1107
      %v1929 = vunpack.c.l.b16 %v1108
      %v1930 = vunpack.c.l.b16 %v1109
      %v1931 = vunpack.c.l.b16 %v1110
      %v1932 = vunpack.c.l.b16 %v1111
      %v1933 = vpack.c.b16 %v1918, %v1917
      %v1934 = vpack.c.b16 %v1920, %v1919
      %v1935 = vpack.c.b16 %v1922, %v1921
      %v1936 = vpack.c.b16 %v1924, %v1923
      %v1937 = vpack.c.b16 %v1926, %v1925
      %v1938 = vpack.c.b16 %v1928, %v1927
      %v1939 = vpack.c.b16 %v1930, %v1929
      %v1940 = vpack.c.b16 %v1932, %v1931
      %1949 = vmatprep.subr.bf16.mxu0 0
      %1950 = vmatpush1.bf16.msra.mxu0 %v1933
      %1951 = vmatprep.subr.bf16.mxu0 0
      %1952 = vmatpush1.bf16.msra.mxu0 %v1934
      %1953 = vmatprep.subr.bf16.mxu0 0
      %1954 = vmatpush1.bf16.msra.mxu0 %v1935
      %1955 = vmatprep.subr.bf16.mxu0 0
      %1956 = vmatpush1.bf16.msra.mxu0 %v1936
      %1957 = vmatprep.subr.bf16.mxu0 0
      %1958 = vmatpush1.bf16.msra.mxu0 %v1937
      %1959 = vmatprep.subr.bf16.mxu0 0
      %1960 = vmatpush1.bf16.msra.mxu0 %v1938
      %1961 = vmatprep.subr.bf16.mxu0 0
      %1962 = vmatpush1.bf16.msra.mxu0 %v1939
      %1963 = vmatprep.subr.bf16.mxu0 0
      %1964 = vmatpush1.bf16.msra.mxu0 %v1940
      %1965 = vmatprep.subr.bf16.mxu0 0
      %1966 = vmatpush1.bf16.msra.mxu0 0
      %1967 = vmatprep.subr.bf16.mxu0 0
      %1968 = vmatpush1.bf16.msra.mxu0 0
      %1969 = vmatprep.subr.bf16.mxu0 0
      %1970 = vmatpush1.bf16.msra.mxu0 0
      %1971 = vmatprep.subr.bf16.mxu0 0
      %1972 = vmatpush1.bf16.msra.mxu0 0
      %1973 = vmatprep.subr.bf16.mxu0 0
      %1974 = vmatpush1.bf16.msra.mxu0 0
      %1975 = vmatprep.subr.bf16.mxu0 0
      %1976 = vmatpush1.bf16.msra.mxu0 0
      %1977 = vmatprep.subr.bf16.mxu0 0
      %1978 = vmatpush1.bf16.msra.mxu0 0
      %1979 = vmatprep.subr.bf16.mxu0 0
      %1980 = vmatpush1.bf16.msra.mxu0 0
      %1981 = vmatprep.mubr.bf16.mxu0 0
      %1982 = vmatmul.mubr.bf16.gmra.mrb[0].mxu0 %v1869
      %v1983 = vpop.f32.mrb[0].mxu0
      %v1984 = vadd.f32 %v1679, %v1983
      %v1985 = vpop.f32.mrb[0].mxu0
      %v1986 = vpop.f32.mrb[0].mxu0
      %v1987 = vadd.f32 %v1682, %v1986
      %v1988 = vpop.f32.mrb[0].mxu0
      %1989 = vmatprep.mubr.bf16.mxu0 0
      %1990 = vmatmul.mubr.bf16.gmra.mrb[0].mxu0 %v1870
      %v1991 = vpop.f32.mrb[0].mxu0
      %v1992 = vadd.f32 %v1687, %v1991
      %v1993 = vpop.f32.mrb[0].mxu0
      %v1994 = vpop.f32.mrb[0].mxu0
      %v1995 = vadd.f32 %v1690, %v1994
      %v1996 = vpop.f32.mrb[0].mxu0
      %1997 = vmatprep.mubr.bf16.mxu0 0
      %1998 = vmatmul.mubr.bf16.gmra.mrb[0].mxu0 %v1871
      %v1999 = vpop.f32.mrb[0].mxu0
      %v2000 = vadd.f32 %v1695, %v1999
      %v2001 = vpop.f32.mrb[0].mxu0
      %v2002 = vpop.f32.mrb[0].mxu0
      %v2003 = vadd.f32 %v1698, %v2002
      %v2004 = vpop.f32.mrb[0].mxu0
      %2005 = vmatprep.mubr.bf16.mxu0 0
      %2006 = vmatmul.mubr.bf16.gmra.mrb[0].mxu0 %v1872
      %v2007 = vpop.f32.mrb[0].mxu0
      %v2008 = vadd.f32 %v1703, %v2007
      %v2009 = vpop.f32.mrb[0].mxu0
      %v2010 = vpop.f32.mrb[0].mxu0
      %v2011 = vadd.f32 %v1706, %v2010
      %v2012 = vpop.f32.mrb[0].mxu0
      %2013 = vmatprep.mubr.bf16.mxu0 0
      %2014 = vmatmul.mubr.bf16.gmra.mrb[0].mxu0 %v1873
      %v2015 = vpop.f32.mrb[0].mxu0
      %v2016 = vadd.f32 %v1711, %v2015
      %v2017 = vpop.f32.mrb[0].mxu0
      %v2018 = vpop.f32.mrb[0].mxu0
      %v2019 = vadd.f32 %v1714, %v2018
      %v2020 = vpop.f32.mrb[0].mxu0
      %2021 = vmatprep.mubr.bf16.mxu0 0
      %2022 = vmatmul.mubr.bf16.gmra.mrb[0].mxu0 %v1874
      %v2023 = vpop.f32.mrb[0].mxu0
      %v2024 = vadd.f32 %v1719, %v2023
      %v2025 = vpop.f32.mrb[0].mxu0
      %v2026 = vpop.f32.mrb[0].mxu0
      %v2027 = vadd.f32 %v1722, %v2026
      %v2028 = vpop.f32.mrb[0].mxu0
      %2029 = vmatprep.mubr.bf16.mxu0 0
      %2030 = vmatmul.mubr.bf16.gmra.mrb[0].mxu0 %v1875
      %v2031 = vpop.f32.mrb[0].mxu0
      %v2032 = vadd.f32 %v1727, %v2031
      %v2033 = vpop.f32.mrb[0].mxu0
      %v2034 = vpop.f32.mrb[0].mxu0
      %v2035 = vadd.f32 %v1730, %v2034
      %v2036 = vpop.f32.mrb[0].mxu0
      %2037 = vmatprep.mubr.bf16.mxu0 0
      %2038 = vmatmul.mubr.bf16.gmra.mrb[0].mxu0 %v1876
      %v2039 = vpop.f32.mrb[0].mxu0
      %v2040 = vadd.f32 %v1735, %v2039
      %v2041 = vpop.f32.mrb[0].mxu0
      %v2042 = vpop.f32.mrb[0].mxu0
      %v2043 = vadd.f32 %v1738, %v2042
      %v2044 = vpop.f32.mrb[0].mxu0
      %2045 = vmatprep.mubr.bf16.mxu0 0
      %2046 = vmatmul.mubr.bf16.gmra.mrb[0].mxu0 %v1877
      %v2047 = vpop.f32.mrb[0].mxu0
      %v2048 = vadd.f32 %v1743, %v2047
      %v2049 = vpop.f32.mrb[0].mxu0
      %v2050 = vpop.f32.mrb[0].mxu0
      %v2051 = vadd.f32 %v1746, %v2050
      %v2052 = vpop.f32.mrb[0].mxu0
      %2053 = vmatprep.mubr.bf16.mxu0 0
      %2054 = vmatmul.mubr.bf16.gmra.mrb[0].mxu0 %v1878
      %v2055 = vpop.f32.mrb[0].mxu0
      %v2056 = vadd.f32 %v1751, %v2055
      %v2057 = vpop.f32.mrb[0].mxu0
      %v2058 = vpop.f32.mrb[0].mxu0
      %v2059 = vadd.f32 %v1754, %v2058
      %v2060 = vpop.f32.mrb[0].mxu0
      %2061 = vmatprep.mubr.bf16.mxu0 0
      %2062 = vmatmul.mubr.bf16.gmra.mrb[0].mxu0 %v1879
      %v2063 = vpop.f32.mrb[0].mxu0
      %v2064 = vadd.f32 %v1759, %v2063
      %v2065 = vpop.f32.mrb[0].mxu0
      %v2066 = vpop.f32.mrb[0].mxu0
      %v2067 = vadd.f32 %v1762, %v2066
      %v2068 = vpop.f32.mrb[0].mxu0
      %2069 = vmatprep.mubr.bf16.mxu0 0
      %2070 = vmatmul.mubr.bf16.gmra.mrb[0].mxu0 %v1880
      %v2071 = vpop.f32.mrb[0].mxu0
      %v2072 = vadd.f32 %v1767, %v2071
      %v2073 = vpop.f32.mrb[0].mxu0
      %v2074 = vpop.f32.mrb[0].mxu0
      %v2075 = vadd.f32 %v1770, %v2074
      %v2076 = vpop.f32.mrb[0].mxu0
      %2077 = vmatprep.mubr.bf16.mxu0 0
      %2078 = vmatmul.mubr.bf16.gmra.mrb[0].mxu0 %v1881
      %v2079 = vpop.f32.mrb[0].mxu0
      %v2080 = vadd.f32 %v1775, %v2079
      %v2081 = vpop.f32.mrb[0].mxu0
      %v2082 = vpop.f32.mrb[0].mxu0
      %v2083 = vadd.f32 %v1778, %v2082
      %v2084 = vpop.f32.mrb[0].mxu0
      %2085 = vmatprep.mubr.bf16.mxu0 0
      %2086 = vmatmul.mubr.bf16.gmra.mrb[0].mxu0 %v1882
      %v2087 = vpop.f32.mrb[0].mxu0
      %v2088 = vadd.f32 %v1783, %v2087
      %v2089 = vpop.f32.mrb[0].mxu0
      %v2090 = vpop.f32.mrb[0].mxu0
      %v2091 = vadd.f32 %v1786, %v2090
      %v2092 = vpop.f32.mrb[0].mxu0
      %2093 = vmatprep.mubr.bf16.mxu0 0
      %2094 = vmatmul.mubr.bf16.gmra.mrb[0].mxu0 %v1883
      %v2095 = vpop.f32.mrb[0].mxu0
      %v2096 = vadd.f32 %v1791, %v2095
      %v2097 = vpop.f32.mrb[0].mxu0
      %v2098 = vpop.f32.mrb[0].mxu0
      %v2099 = vadd.f32 %v1794, %v2098
      %v2100 = vpop.f32.mrb[0].mxu0
      %2101 = vmatprep.mubr.bf16.mxu0 0
      %2102 = vmatmul.mubr.bf16.gmra.mrb[0].mxu0 %v1884
      %v2103 = vpop.f32.mrb[0].mxu0
      %v2104 = vadd.f32 %v1799, %v2103
      %v2105 = vpop.f32.mrb[0].mxu0
      %v2106 = vpop.f32.mrb[0].mxu0
      %v2107 = vadd.f32 %v1802, %v2106
      %v2108 = vpop.f32.mrb[0].mxu0
      %2109 = vdwg.mxu0
      %v2110 = vld [vmem:[#allocation2] sm:$0xe]
      %v2111 = vld [vmem:[#allocation2 + $0xc] sm:$0xe]
      %v2112 = vld [vmem:[#allocation2 + $0x18] sm:$0xe]
      %v2113 = vld [vmem:[#allocation2 + $0x24] sm:$0xe]
      %v2114 = vld [vmem:[#allocation2 + $0x30] sm:$0xe]
      %v2115 = vld [vmem:[#allocation2 + $0x3c] sm:$0xe]
      %v2116 = vld [vmem:[#allocation2 + $0x48] sm:$0xe]
      %v2117 = vld [vmem:[#allocation2 + $0x54] sm:$0xe]
      %v2118 = vld [vmem:[#allocation2 + $0x60] sm:$0xe]
      %v2119 = vld [vmem:[#allocation2 + $0x6c] sm:$0xe]
      %v2120 = vld [vmem:[#allocation2 + $0x78] sm:$0xe]
      %v2121 = vld [vmem:[#allocation2 + $0x84] sm:$0xe]
      %v2122 = vld [vmem:[#allocation2 + $0x90] sm:$0xe]
      %v2123 = vld [vmem:[#allocation2 + $0x9c] sm:$0xe]
      %v2124 = vld [vmem:[#allocation2 + $0xa8] sm:$0xe]
      %v2125 = vld [vmem:[#allocation2 + $0xb4] sm:$0xe]
      %vm2158 = vcmask 1042432
      %vm2159 = vcmask 1046532
      %vm2160 = vmor %vm2158, %vm2159
      %v2161 = vrot.slane %v2110, 5
      %v2162 = vrot.slane %v2161, 4
      %v2163 = vrot.slane %v1065, 5
      %v2164 = vsel %vm2160, %v2162, %v2163
      %v2165 = vrot.slane %v2163, 4
      %v2166 = vrot.slane %v1112, 5
      %v2167 = vsel %vm2160, %v2165, %v2166
      %v2168 = vrot.slane %v2111, 5
      %v2169 = vrot.slane %v2168, 4
      %v2170 = vrot.slane %v1067, 5
      %v2171 = vsel %vm2160, %v2169, %v2170
      %v2172 = vrot.slane %v2170, 4
      %v2173 = vrot.slane %v1113, 5
      %v2174 = vsel %vm2160, %v2172, %v2173
      %v2175 = vrot.slane %v2112, 5
      %v2176 = vrot.slane %v2175, 4
      %v2177 = vrot.slane %v1069, 5
      %v2178 = vsel %vm2160, %v2176, %v2177
      %v2179 = vrot.slane %v2177, 4
      %v2180 = vrot.slane %v1114, 5
      %v2181 = vsel %vm2160, %v2179, %v2180
      %v2182 = vrot.slane %v2113, 5
      %v2183 = vrot.slane %v2182, 4
      %v2184 = vrot.slane %v1071, 5
      %v2185 = vsel %vm2160, %v2183, %v2184
      %v2186 = vrot.slane %v2184, 4
      %v2187 = vrot.slane %v1115, 5
      %v2188 = vsel %vm2160, %v2186, %v2187
      %v2189 = vrot.slane %v2114, 5
      %v2190 = vrot.slane %v2189, 4
      %v2191 = vrot.slane %v1073, 5
      %v2192 = vsel %vm2160, %v2190, %v2191
      %v2193 = vrot.slane %v2191, 4
      %v2194 = vrot.slane %v1116, 5
      %v2195 = vsel %vm2160, %v2193, %v2194
      %v2196 = vrot.slane %v2115, 5
      %v2197 = vrot.slane %v2196, 4
      %v2198 = vrot.slane %v1075, 5
      %v2199 = vsel %vm2160, %v2197, %v2198
      %v2200 = vrot.slane %v2198, 4
      %v2201 = vrot.slane %v1117, 5
      %v2202 = vsel %vm2160, %v2200, %v2201
      %v2203 = vrot.slane %v2116, 5
      %v2204 = vrot.slane %v2203, 4
      %v2205 = vrot.slane %v1077, 5
      %v2206 = vsel %vm2160, %v2204, %v2205
      %v2207 = vrot.slane %v2205, 4
      %v2208 = vrot.slane %v1118, 5
      %v2209 = vsel %vm2160, %v2207, %v2208
      %v2210 = vrot.slane %v2117, 5
      %v2211 = vrot.slane %v2210, 4
      %v2212 = vrot.slane %v1079, 5
      %v2213 = vsel %vm2160, %v2211, %v2212
      %v2214 = vrot.slane %v2212, 4
      %v2215 = vrot.slane %v1119, 5
      %v2216 = vsel %vm2160, %v2214, %v2215
      %v2217 = vrot.slane %v2118, 5
      %v2218 = vrot.slane %v2217, 4
      %v2219 = vrot.slane %v1081, 5
      %v2220 = vsel %vm2160, %v2218, %v2219
      %v2221 = vrot.slane %v2219, 4
      %v2222 = vrot.slane %v1120, 5
      %v2223 = vsel %vm2160, %v2221, %v2222
      %v2224 = vrot.slane %v2119, 5
      %v2225 = vrot.slane %v2224, 4
      %v2226 = vrot.slane %v1083, 5
      %v2227 = vsel %vm2160, %v2225, %v2226
      %v2228 = vrot.slane %v2226, 4
      %v2229 = vrot.slane %v1121, 5
      %v2230 = vsel %vm2160, %v2228, %v2229
      %v2231 = vrot.slane %v2120, 5
      %v2232 = vrot.slane %v2231, 4
      %v2233 = vrot.slane %v1085, 5
      %v2234 = vsel %vm2160, %v2232, %v2233
      %v2235 = vrot.slane %v2233, 4
      %v2236 = vrot.slane %v1122, 5
      %v2237 = vsel %vm2160, %v2235, %v2236
      %v2238 = vrot.slane %v2121, 5
      %v2239 = vrot.slane %v2238, 4
      %v2240 = vrot.slane %v1087, 5
      %v2241 = vsel %vm2160, %v2239, %v2240
      %v2242 = vrot.slane %v2240, 4
      %v2243 = vrot.slane %v1123, 5
      %v2244 = vsel %vm2160, %v2242, %v2243
      %v2245 = vrot.slane %v2122, 5
      %v2246 = vrot.slane %v2245, 4
      %v2247 = vrot.slane %v1089, 5
      %v2248 = vsel %vm2160, %v2246, %v2247
      %v2249 = vrot.slane %v2247, 4
      %v2250 = vrot.slane %v1124, 5
      %v2251 = vsel %vm2160, %v2249, %v2250
      %v2252 = vrot.slane %v2123, 5
      %v2253 = vrot.slane %v2252, 4
      %v2254 = vrot.slane %v1091, 5
      %v2255 = vsel %vm2160, %v2253, %v2254
      %v2256 = vrot.slane %v2254, 4
      %v2257 = vrot.slane %v1125, 5
      %v2258 = vsel %vm2160, %v2256, %v2257
      %v2259 = vrot.slane %v2124, 5
      %v2260 = vrot.slane %v2259, 4
      %v2261 = vrot.slane %v1093, 5
      %v2262 = vsel %vm2160, %v2260, %v2261
      %v2263 = vrot.slane %v2261, 4
      %v2264 = vrot.slane %v1126, 5
      %v2265 = vsel %vm2160, %v2263, %v2264
      %v2266 = vrot.slane %v2125, 5
      %v2267 = vrot.slane %v2266, 4
      %v2268 = vrot.slane %v1095, 5
      %v2269 = vsel %vm2160, %v2267, %v2268
      %v2270 = vrot.slane %v2268, 4
      %v2271 = vrot.slane %v1127, 5
      %v2272 = vsel %vm2160, %v2270, %v2271
      %s2273 = scalar_lea.vmem %s3, 128
      %v2274 = vld [vmem:[%s2273] sm:$0xf]
      %v2275 = vld [vmem:[%s2273 + $0x4] sm:$0xf]
      %v2276 = vld [vmem:[%s2273 + $0x8] sm:$0xf]
      %v2277 = vld [vmem:[%s2273 + $0xc] sm:$0xf]
      %v2278 = vld [vmem:[%s2273 + $0x10] sm:$0xf]
      %v2279 = vld [vmem:[%s2273 + $0x14] sm:$0xf]
      %v2280 = vld [vmem:[%s2273 + $0x18] sm:$0xf]
      %v2281 = vld [vmem:[%s2273 + $0x1c] sm:$0xf]
      %v2282 = vld [vmem:[%s2273 + $0x20] sm:$0xf]
      %v2283 = vld [vmem:[%s2273 + $0x24] sm:$0xf]
      %v2284 = vld [vmem:[%s2273 + $0x28] sm:$0xf]
      %v2285 = vld [vmem:[%s2273 + $0x2c] sm:$0xf]
      %v2286 = vld [vmem:[%s2273 + $0x30] sm:$0xf]
      %v2287 = vld [vmem:[%s2273 + $0x34] sm:$0xf]
      %v2288 = vld [vmem:[%s2273 + $0x38] sm:$0xf]
      %v2289 = vld [vmem:[%s2273 + $0x3c] sm:$0xf]
      %v2290 = vunpack.c.l.b16 %v2164
      %v2291 = vunpack.c.l.b16 %v2167
      %v2292 = vunpack.c.l.b16 %v2171
      %v2293 = vunpack.c.l.b16 %v2174
      %v2294 = vunpack.c.l.b16 %v2178
      %v2295 = vunpack.c.l.b16 %v2181
      %v2296 = vunpack.c.l.b16 %v2185
      %v2297 = vunpack.c.l.b16 %v2188
      %v2298 = vunpack.c.l.b16 %v2192
      %v2299 = vunpack.c.l.b16 %v2195
      %v2300 = vunpack.c.l.b16 %v2199
      %v2301 = vunpack.c.l.b16 %v2202
      %v2302 = vunpack.c.l.b16 %v2206
      %v2303 = vunpack.c.l.b16 %v2209
      %v2304 = vunpack.c.l.b16 %v2213
      %v2305 = vunpack.c.l.b16 %v2216
      %v2306 = vunpack.c.l.b16 %v2220
      %v2307 = vunpack.c.l.b16 %v2223
      %v2308 = vunpack.c.l.b16 %v2227
      %v2309 = vunpack.c.l.b16 %v2230
      %v2310 = vunpack.c.l.b16 %v2234
      %v2311 = vunpack.c.l.b16 %v2237
      %v2312 = vunpack.c.l.b16 %v2241
      %v2313 = vunpack.c.l.b16 %v2244
      %v2314 = vunpack.c.l.b16 %v2248
      %v2315 = vunpack.c.l.b16 %v2251
      %v2316 = vunpack.c.l.b16 %v2255
      %v2317 = vunpack.c.l.b16 %v2258
      %v2318 = vunpack.c.l.b16 %v2262
      %v2319 = vunpack.c.l.b16 %v2265
      %v2320 = vunpack.c.l.b16 %v2269
      %v2321 = vunpack.c.l.b16 %v2272
      %v2322 = vpack.c.b16 %v2291, %v2290
      %v2323 = vpack.c.b16 %v2293, %v2292
      %v2324 = vpack.c.b16 %v2295, %v2294
      %v2325 = vpack.c.b16 %v2297, %v2296
      %v2326 = vpack.c.b16 %v2299, %v2298
      %v2327 = vpack.c.b16 %v2301, %v2300
      %v2328 = vpack.c.b16 %v2303, %v2302
      %v2329 = vpack.c.b16 %v2305, %v2304
      %v2330 = vpack.c.b16 %v2307, %v2306
      %v2331 = vpack.c.b16 %v2309, %v2308
      %v2332 = vpack.c.b16 %v2311, %v2310
      %v2333 = vpack.c.b16 %v2313, %v2312
      %v2334 = vpack.c.b16 %v2315, %v2314
      %v2335 = vpack.c.b16 %v2317, %v2316
      %v2336 = vpack.c.b16 %v2319, %v2318
      %v2337 = vpack.c.b16 %v2321, %v2320
      %v2370 = vunpack.c.l.b16 %v2274
      %v2371 = vunpack.c.l.b16 %v2275
      %v2372 = vunpack.c.l.b16 %v2276
      %v2373 = vunpack.c.l.b16 %v2277
      %v2374 = vunpack.c.l.b16 %v2278
      %v2375 = vunpack.c.l.b16 %v2279
      %v2376 = vunpack.c.l.b16 %v2280
      %v2377 = vunpack.c.l.b16 %v2281
      %v2378 = vunpack.c.l.b16 %v2282
      %v2379 = vunpack.c.l.b16 %v2283
      %v2380 = vunpack.c.l.b16 %v2284
      %v2381 = vunpack.c.l.b16 %v2285
      %v2382 = vunpack.c.l.b16 %v2286
      %v2383 = vunpack.c.l.b16 %v2287
      %v2384 = vunpack.c.l.b16 %v2288
      %v2385 = vunpack.c.l.b16 %v2289
      %v2386 = vpack.c.b16 %v2371, %v2370
      %v2387 = vpack.c.b16 %v2373, %v2372
      %v2388 = vpack.c.b16 %v2375, %v2374
      %v2389 = vpack.c.b16 %v2377, %v2376
      %v2390 = vpack.c.b16 %v2379, %v2378
      %v2391 = vpack.c.b16 %v2381, %v2380
      %v2392 = vpack.c.b16 %v2383, %v2382
      %v2393 = vpack.c.b16 %v2385, %v2384
      %2402 = vmatprep.subr.bf16.mxu0 0
      %2403 = vmatpush1.bf16.msra.mxu0 %v2386
      %2404 = vmatprep.subr.bf16.mxu0 0
      %2405 = vmatpush1.bf16.msra.mxu0 %v2387
      %2406 = vmatprep.subr.bf16.mxu0 0
      %2407 = vmatpush1.bf16.msra.mxu0 %v2388
      %2408 = vmatprep.subr.bf16.mxu0 0
      %2409 = vmatpush1.bf16.msra.mxu0 %v2389
      %2410 = vmatprep.subr.bf16.mxu0 0
      %2411 = vmatpush1.bf16.msra.mxu0 %v2390
      %2412 = vmatprep.subr.bf16.mxu0 0
      %2413 = vmatpush1.bf16.msra.mxu0 %v2391
      %2414 = vmatprep.subr.bf16.mxu0 0
      %2415 = vmatpush1.bf16.msra.mxu0 %v2392
      %2416 = vmatprep.subr.bf16.mxu0 0
      %2417 = vmatpush1.bf16.msra.mxu0 %v2393
      %2418 = vmatprep.subr.bf16.mxu0 0
      %2419 = vmatpush1.bf16.msra.mxu0 0
      %2420 = vmatprep.subr.bf16.mxu0 0
      %2421 = vmatpush1.bf16.msra.mxu0 0
      %2422 = vmatprep.subr.bf16.mxu0 0
      %2423 = vmatpush1.bf16.msra.mxu0 0
      %2424 = vmatprep.subr.bf16.mxu0 0
      %2425 = vmatpush1.bf16.msra.mxu0 0
      %2426 = vmatprep.subr.bf16.mxu0 0
      %2427 = vmatpush1.bf16.msra.mxu0 0
      %2428 = vmatprep.subr.bf16.mxu0 0
      %2429 = vmatpush1.bf16.msra.mxu0 0
      %2430 = vmatprep.subr.bf16.mxu0 0
      %2431 = vmatpush1.bf16.msra.mxu0 0
      %2432 = vmatprep.subr.bf16.mxu0 0
      %2433 = vmatpush1.bf16.msra.mxu0 0
      %2434 = vmatprep.mubr.bf16.mxu0 0
      %2435 = vmatmul.mubr.bf16.gmra.mrb[0].mxu0 %v2322
      %v2436 = vpop.f32.mrb[0].mxu0
      %v2437 = vadd.f32 0.0, %v2436
      %v2438 = vpop.f32.mrb[0].mxu0
      %v2439 = vpop.f32.mrb[0].mxu0
      %v2440 = vadd.f32 0.0, %v2439
      %v2441 = vpop.f32.mrb[0].mxu0
      %2442 = vmatprep.mubr.bf16.mxu0 0
      %2443 = vmatmul.mubr.bf16.gmra.mrb[0].mxu0 %v2323
      %v2444 = vpop.f32.mrb[0].mxu0
      %v2445 = vadd.f32 0.0, %v2444
      %v2446 = vpop.f32.mrb[0].mxu0
      %v2447 = vpop.f32.mrb[0].mxu0
      %v2448 = vadd.f32 0.0, %v2447
      %v2449 = vpop.f32.mrb[0].mxu0
      %2450 = vmatprep.mubr.bf16.mxu0 0
      %2451 = vmatmul.mubr.bf16.gmra.mrb[0].mxu0 %v2324
      %v2452 = vpop.f32.mrb[0].mxu0
      %v2453 = vadd.f32 0.0, %v2452
      %v2454 = vpop.f32.mrb[0].mxu0
      %v2455 = vpop.f32.mrb[0].mxu0
      %v2456 = vadd.f32 0.0, %v2455
      %v2457 = vpop.f32.mrb[0].mxu0
      %2458 = vmatprep.mubr.bf16.mxu0 0
      %2459 = vmatmul.mubr.bf16.gmra.mrb[0].mxu0 %v2325
      %v2460 = vpop.f32.mrb[0].mxu0
      %v2461 = vadd.f32 0.0, %v2460
      %v2462 = vpop.f32.mrb[0].mxu0
      %v2463 = vpop.f32.mrb[0].mxu0
      %v2464 = vadd.f32 0.0, %v2463
      %v2465 = vpop.f32.mrb[0].mxu0
      %2466 = vmatprep.mubr.bf16.mxu0 0
      %2467 = vmatmul.mubr.bf16.gmra.mrb[0].mxu0 %v2326
      %v2468 = vpop.f32.mrb[0].mxu0
      %v2469 = vadd.f32 0.0, %v2468
      %v2470 = vpop.f32.mrb[0].mxu0
      %v2471 = vpop.f32.mrb[0].mxu0
      %v2472 = vadd.f32 0.0, %v2471
      %v2473 = vpop.f32.mrb[0].mxu0
      %2474 = vmatprep.mubr.bf16.mxu0 0
      %2475 = vmatmul.mubr.bf16.gmra.mrb[0].mxu0 %v2327
      %v2476 = vpop.f32.mrb[0].mxu0
      %v2477 = vadd.f32 0.0, %v2476
      %v2478 = vpop.f32.mrb[0].mxu0
      %v2479 = vpop.f32.mrb[0].mxu0
      %v2480 = vadd.f32 0.0, %v2479
      %v2481 = vpop.f32.mrb[0].mxu0
      %2482 = vmatprep.mubr.bf16.mxu0 0
      %2483 = vmatmul.mubr.bf16.gmra.mrb[0].mxu0 %v2328
      %v2484 = vpop.f32.mrb[0].mxu0
      %v2485 = vadd.f32 0.0, %v2484
      %v2486 = vpop.f32.mrb[0].mxu0
      %v2487 = vpop.f32.mrb[0].mxu0
      %v2488 = vadd.f32 0.0, %v2487
      %v2489 = vpop.f32.mrb[0].mxu0
      %2490 = vmatprep.mubr.bf16.mxu0 0
      %2491 = vmatmul.mubr.bf16.gmra.mrb[0].mxu0 %v2329
      %v2492 = vpop.f32.mrb[0].mxu0
      %v2493 = vadd.f32 0.0, %v2492
      %v2494 = vpop.f32.mrb[0].mxu0
      %v2495 = vpop.f32.mrb[0].mxu0
      %v2496 = vadd.f32 0.0, %v2495
      %v2497 = vpop.f32.mrb[0].mxu0
      %2498 = vmatprep.mubr.bf16.mxu0 0
      %2499 = vmatmul.mubr.bf16.gmra.mrb[0].mxu0 %v2330
      %v2500 = vpop.f32.mrb[0].mxu0
      %v2501 = vadd.f32 0.0, %v2500
      %v2502 = vpop.f32.mrb[0].mxu0
      %v2503 = vpop.f32.mrb[0].mxu0
      %v2504 = vadd.f32 0.0, %v2503
      %v2505 = vpop.f32.mrb[0].mxu0
      %2506 = vmatprep.mubr.bf16.mxu0 0
      %2507 = vmatmul.mubr.bf16.gmra.mrb[0].mxu0 %v2331
      %v2508 = vpop.f32.mrb[0].mxu0
      %v2509 = vadd.f32 0.0, %v2508
      %v2510 = vpop.f32.mrb[0].mxu0
      %v2511 = vpop.f32.mrb[0].mxu0
      %v2512 = vadd.f32 0.0, %v2511
      %v2513 = vpop.f32.mrb[0].mxu0
      %2514 = vmatprep.mubr.bf16.mxu0 0
      %2515 = vmatmul.mubr.bf16.gmra.mrb[0].mxu0 %v2332
      %v2516 = vpop.f32.mrb[0].mxu0
      %v2517 = vadd.f32 0.0, %v2516
      %v2518 = vpop.f32.mrb[0].mxu0
      %v2519 = vpop.f32.mrb[0].mxu0
      %v2520 = vadd.f32 0.0, %v2519
      %v2521 = vpop.f32.mrb[0].mxu0
      %2522 = vmatprep.mubr.bf16.mxu0 0
      %2523 = vmatmul.mubr.bf16.gmra.mrb[0].mxu0 %v2333
      %v2524 = vpop.f32.mrb[0].mxu0
      %v2525 = vadd.f32 0.0, %v2524
      %v2526 = vpop.f32.mrb[0].mxu0
      %v2527 = vpop.f32.mrb[0].mxu0
      %v2528 = vadd.f32 0.0, %v2527
      %v2529 = vpop.f32.mrb[0].mxu0
      %2530 = vmatprep.mubr.bf16.mxu0 0
      %2531 = vmatmul.mubr.bf16.gmra.mrb[0].mxu0 %v2334
      %v2532 = vpop.f32.mrb[0].mxu0
      %v2533 = vadd.f32 0.0, %v2532
      %v2534 = vpop.f32.mrb[0].mxu0
      %v2535 = vpop.f32.mrb[0].mxu0
      %v2536 = vadd.f32 0.0, %v2535
      %v2537 = vpop.f32.mrb[0].mxu0
      %2538 = vmatprep.mubr.bf16.mxu0 0
      %2539 = vmatmul.mubr.bf16.gmra.mrb[0].mxu0 %v2335
      %v2540 = vpop.f32.mrb[0].mxu0
      %v2541 = vadd.f32 0.0, %v2540
      %v2542 = vpop.f32.mrb[0].mxu0
      %v2543 = vpop.f32.mrb[0].mxu0
      %v2544 = vadd.f32 0.0, %v2543
      %v2545 = vpop.f32.mrb[0].mxu0
      %2546 = vmatprep.mubr.bf16.mxu0 0
      %2547 = vmatmul.mubr.bf16.gmra.mrb[0].mxu0 %v2336
      %v2548 = vpop.f32.mrb[0].mxu0
      %v2549 = vadd.f32 0.0, %v2548
      %v2550 = vpop.f32.mrb[0].mxu0
      %v2551 = vpop.f32.mrb[0].mxu0
      %v2552 = vadd.f32 0.0, %v2551
      %v2553 = vpop.f32.mrb[0].mxu0
      %2554 = vmatprep.mubr.bf16.mxu0 0
      %2555 = vmatmul.mubr.bf16.gmra.mrb[0].mxu0 %v2337
      %v2556 = vpop.f32.mrb[0].mxu0
      %v2557 = vadd.f32 0.0, %v2556
      %v2558 = vpop.f32.mrb[0].mxu0
      %v2559 = vpop.f32.mrb[0].mxu0
      %v2560 = vadd.f32 0.0, %v2559
      %v2561 = vpop.f32.mrb[0].mxu0
      %2562 = vdwg.mxu0
      %v2563 = vadd.f32 %v1984, %v2437
      %v2564 = vadd.f32 %v1987, %v2440
      %v2565 = vadd.f32 %v1992, %v2445
      %v2566 = vadd.f32 %v1995, %v2448
      %v2567 = vadd.f32 %v2000, %v2453
      %v2568 = vadd.f32 %v2003, %v2456
      %v2569 = vadd.f32 %v2008, %v2461
      %v2570 = vadd.f32 %v2011, %v2464
      %v2571 = vadd.f32 %v2016, %v2469
      %v2572 = vadd.f32 %v2019, %v2472
      %v2573 = vadd.f32 %v2024, %v2477
      %v2574 = vadd.f32 %v2027, %v2480
      %v2575 = vadd.f32 %v2032, %v2485
      %v2576 = vadd.f32 %v2035, %v2488
      %v2577 = vadd.f32 %v2040, %v2493
      %v2578 = vadd.f32 %v2043, %v2496
      %v2579 = vadd.f32 %v2048, %v2501
      %v2580 = vadd.f32 %v2051, %v2504
      %v2581 = vadd.f32 %v2056, %v2509
      %v2582 = vadd.f32 %v2059, %v2512
      %v2583 = vadd.f32 %v2064, %v2517
      %v2584 = vadd.f32 %v2067, %v2520
      %v2585 = vadd.f32 %v2072, %v2525
      %v2586 = vadd.f32 %v2075, %v2528
      %v2587 = vadd.f32 %v2080, %v2533
      %v2588 = vadd.f32 %v2083, %v2536
      %v2589 = vadd.f32 %v2088, %v2541
      %v2590 = vadd.f32 %v2091, %v2544
      %v2591 = vadd.f32 %v2096, %v2549
      %v2592 = vadd.f32 %v2099, %v2552
      %v2593 = vadd.f32 %v2104, %v2557
      %v2594 = vadd.f32 %v2107, %v2560
      %v2595 = vld [vmem:[%s949] sm:$0xf]
      %v2596 = vld [vmem:[%s949 + $0x4] sm:$0xf]
      %v2597 = vld [vmem:[%s949 + $0xc] sm:$0xf]
      %v2598 = vld [vmem:[%s949 + $0x10] sm:$0xf]
      %v2599 = vld [vmem:[%s949 + $0x18] sm:$0xf]
      %v2600 = vld [vmem:[%s949 + $0x1c] sm:$0xf]
      %v2601 = vld [vmem:[%s949 + $0x24] sm:$0xf]
      %v2602 = vld [vmem:[%s949 + $0x28] sm:$0xf]
      %v2603 = vld [vmem:[%s949 + $0x30] sm:$0xf]
      %v2604 = vld [vmem:[%s949 + $0x34] sm:$0xf]
      %v2605 = vld [vmem:[%s949 + $0x3c] sm:$0xf]
      %v2606 = vld [vmem:[%s949 + $0x40] sm:$0xf]
      %v2607 = vld [vmem:[%s949 + $0x48] sm:$0xf]
      %v2608 = vld [vmem:[%s949 + $0x4c] sm:$0xf]
      %v2609 = vld [vmem:[%s949 + $0x54] sm:$0xf]
      %v2610 = vld [vmem:[%s949 + $0x58] sm:$0xf]
      %v2611 = vld [vmem:[%s949 + $0x60] sm:$0xf]
      %v2612 = vld [vmem:[%s949 + $0x64] sm:$0xf]
      %v2613 = vld [vmem:[%s949 + $0x6c] sm:$0xf]
      %v2614 = vld [vmem:[%s949 + $0x70] sm:$0xf]
      %v2615 = vld [vmem:[%s949 + $0x78] sm:$0xf]
      %v2616 = vld [vmem:[%s949 + $0x7c] sm:$0xf]
      %v2617 = vld [vmem:[%s949 + $0x84] sm:$0xf]
      %v2618 = vld [vmem:[%s949 + $0x88] sm:$0xf]
      %v2619 = vld [vmem:[%s949 + $0x90] sm:$0xf]
      %v2620 = vld [vmem:[%s949 + $0x94] sm:$0xf]
      %v2621 = vld [vmem:[%s949 + $0x9c] sm:$0xf]
      %v2622 = vld [vmem:[%s949 + $0xa0] sm:$0xf]
      %v2623 = vld [vmem:[%s949 + $0xa8] sm:$0xf]
      %v2624 = vld [vmem:[%s949 + $0xac] sm:$0xf]
      %v2625 = vld [vmem:[%s949 + $0xb4] sm:$0xf]
      %v2626 = vld [vmem:[%s949 + $0xb8] sm:$0xf]
      %s2627 = scalar_lea.vmem %s3, 192
      %v2628 = vld [vmem:[%s2627] sm:$0xf]
      %v2629 = vld [vmem:[%s2627 + $0x4] sm:$0xf]
      %v2630 = vld [vmem:[%s2627 + $0x8] sm:$0xf]
      %v2631 = vld [vmem:[%s2627 + $0xc] sm:$0xf]
      %v2632 = vld [vmem:[%s2627 + $0x10] sm:$0xf]
      %v2633 = vld [vmem:[%s2627 + $0x14] sm:$0xf]
      %v2634 = vld [vmem:[%s2627 + $0x18] sm:$0xf]
      %v2635 = vld [vmem:[%s2627 + $0x1c] sm:$0xf]
      %v2636 = vld [vmem:[%s2627 + $0x20] sm:$0xf]
      %v2637 = vld [vmem:[%s2627 + $0x24] sm:$0xf]
      %v2638 = vld [vmem:[%s2627 + $0x28] sm:$0xf]
      %v2639 = vld [vmem:[%s2627 + $0x2c] sm:$0xf]
      %v2640 = vld [vmem:[%s2627 + $0x30] sm:$0xf]
      %v2641 = vld [vmem:[%s2627 + $0x34] sm:$0xf]
      %v2642 = vld [vmem:[%s2627 + $0x38] sm:$0xf]
      %v2643 = vld [vmem:[%s2627 + $0x3c] sm:$0xf]
      %v2676 = vunpack.c.l.b16 %v2595
      %v2677 = vunpack.c.l.b16 %v2596
      %v2678 = vunpack.c.l.b16 %v2597
      %v2679 = vunpack.c.l.b16 %v2598
      %v2680 = vunpack.c.l.b16 %v2599
      %v2681 = vunpack.c.l.b16 %v2600
      %v2682 = vunpack.c.l.b16 %v2601
      %v2683 = vunpack.c.l.b16 %v2602
      %v2684 = vunpack.c.l.b16 %v2603
      %v2685 = vunpack.c.l.b16 %v2604
      %v2686 = vunpack.c.l.b16 %v2605
      %v2687 = vunpack.c.l.b16 %v2606
      %v2688 = vunpack.c.l.b16 %v2607
      %v2689 = vunpack.c.l.b16 %v2608
      %v2690 = vunpack.c.l.b16 %v2609
      %v2691 = vunpack.c.l.b16 %v2610
      %v2692 = vunpack.c.l.b16 %v2611
      %v2693 = vunpack.c.l.b16 %v2612
      %v2694 = vunpack.c.l.b16 %v2613
      %v2695 = vunpack.c.l.b16 %v2614
      %v2696 = vunpack.c.l.b16 %v2615
      %v2697 = vunpack.c.l.b16 %v2616
      %v2698 = vunpack.c.l.b16 %v2617
      %v2699 = vunpack.c.l.b16 %v2618
      %v2700 = vunpack.c.l.b16 %v2619
      %v2701 = vunpack.c.l.b16 %v2620
      %v2702 = vunpack.c.l.b16 %v2621
      %v2703 = vunpack.c.l.b16 %v2622
      %v2704 = vunpack.c.l.b16 %v2623
      %v2705 = vunpack.c.l.b16 %v2624
      %v2706 = vunpack.c.l.b16 %v2625
      %v2707 = vunpack.c.l.b16 %v2626
      %v2708 = vpack.c.b16 %v2677, %v2676
      %v2709 = vpack.c.b16 %v2679, %v2678
      %v2710 = vpack.c.b16 %v2681, %v2680
      %v2711 = vpack.c.b16 %v2683, %v2682
      %v2712 = vpack.c.b16 %v2685, %v2684
      %v2713 = vpack.c.b16 %v2687, %v2686
      %v2714 = vpack.c.b16 %v2689, %v2688
      %v2715 = vpack.c.b16 %v2691, %v2690
      %v2716 = vpack.c.b16 %v2693, %v2692
      %v2717 = vpack.c.b16 %v2695, %v2694
      %v2718 = vpack.c.b16 %v2697, %v2696
      %v2719 = vpack.c.b16 %v2699, %v2698
      %v2720 = vpack.c.b16 %v2701, %v2700
      %v2721 = vpack.c.b16 %v2703, %v2702
      %v2722 = vpack.c.b16 %v2705, %v2704
      %v2723 = vpack.c.b16 %v2707, %v2706
      %v2756 = vunpack.c.l.b16 %v2628
      %v2757 = vunpack.c.l.b16 %v2629
      %v2758 = vunpack.c.l.b16 %v2630
      %v2759 = vunpack.c.l.b16 %v2631
      %v2760 = vunpack.c.l.b16 %v2632
      %v2761 = vunpack.c.l.b16 %v2633
      %v2762 = vunpack.c.l.b16 %v2634
      %v2763 = vunpack.c.l.b16 %v2635
      %v2764 = vunpack.c.l.b16 %v2636
      %v2765 = vunpack.c.l.b16 %v2637
      %v2766 = vunpack.c.l.b16 %v2638
      %v2767 = vunpack.c.l.b16 %v2639
      %v2768 = vunpack.c.l.b16 %v2640
      %v2769 = vunpack.c.l.b16 %v2641
      %v2770 = vunpack.c.l.b16 %v2642
      %v2771 = vunpack.c.l.b16 %v2643
      %v2772 = vpack.c.b16 %v2757, %v2756
      %v2773 = vpack.c.b16 %v2759, %v2758
      %v2774 = vpack.c.b16 %v2761, %v2760
      %v2775 = vpack.c.b16 %v2763, %v2762
      %v2776 = vpack.c.b16 %v2765, %v2764
      %v2777 = vpack.c.b16 %v2767, %v2766
      %v2778 = vpack.c.b16 %v2769, %v2768
      %v2779 = vpack.c.b16 %v2771, %v2770
      %2788 = vmatprep.subr.bf16.mxu0 0
      %2789 = vmatpush1.bf16.msra.mxu0 %v2772
      %2790 = vmatprep.subr.bf16.mxu0 0
      %2791 = vmatpush1.bf16.msra.mxu0 %v2773
      %2792 = vmatprep.subr.bf16.mxu0 0
      %2793 = vmatpush1.bf16.msra.mxu0 %v2774
      %2794 = vmatprep.subr.bf16.mxu0 0
      %2795 = vmatpush1.bf16.msra.mxu0 %v2775
      %2796 = vmatprep.subr.bf16.mxu0 0
      %2797 = vmatpush1.bf16.msra.mxu0 %v2776
      %2798 = vmatprep.subr.bf16.mxu0 0
      %2799 = vmatpush1.bf16.msra.mxu0 %v2777
      %2800 = vmatprep.subr.bf16.mxu0 0
      %2801 = vmatpush1.bf16.msra.mxu0 %v2778
      %2802 = vmatprep.subr.bf16.mxu0 0
      %2803 = vmatpush1.bf16.msra.mxu0 %v2779
      %2804 = vmatprep.subr.bf16.mxu0 0
      %2805 = vmatpush1.bf16.msra.mxu0 0
      %2806 = vmatprep.subr.bf16.mxu0 0
      %2807 = vmatpush1.bf16.msra.mxu0 0
      %2808 = vmatprep.subr.bf16.mxu0 0
      %2809 = vmatpush1.bf16.msra.mxu0 0
      %2810 = vmatprep.subr.bf16.mxu0 0
      %2811 = vmatpush1.bf16.msra.mxu0 0
      %2812 = vmatprep.subr.bf16.mxu0 0
      %2813 = vmatpush1.bf16.msra.mxu0 0
      %2814 = vmatprep.subr.bf16.mxu0 0
      %2815 = vmatpush1.bf16.msra.mxu0 0
      %2816 = vmatprep.subr.bf16.mxu0 0
      %2817 = vmatpush1.bf16.msra.mxu0 0
      %2818 = vmatprep.subr.bf16.mxu0 0
      %2819 = vmatpush1.bf16.msra.mxu0 0
      %2820 = vmatprep.mubr.bf16.mxu0 0
      %2821 = vmatmul.mubr.bf16.gmra.mrb[0].mxu0 %v2708
      %v2822 = vpop.f32.mrb[0].mxu0
      %v2823 = vadd.f32 0.0, %v2822
      %v2824 = vpop.f32.mrb[0].mxu0
      %v2825 = vpop.f32.mrb[0].mxu0
      %v2826 = vadd.f32 0.0, %v2825
      %v2827 = vpop.f32.mrb[0].mxu0
      %2828 = vmatprep.mubr.bf16.mxu0 0
      %2829 = vmatmul.mubr.bf16.gmra.mrb[0].mxu0 %v2709
      %v2830 = vpop.f32.mrb[0].mxu0
      %v2831 = vadd.f32 0.0, %v2830
      %v2832 = vpop.f32.mrb[0].mxu0
      %v2833 = vpop.f32.mrb[0].mxu0
      %v2834 = vadd.f32 0.0, %v2833
      %v2835 = vpop.f32.mrb[0].mxu0
      %2836 = vmatprep.mubr.bf16.mxu0 0
      %2837 = vmatmul.mubr.bf16.gmra.mrb[0].mxu0 %v2710
      %v2838 = vpop.f32.mrb[0].mxu0
      %v2839 = vadd.f32 0.0, %v2838
      %v2840 = vpop.f32.mrb[0].mxu0
      %v2841 = vpop.f32.mrb[0].mxu0
      %v2842 = vadd.f32 0.0, %v2841
      %v2843 = vpop.f32.mrb[0].mxu0
      %2844 = vmatprep.mubr.bf16.mxu0 0
      %2845 = vmatmul.mubr.bf16.gmra.mrb[0].mxu0 %v2711
      %v2846 = vpop.f32.mrb[0].mxu0
      %v2847 = vadd.f32 0.0, %v2846
      %v2848 = vpop.f32.mrb[0].mxu0
      %v2849 = vpop.f32.mrb[0].mxu0
      %v2850 = vadd.f32 0.0, %v2849
      %v2851 = vpop.f32.mrb[0].mxu0
      %2852 = vmatprep.mubr.bf16.mxu0 0
      %2853 = vmatmul.mubr.bf16.gmra.mrb[0].mxu0 %v2712
      %v2854 = vpop.f32.mrb[0].mxu0
      %v2855 = vadd.f32 0.0, %v2854
      %v2856 = vpop.f32.mrb[0].mxu0
      %v2857 = vpop.f32.mrb[0].mxu0
      %v2858 = vadd.f32 0.0, %v2857
      %v2859 = vpop.f32.mrb[0].mxu0
      %2860 = vmatprep.mubr.bf16.mxu0 0
      %2861 = vmatmul.mubr.bf16.gmra.mrb[0].mxu0 %v2713
      %v2862 = vpop.f32.mrb[0].mxu0
      %v2863 = vadd.f32 0.0, %v2862
      %v2864 = vpop.f32.mrb[0].mxu0
      %v2865 = vpop.f32.mrb[0].mxu0
      %v2866 = vadd.f32 0.0, %v2865
      %v2867 = vpop.f32.mrb[0].mxu0
      %2868 = vmatprep.mubr.bf16.mxu0 0
      %2869 = vmatmul.mubr.bf16.gmra.mrb[0].mxu0 %v2714
      %v2870 = vpop.f32.mrb[0].mxu0
      %v2871 = vadd.f32 0.0, %v2870
      %v2872 = vpop.f32.mrb[0].mxu0
      %v2873 = vpop.f32.mrb[0].mxu0
      %v2874 = vadd.f32 0.0, %v2873
      %v2875 = vpop.f32.mrb[0].mxu0
      %2876 = vmatprep.mubr.bf16.mxu0 0
      %2877 = vmatmul.mubr.bf16.gmra.mrb[0].mxu0 %v2715
      %v2878 = vpop.f32.mrb[0].mxu0
      %v2879 = vadd.f32 0.0, %v2878
      %v2880 = vpop.f32.mrb[0].mxu0
      %v2881 = vpop.f32.mrb[0].mxu0
      %v2882 = vadd.f32 0.0, %v2881
      %v2883 = vpop.f32.mrb[0].mxu0
      %2884 = vmatprep.mubr.bf16.mxu0 0
      %2885 = vmatmul.mubr.bf16.gmra.mrb[0].mxu0 %v2716
      %v2886 = vpop.f32.mrb[0].mxu0
      %v2887 = vadd.f32 0.0, %v2886
      %v2888 = vpop.f32.mrb[0].mxu0
      %v2889 = vpop.f32.mrb[0].mxu0
      %v2890 = vadd.f32 0.0, %v2889
      %v2891 = vpop.f32.mrb[0].mxu0
      %2892 = vmatprep.mubr.bf16.mxu0 0
      %2893 = vmatmul.mubr.bf16.gmra.mrb[0].mxu0 %v2717
      %v2894 = vpop.f32.mrb[0].mxu0
      %v2895 = vadd.f32 0.0, %v2894
      %v2896 = vpop.f32.mrb[0].mxu0
      %v2897 = vpop.f32.mrb[0].mxu0
      %v2898 = vadd.f32 0.0, %v2897
      %v2899 = vpop.f32.mrb[0].mxu0
      %2900 = vmatprep.mubr.bf16.mxu0 0
      %2901 = vmatmul.mubr.bf16.gmra.mrb[0].mxu0 %v2718
      %v2902 = vpop.f32.mrb[0].mxu0
      %v2903 = vadd.f32 0.0, %v2902
      %v2904 = vpop.f32.mrb[0].mxu0
      %v2905 = vpop.f32.mrb[0].mxu0
      %v2906 = vadd.f32 0.0, %v2905
      %v2907 = vpop.f32.mrb[0].mxu0
      %2908 = vmatprep.mubr.bf16.mxu0 0
      %2909 = vmatmul.mubr.bf16.gmra.mrb[0].mxu0 %v2719
      %v2910 = vpop.f32.mrb[0].mxu0
      %v2911 = vadd.f32 0.0, %v2910
      %v2912 = vpop.f32.mrb[0].mxu0
      %v2913 = vpop.f32.mrb[0].mxu0
      %v2914 = vadd.f32 0.0, %v2913
      %v2915 = vpop.f32.mrb[0].mxu0
      %2916 = vmatprep.mubr.bf16.mxu0 0
      %2917 = vmatmul.mubr.bf16.gmra.mrb[0].mxu0 %v2720
      %v2918 = vpop.f32.mrb[0].mxu0
      %v2919 = vadd.f32 0.0, %v2918
      %v2920 = vpop.f32.mrb[0].mxu0
      %v2921 = vpop.f32.mrb[0].mxu0
      %v2922 = vadd.f32 0.0, %v2921
      %v2923 = vpop.f32.mrb[0].mxu0
      %2924 = vmatprep.mubr.bf16.mxu0 0
      %2925 = vmatmul.mubr.bf16.gmra.mrb[0].mxu0 %v2721
      %v2926 = vpop.f32.mrb[0].mxu0
      %v2927 = vadd.f32 0.0, %v2926
      %v2928 = vpop.f32.mrb[0].mxu0
      %v2929 = vpop.f32.mrb[0].mxu0
      %v2930 = vadd.f32 0.0, %v2929
      %v2931 = vpop.f32.mrb[0].mxu0
      %2932 = vmatprep.mubr.bf16.mxu0 0
      %2933 = vmatmul.mubr.bf16.gmra.mrb[0].mxu0 %v2722
      %v2934 = vpop.f32.mrb[0].mxu0
      %v2935 = vadd.f32 0.0, %v2934
      %v2936 = vpop.f32.mrb[0].mxu0
      %v2937 = vpop.f32.mrb[0].mxu0
      %v2938 = vadd.f32 0.0, %v2937
      %v2939 = vpop.f32.mrb[0].mxu0
      %2940 = vmatprep.mubr.bf16.mxu0 0
      %2941 = vmatmul.mubr.bf16.gmra.mrb[0].mxu0 %v2723
      %v2942 = vpop.f32.mrb[0].mxu0
      %v2943 = vadd.f32 0.0, %v2942
      %v2944 = vpop.f32.mrb[0].mxu0
      %v2945 = vpop.f32.mrb[0].mxu0
      %v2946 = vadd.f32 0.0, %v2945
      %v2947 = vpop.f32.mrb[0].mxu0
      %2948 = vdwg.mxu0
      %v2949 = vadd.f32 %v2563, %v2823
      %v2950 = vadd.f32 %v2564, %v2826
      %v2951 = vadd.f32 %v2565, %v2831
      %v2952 = vadd.f32 %v2566, %v2834
      %v2953 = vadd.f32 %v2567, %v2839
      %v2954 = vadd.f32 %v2568, %v2842
      %v2955 = vadd.f32 %v2569, %v2847
      %v2956 = vadd.f32 %v2570, %v2850
      %v2957 = vadd.f32 %v2571, %v2855
      %v2958 = vadd.f32 %v2572, %v2858
      %v2959 = vadd.f32 %v2573, %v2863
      %v2960 = vadd.f32 %v2574, %v2866
      %v2961 = vadd.f32 %v2575, %v2871
      %v2962 = vadd.f32 %v2576, %v2874
      %v2963 = vadd.f32 %v2577, %v2879
      %v2964 = vadd.f32 %v2578, %v2882
      %v2965 = vadd.f32 %v2579, %v2887
      %v2966 = vadd.f32 %v2580, %v2890
      %v2967 = vadd.f32 %v2581, %v2895
      %v2968 = vadd.f32 %v2582, %v2898
      %v2969 = vadd.f32 %v2583, %v2903
      %v2970 = vadd.f32 %v2584, %v2906
      %v2971 = vadd.f32 %v2585, %v2911
      %v2972 = vadd.f32 %v2586, %v2914
      %v2973 = vadd.f32 %v2587, %v2919
      %v2974 = vadd.f32 %v2588, %v2922
      %v2975 = vadd.f32 %v2589, %v2927
      %v2976 = vadd.f32 %v2590, %v2930
      %v2977 = vadd.f32 %v2591, %v2935
      %v2978 = vadd.f32 %v2592, %v2938
      %v2979 = vadd.f32 %v2593, %v2943
      %v2980 = vadd.f32 %v2594, %v2946
      %v2981 = vld [vmem:[%s949] sm:$0xf]
      %v2982 = vld [vmem:[%s949 + $0x4] sm:$0xf]
      %v2983 = vld [vmem:[%s949 + $0x8] sm:$0x1]
      %v2984 = vld [vmem:[%s949 + $0xc] sm:$0xf]
      %v2985 = vld [vmem:[%s949 + $0x10] sm:$0xf]
      %v2986 = vld [vmem:[%s949 + $0x14] sm:$0x1]
      %v2987 = vld [vmem:[%s949 + $0x18] sm:$0xf]
      %v2988 = vld [vmem:[%s949 + $0x1c] sm:$0xf]
      %v2989 = vld [vmem:[%s949 + $0x20] sm:$0x1]
      %v2990 = vld [vmem:[%s949 + $0x24] sm:$0xf]
      %v2991 = vld [vmem:[%s949 + $0x28] sm:$0xf]
      %v2992 = vld [vmem:[%s949 + $0x2c] sm:$0x1]
      %v2993 = vld [vmem:[%s949 + $0x30] sm:$0xf]
      %v2994 = vld [vmem:[%s949 + $0x34] sm:$0xf]
      %v2995 = vld [vmem:[%s949 + $0x38] sm:$0x1]
      %v2996 = vld [vmem:[%s949 + $0x3c] sm:$0xf]
      %v2997 = vld [vmem:[%s949 + $0x40] sm:$0xf]
      %v2998 = vld [vmem:[%s949 + $0x44] sm:$0x1]
      %v2999 = vld [vmem:[%s949 + $0x48] sm:$0xf]
      %v3000 = vld [vmem:[%s949 + $0x4c] sm:$0xf]
      %v3001 = vld [vmem:[%s949 + $0x50] sm:$0x1]
      %v3002 = vld [vmem:[%s949 + $0x54] sm:$0xf]
      %v3003 = vld [vmem:[%s949 + $0x58] sm:$0xf]
      %v3004 = vld [vmem:[%s949 + $0x5c] sm:$0x1]
      %v3005 = vld [vmem:[%s949 + $0x60] sm:$0xf]
      %v3006 = vld [vmem:[%s949 + $0x64] sm:$0xf]
      %v3007 = vld [vmem:[%s949 + $0x68] sm:$0x1]
      %v3008 = vld [vmem:[%s949 + $0x6c] sm:$0xf]
      %v3009 = vld [vmem:[%s949 + $0x70] sm:$0xf]
      %v3010 = vld [vmem:[%s949 + $0x74] sm:$0x1]
      %v3011 = vld [vmem:[%s949 + $0x78] sm:$0xf]
      %v3012 = vld [vmem:[%s949 + $0x7c] sm:$0xf]
      %v3013 = vld [vmem:[%s949 + $0x80] sm:$0x1]
      %v3014 = vld [vmem:[%s949 + $0x84] sm:$0xf]
      %v3015 = vld [vmem:[%s949 + $0x88] sm:$0xf]
      %v3016 = vld [vmem:[%s949 + $0x8c] sm:$0x1]
      %v3017 = vld [vmem:[%s949 + $0x90] sm:$0xf]
      %v3018 = vld [vmem:[%s949 + $0x94] sm:$0xf]
      %v3019 = vld [vmem:[%s949 + $0x98] sm:$0x1]
      %v3020 = vld [vmem:[%s949 + $0x9c] sm:$0xf]
      %v3021 = vld [vmem:[%s949 + $0xa0] sm:$0xf]
      %v3022 = vld [vmem:[%s949 + $0xa4] sm:$0x1]
      %v3023 = vld [vmem:[%s949 + $0xa8] sm:$0xf]
      %v3024 = vld [vmem:[%s949 + $0xac] sm:$0xf]
      %v3025 = vld [vmem:[%s949 + $0xb0] sm:$0x1]
      %v3026 = vld [vmem:[%s949 + $0xb4] sm:$0xf]
      %v3027 = vld [vmem:[%s949 + $0xb8] sm:$0xf]
      %v3028 = vld [vmem:[%s949 + $0xbc] sm:$0x1]
      %v3030 = vshrl.u32 %v2981, 16
      %v3032 = vrot.slane %v3030, 4
      %v3033 = vshll.u32 %v2981, 16
      %v3035 = vrot.slane %v3033, 5
      %v3036 = vor.u32 %v3032, %v3035
      %v3037 = vrot.slane %v3036, 4
      %v3039 = vshll.u32 %v2982, 16
      %v3041 = vrot.slane %v3039, 5
      %v3042 = vsel %vm1130, %v3037, %v3041
      %v3043 = vshrl.u32 %v2982, 16
      %v3045 = vrot.slane %v3043, 4
      %v3046 = vor.u32 %v3045, %v3041
      %v3047 = vrot.slane %v3046, 4
      %v3049 = vshll.u32 %v2983, 16
      %v3051 = vrot.slane %v3049, 5
      %v3052 = vsel %vm1130, %v3047, %v3051
      %v3054 = vshrl.u32 %v2984, 16
      %v3056 = vrot.slane %v3054, 4
      %v3057 = vshll.u32 %v2984, 16
      %v3059 = vrot.slane %v3057, 5
      %v3060 = vor.u32 %v3056, %v3059
      %v3061 = vrot.slane %v3060, 4
      %v3063 = vshll.u32 %v2985, 16
      %v3065 = vrot.slane %v3063, 5
      %v3066 = vsel %vm1130, %v3061, %v3065
      %v3067 = vshrl.u32 %v2985, 16
      %v3069 = vrot.slane %v3067, 4
      %v3070 = vor.u32 %v3069, %v3065
      %v3071 = vrot.slane %v3070, 4
      %v3073 = vshll.u32 %v2986, 16
      %v3075 = vrot.slane %v3073, 5
      %v3076 = vsel %vm1130, %v3071, %v3075
      %v3078 = vshrl.u32 %v2987, 16
      %v3080 = vrot.slane %v3078, 4
      %v3081 = vshll.u32 %v2987, 16
      %v3083 = vrot.slane %v3081, 5
      %v3084 = vor.u32 %v3080, %v3083
      %v3085 = vrot.slane %v3084, 4
      %v3087 = vshll.u32 %v2988, 16
      %v3089 = vrot.slane %v3087, 5
      %v3090 = vsel %vm1130, %v3085, %v3089
      %v3091 = vshrl.u32 %v2988, 16
      %v3093 = vrot.slane %v3091, 4
      %v3094 = vor.u32 %v3093, %v3089
      %v3095 = vrot.slane %v3094, 4
      %v3097 = vshll.u32 %v2989, 16
      %v3099 = vrot.slane %v3097, 5
      %v3100 = vsel %vm1130, %v3095, %v3099
      %v3102 = vshrl.u32 %v2990, 16
      %v3104 = vrot.slane %v3102, 4
      %v3105 = vshll.u32 %v2990, 16
      %v3107 = vrot.slane %v3105, 5
      %v3108 = vor.u32 %v3104, %v3107
      %v3109 = vrot.slane %v3108, 4
      %v3111 = vshll.u32 %v2991, 16
      %v3113 = vrot.slane %v3111, 5
      %v3114 = vsel %vm1130, %v3109, %v3113
      %v3115 = vshrl.u32 %v2991, 16
      %v3117 = vrot.slane %v3115, 4
      %v3118 = vor.u32 %v3117, %v3113
      %v3119 = vrot.slane %v3118, 4
      %v3121 = vshll.u32 %v2992, 16
      %v3123 = vrot.slane %v3121, 5
      %v3124 = vsel %vm1130, %v3119, %v3123
      %v3126 = vshrl.u32 %v2993, 16
      %v3128 = vrot.slane %v3126, 4
      %v3129 = vshll.u32 %v2993, 16
      %v3131 = vrot.slane %v3129, 5
      %v3132 = vor.u32 %v3128, %v3131
      %v3133 = vrot.slane %v3132, 4
      %v3135 = vshll.u32 %v2994, 16
      %v3137 = vrot.slane %v3135, 5
      %v3138 = vsel %vm1130, %v3133, %v3137
      %v3139 = vshrl.u32 %v2994, 16
      %v3141 = vrot.slane %v3139, 4
      %v3142 = vor.u32 %v3141, %v3137
      %v3143 = vrot.slane %v3142, 4
      %v3145 = vshll.u32 %v2995, 16
      %v3147 = vrot.slane %v3145, 5
      %v3148 = vsel %vm1130, %v3143, %v3147
      %v3150 = vshrl.u32 %v2996, 16
      %v3152 = vrot.slane %v3150, 4
      %v3153 = vshll.u32 %v2996, 16
      %v3155 = vrot.slane %v3153, 5
      %v3156 = vor.u32 %v3152, %v3155
      %v3157 = vrot.slane %v3156, 4
      %v3159 = vshll.u32 %v2997, 16
      %v3161 = vrot.slane %v3159, 5
      %v3162 = vsel %vm1130, %v3157, %v3161
      %v3163 = vshrl.u32 %v2997, 16
      %v3165 = vrot.slane %v3163, 4
      %v3166 = vor.u32 %v3165, %v3161
      %v3167 = vrot.slane %v3166, 4
      %v3169 = vshll.u32 %v2998, 16
      %v3171 = vrot.slane %v3169, 5
      %v3172 = vsel %vm1130, %v3167, %v3171
      %v3174 = vshrl.u32 %v2999, 16
      %v3176 = vrot.slane %v3174, 4
      %v3177 = vshll.u32 %v2999, 16
      %v3179 = vrot.slane %v3177, 5
      %v3180 = vor.u32 %v3176, %v3179
      %v3181 = vrot.slane %v3180, 4
      %v3183 = vshll.u32 %v3000, 16
      %v3185 = vrot.slane %v3183, 5
      %v3186 = vsel %vm1130, %v3181, %v3185
      %v3187 = vshrl.u32 %v3000, 16
      %v3189 = vrot.slane %v3187, 4
      %v3190 = vor.u32 %v3189, %v3185
      %v3191 = vrot.slane %v3190, 4
      %v3193 = vshll.u32 %v3001, 16
      %v3195 = vrot.slane %v3193, 5
      %v3196 = vsel %vm1130, %v3191, %v3195
      %v3198 = vshrl.u32 %v3002, 16
      %v3200 = vrot.slane %v3198, 4
      %v3201 = vshll.u32 %v3002, 16
      %v3203 = vrot.slane %v3201, 5
      %v3204 = vor.u32 %v3200, %v3203
      %v3205 = vrot.slane %v3204, 4
      %v3207 = vshll.u32 %v3003, 16
      %v3209 = vrot.slane %v3207, 5
      %v3210 = vsel %vm1130, %v3205, %v3209
      %v3211 = vshrl.u32 %v3003, 16
      %v3213 = vrot.slane %v3211, 4
      %v3214 = vor.u32 %v3213, %v3209
      %v3215 = vrot.slane %v3214, 4
      %v3217 = vshll.u32 %v3004, 16
      %v3219 = vrot.slane %v3217, 5
      %v3220 = vsel %vm1130, %v3215, %v3219
      %v3222 = vshrl.u32 %v3005, 16
      %v3224 = vrot.slane %v3222, 4
      %v3225 = vshll.u32 %v3005, 16
      %v3227 = vrot.slane %v3225, 5
      %v3228 = vor.u32 %v3224, %v3227
      %v3229 = vrot.slane %v3228, 4
      %v3231 = vshll.u32 %v3006, 16
      %v3233 = vrot.slane %v3231, 5
      %v3234 = vsel %vm1130, %v3229, %v3233
      %v3235 = vshrl.u32 %v3006, 16
      %v3237 = vrot.slane %v3235, 4
      %v3238 = vor.u32 %v3237, %v3233
      %v3239 = vrot.slane %v3238, 4
      %v3241 = vshll.u32 %v3007, 16
      %v3243 = vrot.slane %v3241, 5
      %v3244 = vsel %vm1130, %v3239, %v3243
      %v3246 = vshrl.u32 %v3008, 16
      %v3248 = vrot.slane %v3246, 4
      %v3249 = vshll.u32 %v3008, 16
      %v3251 = vrot.slane %v3249, 5
      %v3252 = vor.u32 %v3248, %v3251
      %v3253 = vrot.slane %v3252, 4
      %v3255 = vshll.u32 %v3009, 16
      %v3257 = vrot.slane %v3255, 5
      %v3258 = vsel %vm1130, %v3253, %v3257
      %v3259 = vshrl.u32 %v3009, 16
      %v3261 = vrot.slane %v3259, 4
      %v3262 = vor.u32 %v3261, %v3257
      %v3263 = vrot.slane %v3262, 4
      %v3265 = vshll.u32 %v3010, 16
      %v3267 = vrot.slane %v3265, 5
      %v3268 = vsel %vm1130, %v3263, %v3267
      %v3270 = vshrl.u32 %v3011, 16
      %v3272 = vrot.slane %v3270, 4
      %v3273 = vshll.u32 %v3011, 16
      %v3275 = vrot.slane %v3273, 5
      %v3276 = vor.u32 %v3272, %v3275
      %v3277 = vrot.slane %v3276, 4
      %v3279 = vshll.u32 %v3012, 16
      %v3281 = vrot.slane %v3279, 5
      %v3282 = vsel %vm1130, %v3277, %v3281
      %v3283 = vshrl.u32 %v3012, 16
      %v3285 = vrot.slane %v3283, 4
      %v3286 = vor.u32 %v3285, %v3281
      %v3287 = vrot.slane %v3286, 4
      %v3289 = vshll.u32 %v3013, 16
      %v3291 = vrot.slane %v3289, 5
      %v3292 = vsel %vm1130, %v3287, %v3291
      %v3294 = vshrl.u32 %v3014, 16
      %v3296 = vrot.slane %v3294, 4
      %v3297 = vshll.u32 %v3014, 16
      %v3299 = vrot.slane %v3297, 5
      %v3300 = vor.u32 %v3296, %v3299
      %v3301 = vrot.slane %v3300, 4
      %v3303 = vshll.u32 %v3015, 16
      %v3305 = vrot.slane %v3303, 5
      %v3306 = vsel %vm1130, %v3301, %v3305
      %v3307 = vshrl.u32 %v3015, 16
      %v3309 = vrot.slane %v3307, 4
      %v3310 = vor.u32 %v3309, %v3305
      %v3311 = vrot.slane %v3310, 4
      %v3313 = vshll.u32 %v3016, 16
      %v3315 = vrot.slane %v3313, 5
      %v3316 = vsel %vm1130, %v3311, %v3315
      %v3318 = vshrl.u32 %v3017, 16
      %v3320 = vrot.slane %v3318, 4
      %v3321 = vshll.u32 %v3017, 16
      %v3323 = vrot.slane %v3321, 5
      %v3324 = vor.u32 %v3320, %v3323
      %v3325 = vrot.slane %v3324, 4
      %v3327 = vshll.u32 %v3018, 16
      %v3329 = vrot.slane %v3327, 5
      %v3330 = vsel %vm1130, %v3325, %v3329
      %v3331 = vshrl.u32 %v3018, 16
      %v3333 = vrot.slane %v3331, 4
      %v3334 = vor.u32 %v3333, %v3329
      %v3335 = vrot.slane %v3334, 4
      %v3337 = vshll.u32 %v3019, 16
      %v3339 = vrot.slane %v3337, 5
      %v3340 = vsel %vm1130, %v3335, %v3339
      %v3342 = vshrl.u32 %v3020, 16
      %v3344 = vrot.slane %v3342, 4
      %v3345 = vshll.u32 %v3020, 16
      %v3347 = vrot.slane %v3345, 5
      %v3348 = vor.u32 %v3344, %v3347
      %v3349 = vrot.slane %v3348, 4
      %v3351 = vshll.u32 %v3021, 16
      %v3353 = vrot.slane %v3351, 5
      %v3354 = vsel %vm1130, %v3349, %v3353
      %v3355 = vshrl.u32 %v3021, 16
      %v3357 = vrot.slane %v3355, 4
      %v3358 = vor.u32 %v3357, %v3353
      %v3359 = vrot.slane %v3358, 4
      %v3361 = vshll.u32 %v3022, 16
      %v3363 = vrot.slane %v3361, 5
      %v3364 = vsel %vm1130, %v3359, %v3363
      %v3366 = vshrl.u32 %v3023, 16
      %v3368 = vrot.slane %v3366, 4
      %v3369 = vshll.u32 %v3023, 16
      %v3371 = vrot.slane %v3369, 5
      %v3372 = vor.u32 %v3368, %v3371
      %v3373 = vrot.slane %v3372, 4
      %v3375 = vshll.u32 %v3024, 16
      %v3377 = vrot.slane %v3375, 5
      %v3378 = vsel %vm1130, %v3373, %v3377
      %v3379 = vshrl.u32 %v3024, 16
      %v3381 = vrot.slane %v3379, 4
      %v3382 = vor.u32 %v3381, %v3377
      %v3383 = vrot.slane %v3382, 4
      %v3385 = vshll.u32 %v3025, 16
      %v3387 = vrot.slane %v3385, 5
      %v3388 = vsel %vm1130, %v3383, %v3387
      %v3390 = vshrl.u32 %v3026, 16
      %v3392 = vrot.slane %v3390, 4
      %v3393 = vshll.u32 %v3026, 16
      %v3395 = vrot.slane %v3393, 5
      %v3396 = vor.u32 %v3392, %v3395
      %v3397 = vrot.slane %v3396, 4
      %v3399 = vshll.u32 %v3027, 16
      %v3401 = vrot.slane %v3399, 5
      %v3402 = vsel %vm1130, %v3397, %v3401
      %v3403 = vshrl.u32 %v3027, 16
      %v3405 = vrot.slane %v3403, 4
      %v3406 = vor.u32 %v3405, %v3401
      %v3407 = vrot.slane %v3406, 4
      %v3409 = vshll.u32 %v3028, 16
      %v3411 = vrot.slane %v3409, 5
      %v3412 = vsel %vm1130, %v3407, %v3411
      %s3413 = scalar_lea.vmem %s3, 256
      %v3414 = vld [vmem:[%s3413] sm:$0xf]
      %v3415 = vld [vmem:[%s3413 + $0x4] sm:$0xf]
      %v3416 = vld [vmem:[%s3413 + $0x8] sm:$0xf]
      %v3417 = vld [vmem:[%s3413 + $0xc] sm:$0xf]
      %v3418 = vld [vmem:[%s3413 + $0x10] sm:$0xf]
      %v3419 = vld [vmem:[%s3413 + $0x14] sm:$0xf]
      %v3420 = vld [vmem:[%s3413 + $0x18] sm:$0xf]
      %v3421 = vld [vmem:[%s3413 + $0x1c] sm:$0xf]
      %v3422 = vld [vmem:[%s3413 + $0x20] sm:$0xf]
      %v3423 = vld [vmem:[%s3413 + $0x24] sm:$0xf]
      %v3424 = vld [vmem:[%s3413 + $0x28] sm:$0xf]
      %v3425 = vld [vmem:[%s3413 + $0x2c] sm:$0xf]
      %v3426 = vld [vmem:[%s3413 + $0x30] sm:$0xf]
      %v3427 = vld [vmem:[%s3413 + $0x34] sm:$0xf]
      %v3428 = vld [vmem:[%s3413 + $0x38] sm:$0xf]
      %v3429 = vld [vmem:[%s3413 + $0x3c] sm:$0xf]
      %v3430 = vunpack.c.l.b16 %v3042
      %v3431 = vunpack.c.l.b16 %v3052
      %v3432 = vunpack.c.l.b16 %v3066
      %v3433 = vunpack.c.l.b16 %v3076
      %v3434 = vunpack.c.l.b16 %v3090
      %v3435 = vunpack.c.l.b16 %v3100
      %v3436 = vunpack.c.l.b16 %v3114
      %v3437 = vunpack.c.l.b16 %v3124
      %v3438 = vunpack.c.l.b16 %v3138
      %v3439 = vunpack.c.l.b16 %v3148
      %v3440 = vunpack.c.l.b16 %v3162
      %v3441 = vunpack.c.l.b16 %v3172
      %v3442 = vunpack.c.l.b16 %v3186
      %v3443 = vunpack.c.l.b16 %v3196
      %v3444 = vunpack.c.l.b16 %v3210
      %v3445 = vunpack.c.l.b16 %v3220
      %v3446 = vunpack.c.l.b16 %v3234
      %v3447 = vunpack.c.l.b16 %v3244
      %v3448 = vunpack.c.l.b16 %v3258
      %v3449 = vunpack.c.l.b16 %v3268
      %v3450 = vunpack.c.l.b16 %v3282
      %v3451 = vunpack.c.l.b16 %v3292
      %v3452 = vunpack.c.l.b16 %v3306
      %v3453 = vunpack.c.l.b16 %v3316
      %v3454 = vunpack.c.l.b16 %v3330
      %v3455 = vunpack.c.l.b16 %v3340
      %v3456 = vunpack.c.l.b16 %v3354
      %v3457 = vunpack.c.l.b16 %v3364
      %v3458 = vunpack.c.l.b16 %v3378
      %v3459 = vunpack.c.l.b16 %v3388
      %v3460 = vunpack.c.l.b16 %v3402
      %v3461 = vunpack.c.l.b16 %v3412
      %v3462 = vpack.c.b16 %v3431, %v3430
      %v3463 = vpack.c.b16 %v3433, %v3432
      %v3464 = vpack.c.b16 %v3435, %v3434
      %v3465 = vpack.c.b16 %v3437, %v3436
      %v3466 = vpack.c.b16 %v3439, %v3438
      %v3467 = vpack.c.b16 %v3441, %v3440
      %v3468 = vpack.c.b16 %v3443, %v3442
      %v3469 = vpack.c.b16 %v3445, %v3444
      %v3470 = vpack.c.b16 %v3447, %v3446
      %v3471 = vpack.c.b16 %v3449, %v3448
      %v3472 = vpack.c.b16 %v3451, %v3450
      %v3473 = vpack.c.b16 %v3453, %v3452
      %v3474 = vpack.c.b16 %v3455, %v3454
      %v3475 = vpack.c.b16 %v3457, %v3456
      %v3476 = vpack.c.b16 %v3459, %v3458
      %v3477 = vpack.c.b16 %v3461, %v3460
      %v3510 = vunpack.c.l.b16 %v3414
      %v3511 = vunpack.c.l.b16 %v3415
      %v3512 = vunpack.c.l.b16 %v3416
      %v3513 = vunpack.c.l.b16 %v3417
      %v3514 = vunpack.c.l.b16 %v3418
      %v3515 = vunpack.c.l.b16 %v3419
      %v3516 = vunpack.c.l.b16 %v3420
      %v3517 = vunpack.c.l.b16 %v3421
      %v3518 = vunpack.c.l.b16 %v3422
      %v3519 = vunpack.c.l.b16 %v3423
      %v3520 = vunpack.c.l.b16 %v3424
      %v3521 = vunpack.c.l.b16 %v3425
      %v3522 = vunpack.c.l.b16 %v3426
      %v3523 = vunpack.c.l.b16 %v3427
      %v3524 = vunpack.c.l.b16 %v3428
      %v3525 = vunpack.c.l.b16 %v3429
      %v3526 = vpack.c.b16 %v3511, %v3510
      %v3527 = vpack.c.b16 %v3513, %v3512
      %v3528 = vpack.c.b16 %v3515, %v3514
      %v3529 = vpack.c.b16 %v3517, %v3516
      %v3530 = vpack.c.b16 %v3519, %v3518
      %v3531 = vpack.c.b16 %v3521, %v3520
      %v3532 = vpack.c.b16 %v3523, %v3522
      %v3533 = vpack.c.b16 %v3525, %v3524
      %3542 = vmatprep.subr.bf16.mxu0 0
      %3543 = vmatpush1.bf16.msra.mxu0 %v3526
      %3544 = vmatprep.subr.bf16.mxu0 0
      %3545 = vmatpush1.bf16.msra.mxu0 %v3527
      %3546 = vmatprep.subr.bf16.mxu0 0
      %3547 = vmatpush1.bf16.msra.mxu0 %v3528
      %3548 = vmatprep.subr.bf16.mxu0 0
      %3549 = vmatpush1.bf16.msra.mxu0 %v3529
      %3550 = vmatprep.subr.bf16.mxu0 0
      %3551 = vmatpush1.bf16.msra.mxu0 %v3530
      %3552 = vmatprep.subr.bf16.mxu0 0
      %3553 = vmatpush1.bf16.msra.mxu0 %v3531
      %3554 = vmatprep.subr.bf16.mxu0 0
      %3555 = vmatpush1.bf16.msra.mxu0 %v3532
      %3556 = vmatprep.subr.bf16.mxu0 0
      %3557 = vmatpush1.bf16.msra.mxu0 %v3533
      %3558 = vmatprep.subr.bf16.mxu0 0
      %3559 = vmatpush1.bf16.msra.mxu0 0
      %3560 = vmatprep.subr.bf16.mxu0 0
      %3561 = vmatpush1.bf16.msra.mxu0 0
      %3562 = vmatprep.subr.bf16.mxu0 0
      %3563 = vmatpush1.bf16.msra.mxu0 0
      %3564 = vmatprep.subr.bf16.mxu0 0
      %3565 = vmatpush1.bf16.msra.mxu0 0
      %3566 = vmatprep.subr.bf16.mxu0 0
      %3567 = vmatpush1.bf16.msra.mxu0 0
      %3568 = vmatprep.subr.bf16.mxu0 0
      %3569 = vmatpush1.bf16.msra.mxu0 0
      %3570 = vmatprep.subr.bf16.mxu0 0
      %3571 = vmatpush1.bf16.msra.mxu0 0
      %3572 = vmatprep.subr.bf16.mxu0 0
      %3573 = vmatpush1.bf16.msra.mxu0 0
      %3574 = vmatprep.mubr.bf16.mxu0 0
      %3575 = vmatmul.mubr.bf16.gmra.mrb[0].mxu0 %v3462
      %v3576 = vpop.f32.mrb[0].mxu0
      %v3577 = vadd.f32 0.0, %v3576
      %v3578 = vpop.f32.mrb[0].mxu0
      %v3579 = vpop.f32.mrb[0].mxu0
      %v3580 = vadd.f32 0.0, %v3579
      %v3581 = vpop.f32.mrb[0].mxu0
      %3582 = vmatprep.mubr.bf16.mxu0 0
      %3583 = vmatmul.mubr.bf16.gmra.mrb[0].mxu0 %v3463
      %v3584 = vpop.f32.mrb[0].mxu0
      %v3585 = vadd.f32 0.0, %v3584
      %v3586 = vpop.f32.mrb[0].mxu0
      %v3587 = vpop.f32.mrb[0].mxu0
      %v3588 = vadd.f32 0.0, %v3587
      %v3589 = vpop.f32.mrb[0].mxu0
      %3590 = vmatprep.mubr.bf16.mxu0 0
      %3591 = vmatmul.mubr.bf16.gmra.mrb[0].mxu0 %v3464
      %v3592 = vpop.f32.mrb[0].mxu0
      %v3593 = vadd.f32 0.0, %v3592
      %v3594 = vpop.f32.mrb[0].mxu0
      %v3595 = vpop.f32.mrb[0].mxu0
      %v3596 = vadd.f32 0.0, %v3595
      %v3597 = vpop.f32.mrb[0].mxu0
      %3598 = vmatprep.mubr.bf16.mxu0 0
      %3599 = vmatmul.mubr.bf16.gmra.mrb[0].mxu0 %v3465
      %v3600 = vpop.f32.mrb[0].mxu0
      %v3601 = vadd.f32 0.0, %v3600
      %v3602 = vpop.f32.mrb[0].mxu0
      %v3603 = vpop.f32.mrb[0].mxu0
      %v3604 = vadd.f32 0.0, %v3603
      %v3605 = vpop.f32.mrb[0].mxu0
      %3606 = vmatprep.mubr.bf16.mxu0 0
      %3607 = vmatmul.mubr.bf16.gmra.mrb[0].mxu0 %v3466
      %v3608 = vpop.f32.mrb[0].mxu0
      %v3609 = vadd.f32 0.0, %v3608
      %v3610 = vpop.f32.mrb[0].mxu0
      %v3611 = vpop.f32.mrb[0].mxu0
      %v3612 = vadd.f32 0.0, %v3611
      %v3613 = vpop.f32.mrb[0].mxu0
      %3614 = vmatprep.mubr.bf16.mxu0 0
      %3615 = vmatmul.mubr.bf16.gmra.mrb[0].mxu0 %v3467
      %v3616 = vpop.f32.mrb[0].mxu0
      %v3617 = vadd.f32 0.0, %v3616
      %v3618 = vpop.f32.mrb[0].mxu0
      %v3619 = vpop.f32.mrb[0].mxu0
      %v3620 = vadd.f32 0.0, %v3619
      %v3621 = vpop.f32.mrb[0].mxu0
      %3622 = vmatprep.mubr.bf16.mxu0 0
      %3623 = vmatmul.mubr.bf16.gmra.mrb[0].mxu0 %v3468
      %v3624 = vpop.f32.mrb[0].mxu0
      %v3625 = vadd.f32 0.0, %v3624
      %v3626 = vpop.f32.mrb[0].mxu0
      %v3627 = vpop.f32.mrb[0].mxu0
      %v3628 = vadd.f32 0.0, %v3627
      %v3629 = vpop.f32.mrb[0].mxu0
      %3630 = vmatprep.mubr.bf16.mxu0 0
      %3631 = vmatmul.mubr.bf16.gmra.mrb[0].mxu0 %v3469
      %v3632 = vpop.f32.mrb[0].mxu0
      %v3633 = vadd.f32 0.0, %v3632
      %v3634 = vpop.f32.mrb[0].mxu0
      %v3635 = vpop.f32.mrb[0].mxu0
      %v3636 = vadd.f32 0.0, %v3635
      %v3637 = vpop.f32.mrb[0].mxu0
      %3638 = vmatprep.mubr.bf16.mxu0 0
      %3639 = vmatmul.mubr.bf16.gmra.mrb[0].mxu0 %v3470
      %v3640 = vpop.f32.mrb[0].mxu0
      %v3641 = vadd.f32 0.0, %v3640
      %v3642 = vpop.f32.mrb[0].mxu0
      %v3643 = vpop.f32.mrb[0].mxu0
      %v3644 = vadd.f32 0.0, %v3643
      %v3645 = vpop.f32.mrb[0].mxu0
      %3646 = vmatprep.mubr.bf16.mxu0 0
      %3647 = vmatmul.mubr.bf16.gmra.mrb[0].mxu0 %v3471
      %v3648 = vpop.f32.mrb[0].mxu0
      %v3649 = vadd.f32 0.0, %v3648
      %v3650 = vpop.f32.mrb[0].mxu0
      %v3651 = vpop.f32.mrb[0].mxu0
      %v3652 = vadd.f32 0.0, %v3651
      %v3653 = vpop.f32.mrb[0].mxu0
      %3654 = vmatprep.mubr.bf16.mxu0 0
      %3655 = vmatmul.mubr.bf16.gmra.mrb[0].mxu0 %v3472
      %v3656 = vpop.f32.mrb[0].mxu0
      %v3657 = vadd.f32 0.0, %v3656
      %v3658 = vpop.f32.mrb[0].mxu0
      %v3659 = vpop.f32.mrb[0].mxu0
      %v3660 = vadd.f32 0.0, %v3659
      %v3661 = vpop.f32.mrb[0].mxu0
      %3662 = vmatprep.mubr.bf16.mxu0 0
      %3663 = vmatmul.mubr.bf16.gmra.mrb[0].mxu0 %v3473
      %v3664 = vpop.f32.mrb[0].mxu0
      %v3665 = vadd.f32 0.0, %v3664
      %v3666 = vpop.f32.mrb[0].mxu0
      %v3667 = vpop.f32.mrb[0].mxu0
      %v3668 = vadd.f32 0.0, %v3667
      %v3669 = vpop.f32.mrb[0].mxu0
      %3670 = vmatprep.mubr.bf16.mxu0 0
      %3671 = vmatmul.mubr.bf16.gmra.mrb[0].mxu0 %v3474
      %v3672 = vpop.f32.mrb[0].mxu0
      %v3673 = vadd.f32 0.0, %v3672
      %v3674 = vpop.f32.mrb[0].mxu0
      %v3675 = vpop.f32.mrb[0].mxu0
      %v3676 = vadd.f32 0.0, %v3675
      %v3677 = vpop.f32.mrb[0].mxu0
      %3678 = vmatprep.mubr.bf16.mxu0 0
      %3679 = vmatmul.mubr.bf16.gmra.mrb[0].mxu0 %v3475
      %v3680 = vpop.f32.mrb[0].mxu0
      %v3681 = vadd.f32 0.0, %v3680
      %v3682 = vpop.f32.mrb[0].mxu0
      %v3683 = vpop.f32.mrb[0].mxu0
      %v3684 = vadd.f32 0.0, %v3683
      %v3685 = vpop.f32.mrb[0].mxu0
      %3686 = vmatprep.mubr.bf16.mxu0 0
      %3687 = vmatmul.mubr.bf16.gmra.mrb[0].mxu0 %v3476
      %v3688 = vpop.f32.mrb[0].mxu0
      %v3689 = vadd.f32 0.0, %v3688
      %v3690 = vpop.f32.mrb[0].mxu0
      %v3691 = vpop.f32.mrb[0].mxu0
      %v3692 = vadd.f32 0.0, %v3691
      %v3693 = vpop.f32.mrb[0].mxu0
      %3694 = vmatprep.mubr.bf16.mxu0 0
      %3695 = vmatmul.mubr.bf16.gmra.mrb[0].mxu0 %v3477
      %v3696 = vpop.f32.mrb[0].mxu0
      %v3697 = vadd.f32 0.0, %v3696
      %v3698 = vpop.f32.mrb[0].mxu0
      %v3699 = vpop.f32.mrb[0].mxu0
      %v3700 = vadd.f32 0.0, %v3699
      %v3701 = vpop.f32.mrb[0].mxu0
      %3702 = vdwg.mxu0
      %v3703 = vadd.f32 %v2949, %v3577
      %v3704 = vadd.f32 %v2950, %v3580
      %v3705 = vadd.f32 %v2951, %v3585
      %v3706 = vadd.f32 %v2952, %v3588
      %v3707 = vadd.f32 %v2953, %v3593
      %v3708 = vadd.f32 %v2954, %v3596
      %v3709 = vadd.f32 %v2955, %v3601
      %v3710 = vadd.f32 %v2956, %v3604
      %v3711 = vadd.f32 %v2957, %v3609
      %v3712 = vadd.f32 %v2958, %v3612
      %v3713 = vadd.f32 %v2959, %v3617
      %v3714 = vadd.f32 %v2960, %v3620
      %v3715 = vadd.f32 %v2961, %v3625
      %v3716 = vadd.f32 %v2962, %v3628
      %v3717 = vadd.f32 %v2963, %v3633
      %v3718 = vadd.f32 %v2964, %v3636
      %v3719 = vadd.f32 %v2965, %v3641
      %v3720 = vadd.f32 %v2966, %v3644
      %v3721 = vadd.f32 %v2967, %v3649
      %v3722 = vadd.f32 %v2968, %v3652
      %v3723 = vadd.f32 %v2969, %v3657
      %v3724 = vadd.f32 %v2970, %v3660
      %v3725 = vadd.f32 %v2971, %v3665
      %v3726 = vadd.f32 %v2972, %v3668
      %v3727 = vadd.f32 %v2973, %v3673
      %v3728 = vadd.f32 %v2974, %v3676
      %v3729 = vadd.f32 %v2975, %v3681
      %v3730 = vadd.f32 %v2976, %v3684
      %v3731 = vadd.f32 %v2977, %v3689
      %v3732 = vadd.f32 %v2978, %v3692
      %v3733 = vadd.f32 %v2979, %v3697
      %v3734 = vadd.f32 %v2980, %v3700
      %v3735 = vld [vmem:[%s949] sm:$0xe]
      %v3736 = vld [vmem:[%s949 + $0xc] sm:$0xe]
      %v3737 = vld [vmem:[%s949 + $0x18] sm:$0xe]
      %v3738 = vld [vmem:[%s949 + $0x24] sm:$0xe]
      %v3739 = vld [vmem:[%s949 + $0x30] sm:$0xe]
      %v3740 = vld [vmem:[%s949 + $0x3c] sm:$0xe]
      %v3741 = vld [vmem:[%s949 + $0x48] sm:$0xe]
      %v3742 = vld [vmem:[%s949 + $0x54] sm:$0xe]
      %v3743 = vld [vmem:[%s949 + $0x60] sm:$0xe]
      %v3744 = vld [vmem:[%s949 + $0x6c] sm:$0xe]
      %v3745 = vld [vmem:[%s949 + $0x78] sm:$0xe]
      %v3746 = vld [vmem:[%s949 + $0x84] sm:$0xe]
      %v3747 = vld [vmem:[%s949 + $0x90] sm:$0xe]
      %v3748 = vld [vmem:[%s949 + $0x9c] sm:$0xe]
      %v3749 = vld [vmem:[%s949 + $0xa8] sm:$0xe]
      %v3750 = vld [vmem:[%s949 + $0xb4] sm:$0xe]
      %v3799 = vrot.slane %v3735, 5
      %v3800 = vrot.slane %v3799, 4
      %v3801 = vrot.slane %v2982, 5
      %v3802 = vsel %vm2160, %v3800, %v3801
      %v3803 = vrot.slane %v3801, 4
      %v3804 = vrot.slane %v2983, 5
      %v3805 = vsel %vm2160, %v3803, %v3804
      %v3806 = vrot.slane %v3736, 5
      %v3807 = vrot.slane %v3806, 4
      %v3808 = vrot.slane %v2985, 5
      %v3809 = vsel %vm2160, %v3807, %v3808
      %v3810 = vrot.slane %v3808, 4
      %v3811 = vrot.slane %v2986, 5
      %v3812 = vsel %vm2160, %v3810, %v3811
      %v3813 = vrot.slane %v3737, 5
      %v3814 = vrot.slane %v3813, 4
      %v3815 = vrot.slane %v2988, 5
      %v3816 = vsel %vm2160, %v3814, %v3815
      %v3817 = vrot.slane %v3815, 4
      %v3818 = vrot.slane %v2989, 5
      %v3819 = vsel %vm2160, %v3817, %v3818
      %v3820 = vrot.slane %v3738, 5
      %v3821 = vrot.slane %v3820, 4
      %v3822 = vrot.slane %v2991, 5
      %v3823 = vsel %vm2160, %v3821, %v3822
      %v3824 = vrot.slane %v3822, 4
      %v3825 = vrot.slane %v2992, 5
      %v3826 = vsel %vm2160, %v3824, %v3825
      %v3827 = vrot.slane %v3739, 5
      %v3828 = vrot.slane %v3827, 4
      %v3829 = vrot.slane %v2994, 5
      %v3830 = vsel %vm2160, %v3828, %v3829
      %v3831 = vrot.slane %v3829, 4
      %v3832 = vrot.slane %v2995, 5
      %v3833 = vsel %vm2160, %v3831, %v3832
      %v3834 = vrot.slane %v3740, 5
      %v3835 = vrot.slane %v3834, 4
      %v3836 = vrot.slane %v2997, 5
      %v3837 = vsel %vm2160, %v3835, %v3836
      %v3838 = vrot.slane %v3836, 4
      %v3839 = vrot.slane %v2998, 5
      %v3840 = vsel %vm2160, %v3838, %v3839
      %v3841 = vrot.slane %v3741, 5
      %v3842 = vrot.slane %v3841, 4
      %v3843 = vrot.slane %v3000, 5
      %v3844 = vsel %vm2160, %v3842, %v3843
      %v3845 = vrot.slane %v3843, 4
      %v3846 = vrot.slane %v3001, 5
      %v3847 = vsel %vm2160, %v3845, %v3846
      %v3848 = vrot.slane %v3742, 5
      %v3849 = vrot.slane %v3848, 4
      %v3850 = vrot.slane %v3003, 5
      %v3851 = vsel %vm2160, %v3849, %v3850
      %v3852 = vrot.slane %v3850, 4
      %v3853 = vrot.slane %v3004, 5
      %v3854 = vsel %vm2160, %v3852, %v3853
      %v3855 = vrot.slane %v3743, 5
      %v3856 = vrot.slane %v3855, 4
      %v3857 = vrot.slane %v3006, 5
      %v3858 = vsel %vm2160, %v3856, %v3857
      %v3859 = vrot.slane %v3857, 4
      %v3860 = vrot.slane %v3007, 5
      %v3861 = vsel %vm2160, %v3859, %v3860
      %v3862 = vrot.slane %v3744, 5
      %v3863 = vrot.slane %v3862, 4
      %v3864 = vrot.slane %v3009, 5
      %v3865 = vsel %vm2160, %v3863, %v3864
      %v3866 = vrot.slane %v3864, 4
      %v3867 = vrot.slane %v3010, 5
      %v3868 = vsel %vm2160, %v3866, %v3867
      %v3869 = vrot.slane %v3745, 5
      %v3870 = vrot.slane %v3869, 4
      %v3871 = vrot.slane %v3012, 5
      %v3872 = vsel %vm2160, %v3870, %v3871
      %v3873 = vrot.slane %v3871, 4
      %v3874 = vrot.slane %v3013, 5
      %v3875 = vsel %vm2160, %v3873, %v3874
      %v3876 = vrot.slane %v3746, 5
      %v3877 = vrot.slane %v3876, 4
      %v3878 = vrot.slane %v3015, 5
      %v3879 = vsel %vm2160, %v3877, %v3878
      %v3880 = vrot.slane %v3878, 4
      %v3881 = vrot.slane %v3016, 5
      %v3882 = vsel %vm2160, %v3880, %v3881
      %v3883 = vrot.slane %v3747, 5
      %v3884 = vrot.slane %v3883, 4
      %v3885 = vrot.slane %v3018, 5
      %v3886 = vsel %vm2160, %v3884, %v3885
      %v3887 = vrot.slane %v3885, 4
      %v3888 = vrot.slane %v3019, 5
      %v3889 = vsel %vm2160, %v3887, %v3888
      %v3890 = vrot.slane %v3748, 5
      %v3891 = vrot.slane %v3890, 4
      %v3892 = vrot.slane %v3021, 5
      %v3893 = vsel %vm2160, %v3891, %v3892
      %v3894 = vrot.slane %v3892, 4
      %v3895 = vrot.slane %v3022, 5
      %v3896 = vsel %vm2160, %v3894, %v3895
      %v3897 = vrot.slane %v3749, 5
      %v3898 = vrot.slane %v3897, 4
      %v3899 = vrot.slane %v3024, 5
      %v3900 = vsel %vm2160, %v3898, %v3899
      %v3901 = vrot.slane %v3899, 4
      %v3902 = vrot.slane %v3025, 5
      %v3903 = vsel %vm2160, %v3901, %v3902
      %v3904 = vrot.slane %v3750, 5
      %v3905 = vrot.slane %v3904, 4
      %v3906 = vrot.slane %v3027, 5
      %v3907 = vsel %vm2160, %v3905, %v3906
      %v3908 = vrot.slane %v3906, 4
      %v3909 = vrot.slane %v3028, 5
      %v3910 = vsel %vm2160, %v3908, %v3909
      %s3911 = scalar_lea.vmem %s3, 320
      %v3912 = vld [vmem:[%s3911] sm:$0xf]
      %v3913 = vld [vmem:[%s3911 + $0x4] sm:$0xf]
      %v3914 = vld [vmem:[%s3911 + $0x8] sm:$0xf]
      %v3915 = vld [vmem:[%s3911 + $0xc] sm:$0xf]
      %v3916 = vld [vmem:[%s3911 + $0x10] sm:$0xf]
      %v3917 = vld [vmem:[%s3911 + $0x14] sm:$0xf]
      %v3918 = vld [vmem:[%s3911 + $0x18] sm:$0xf]
      %v3919 = vld [vmem:[%s3911 + $0x1c] sm:$0xf]
      %v3920 = vld [vmem:[%s3911 + $0x20] sm:$0xf]
      %v3921 = vld [vmem:[%s3911 + $0x24] sm:$0xf]
      %v3922 = vld [vmem:[%s3911 + $0x28] sm:$0xf]
      %v3923 = vld [vmem:[%s3911 + $0x2c] sm:$0xf]
      %v3924 = vld [vmem:[%s3911 + $0x30] sm:$0xf]
      %v3925 = vld [vmem:[%s3911 + $0x34] sm:$0xf]
      %v3926 = vld [vmem:[%s3911 + $0x38] sm:$0xf]
      %v3927 = vld [vmem:[%s3911 + $0x3c] sm:$0xf]
      %v3928 = vunpack.c.l.b16 %v3802
      %v3929 = vunpack.c.l.b16 %v3805
      %v3930 = vunpack.c.l.b16 %v3809
      %v3931 = vunpack.c.l.b16 %v3812
      %v3932 = vunpack.c.l.b16 %v3816
      %v3933 = vunpack.c.l.b16 %v3819
      %v3934 = vunpack.c.l.b16 %v3823
      %v3935 = vunpack.c.l.b16 %v3826
      %v3936 = vunpack.c.l.b16 %v3830
      %v3937 = vunpack.c.l.b16 %v3833
      %v3938 = vunpack.c.l.b16 %v3837
      %v3939 = vunpack.c.l.b16 %v3840
      %v3940 = vunpack.c.l.b16 %v3844
      %v3941 = vunpack.c.l.b16 %v3847
      %v3942 = vunpack.c.l.b16 %v3851
      %v3943 = vunpack.c.l.b16 %v3854
      %v3944 = vunpack.c.l.b16 %v3858
      %v3945 = vunpack.c.l.b16 %v3861
      %v3946 = vunpack.c.l.b16 %v3865
      %v3947 = vunpack.c.l.b16 %v3868
      %v3948 = vunpack.c.l.b16 %v3872
      %v3949 = vunpack.c.l.b16 %v3875
      %v3950 = vunpack.c.l.b16 %v3879
      %v3951 = vunpack.c.l.b16 %v3882
      %v3952 = vunpack.c.l.b16 %v3886
      %v3953 = vunpack.c.l.b16 %v3889
      %v3954 = vunpack.c.l.b16 %v3893
      %v3955 = vunpack.c.l.b16 %v3896
      %v3956 = vunpack.c.l.b16 %v3900
      %v3957 = vunpack.c.l.b16 %v3903
      %v3958 = vunpack.c.l.b16 %v3907
      %v3959 = vunpack.c.l.b16 %v3910
      %v3960 = vpack.c.b16 %v3929, %v3928
      %v3961 = vpack.c.b16 %v3931, %v3930
      %v3962 = vpack.c.b16 %v3933, %v3932
      %v3963 = vpack.c.b16 %v3935, %v3934
      %v3964 = vpack.c.b16 %v3937, %v3936
      %v3965 = vpack.c.b16 %v3939, %v3938
      %v3966 = vpack.c.b16 %v3941, %v3940
      %v3967 = vpack.c.b16 %v3943, %v3942
      %v3968 = vpack.c.b16 %v3945, %v3944
      %v3969 = vpack.c.b16 %v3947, %v3946
      %v3970 = vpack.c.b16 %v3949, %v3948
      %v3971 = vpack.c.b16 %v3951, %v3950
      %v3972 = vpack.c.b16 %v3953, %v3952
      %v3973 = vpack.c.b16 %v3955, %v3954
      %v3974 = vpack.c.b16 %v3957, %v3956
      %v3975 = vpack.c.b16 %v3959, %v3958
      %v4008 = vunpack.c.l.b16 %v3912
      %v4009 = vunpack.c.l.b16 %v3913
      %v4010 = vunpack.c.l.b16 %v3914
      %v4011 = vunpack.c.l.b16 %v3915
      %v4012 = vunpack.c.l.b16 %v3916
      %v4013 = vunpack.c.l.b16 %v3917
      %v4014 = vunpack.c.l.b16 %v3918
      %v4015 = vunpack.c.l.b16 %v3919
      %v4016 = vunpack.c.l.b16 %v3920
      %v4017 = vunpack.c.l.b16 %v3921
      %v4018 = vunpack.c.l.b16 %v3922
      %v4019 = vunpack.c.l.b16 %v3923
      %v4020 = vunpack.c.l.b16 %v3924
      %v4021 = vunpack.c.l.b16 %v3925
      %v4022 = vunpack.c.l.b16 %v3926
      %v4023 = vunpack.c.l.b16 %v3927
      %v4024 = vpack.c.b16 %v4009, %v4008
      %v4025 = vpack.c.b16 %v4011, %v4010
      %v4026 = vpack.c.b16 %v4013, %v4012
      %v4027 = vpack.c.b16 %v4015, %v4014
      %v4028 = vpack.c.b16 %v4017, %v4016
      %v4029 = vpack.c.b16 %v4019, %v4018
      %v4030 = vpack.c.b16 %v4021, %v4020
      %v4031 = vpack.c.b16 %v4023, %v4022
      %4040 = vmatprep.subr.bf16.mxu0 0
      %4041 = vmatpush1.bf16.msra.mxu0 %v4024
      %4042 = vmatprep.subr.bf16.mxu0 0
      %4043 = vmatpush1.bf16.msra.mxu0 %v4025
      %4044 = vmatprep.subr.bf16.mxu0 0
      %4045 = vmatpush1.bf16.msra.mxu0 %v4026
      %4046 = vmatprep.subr.bf16.mxu0 0
      %4047 = vmatpush1.bf16.msra.mxu0 %v4027
      %4048 = vmatprep.subr.bf16.mxu0 0
      %4049 = vmatpush1.bf16.msra.mxu0 %v4028
      %4050 = vmatprep.subr.bf16.mxu0 0
      %4051 = vmatpush1.bf16.msra.mxu0 %v4029
      %4052 = vmatprep.subr.bf16.mxu0 0
      %4053 = vmatpush1.bf16.msra.mxu0 %v4030
      %4054 = vmatprep.subr.bf16.mxu0 0
      %4055 = vmatpush1.bf16.msra.mxu0 %v4031
      %4056 = vmatprep.subr.bf16.mxu0 0
      %4057 = vmatpush1.bf16.msra.mxu0 0
      %4058 = vmatprep.subr.bf16.mxu0 0
      %4059 = vmatpush1.bf16.msra.mxu0 0
      %4060 = vmatprep.subr.bf16.mxu0 0
      %4061 = vmatpush1.bf16.msra.mxu0 0
      %4062 = vmatprep.subr.bf16.mxu0 0
      %4063 = vmatpush1.bf16.msra.mxu0 0
      %4064 = vmatprep.subr.bf16.mxu0 0
      %4065 = vmatpush1.bf16.msra.mxu0 0
      %4066 = vmatprep.subr.bf16.mxu0 0
      %4067 = vmatpush1.bf16.msra.mxu0 0
      %4068 = vmatprep.subr.bf16.mxu0 0
      %4069 = vmatpush1.bf16.msra.mxu0 0
      %4070 = vmatprep.subr.bf16.mxu0 0
      %4071 = vmatpush1.bf16.msra.mxu0 0
      %4072 = vmatprep.mubr.bf16.mxu0 0
      %4073 = vmatmul.mubr.bf16.gmra.mrb[0].mxu0 %v3960
      %v4074 = vpop.f32.mrb[0].mxu0
      %v4075 = vadd.f32 0.0, %v4074
      %v4076 = vpop.f32.mrb[0].mxu0
      %v4077 = vpop.f32.mrb[0].mxu0
      %v4078 = vadd.f32 0.0, %v4077
      %v4079 = vpop.f32.mrb[0].mxu0
      %4080 = vmatprep.mubr.bf16.mxu0 0
      %4081 = vmatmul.mubr.bf16.gmra.mrb[0].mxu0 %v3961
      %v4082 = vpop.f32.mrb[0].mxu0
      %v4083 = vadd.f32 0.0, %v4082
      %v4084 = vpop.f32.mrb[0].mxu0
      %v4085 = vpop.f32.mrb[0].mxu0
      %v4086 = vadd.f32 0.0, %v4085
      %v4087 = vpop.f32.mrb[0].mxu0
      %4088 = vmatprep.mubr.bf16.mxu0 0
      %4089 = vmatmul.mubr.bf16.gmra.mrb[0].mxu0 %v3962
      %v4090 = vpop.f32.mrb[0].mxu0
      %v4091 = vadd.f32 0.0, %v4090
      %v4092 = vpop.f32.mrb[0].mxu0
      %v4093 = vpop.f32.mrb[0].mxu0
      %v4094 = vadd.f32 0.0, %v4093
      %v4095 = vpop.f32.mrb[0].mxu0
      %4096 = vmatprep.mubr.bf16.mxu0 0
      %4097 = vmatmul.mubr.bf16.gmra.mrb[0].mxu0 %v3963
      %v4098 = vpop.f32.mrb[0].mxu0
      %v4099 = vadd.f32 0.0, %v4098
      %v4100 = vpop.f32.mrb[0].mxu0
      %v4101 = vpop.f32.mrb[0].mxu0
      %v4102 = vadd.f32 0.0, %v4101
      %v4103 = vpop.f32.mrb[0].mxu0
      %4104 = vmatprep.mubr.bf16.mxu0 0
      %4105 = vmatmul.mubr.bf16.gmra.mrb[0].mxu0 %v3964
      %v4106 = vpop.f32.mrb[0].mxu0
      %v4107 = vadd.f32 0.0, %v4106
      %v4108 = vpop.f32.mrb[0].mxu0
      %v4109 = vpop.f32.mrb[0].mxu0
      %v4110 = vadd.f32 0.0, %v4109
      %v4111 = vpop.f32.mrb[0].mxu0
      %4112 = vmatprep.mubr.bf16.mxu0 0
      %4113 = vmatmul.mubr.bf16.gmra.mrb[0].mxu0 %v3965
      %v4114 = vpop.f32.mrb[0].mxu0
      %v4115 = vadd.f32 0.0, %v4114
      %v4116 = vpop.f32.mrb[0].mxu0
      %v4117 = vpop.f32.mrb[0].mxu0
      %v4118 = vadd.f32 0.0, %v4117
      %v4119 = vpop.f32.mrb[0].mxu0
      %4120 = vmatprep.mubr.bf16.mxu0 0
      %4121 = vmatmul.mubr.bf16.gmra.mrb[0].mxu0 %v3966
      %v4122 = vpop.f32.mrb[0].mxu0
      %v4123 = vadd.f32 0.0, %v4122
      %v4124 = vpop.f32.mrb[0].mxu0
      %v4125 = vpop.f32.mrb[0].mxu0
      %v4126 = vadd.f32 0.0, %v4125
      %v4127 = vpop.f32.mrb[0].mxu0
      %4128 = vmatprep.mubr.bf16.mxu0 0
      %4129 = vmatmul.mubr.bf16.gmra.mrb[0].mxu0 %v3967
      %v4130 = vpop.f32.mrb[0].mxu0
      %v4131 = vadd.f32 0.0, %v4130
      %v4132 = vpop.f32.mrb[0].mxu0
      %v4133 = vpop.f32.mrb[0].mxu0
      %v4134 = vadd.f32 0.0, %v4133
      %v4135 = vpop.f32.mrb[0].mxu0
      %4136 = vmatprep.mubr.bf16.mxu0 0
      %4137 = vmatmul.mubr.bf16.gmra.mrb[0].mxu0 %v3968
      %v4138 = vpop.f32.mrb[0].mxu0
      %v4139 = vadd.f32 0.0, %v4138
      %v4140 = vpop.f32.mrb[0].mxu0
      %v4141 = vpop.f32.mrb[0].mxu0
      %v4142 = vadd.f32 0.0, %v4141
      %v4143 = vpop.f32.mrb[0].mxu0
      %4144 = vmatprep.mubr.bf16.mxu0 0
      %4145 = vmatmul.mubr.bf16.gmra.mrb[0].mxu0 %v3969
      %v4146 = vpop.f32.mrb[0].mxu0
      %v4147 = vadd.f32 0.0, %v4146
      %v4148 = vpop.f32.mrb[0].mxu0
      %v4149 = vpop.f32.mrb[0].mxu0
      %v4150 = vadd.f32 0.0, %v4149
      %v4151 = vpop.f32.mrb[0].mxu0
      %4152 = vmatprep.mubr.bf16.mxu0 0
      %4153 = vmatmul.mubr.bf16.gmra.mrb[0].mxu0 %v3970
      %v4154 = vpop.f32.mrb[0].mxu0
      %v4155 = vadd.f32 0.0, %v4154
      %v4156 = vpop.f32.mrb[0].mxu0
      %v4157 = vpop.f32.mrb[0].mxu0
      %v4158 = vadd.f32 0.0, %v4157
      %v4159 = vpop.f32.mrb[0].mxu0
      %4160 = vmatprep.mubr.bf16.mxu0 0
      %4161 = vmatmul.mubr.bf16.gmra.mrb[0].mxu0 %v3971
      %v4162 = vpop.f32.mrb[0].mxu0
      %v4163 = vadd.f32 0.0, %v4162
      %v4164 = vpop.f32.mrb[0].mxu0
      %v4165 = vpop.f32.mrb[0].mxu0
      %v4166 = vadd.f32 0.0, %v4165
      %v4167 = vpop.f32.mrb[0].mxu0
      %4168 = vmatprep.mubr.bf16.mxu0 0
      %4169 = vmatmul.mubr.bf16.gmra.mrb[0].mxu0 %v3972
      %v4170 = vpop.f32.mrb[0].mxu0
      %v4171 = vadd.f32 0.0, %v4170
      %v4172 = vpop.f32.mrb[0].mxu0
      %v4173 = vpop.f32.mrb[0].mxu0
      %v4174 = vadd.f32 0.0, %v4173
      %v4175 = vpop.f32.mrb[0].mxu0
      %4176 = vmatprep.mubr.bf16.mxu0 0
      %4177 = vmatmul.mubr.bf16.gmra.mrb[0].mxu0 %v3973
      %v4178 = vpop.f32.mrb[0].mxu0
      %v4179 = vadd.f32 0.0, %v4178
      %v4180 = vpop.f32.mrb[0].mxu0
      %v4181 = vpop.f32.mrb[0].mxu0
      %v4182 = vadd.f32 0.0, %v4181
      %v4183 = vpop.f32.mrb[0].mxu0
      %4184 = vmatprep.mubr.bf16.mxu0 0
      %4185 = vmatmul.mubr.bf16.gmra.mrb[0].mxu0 %v3974
      %v4186 = vpop.f32.mrb[0].mxu0
      %v4187 = vadd.f32 0.0, %v4186
      %v4188 = vpop.f32.mrb[0].mxu0
      %v4189 = vpop.f32.mrb[0].mxu0
      %v4190 = vadd.f32 0.0, %v4189
      %v4191 = vpop.f32.mrb[0].mxu0
      %4192 = vmatprep.mubr.bf16.mxu0 0
      %4193 = vmatmul.mubr.bf16.gmra.mrb[0].mxu0 %v3975
      %v4194 = vpop.f32.mrb[0].mxu0
      %v4195 = vadd.f32 0.0, %v4194
      %v4196 = vpop.f32.mrb[0].mxu0
      %v4197 = vpop.f32.mrb[0].mxu0
      %v4198 = vadd.f32 0.0, %v4197
      %v4199 = vpop.f32.mrb[0].mxu0
      %4200 = vdwg.mxu0
      %v4201 = vadd.f32 %v3703, %v4075
      %v4202 = vadd.f32 %v3704, %v4078
      %v4203 = vadd.f32 %v3705, %v4083
      %v4204 = vadd.f32 %v3706, %v4086
      %v4205 = vadd.f32 %v3707, %v4091
      %v4206 = vadd.f32 %v3708, %v4094
      %v4207 = vadd.f32 %v3709, %v4099
      %v4208 = vadd.f32 %v3710, %v4102
      %v4209 = vadd.f32 %v3711, %v4107
      %v4210 = vadd.f32 %v3712, %v4110
      %v4211 = vadd.f32 %v3713, %v4115
      %v4212 = vadd.f32 %v3714, %v4118
      %v4213 = vadd.f32 %v3715, %v4123
      %v4214 = vadd.f32 %v3716, %v4126
      %v4215 = vadd.f32 %v3717, %v4131
      %v4216 = vadd.f32 %v3718, %v4134
      %v4217 = vadd.f32 %v3719, %v4139
      %v4218 = vadd.f32 %v3720, %v4142
      %v4219 = vadd.f32 %v3721, %v4147
      %v4220 = vadd.f32 %v3722, %v4150
      %v4221 = vadd.f32 %v3723, %v4155
      %v4222 = vadd.f32 %v3724, %v4158
      %v4223 = vadd.f32 %v3725, %v4163
      %v4224 = vadd.f32 %v3726, %v4166
      %v4225 = vadd.f32 %v3727, %v4171
      %v4226 = vadd.f32 %v3728, %v4174
      %v4227 = vadd.f32 %v3729, %v4179
      %v4228 = vadd.f32 %v3730, %v4182
      %v4229 = vadd.f32 %v3731, %v4187
      %v4230 = vadd.f32 %v3732, %v4190
      %v4231 = vadd.f32 %v3733, %v4195
      %v4232 = vadd.f32 %v3734, %v4198
      %s4233 = scalar_lea.vmem [#allocation2], 24
      %v4234 = vld [vmem:[%s4233] sm:$0xf]
      %v4235 = vld [vmem:[%s4233 + $0x4] sm:$0xf]
      %v4236 = vld [vmem:[%s4233 + $0xc] sm:$0xf]
      %v4237 = vld [vmem:[%s4233 + $0x10] sm:$0xf]
      %v4238 = vld [vmem:[%s4233 + $0x18] sm:$0xf]
      %v4239 = vld [vmem:[%s4233 + $0x1c] sm:$0xf]
      %v4240 = vld [vmem:[%s4233 + $0x24] sm:$0xf]
      %v4241 = vld [vmem:[%s4233 + $0x28] sm:$0xf]
      %v4242 = vld [vmem:[%s4233 + $0x30] sm:$0xf]
      %v4243 = vld [vmem:[%s4233 + $0x34] sm:$0xf]
      %v4244 = vld [vmem:[%s4233 + $0x3c] sm:$0xf]
      %v4245 = vld [vmem:[%s4233 + $0x40] sm:$0xf]
      %v4246 = vld [vmem:[%s4233 + $0x48] sm:$0xf]
      %v4247 = vld [vmem:[%s4233 + $0x4c] sm:$0xf]
      %v4248 = vld [vmem:[%s4233 + $0x54] sm:$0xf]
      %v4249 = vld [vmem:[%s4233 + $0x58] sm:$0xf]
      %v4250 = vld [vmem:[%s4233 + $0x60] sm:$0xf]
      %v4251 = vld [vmem:[%s4233 + $0x64] sm:$0xf]
      %v4252 = vld [vmem:[%s4233 + $0x6c] sm:$0xf]
      %v4253 = vld [vmem:[%s4233 + $0x70] sm:$0xf]
      %v4254 = vld [vmem:[%s4233 + $0x78] sm:$0xf]
      %v4255 = vld [vmem:[%s4233 + $0x7c] sm:$0xf]
      %v4256 = vld [vmem:[%s4233 + $0x84] sm:$0xf]
      %v4257 = vld [vmem:[%s4233 + $0x88] sm:$0xf]
      %v4258 = vld [vmem:[%s4233 + $0x90] sm:$0xf]
      %v4259 = vld [vmem:[%s4233 + $0x94] sm:$0xf]
      %v4260 = vld [vmem:[%s4233 + $0x9c] sm:$0xf]
      %v4261 = vld [vmem:[%s4233 + $0xa0] sm:$0xf]
      %v4262 = vld [vmem:[%s4233 + $0xa8] sm:$0xf]
      %v4263 = vld [vmem:[%s4233 + $0xac] sm:$0xf]
      %v4264 = vld [vmem:[%s4233 + $0xb4] sm:$0xf]
      %v4265 = vld [vmem:[%s4233 + $0xb8] sm:$0xf]
      %s4266 = scalar_lea.vmem %s3, 384
      %v4267 = vld [vmem:[%s4266] sm:$0xf]
      %v4268 = vld [vmem:[%s4266 + $0x4] sm:$0xf]
      %v4269 = vld [vmem:[%s4266 + $0x8] sm:$0xf]
      %v4270 = vld [vmem:[%s4266 + $0xc] sm:$0xf]
      %v4271 = vld [vmem:[%s4266 + $0x10] sm:$0xf]
      %v4272 = vld [vmem:[%s4266 + $0x14] sm:$0xf]
      %v4273 = vld [vmem:[%s4266 + $0x18] sm:$0xf]
      %v4274 = vld [vmem:[%s4266 + $0x1c] sm:$0xf]
      %v4275 = vld [vmem:[%s4266 + $0x20] sm:$0xf]
      %v4276 = vld [vmem:[%s4266 + $0x24] sm:$0xf]
      %v4277 = vld [vmem:[%s4266 + $0x28] sm:$0xf]
      %v4278 = vld [vmem:[%s4266 + $0x2c] sm:$0xf]
      %v4279 = vld [vmem:[%s4266 + $0x30] sm:$0xf]
      %v4280 = vld [vmem:[%s4266 + $0x34] sm:$0xf]
      %v4281 = vld [vmem:[%s4266 + $0x38] sm:$0xf]
      %v4282 = vld [vmem:[%s4266 + $0x3c] sm:$0xf]
      %v4315 = vunpack.c.l.b16 %v4234
      %v4316 = vunpack.c.l.b16 %v4235
      %v4317 = vunpack.c.l.b16 %v4236
      %v4318 = vunpack.c.l.b16 %v4237
      %v4319 = vunpack.c.l.b16 %v4238
      %v4320 = vunpack.c.l.b16 %v4239
      %v4321 = vunpack.c.l.b16 %v4240
      %v4322 = vunpack.c.l.b16 %v4241
      %v4323 = vunpack.c.l.b16 %v4242
      %v4324 = vunpack.c.l.b16 %v4243
      %v4325 = vunpack.c.l.b16 %v4244
      %v4326 = vunpack.c.l.b16 %v4245
      %v4327 = vunpack.c.l.b16 %v4246
      %v4328 = vunpack.c.l.b16 %v4247
      %v4329 = vunpack.c.l.b16 %v4248
      %v4330 = vunpack.c.l.b16 %v4249
      %v4331 = vunpack.c.l.b16 %v4250
      %v4332 = vunpack.c.l.b16 %v4251
      %v4333 = vunpack.c.l.b16 %v4252
      %v4334 = vunpack.c.l.b16 %v4253
      %v4335 = vunpack.c.l.b16 %v4254
      %v4336 = vunpack.c.l.b16 %v4255
      %v4337 = vunpack.c.l.b16 %v4256
      %v4338 = vunpack.c.l.b16 %v4257
      %v4339 = vunpack.c.l.b16 %v4258
      %v4340 = vunpack.c.l.b16 %v4259
      %v4341 = vunpack.c.l.b16 %v4260
      %v4342 = vunpack.c.l.b16 %v4261
      %v4343 = vunpack.c.l.b16 %v4262
      %v4344 = vunpack.c.l.b16 %v4263
      %v4345 = vunpack.c.l.b16 %v4264
      %v4346 = vunpack.c.l.b16 %v4265
      %v4347 = vpack.c.b16 %v4316, %v4315
      %v4348 = vpack.c.b16 %v4318, %v4317
      %v4349 = vpack.c.b16 %v4320, %v4319
      %v4350 = vpack.c.b16 %v4322, %v4321
      %v4351 = vpack.c.b16 %v4324, %v4323
      %v4352 = vpack.c.b16 %v4326, %v4325
      %v4353 = vpack.c.b16 %v4328, %v4327
      %v4354 = vpack.c.b16 %v4330, %v4329
      %v4355 = vpack.c.b16 %v4332, %v4331
      %v4356 = vpack.c.b16 %v4334, %v4333
      %v4357 = vpack.c.b16 %v4336, %v4335
      %v4358 = vpack.c.b16 %v4338, %v4337
      %v4359 = vpack.c.b16 %v4340, %v4339
      %v4360 = vpack.c.b16 %v4342, %v4341
      %v4361 = vpack.c.b16 %v4344, %v4343
      %v4362 = vpack.c.b16 %v4346, %v4345
      %v4395 = vunpack.c.l.b16 %v4267
      %v4396 = vunpack.c.l.b16 %v4268
      %v4397 = vunpack.c.l.b16 %v4269
      %v4398 = vunpack.c.l.b16 %v4270
      %v4399 = vunpack.c.l.b16 %v4271
      %v4400 = vunpack.c.l.b16 %v4272
      %v4401 = vunpack.c.l.b16 %v4273
      %v4402 = vunpack.c.l.b16 %v4274
      %v4403 = vunpack.c.l.b16 %v4275
      %v4404 = vunpack.c.l.b16 %v4276
      %v4405 = vunpack.c.l.b16 %v4277
      %v4406 = vunpack.c.l.b16 %v4278
      %v4407 = vunpack.c.l.b16 %v4279
      %v4408 = vunpack.c.l.b16 %v4280
      %v4409 = vunpack.c.l.b16 %v4281
      %v4410 = vunpack.c.l.b16 %v4282
      %v4411 = vpack.c.b16 %v4396, %v4395
      %v4412 = vpack.c.b16 %v4398, %v4397
      %v4413 = vpack.c.b16 %v4400, %v4399
      %v4414 = vpack.c.b16 %v4402, %v4401
      %v4415 = vpack.c.b16 %v4404, %v4403
      %v4416 = vpack.c.b16 %v4406, %v4405
      %v4417 = vpack.c.b16 %v4408, %v4407
      %v4418 = vpack.c.b16 %v4410, %v4409
      %4427 = vmatprep.subr.bf16.mxu0 0
      %4428 = vmatpush1.bf16.msra.mxu0 %v4411
      %4429 = vmatprep.subr.bf16.mxu0 0
      %4430 = vmatpush1.bf16.msra.mxu0 %v4412
      %4431 = vmatprep.subr.bf16.mxu0 0
      %4432 = vmatpush1.bf16.msra.mxu0 %v4413
      %4433 = vmatprep.subr.bf16.mxu0 0
      %4434 = vmatpush1.bf16.msra.mxu0 %v4414
      %4435 = vmatprep.subr.bf16.mxu0 0
      %4436 = vmatpush1.bf16.msra.mxu0 %v4415
      %4437 = vmatprep.subr.bf16.mxu0 0
      %4438 = vmatpush1.bf16.msra.mxu0 %v4416
      %4439 = vmatprep.subr.bf16.mxu0 0
      %4440 = vmatpush1.bf16.msra.mxu0 %v4417
      %4441 = vmatprep.subr.bf16.mxu0 0
      %4442 = vmatpush1.bf16.msra.mxu0 %v4418
      %4443 = vmatprep.subr.bf16.mxu0 0
      %4444 = vmatpush1.bf16.msra.mxu0 0
      %4445 = vmatprep.subr.bf16.mxu0 0
      %4446 = vmatpush1.bf16.msra.mxu0 0
      %4447 = vmatprep.subr.bf16.mxu0 0
      %4448 = vmatpush1.bf16.msra.mxu0 0
      %4449 = vmatprep.subr.bf16.mxu0 0
      %4450 = vmatpush1.bf16.msra.mxu0 0
      %4451 = vmatprep.subr.bf16.mxu0 0
      %4452 = vmatpush1.bf16.msra.mxu0 0
      %4453 = vmatprep.subr.bf16.mxu0 0
      %4454 = vmatpush1.bf16.msra.mxu0 0
      %4455 = vmatprep.subr.bf16.mxu0 0
      %4456 = vmatpush1.bf16.msra.mxu0 0
      %4457 = vmatprep.subr.bf16.mxu0 0
      %4458 = vmatpush1.bf16.msra.mxu0 0
      %4459 = vmatprep.mubr.bf16.mxu0 0
      %4460 = vmatmul.mubr.bf16.gmra.mrb[0].mxu0 %v4347
      %v4461 = vpop.f32.mrb[0].mxu0
      %v4462 = vadd.f32 0.0, %v4461
      %v4463 = vpop.f32.mrb[0].mxu0
      %v4464 = vpop.f32.mrb[0].mxu0
      %v4465 = vadd.f32 0.0, %v4464
      %v4466 = vpop.f32.mrb[0].mxu0
      %4467 = vmatprep.mubr.bf16.mxu0 0
      %4468 = vmatmul.mubr.bf16.gmra.mrb[0].mxu0 %v4348
      %v4469 = vpop.f32.mrb[0].mxu0
      %v4470 = vadd.f32 0.0, %v4469
      %v4471 = vpop.f32.mrb[0].mxu0
      %v4472 = vpop.f32.mrb[0].mxu0
      %v4473 = vadd.f32 0.0, %v4472
      %v4474 = vpop.f32.mrb[0].mxu0
      %4475 = vmatprep.mubr.bf16.mxu0 0
      %4476 = vmatmul.mubr.bf16.gmra.mrb[0].mxu0 %v4349
      %v4477 = vpop.f32.mrb[0].mxu0
      %v4478 = vadd.f32 0.0, %v4477
      %v4479 = vpop.f32.mrb[0].mxu0
      %v4480 = vpop.f32.mrb[0].mxu0
      %v4481 = vadd.f32 0.0, %v4480
      %v4482 = vpop.f32.mrb[0].mxu0
      %4483 = vmatprep.mubr.bf16.mxu0 0
      %4484 = vmatmul.mubr.bf16.gmra.mrb[0].mxu0 %v4350
      %v4485 = vpop.f32.mrb[0].mxu0
      %v4486 = vadd.f32 0.0, %v4485
      %v4487 = vpop.f32.mrb[0].mxu0
      %v4488 = vpop.f32.mrb[0].mxu0
      %v4489 = vadd.f32 0.0, %v4488
      %v4490 = vpop.f32.mrb[0].mxu0
      %4491 = vmatprep.mubr.bf16.mxu0 0
      %4492 = vmatmul.mubr.bf16.gmra.mrb[0].mxu0 %v4351
      %v4493 = vpop.f32.mrb[0].mxu0
      %v4494 = vadd.f32 0.0, %v4493
      %v4495 = vpop.f32.mrb[0].mxu0
      %v4496 = vpop.f32.mrb[0].mxu0
      %v4497 = vadd.f32 0.0, %v4496
      %v4498 = vpop.f32.mrb[0].mxu0
      %4499 = vmatprep.mubr.bf16.mxu0 0
      %4500 = vmatmul.mubr.bf16.gmra.mrb[0].mxu0 %v4352
      %v4501 = vpop.f32.mrb[0].mxu0
      %v4502 = vadd.f32 0.0, %v4501
      %v4503 = vpop.f32.mrb[0].mxu0
      %v4504 = vpop.f32.mrb[0].mxu0
      %v4505 = vadd.f32 0.0, %v4504
      %v4506 = vpop.f32.mrb[0].mxu0
      %4507 = vmatprep.mubr.bf16.mxu0 0
      %4508 = vmatmul.mubr.bf16.gmra.mrb[0].mxu0 %v4353
      %v4509 = vpop.f32.mrb[0].mxu0
      %v4510 = vadd.f32 0.0, %v4509
      %v4511 = vpop.f32.mrb[0].mxu0
      %v4512 = vpop.f32.mrb[0].mxu0
      %v4513 = vadd.f32 0.0, %v4512
      %v4514 = vpop.f32.mrb[0].mxu0
      %4515 = vmatprep.mubr.bf16.mxu0 0
      %4516 = vmatmul.mubr.bf16.gmra.mrb[0].mxu0 %v4354
      %v4517 = vpop.f32.mrb[0].mxu0
      %v4518 = vadd.f32 0.0, %v4517
      %v4519 = vpop.f32.mrb[0].mxu0
      %v4520 = vpop.f32.mrb[0].mxu0
      %v4521 = vadd.f32 0.0, %v4520
      %v4522 = vpop.f32.mrb[0].mxu0
      %4523 = vmatprep.mubr.bf16.mxu0 0
      %4524 = vmatmul.mubr.bf16.gmra.mrb[0].mxu0 %v4355
      %v4525 = vpop.f32.mrb[0].mxu0
      %v4526 = vadd.f32 0.0, %v4525
      %v4527 = vpop.f32.mrb[0].mxu0
      %v4528 = vpop.f32.mrb[0].mxu0
      %v4529 = vadd.f32 0.0, %v4528
      %v4530 = vpop.f32.mrb[0].mxu0
      %4531 = vmatprep.mubr.bf16.mxu0 0
      %4532 = vmatmul.mubr.bf16.gmra.mrb[0].mxu0 %v4356
      %v4533 = vpop.f32.mrb[0].mxu0
      %v4534 = vadd.f32 0.0, %v4533
      %v4535 = vpop.f32.mrb[0].mxu0
      %v4536 = vpop.f32.mrb[0].mxu0
      %v4537 = vadd.f32 0.0, %v4536
      %v4538 = vpop.f32.mrb[0].mxu0
      %4539 = vmatprep.mubr.bf16.mxu0 0
      %4540 = vmatmul.mubr.bf16.gmra.mrb[0].mxu0 %v4357
      %v4541 = vpop.f32.mrb[0].mxu0
      %v4542 = vadd.f32 0.0, %v4541
      %v4543 = vpop.f32.mrb[0].mxu0
      %v4544 = vpop.f32.mrb[0].mxu0
      %v4545 = vadd.f32 0.0, %v4544
      %v4546 = vpop.f32.mrb[0].mxu0
      %4547 = vmatprep.mubr.bf16.mxu0 0
      %4548 = vmatmul.mubr.bf16.gmra.mrb[0].mxu0 %v4358
      %v4549 = vpop.f32.mrb[0].mxu0
      %v4550 = vadd.f32 0.0, %v4549
      %v4551 = vpop.f32.mrb[0].mxu0
      %v4552 = vpop.f32.mrb[0].mxu0
      %v4553 = vadd.f32 0.0, %v4552
      %v4554 = vpop.f32.mrb[0].mxu0
      %4555 = vmatprep.mubr.bf16.mxu0 0
      %4556 = vmatmul.mubr.bf16.gmra.mrb[0].mxu0 %v4359
      %v4557 = vpop.f32.mrb[0].mxu0
      %v4558 = vadd.f32 0.0, %v4557
      %v4559 = vpop.f32.mrb[0].mxu0
      %v4560 = vpop.f32.mrb[0].mxu0
      %v4561 = vadd.f32 0.0, %v4560
      %v4562 = vpop.f32.mrb[0].mxu0
      %4563 = vmatprep.mubr.bf16.mxu0 0
      %4564 = vmatmul.mubr.bf16.gmra.mrb[0].mxu0 %v4360
      %v4565 = vpop.f32.mrb[0].mxu0
      %v4566 = vadd.f32 0.0, %v4565
      %v4567 = vpop.f32.mrb[0].mxu0
      %v4568 = vpop.f32.mrb[0].mxu0
      %v4569 = vadd.f32 0.0, %v4568
      %v4570 = vpop.f32.mrb[0].mxu0
      %4571 = vmatprep.mubr.bf16.mxu0 0
      %4572 = vmatmul.mubr.bf16.gmra.mrb[0].mxu0 %v4361
      %v4573 = vpop.f32.mrb[0].mxu0
      %v4574 = vadd.f32 0.0, %v4573
      %v4575 = vpop.f32.mrb[0].mxu0
      %v4576 = vpop.f32.mrb[0].mxu0
      %v4577 = vadd.f32 0.0, %v4576
      %v4578 = vpop.f32.mrb[0].mxu0
      %4579 = vmatprep.mubr.bf16.mxu0 0
      %4580 = vmatmul.mubr.bf16.gmra.mrb[0].mxu0 %v4362
      %v4581 = vpop.f32.mrb[0].mxu0
      %v4582 = vadd.f32 0.0, %v4581
      %v4583 = vpop.f32.mrb[0].mxu0
      %v4584 = vpop.f32.mrb[0].mxu0
      %v4585 = vadd.f32 0.0, %v4584
      %v4586 = vpop.f32.mrb[0].mxu0
      %4587 = vdwg.mxu0
      %v4588 = vadd.f32 %v4201, %v4462
      %v4589 = vadd.f32 %v4202, %v4465
      %v4590 = vadd.f32 %v4203, %v4470
      %v4591 = vadd.f32 %v4204, %v4473
      %v4592 = vadd.f32 %v4205, %v4478
      %v4593 = vadd.f32 %v4206, %v4481
      %v4594 = vadd.f32 %v4207, %v4486
      %v4595 = vadd.f32 %v4208, %v4489
      %v4596 = vadd.f32 %v4209, %v4494
      %v4597 = vadd.f32 %v4210, %v4497
      %v4598 = vadd.f32 %v4211, %v4502
      %v4599 = vadd.f32 %v4212, %v4505
      %v4600 = vadd.f32 %v4213, %v4510
      %v4601 = vadd.f32 %v4214, %v4513
      %v4602 = vadd.f32 %v4215, %v4518
      %v4603 = vadd.f32 %v4216, %v4521
      %v4604 = vadd.f32 %v4217, %v4526
      %v4605 = vadd.f32 %v4218, %v4529
      %v4606 = vadd.f32 %v4219, %v4534
      %v4607 = vadd.f32 %v4220, %v4537
      %v4608 = vadd.f32 %v4221, %v4542
      %v4609 = vadd.f32 %v4222, %v4545
      %v4610 = vadd.f32 %v4223, %v4550
      %v4611 = vadd.f32 %v4224, %v4553
      %v4612 = vadd.f32 %v4225, %v4558
      %v4613 = vadd.f32 %v4226, %v4561
      %v4614 = vadd.f32 %v4227, %v4566
      %v4615 = vadd.f32 %v4228, %v4569
      %v4616 = vadd.f32 %v4229, %v4574
      %v4617 = vadd.f32 %v4230, %v4577
      %v4618 = vadd.f32 %v4231, %v4582
      %v4619 = vadd.f32 %v4232, %v4585
      %v4620 = vld [vmem:[%s4233] sm:$0xf]
      %v4621 = vld [vmem:[%s4233 + $0x4] sm:$0xf]
      %v4622 = vld [vmem:[%s4233 + $0x8] sm:$0x1]
      %v4623 = vld [vmem:[%s4233 + $0xc] sm:$0xf]
      %v4624 = vld [vmem:[%s4233 + $0x10] sm:$0xf]
      %v4625 = vld [vmem:[%s4233 + $0x14] sm:$0x1]
      %v4626 = vld [vmem:[%s4233 + $0x18] sm:$0xf]
      %v4627 = vld [vmem:[%s4233 + $0x1c] sm:$0xf]
      %v4628 = vld [vmem:[%s4233 + $0x20] sm:$0x1]
      %v4629 = vld [vmem:[%s4233 + $0x24] sm:$0xf]
      %v4630 = vld [vmem:[%s4233 + $0x28] sm:$0xf]
      %v4631 = vld [vmem:[%s4233 + $0x2c] sm:$0x1]
      %v4632 = vld [vmem:[%s4233 + $0x30] sm:$0xf]
      %v4633 = vld [vmem:[%s4233 + $0x34] sm:$0xf]
      %v4634 = vld [vmem:[%s4233 + $0x38] sm:$0x1]
      %v4635 = vld [vmem:[%s4233 + $0x3c] sm:$0xf]
      %v4636 = vld [vmem:[%s4233 + $0x40] sm:$0xf]
      %v4637 = vld [vmem:[%s4233 + $0x44] sm:$0x1]
      %v4638 = vld [vmem:[%s4233 + $0x48] sm:$0xf]
      %v4639 = vld [vmem:[%s4233 + $0x4c] sm:$0xf]
      %v4640 = vld [vmem:[%s4233 + $0x50] sm:$0x1]
      %v4641 = vld [vmem:[%s4233 + $0x54] sm:$0xf]
      %v4642 = vld [vmem:[%s4233 + $0x58] sm:$0xf]
      %v4643 = vld [vmem:[%s4233 + $0x5c] sm:$0x1]
      %v4644 = vld [vmem:[%s4233 + $0x60] sm:$0xf]
      %v4645 = vld [vmem:[%s4233 + $0x64] sm:$0xf]
      %v4646 = vld [vmem:[%s4233 + $0x68] sm:$0x1]
      %v4647 = vld [vmem:[%s4233 + $0x6c] sm:$0xf]
      %v4648 = vld [vmem:[%s4233 + $0x70] sm:$0xf]
      %v4649 = vld [vmem:[%s4233 + $0x74] sm:$0x1]
      %v4650 = vld [vmem:[%s4233 + $0x78] sm:$0xf]
      %v4651 = vld [vmem:[%s4233 + $0x7c] sm:$0xf]
      %v4652 = vld [vmem:[%s4233 + $0x80] sm:$0x1]
      %v4653 = vld [vmem:[%s4233 + $0x84] sm:$0xf]
      %v4654 = vld [vmem:[%s4233 + $0x88] sm:$0xf]
      %v4655 = vld [vmem:[%s4233 + $0x8c] sm:$0x1]
      %v4656 = vld [vmem:[%s4233 + $0x90] sm:$0xf]
      %v4657 = vld [vmem:[%s4233 + $0x94] sm:$0xf]
      %v4658 = vld [vmem:[%s4233 + $0x98] sm:$0x1]
      %v4659 = vld [vmem:[%s4233 + $0x9c] sm:$0xf]
      %v4660 = vld [vmem:[%s4233 + $0xa0] sm:$0xf]
      %v4661 = vld [vmem:[%s4233 + $0xa4] sm:$0x1]
      %v4662 = vld [vmem:[%s4233 + $0xa8] sm:$0xf]
      %v4663 = vld [vmem:[%s4233 + $0xac] sm:$0xf]
      %v4664 = vld [vmem:[%s4233 + $0xb0] sm:$0x1]
      %v4665 = vld [vmem:[%s4233 + $0xb4] sm:$0xf]
      %v4666 = vld [vmem:[%s4233 + $0xb8] sm:$0xf]
      %v4667 = vld [vmem:[%s4233 + $0xbc] sm:$0x1]
      %v4669 = vshrl.u32 %v4620, 16
      %v4671 = vrot.slane %v4669, 4
      %v4672 = vshll.u32 %v4620, 16
      %v4674 = vrot.slane %v4672, 5
      %v4675 = vor.u32 %v4671, %v4674
      %v4676 = vrot.slane %v4675, 4
      %v4678 = vshll.u32 %v4621, 16
      %v4680 = vrot.slane %v4678, 5
      %v4681 = vsel %vm1130, %v4676, %v4680
      %v4682 = vshrl.u32 %v4621, 16
      %v4684 = vrot.slane %v4682, 4
      %v4685 = vor.u32 %v4684, %v4680
      %v4686 = vrot.slane %v4685, 4
      %v4688 = vshll.u32 %v4622, 16
      %v4690 = vrot.slane %v4688, 5
      %v4691 = vsel %vm1130, %v4686, %v4690
      %v4693 = vshrl.u32 %v4623, 16
      %v4695 = vrot.slane %v4693, 4
      %v4696 = vshll.u32 %v4623, 16
      %v4698 = vrot.slane %v4696, 5
      %v4699 = vor.u32 %v4695, %v4698
      %v4700 = vrot.slane %v4699, 4
      %v4702 = vshll.u32 %v4624, 16
      %v4704 = vrot.slane %v4702, 5
      %v4705 = vsel %vm1130, %v4700, %v4704
      %v4706 = vshrl.u32 %v4624, 16
      %v4708 = vrot.slane %v4706, 4
      %v4709 = vor.u32 %v4708, %v4704
      %v4710 = vrot.slane %v4709, 4
      %v4712 = vshll.u32 %v4625, 16
      %v4714 = vrot.slane %v4712, 5
      %v4715 = vsel %vm1130, %v4710, %v4714
      %v4717 = vshrl.u32 %v4626, 16
      %v4719 = vrot.slane %v4717, 4
      %v4720 = vshll.u32 %v4626, 16
      %v4722 = vrot.slane %v4720, 5
      %v4723 = vor.u32 %v4719, %v4722
      %v4724 = vrot.slane %v4723, 4
      %v4726 = vshll.u32 %v4627, 16
      %v4728 = vrot.slane %v4726, 5
      %v4729 = vsel %vm1130, %v4724, %v4728
      %v4730 = vshrl.u32 %v4627, 16
      %v4732 = vrot.slane %v4730, 4
      %v4733 = vor.u32 %v4732, %v4728
      %v4734 = vrot.slane %v4733, 4
      %v4736 = vshll.u32 %v4628, 16
      %v4738 = vrot.slane %v4736, 5
      %v4739 = vsel %vm1130, %v4734, %v4738
      %v4741 = vshrl.u32 %v4629, 16
      %v4743 = vrot.slane %v4741, 4
      %v4744 = vshll.u32 %v4629, 16
      %v4746 = vrot.slane %v4744, 5
      %v4747 = vor.u32 %v4743, %v4746
      %v4748 = vrot.slane %v4747, 4
      %v4750 = vshll.u32 %v4630, 16
      %v4752 = vrot.slane %v4750, 5
      %v4753 = vsel %vm1130, %v4748, %v4752
      %v4754 = vshrl.u32 %v4630, 16
      %v4756 = vrot.slane %v4754, 4
      %v4757 = vor.u32 %v4756, %v4752
      %v4758 = vrot.slane %v4757, 4
      %v4760 = vshll.u32 %v4631, 16
      %v4762 = vrot.slane %v4760, 5
      %v4763 = vsel %vm1130, %v4758, %v4762
      %v4765 = vshrl.u32 %v4632, 16
      %v4767 = vrot.slane %v4765, 4
      %v4768 = vshll.u32 %v4632, 16
      %v4770 = vrot.slane %v4768, 5
      %v4771 = vor.u32 %v4767, %v4770
      %v4772 = vrot.slane %v4771, 4
      %v4774 = vshll.u32 %v4633, 16
      %v4776 = vrot.slane %v4774, 5
      %v4777 = vsel %vm1130, %v4772, %v4776
      %v4778 = vshrl.u32 %v4633, 16
      %v4780 = vrot.slane %v4778, 4
      %v4781 = vor.u32 %v4780, %v4776
      %v4782 = vrot.slane %v4781, 4
      %v4784 = vshll.u32 %v4634, 16
      %v4786 = vrot.slane %v4784, 5
      %v4787 = vsel %vm1130, %v4782, %v4786
      %v4789 = vshrl.u32 %v4635, 16
      %v4791 = vrot.slane %v4789, 4
      %v4792 = vshll.u32 %v4635, 16
      %v4794 = vrot.slane %v4792, 5
      %v4795 = vor.u32 %v4791, %v4794
      %v4796 = vrot.slane %v4795, 4
      %v4798 = vshll.u32 %v4636, 16
      %v4800 = vrot.slane %v4798, 5
      %v4801 = vsel %vm1130, %v4796, %v4800
      %v4802 = vshrl.u32 %v4636, 16
      %v4804 = vrot.slane %v4802, 4
      %v4805 = vor.u32 %v4804, %v4800
      %v4806 = vrot.slane %v4805, 4
      %v4808 = vshll.u32 %v4637, 16
      %v4810 = vrot.slane %v4808, 5
      %v4811 = vsel %vm1130, %v4806, %v4810
      %v4813 = vshrl.u32 %v4638, 16
      %v4815 = vrot.slane %v4813, 4
      %v4816 = vshll.u32 %v4638, 16
      %v4818 = vrot.slane %v4816, 5
      %v4819 = vor.u32 %v4815, %v4818
      %v4820 = vrot.slane %v4819, 4
      %v4822 = vshll.u32 %v4639, 16
      %v4824 = vrot.slane %v4822, 5
      %v4825 = vsel %vm1130, %v4820, %v4824
      %v4826 = vshrl.u32 %v4639, 16
      %v4828 = vrot.slane %v4826, 4
      %v4829 = vor.u32 %v4828, %v4824
      %v4830 = vrot.slane %v4829, 4
      %v4832 = vshll.u32 %v4640, 16
      %v4834 = vrot.slane %v4832, 5
      %v4835 = vsel %vm1130, %v4830, %v4834
      %v4837 = vshrl.u32 %v4641, 16
      %v4839 = vrot.slane %v4837, 4
      %v4840 = vshll.u32 %v4641, 16
      %v4842 = vrot.slane %v4840, 5
      %v4843 = vor.u32 %v4839, %v4842
      %v4844 = vrot.slane %v4843, 4
      %v4846 = vshll.u32 %v4642, 16
      %v4848 = vrot.slane %v4846, 5
      %v4849 = vsel %vm1130, %v4844, %v4848
      %v4850 = vshrl.u32 %v4642, 16
      %v4852 = vrot.slane %v4850, 4
      %v4853 = vor.u32 %v4852, %v4848
      %v4854 = vrot.slane %v4853, 4
      %v4856 = vshll.u32 %v4643, 16
      %v4858 = vrot.slane %v4856, 5
      %v4859 = vsel %vm1130, %v4854, %v4858
      %v4861 = vshrl.u32 %v4644, 16
      %v4863 = vrot.slane %v4861, 4
      %v4864 = vshll.u32 %v4644, 16
      %v4866 = vrot.slane %v4864, 5
      %v4867 = vor.u32 %v4863, %v4866
      %v4868 = vrot.slane %v4867, 4
      %v4870 = vshll.u32 %v4645, 16
      %v4872 = vrot.slane %v4870, 5
      %v4873 = vsel %vm1130, %v4868, %v4872
      %v4874 = vshrl.u32 %v4645, 16
      %v4876 = vrot.slane %v4874, 4
      %v4877 = vor.u32 %v4876, %v4872
      %v4878 = vrot.slane %v4877, 4
      %v4880 = vshll.u32 %v4646, 16
      %v4882 = vrot.slane %v4880, 5
      %v4883 = vsel %vm1130, %v4878, %v4882
      %v4885 = vshrl.u32 %v4647, 16
      %v4887 = vrot.slane %v4885, 4
      %v4888 = vshll.u32 %v4647, 16
      %v4890 = vrot.slane %v4888, 5
      %v4891 = vor.u32 %v4887, %v4890
      %v4892 = vrot.slane %v4891, 4
      %v4894 = vshll.u32 %v4648, 16
      %v4896 = vrot.slane %v4894, 5
      %v4897 = vsel %vm1130, %v4892, %v4896
      %v4898 = vshrl.u32 %v4648, 16
      %v4900 = vrot.slane %v4898, 4
      %v4901 = vor.u32 %v4900, %v4896
      %v4902 = vrot.slane %v4901, 4
      %v4904 = vshll.u32 %v4649, 16
      %v4906 = vrot.slane %v4904, 5
      %v4907 = vsel %vm1130, %v4902, %v4906
      %v4909 = vshrl.u32 %v4650, 16
      %v4911 = vrot.slane %v4909, 4
      %v4912 = vshll.u32 %v4650, 16
      %v4914 = vrot.slane %v4912, 5
      %v4915 = vor.u32 %v4911, %v4914
      %v4916 = vrot.slane %v4915, 4
      %v4918 = vshll.u32 %v4651, 16
      %v4920 = vrot.slane %v4918, 5
      %v4921 = vsel %vm1130, %v4916, %v4920
      %v4922 = vshrl.u32 %v4651, 16
      %v4924 = vrot.slane %v4922, 4
      %v4925 = vor.u32 %v4924, %v4920
      %v4926 = vrot.slane %v4925, 4
      %v4928 = vshll.u32 %v4652, 16
      %v4930 = vrot.slane %v4928, 5
      %v4931 = vsel %vm1130, %v4926, %v4930
      %v4933 = vshrl.u32 %v4653, 16
      %v4935 = vrot.slane %v4933, 4
      %v4936 = vshll.u32 %v4653, 16
      %v4938 = vrot.slane %v4936, 5
      %v4939 = vor.u32 %v4935, %v4938
      %v4940 = vrot.slane %v4939, 4
      %v4942 = vshll.u32 %v4654, 16
      %v4944 = vrot.slane %v4942, 5
      %v4945 = vsel %vm1130, %v4940, %v4944
      %v4946 = vshrl.u32 %v4654, 16
      %v4948 = vrot.slane %v4946, 4
      %v4949 = vor.u32 %v4948, %v4944
      %v4950 = vrot.slane %v4949, 4
      %v4952 = vshll.u32 %v4655, 16
      %v4954 = vrot.slane %v4952, 5
      %v4955 = vsel %vm1130, %v4950, %v4954
      %v4957 = vshrl.u32 %v4656, 16
      %v4959 = vrot.slane %v4957, 4
      %v4960 = vshll.u32 %v4656, 16
      %v4962 = vrot.slane %v4960, 5
      %v4963 = vor.u32 %v4959, %v4962
      %v4964 = vrot.slane %v4963, 4
      %v4966 = vshll.u32 %v4657, 16
      %v4968 = vrot.slane %v4966, 5
      %v4969 = vsel %vm1130, %v4964, %v4968
      %v4970 = vshrl.u32 %v4657, 16
      %v4972 = vrot.slane %v4970, 4
      %v4973 = vor.u32 %v4972, %v4968
      %v4974 = vrot.slane %v4973, 4
      %v4976 = vshll.u32 %v4658, 16
      %v4978 = vrot.slane %v4976, 5
      %v4979 = vsel %vm1130, %v4974, %v4978
      %v4981 = vshrl.u32 %v4659, 16
      %v4983 = vrot.slane %v4981, 4
      %v4984 = vshll.u32 %v4659, 16
      %v4986 = vrot.slane %v4984, 5
      %v4987 = vor.u32 %v4983, %v4986
      %v4988 = vrot.slane %v4987, 4
      %v4990 = vshll.u32 %v4660, 16
      %v4992 = vrot.slane %v4990, 5
      %v4993 = vsel %vm1130, %v4988, %v4992
      %v4994 = vshrl.u32 %v4660, 16
      %v4996 = vrot.slane %v4994, 4
      %v4997 = vor.u32 %v4996, %v4992
      %v4998 = vrot.slane %v4997, 4
      %v5000 = vshll.u32 %v4661, 16
      %v5002 = vrot.slane %v5000, 5
      %v5003 = vsel %vm1130, %v4998, %v5002
      %v5005 = vshrl.u32 %v4662, 16
      %v5007 = vrot.slane %v5005, 4
      %v5008 = vshll.u32 %v4662, 16
      %v5010 = vrot.slane %v5008, 5
      %v5011 = vor.u32 %v5007, %v5010
      %v5012 = vrot.slane %v5011, 4
      %v5014 = vshll.u32 %v4663, 16
      %v5016 = vrot.slane %v5014, 5
      %v5017 = vsel %vm1130, %v5012, %v5016
      %v5018 = vshrl.u32 %v4663, 16
      %v5020 = vrot.slane %v5018, 4
      %v5021 = vor.u32 %v5020, %v5016
      %v5022 = vrot.slane %v5021, 4
      %v5024 = vshll.u32 %v4664, 16
      %v5026 = vrot.slane %v5024, 5
      %v5027 = vsel %vm1130, %v5022, %v5026
      %v5029 = vshrl.u32 %v4665, 16
      %v5031 = vrot.slane %v5029, 4
      %v5032 = vshll.u32 %v4665, 16
      %v5034 = vrot.slane %v5032, 5
      %v5035 = vor.u32 %v5031, %v5034
      %v5036 = vrot.slane %v5035, 4
      %v5038 = vshll.u32 %v4666, 16
      %v5040 = vrot.slane %v5038, 5
      %v5041 = vsel %vm1130, %v5036, %v5040
      %v5042 = vshrl.u32 %v4666, 16
      %v5044 = vrot.slane %v5042, 4
      %v5045 = vor.u32 %v5044, %v5040
      %v5046 = vrot.slane %v5045, 4
      %v5048 = vshll.u32 %v4667, 16
      %v5050 = vrot.slane %v5048, 5
      %v5051 = vsel %vm1130, %v5046, %v5050
      %s5052 = scalar_lea.vmem %s3, 448
      %v5053 = vld [vmem:[%s5052] sm:$0xf]
      %v5054 = vld [vmem:[%s5052 + $0x4] sm:$0xf]
      %v5055 = vld [vmem:[%s5052 + $0x8] sm:$0xf]
      %v5056 = vld [vmem:[%s5052 + $0xc] sm:$0xf]
      %v5057 = vld [vmem:[%s5052 + $0x10] sm:$0xf]
      %v5058 = vld [vmem:[%s5052 + $0x14] sm:$0xf]
      %v5059 = vld [vmem:[%s5052 + $0x18] sm:$0xf]
      %v5060 = vld [vmem:[%s5052 + $0x1c] sm:$0xf]
      %v5061 = vld [vmem:[%s5052 + $0x20] sm:$0xf]
      %v5062 = vld [vmem:[%s5052 + $0x24] sm:$0xf]
      %v5063 = vld [vmem:[%s5052 + $0x28] sm:$0xf]
      %v5064 = vld [vmem:[%s5052 + $0x2c] sm:$0xf]
      %v5065 = vld [vmem:[%s5052 + $0x30] sm:$0xf]
      %v5066 = vld [vmem:[%s5052 + $0x34] sm:$0xf]
      %v5067 = vld [vmem:[%s5052 + $0x38] sm:$0xf]
      %v5068 = vld [vmem:[%s5052 + $0x3c] sm:$0xf]
      %v5069 = vunpack.c.l.b16 %v4681
      %v5070 = vunpack.c.l.b16 %v4691
      %v5071 = vunpack.c.l.b16 %v4705
      %v5072 = vunpack.c.l.b16 %v4715
      %v5073 = vunpack.c.l.b16 %v4729
      %v5074 = vunpack.c.l.b16 %v4739
      %v5075 = vunpack.c.l.b16 %v4753
      %v5076 = vunpack.c.l.b16 %v4763
      %v5077 = vunpack.c.l.b16 %v4777
      %v5078 = vunpack.c.l.b16 %v4787
      %v5079 = vunpack.c.l.b16 %v4801
      %v5080 = vunpack.c.l.b16 %v4811
      %v5081 = vunpack.c.l.b16 %v4825
      %v5082 = vunpack.c.l.b16 %v4835
      %v5083 = vunpack.c.l.b16 %v4849
      %v5084 = vunpack.c.l.b16 %v4859
      %v5085 = vunpack.c.l.b16 %v4873
      %v5086 = vunpack.c.l.b16 %v4883
      %v5087 = vunpack.c.l.b16 %v4897
      %v5088 = vunpack.c.l.b16 %v4907
      %v5089 = vunpack.c.l.b16 %v4921
      %v5090 = vunpack.c.l.b16 %v4931
      %v5091 = vunpack.c.l.b16 %v4945
      %v5092 = vunpack.c.l.b16 %v4955
      %v5093 = vunpack.c.l.b16 %v4969
      %v5094 = vunpack.c.l.b16 %v4979
      %v5095 = vunpack.c.l.b16 %v4993
      %v5096 = vunpack.c.l.b16 %v5003
      %v5097 = vunpack.c.l.b16 %v5017
      %v5098 = vunpack.c.l.b16 %v5027
      %v5099 = vunpack.c.l.b16 %v5041
      %v5100 = vunpack.c.l.b16 %v5051
      %v5101 = vpack.c.b16 %v5070, %v5069
      %v5102 = vpack.c.b16 %v5072, %v5071
      %v5103 = vpack.c.b16 %v5074, %v5073
      %v5104 = vpack.c.b16 %v5076, %v5075
      %v5105 = vpack.c.b16 %v5078, %v5077
      %v5106 = vpack.c.b16 %v5080, %v5079
      %v5107 = vpack.c.b16 %v5082, %v5081
      %v5108 = vpack.c.b16 %v5084, %v5083
      %v5109 = vpack.c.b16 %v5086, %v5085
      %v5110 = vpack.c.b16 %v5088, %v5087
      %v5111 = vpack.c.b16 %v5090, %v5089
      %v5112 = vpack.c.b16 %v5092, %v5091
      %v5113 = vpack.c.b16 %v5094, %v5093
      %v5114 = vpack.c.b16 %v5096, %v5095
      %v5115 = vpack.c.b16 %v5098, %v5097
      %v5116 = vpack.c.b16 %v5100, %v5099
      %v5149 = vunpack.c.l.b16 %v5053
      %v5150 = vunpack.c.l.b16 %v5054
      %v5151 = vunpack.c.l.b16 %v5055
      %v5152 = vunpack.c.l.b16 %v5056
      %v5153 = vunpack.c.l.b16 %v5057
      %v5154 = vunpack.c.l.b16 %v5058
      %v5155 = vunpack.c.l.b16 %v5059
      %v5156 = vunpack.c.l.b16 %v5060
      %v5157 = vunpack.c.l.b16 %v5061
      %v5158 = vunpack.c.l.b16 %v5062
      %v5159 = vunpack.c.l.b16 %v5063
      %v5160 = vunpack.c.l.b16 %v5064
      %v5161 = vunpack.c.l.b16 %v5065
      %v5162 = vunpack.c.l.b16 %v5066
      %v5163 = vunpack.c.l.b16 %v5067
      %v5164 = vunpack.c.l.b16 %v5068
      %v5165 = vpack.c.b16 %v5150, %v5149
      %v5166 = vpack.c.b16 %v5152, %v5151
      %v5167 = vpack.c.b16 %v5154, %v5153
      %v5168 = vpack.c.b16 %v5156, %v5155
      %v5169 = vpack.c.b16 %v5158, %v5157
      %v5170 = vpack.c.b16 %v5160, %v5159
      %v5171 = vpack.c.b16 %v5162, %v5161
      %v5172 = vpack.c.b16 %v5164, %v5163
      %5181 = vmatprep.subr.bf16.mxu0 0
      %5182 = vmatpush1.bf16.msra.mxu0 %v5165
      %5183 = vmatprep.subr.bf16.mxu0 0
      %5184 = vmatpush1.bf16.msra.mxu0 %v5166
      %5185 = vmatprep.subr.bf16.mxu0 0
      %5186 = vmatpush1.bf16.msra.mxu0 %v5167
      %5187 = vmatprep.subr.bf16.mxu0 0
      %5188 = vmatpush1.bf16.msra.mxu0 %v5168
      %5189 = vmatprep.subr.bf16.mxu0 0
      %5190 = vmatpush1.bf16.msra.mxu0 %v5169
      %5191 = vmatprep.subr.bf16.mxu0 0
      %5192 = vmatpush1.bf16.msra.mxu0 %v5170
      %5193 = vmatprep.subr.bf16.mxu0 0
      %5194 = vmatpush1.bf16.msra.mxu0 %v5171
      %5195 = vmatprep.subr.bf16.mxu0 0
      %5196 = vmatpush1.bf16.msra.mxu0 %v5172
      %5197 = vmatprep.subr.bf16.mxu0 0
      %5198 = vmatpush1.bf16.msra.mxu0 0
      %5199 = vmatprep.subr.bf16.mxu0 0
      %5200 = vmatpush1.bf16.msra.mxu0 0
      %5201 = vmatprep.subr.bf16.mxu0 0
      %5202 = vmatpush1.bf16.msra.mxu0 0
      %5203 = vmatprep.subr.bf16.mxu0 0
      %5204 = vmatpush1.bf16.msra.mxu0 0
      %5205 = vmatprep.subr.bf16.mxu0 0
      %5206 = vmatpush1.bf16.msra.mxu0 0
      %5207 = vmatprep.subr.bf16.mxu0 0
      %5208 = vmatpush1.bf16.msra.mxu0 0
      %5209 = vmatprep.subr.bf16.mxu0 0
      %5210 = vmatpush1.bf16.msra.mxu0 0
      %5211 = vmatprep.subr.bf16.mxu0 0
      %5212 = vmatpush1.bf16.msra.mxu0 0
      %5213 = vmatprep.mubr.bf16.mxu0 0
      %5214 = vmatmul.mubr.bf16.gmra.mrb[0].mxu0 %v5101
      %v5215 = vpop.f32.mrb[0].mxu0
      %v5216 = vadd.f32 0.0, %v5215
      %v5217 = vpop.f32.mrb[0].mxu0
      %v5218 = vpop.f32.mrb[0].mxu0
      %v5219 = vadd.f32 0.0, %v5218
      %v5220 = vpop.f32.mrb[0].mxu0
      %5221 = vmatprep.mubr.bf16.mxu0 0
      %5222 = vmatmul.mubr.bf16.gmra.mrb[0].mxu0 %v5102
      %v5223 = vpop.f32.mrb[0].mxu0
      %v5224 = vadd.f32 0.0, %v5223
      %v5225 = vpop.f32.mrb[0].mxu0
      %v5226 = vpop.f32.mrb[0].mxu0
      %v5227 = vadd.f32 0.0, %v5226
      %v5228 = vpop.f32.mrb[0].mxu0
      %5229 = vmatprep.mubr.bf16.mxu0 0
      %5230 = vmatmul.mubr.bf16.gmra.mrb[0].mxu0 %v5103
      %v5231 = vpop.f32.mrb[0].mxu0
      %v5232 = vadd.f32 0.0, %v5231
      %v5233 = vpop.f32.mrb[0].mxu0
      %v5234 = vpop.f32.mrb[0].mxu0
      %v5235 = vadd.f32 0.0, %v5234
      %v5236 = vpop.f32.mrb[0].mxu0
      %5237 = vmatprep.mubr.bf16.mxu0 0
      %5238 = vmatmul.mubr.bf16.gmra.mrb[0].mxu0 %v5104
      %v5239 = vpop.f32.mrb[0].mxu0
      %v5240 = vadd.f32 0.0, %v5239
      %v5241 = vpop.f32.mrb[0].mxu0
      %v5242 = vpop.f32.mrb[0].mxu0
      %v5243 = vadd.f32 0.0, %v5242
      %v5244 = vpop.f32.mrb[0].mxu0
      %5245 = vmatprep.mubr.bf16.mxu0 0
      %5246 = vmatmul.mubr.bf16.gmra.mrb[0].mxu0 %v5105
      %v5247 = vpop.f32.mrb[0].mxu0
      %v5248 = vadd.f32 0.0, %v5247
      %v5249 = vpop.f32.mrb[0].mxu0
      %v5250 = vpop.f32.mrb[0].mxu0
      %v5251 = vadd.f32 0.0, %v5250
      %v5252 = vpop.f32.mrb[0].mxu0
      %5253 = vmatprep.mubr.bf16.mxu0 0
      %5254 = vmatmul.mubr.bf16.gmra.mrb[0].mxu0 %v5106
      %v5255 = vpop.f32.mrb[0].mxu0
      %v5256 = vadd.f32 0.0, %v5255
      %v5257 = vpop.f32.mrb[0].mxu0
      %v5258 = vpop.f32.mrb[0].mxu0
      %v5259 = vadd.f32 0.0, %v5258
      %v5260 = vpop.f32.mrb[0].mxu0
      %5261 = vmatprep.mubr.bf16.mxu0 0
      %5262 = vmatmul.mubr.bf16.gmra.mrb[0].mxu0 %v5107
      %v5263 = vpop.f32.mrb[0].mxu0
      %v5264 = vadd.f32 0.0, %v5263
      %v5265 = vpop.f32.mrb[0].mxu0
      %v5266 = vpop.f32.mrb[0].mxu0
      %v5267 = vadd.f32 0.0, %v5266
      %v5268 = vpop.f32.mrb[0].mxu0
      %5269 = vmatprep.mubr.bf16.mxu0 0
      %5270 = vmatmul.mubr.bf16.gmra.mrb[0].mxu0 %v5108
      %v5271 = vpop.f32.mrb[0].mxu0
      %v5272 = vadd.f32 0.0, %v5271
      %v5273 = vpop.f32.mrb[0].mxu0
      %v5274 = vpop.f32.mrb[0].mxu0
      %v5275 = vadd.f32 0.0, %v5274
      %v5276 = vpop.f32.mrb[0].mxu0
      %5277 = vmatprep.mubr.bf16.mxu0 0
      %5278 = vmatmul.mubr.bf16.gmra.mrb[0].mxu0 %v5109
      %v5279 = vpop.f32.mrb[0].mxu0
      %v5280 = vadd.f32 0.0, %v5279
      %v5281 = vpop.f32.mrb[0].mxu0
      %v5282 = vpop.f32.mrb[0].mxu0
      %v5283 = vadd.f32 0.0, %v5282
      %v5284 = vpop.f32.mrb[0].mxu0
      %5285 = vmatprep.mubr.bf16.mxu0 0
      %5286 = vmatmul.mubr.bf16.gmra.mrb[0].mxu0 %v5110
      %v5287 = vpop.f32.mrb[0].mxu0
      %v5288 = vadd.f32 0.0, %v5287
      %v5289 = vpop.f32.mrb[0].mxu0
      %v5290 = vpop.f32.mrb[0].mxu0
      %v5291 = vadd.f32 0.0, %v5290
      %v5292 = vpop.f32.mrb[0].mxu0
      %5293 = vmatprep.mubr.bf16.mxu0 0
      %5294 = vmatmul.mubr.bf16.gmra.mrb[0].mxu0 %v5111
      %v5295 = vpop.f32.mrb[0].mxu0
      %v5296 = vadd.f32 0.0, %v5295
      %v5297 = vpop.f32.mrb[0].mxu0
      %v5298 = vpop.f32.mrb[0].mxu0
      %v5299 = vadd.f32 0.0, %v5298
      %v5300 = vpop.f32.mrb[0].mxu0
      %5301 = vmatprep.mubr.bf16.mxu0 0
      %5302 = vmatmul.mubr.bf16.gmra.mrb[0].mxu0 %v5112
      %v5303 = vpop.f32.mrb[0].mxu0
      %v5304 = vadd.f32 0.0, %v5303
      %v5305 = vpop.f32.mrb[0].mxu0
      %v5306 = vpop.f32.mrb[0].mxu0
      %v5307 = vadd.f32 0.0, %v5306
      %v5308 = vpop.f32.mrb[0].mxu0
      %5309 = vmatprep.mubr.bf16.mxu0 0
      %5310 = vmatmul.mubr.bf16.gmra.mrb[0].mxu0 %v5113
      %v5311 = vpop.f32.mrb[0].mxu0
      %v5312 = vadd.f32 0.0, %v5311
      %v5313 = vpop.f32.mrb[0].mxu0
      %v5314 = vpop.f32.mrb[0].mxu0
      %v5315 = vadd.f32 0.0, %v5314
      %v5316 = vpop.f32.mrb[0].mxu0
      %5317 = vmatprep.mubr.bf16.mxu0 0
      %5318 = vmatmul.mubr.bf16.gmra.mrb[0].mxu0 %v5114
      %v5319 = vpop.f32.mrb[0].mxu0
      %v5320 = vadd.f32 0.0, %v5319
      %v5321 = vpop.f32.mrb[0].mxu0
      %v5322 = vpop.f32.mrb[0].mxu0
      %v5323 = vadd.f32 0.0, %v5322
      %v5324 = vpop.f32.mrb[0].mxu0
      %5325 = vmatprep.mubr.bf16.mxu0 0
      %5326 = vmatmul.mubr.bf16.gmra.mrb[0].mxu0 %v5115
      %v5327 = vpop.f32.mrb[0].mxu0
      %v5328 = vadd.f32 0.0, %v5327
      %v5329 = vpop.f32.mrb[0].mxu0
      %v5330 = vpop.f32.mrb[0].mxu0
      %v5331 = vadd.f32 0.0, %v5330
      %v5332 = vpop.f32.mrb[0].mxu0
      %5333 = vmatprep.mubr.bf16.mxu0 0
      %5334 = vmatmul.mubr.bf16.gmra.mrb[0].mxu0 %v5116
      %v5335 = vpop.f32.mrb[0].mxu0
      %v5336 = vadd.f32 0.0, %v5335
      %v5337 = vpop.f32.mrb[0].mxu0
      %v5338 = vpop.f32.mrb[0].mxu0
      %v5339 = vadd.f32 0.0, %v5338
      %v5340 = vpop.f32.mrb[0].mxu0
      %5341 = vdwg.mxu0
      %v5342 = vadd.f32 %v4588, %v5216
      %v5343 = vadd.f32 %v4589, %v5219
      %v5344 = vadd.f32 %v4590, %v5224
      %v5345 = vadd.f32 %v4591, %v5227
      %v5346 = vadd.f32 %v4592, %v5232
      %v5347 = vadd.f32 %v4593, %v5235
      %v5348 = vadd.f32 %v4594, %v5240
      %v5349 = vadd.f32 %v4595, %v5243
      %v5350 = vadd.f32 %v4596, %v5248
      %v5351 = vadd.f32 %v4597, %v5251
      %v5352 = vadd.f32 %v4598, %v5256
      %v5353 = vadd.f32 %v4599, %v5259
      %v5354 = vadd.f32 %v4600, %v5264
      %v5355 = vadd.f32 %v4601, %v5267
      %v5356 = vadd.f32 %v4602, %v5272
      %v5357 = vadd.f32 %v4603, %v5275
      %v5358 = vadd.f32 %v4604, %v5280
      %v5359 = vadd.f32 %v4605, %v5283
      %v5360 = vadd.f32 %v4606, %v5288
      %v5361 = vadd.f32 %v4607, %v5291
      %v5362 = vadd.f32 %v4608, %v5296
      %v5363 = vadd.f32 %v4609, %v5299
      %v5364 = vadd.f32 %v4610, %v5304
      %v5365 = vadd.f32 %v4611, %v5307
      %v5366 = vadd.f32 %v4612, %v5312
      %v5367 = vadd.f32 %v4613, %v5315
      %v5368 = vadd.f32 %v4614, %v5320
      %v5369 = vadd.f32 %v4615, %v5323
      %v5370 = vadd.f32 %v4616, %v5328
      %v5371 = vadd.f32 %v4617, %v5331
      %v5372 = vadd.f32 %v4618, %v5336
      %v5373 = vadd.f32 %v4619, %v5339
      %v5374 = vld [vmem:[%s4233] sm:$0xe]
      %v5375 = vld [vmem:[%s4233 + $0xc] sm:$0xe]
      %v5376 = vld [vmem:[%s4233 + $0x18] sm:$0xe]
      %v5377 = vld [vmem:[%s4233 + $0x24] sm:$0xe]
      %v5378 = vld [vmem:[%s4233 + $0x30] sm:$0xe]
      %v5379 = vld [vmem:[%s4233 + $0x3c] sm:$0xe]
      %v5380 = vld [vmem:[%s4233 + $0x48] sm:$0xe]
      %v5381 = vld [vmem:[%s4233 + $0x54] sm:$0xe]
      %v5382 = vld [vmem:[%s4233 + $0x60] sm:$0xe]
      %v5383 = vld [vmem:[%s4233 + $0x6c] sm:$0xe]
      %v5384 = vld [vmem:[%s4233 + $0x78] sm:$0xe]
      %v5385 = vld [vmem:[%s4233 + $0x84] sm:$0xe]
      %v5386 = vld [vmem:[%s4233 + $0x90] sm:$0xe]
      %v5387 = vld [vmem:[%s4233 + $0x9c] sm:$0xe]
      %v5388 = vld [vmem:[%s4233 + $0xa8] sm:$0xe]
      %v5389 = vld [vmem:[%s4233 + $0xb4] sm:$0xe]
      %v5438 = vrot.slane %v5374, 5
      %v5439 = vrot.slane %v5438, 4
      %v5440 = vrot.slane %v4621, 5
      %v5441 = vsel %vm2160, %v5439, %v5440
      %v5442 = vrot.slane %v5440, 4
      %v5443 = vrot.slane %v4622, 5
      %v5444 = vsel %vm2160, %v5442, %v5443
      %v5445 = vrot.slane %v5375, 5
      %v5446 = vrot.slane %v5445, 4
      %v5447 = vrot.slane %v4624, 5
      %v5448 = vsel %vm2160, %v5446, %v5447
      %v5449 = vrot.slane %v5447, 4
      %v5450 = vrot.slane %v4625, 5
      %v5451 = vsel %vm2160, %v5449, %v5450
      %v5452 = vrot.slane %v5376, 5
      %v5453 = vrot.slane %v5452, 4
      %v5454 = vrot.slane %v4627, 5
      %v5455 = vsel %vm2160, %v5453, %v5454
      %v5456 = vrot.slane %v5454, 4
      %v5457 = vrot.slane %v4628, 5
      %v5458 = vsel %vm2160, %v5456, %v5457
      %v5459 = vrot.slane %v5377, 5
      %v5460 = vrot.slane %v5459, 4
      %v5461 = vrot.slane %v4630, 5
      %v5462 = vsel %vm2160, %v5460, %v5461
      %v5463 = vrot.slane %v5461, 4
      %v5464 = vrot.slane %v4631, 5
      %v5465 = vsel %vm2160, %v5463, %v5464
      %v5466 = vrot.slane %v5378, 5
      %v5467 = vrot.slane %v5466, 4
      %v5468 = vrot.slane %v4633, 5
      %v5469 = vsel %vm2160, %v5467, %v5468
      %v5470 = vrot.slane %v5468, 4
      %v5471 = vrot.slane %v4634, 5
      %v5472 = vsel %vm2160, %v5470, %v5471
      %v5473 = vrot.slane %v5379, 5
      %v5474 = vrot.slane %v5473, 4
      %v5475 = vrot.slane %v4636, 5
      %v5476 = vsel %vm2160, %v5474, %v5475
      %v5477 = vrot.slane %v5475, 4
      %v5478 = vrot.slane %v4637, 5
      %v5479 = vsel %vm2160, %v5477, %v5478
      %v5480 = vrot.slane %v5380, 5
      %v5481 = vrot.slane %v5480, 4
      %v5482 = vrot.slane %v4639, 5
      %v5483 = vsel %vm2160, %v5481, %v5482
      %v5484 = vrot.slane %v5482, 4
      %v5485 = vrot.slane %v4640, 5
      %v5486 = vsel %vm2160, %v5484, %v5485
      %v5487 = vrot.slane %v5381, 5
      %v5488 = vrot.slane %v5487, 4
      %v5489 = vrot.slane %v4642, 5
      %v5490 = vsel %vm2160, %v5488, %v5489
      %v5491 = vrot.slane %v5489, 4
      %v5492 = vrot.slane %v4643, 5
      %v5493 = vsel %vm2160, %v5491, %v5492
      %v5494 = vrot.slane %v5382, 5
      %v5495 = vrot.slane %v5494, 4
      %v5496 = vrot.slane %v4645, 5
      %v5497 = vsel %vm2160, %v5495, %v5496
      %v5498 = vrot.slane %v5496, 4
      %v5499 = vrot.slane %v4646, 5
      %v5500 = vsel %vm2160, %v5498, %v5499
      %v5501 = vrot.slane %v5383, 5
      %v5502 = vrot.slane %v5501, 4
      %v5503 = vrot.slane %v4648, 5
      %v5504 = vsel %vm2160, %v5502, %v5503
      %v5505 = vrot.slane %v5503, 4
      %v5506 = vrot.slane %v4649, 5
      %v5507 = vsel %vm2160, %v5505, %v5506
      %v5508 = vrot.slane %v5384, 5
      %v5509 = vrot.slane %v5508, 4
      %v5510 = vrot.slane %v4651, 5
      %v5511 = vsel %vm2160, %v5509, %v5510
      %v5512 = vrot.slane %v5510, 4
      %v5513 = vrot.slane %v4652, 5
      %v5514 = vsel %vm2160, %v5512, %v5513
      %v5515 = vrot.slane %v5385, 5
      %v5516 = vrot.slane %v5515, 4
      %v5517 = vrot.slane %v4654, 5
      %v5518 = vsel %vm2160, %v5516, %v5517
      %v5519 = vrot.slane %v5517, 4
      %v5520 = vrot.slane %v4655, 5
      %v5521 = vsel %vm2160, %v5519, %v5520
      %v5522 = vrot.slane %v5386, 5
      %v5523 = vrot.slane %v5522, 4
      %v5524 = vrot.slane %v4657, 5
      %v5525 = vsel %vm2160, %v5523, %v5524
      %v5526 = vrot.slane %v5524, 4
      %v5527 = vrot.slane %v4658, 5
      %v5528 = vsel %vm2160, %v5526, %v5527
      %v5529 = vrot.slane %v5387, 5
      %v5530 = vrot.slane %v5529, 4
      %v5531 = vrot.slane %v4660, 5
      %v5532 = vsel %vm2160, %v5530, %v5531
      %v5533 = vrot.slane %v5531, 4
      %v5534 = vrot.slane %v4661, 5
      %v5535 = vsel %vm2160, %v5533, %v5534
      %v5536 = vrot.slane %v5388, 5
      %v5537 = vrot.slane %v5536, 4
      %v5538 = vrot.slane %v4663, 5
      %v5539 = vsel %vm2160, %v5537, %v5538
      %v5540 = vrot.slane %v5538, 4
      %v5541 = vrot.slane %v4664, 5
      %v5542 = vsel %vm2160, %v5540, %v5541
      %v5543 = vrot.slane %v5389, 5
      %v5544 = vrot.slane %v5543, 4
      %v5545 = vrot.slane %v4666, 5
      %v5546 = vsel %vm2160, %v5544, %v5545
      %v5547 = vrot.slane %v5545, 4
      %v5548 = vrot.slane %v4667, 5
      %v5549 = vsel %vm2160, %v5547, %v5548
      %s5550 = scalar_lea.vmem %s3, 512
      %v5551 = vld [vmem:[%s5550] sm:$0xf]
      %v5552 = vld [vmem:[%s5550 + $0x4] sm:$0xf]
      %v5553 = vld [vmem:[%s5550 + $0x8] sm:$0xf]
      %v5554 = vld [vmem:[%s5550 + $0xc] sm:$0xf]
      %v5555 = vld [vmem:[%s5550 + $0x10] sm:$0xf]
      %v5556 = vld [vmem:[%s5550 + $0x14] sm:$0xf]
      %v5557 = vld [vmem:[%s5550 + $0x18] sm:$0xf]
      %v5558 = vld [vmem:[%s5550 + $0x1c] sm:$0xf]
      %v5559 = vld [vmem:[%s5550 + $0x20] sm:$0xf]
      %v5560 = vld [vmem:[%s5550 + $0x24] sm:$0xf]
      %v5561 = vld [vmem:[%s5550 + $0x28] sm:$0xf]
      %v5562 = vld [vmem:[%s5550 + $0x2c] sm:$0xf]
      %v5563 = vld [vmem:[%s5550 + $0x30] sm:$0xf]
      %v5564 = vld [vmem:[%s5550 + $0x34] sm:$0xf]
      %v5565 = vld [vmem:[%s5550 + $0x38] sm:$0xf]
      %v5566 = vld [vmem:[%s5550 + $0x3c] sm:$0xf]
      %v5567 = vunpack.c.l.b16 %v5441
      %v5568 = vunpack.c.l.b16 %v5444
      %v5569 = vunpack.c.l.b16 %v5448
      %v5570 = vunpack.c.l.b16 %v5451
      %v5571 = vunpack.c.l.b16 %v5455
      %v5572 = vunpack.c.l.b16 %v5458
      %v5573 = vunpack.c.l.b16 %v5462
      %v5574 = vunpack.c.l.b16 %v5465
      %v5575 = vunpack.c.l.b16 %v5469
      %v5576 = vunpack.c.l.b16 %v5472
      %v5577 = vunpack.c.l.b16 %v5476
      %v5578 = vunpack.c.l.b16 %v5479
      %v5579 = vunpack.c.l.b16 %v5483
      %v5580 = vunpack.c.l.b16 %v5486
      %v5581 = vunpack.c.l.b16 %v5490
      %v5582 = vunpack.c.l.b16 %v5493
      %v5583 = vunpack.c.l.b16 %v5497
      %v5584 = vunpack.c.l.b16 %v5500
      %v5585 = vunpack.c.l.b16 %v5504
      %v5586 = vunpack.c.l.b16 %v5507
      %v5587 = vunpack.c.l.b16 %v5511
      %v5588 = vunpack.c.l.b16 %v5514
      %v5589 = vunpack.c.l.b16 %v5518
      %v5590 = vunpack.c.l.b16 %v5521
      %v5591 = vunpack.c.l.b16 %v5525
      %v5592 = vunpack.c.l.b16 %v5528
      %v5593 = vunpack.c.l.b16 %v5532
      %v5594 = vunpack.c.l.b16 %v5535
      %v5595 = vunpack.c.l.b16 %v5539
      %v5596 = vunpack.c.l.b16 %v5542
      %v5597 = vunpack.c.l.b16 %v5546
      %v5598 = vunpack.c.l.b16 %v5549
      %v5599 = vpack.c.b16 %v5568, %v5567
      %v5600 = vpack.c.b16 %v5570, %v5569
      %v5601 = vpack.c.b16 %v5572, %v5571
      %v5602 = vpack.c.b16 %v5574, %v5573
      %v5603 = vpack.c.b16 %v5576, %v5575
      %v5604 = vpack.c.b16 %v5578, %v5577
      %v5605 = vpack.c.b16 %v5580, %v5579
      %v5606 = vpack.c.b16 %v5582, %v5581
      %v5607 = vpack.c.b16 %v5584, %v5583
      %v5608 = vpack.c.b16 %v5586, %v5585
      %v5609 = vpack.c.b16 %v5588, %v5587
      %v5610 = vpack.c.b16 %v5590, %v5589
      %v5611 = vpack.c.b16 %v5592, %v5591
      %v5612 = vpack.c.b16 %v5594, %v5593
      %v5613 = vpack.c.b16 %v5596, %v5595
      %v5614 = vpack.c.b16 %v5598, %v5597
      %v5647 = vunpack.c.l.b16 %v5551
      %v5648 = vunpack.c.l.b16 %v5552
      %v5649 = vunpack.c.l.b16 %v5553
      %v5650 = vunpack.c.l.b16 %v5554
      %v5651 = vunpack.c.l.b16 %v5555
      %v5652 = vunpack.c.l.b16 %v5556
      %v5653 = vunpack.c.l.b16 %v5557
      %v5654 = vunpack.c.l.b16 %v5558
      %v5655 = vunpack.c.l.b16 %v5559
      %v5656 = vunpack.c.l.b16 %v5560
      %v5657 = vunpack.c.l.b16 %v5561
      %v5658 = vunpack.c.l.b16 %v5562
      %v5659 = vunpack.c.l.b16 %v5563
      %v5660 = vunpack.c.l.b16 %v5564
      %v5661 = vunpack.c.l.b16 %v5565
      %v5662 = vunpack.c.l.b16 %v5566
      %v5663 = vpack.c.b16 %v5648, %v5647
      %v5664 = vpack.c.b16 %v5650, %v5649
      %v5665 = vpack.c.b16 %v5652, %v5651
      %v5666 = vpack.c.b16 %v5654, %v5653
      %v5667 = vpack.c.b16 %v5656, %v5655
      %v5668 = vpack.c.b16 %v5658, %v5657
      %v5669 = vpack.c.b16 %v5660, %v5659
      %v5670 = vpack.c.b16 %v5662, %v5661
      %5679 = vmatprep.subr.bf16.mxu0 0
      %5680 = vmatpush1.bf16.msra.mxu0 %v5663
      %5681 = vmatprep.subr.bf16.mxu0 0
      %5682 = vmatpush1.bf16.msra.mxu0 %v5664
      %5683 = vmatprep.subr.bf16.mxu0 0
      %5684 = vmatpush1.bf16.msra.mxu0 %v5665
      %5685 = vmatprep.subr.bf16.mxu0 0
      %5686 = vmatpush1.bf16.msra.mxu0 %v5666
      %5687 = vmatprep.subr.bf16.mxu0 0
      %5688 = vmatpush1.bf16.msra.mxu0 %v5667
      %5689 = vmatprep.subr.bf16.mxu0 0
      %5690 = vmatpush1.bf16.msra.mxu0 %v5668
      %5691 = vmatprep.subr.bf16.mxu0 0
      %5692 = vmatpush1.bf16.msra.mxu0 %v5669
      %5693 = vmatprep.subr.bf16.mxu0 0
      %5694 = vmatpush1.bf16.msra.mxu0 %v5670
      %5695 = vmatprep.subr.bf16.mxu0 0
      %5696 = vmatpush1.bf16.msra.mxu0 0
      %5697 = vmatprep.subr.bf16.mxu0 0
      %5698 = vmatpush1.bf16.msra.mxu0 0
      %5699 = vmatprep.subr.bf16.mxu0 0
      %5700 = vmatpush1.bf16.msra.mxu0 0
      %5701 = vmatprep.subr.bf16.mxu0 0
      %5702 = vmatpush1.bf16.msra.mxu0 0
      %5703 = vmatprep.subr.bf16.mxu0 0
      %5704 = vmatpush1.bf16.msra.mxu0 0
      %5705 = vmatprep.subr.bf16.mxu0 0
      %5706 = vmatpush1.bf16.msra.mxu0 0
      %5707 = vmatprep.subr.bf16.mxu0 0
      %5708 = vmatpush1.bf16.msra.mxu0 0
      %5709 = vmatprep.subr.bf16.mxu0 0
      %5710 = vmatpush1.bf16.msra.mxu0 0
      %5711 = vmatprep.mubr.bf16.mxu0 0
      %5712 = vmatmul.mubr.bf16.gmra.mrb[0].mxu0 %v5599
      %v5713 = vpop.f32.mrb[0].mxu0
      %v5714 = vadd.f32 0.0, %v5713
      %v5715 = vpop.f32.mrb[0].mxu0
      %v5716 = vpop.f32.mrb[0].mxu0
      %v5717 = vadd.f32 0.0, %v5716
      %v5718 = vpop.f32.mrb[0].mxu0
      %5719 = vmatprep.mubr.bf16.mxu0 0
      %5720 = vmatmul.mubr.bf16.gmra.mrb[0].mxu0 %v5600
      %v5721 = vpop.f32.mrb[0].mxu0
      %v5722 = vadd.f32 0.0, %v5721
      %v5723 = vpop.f32.mrb[0].mxu0
      %v5724 = vpop.f32.mrb[0].mxu0
      %v5725 = vadd.f32 0.0, %v5724
      %v5726 = vpop.f32.mrb[0].mxu0
      %5727 = vmatprep.mubr.bf16.mxu0 0
      %5728 = vmatmul.mubr.bf16.gmra.mrb[0].mxu0 %v5601
      %v5729 = vpop.f32.mrb[0].mxu0
      %v5730 = vadd.f32 0.0, %v5729
      %v5731 = vpop.f32.mrb[0].mxu0
      %v5732 = vpop.f32.mrb[0].mxu0
      %v5733 = vadd.f32 0.0, %v5732
      %v5734 = vpop.f32.mrb[0].mxu0
      %5735 = vmatprep.mubr.bf16.mxu0 0
      %5736 = vmatmul.mubr.bf16.gmra.mrb[0].mxu0 %v5602
      %v5737 = vpop.f32.mrb[0].mxu0
      %v5738 = vadd.f32 0.0, %v5737
      %v5739 = vpop.f32.mrb[0].mxu0
      %v5740 = vpop.f32.mrb[0].mxu0
      %v5741 = vadd.f32 0.0, %v5740
      %v5742 = vpop.f32.mrb[0].mxu0
      %5743 = vmatprep.mubr.bf16.mxu0 0
      %5744 = vmatmul.mubr.bf16.gmra.mrb[0].mxu0 %v5603
      %v5745 = vpop.f32.mrb[0].mxu0
      %v5746 = vadd.f32 0.0, %v5745
      %v5747 = vpop.f32.mrb[0].mxu0
      %v5748 = vpop.f32.mrb[0].mxu0
      %v5749 = vadd.f32 0.0, %v5748
      %v5750 = vpop.f32.mrb[0].mxu0
      %5751 = vmatprep.mubr.bf16.mxu0 0
      %5752 = vmatmul.mubr.bf16.gmra.mrb[0].mxu0 %v5604
      %v5753 = vpop.f32.mrb[0].mxu0
      %v5754 = vadd.f32 0.0, %v5753
      %v5755 = vpop.f32.mrb[0].mxu0
      %v5756 = vpop.f32.mrb[0].mxu0
      %v5757 = vadd.f32 0.0, %v5756
      %v5758 = vpop.f32.mrb[0].mxu0
      %5759 = vmatprep.mubr.bf16.mxu0 0
      %5760 = vmatmul.mubr.bf16.gmra.mrb[0].mxu0 %v5605
      %v5761 = vpop.f32.mrb[0].mxu0
      %v5762 = vadd.f32 0.0, %v5761
      %v5763 = vpop.f32.mrb[0].mxu0
      %v5764 = vpop.f32.mrb[0].mxu0
      %v5765 = vadd.f32 0.0, %v5764
      %v5766 = vpop.f32.mrb[0].mxu0
      %5767 = vmatprep.mubr.bf16.mxu0 0
      %5768 = vmatmul.mubr.bf16.gmra.mrb[0].mxu0 %v5606
      %v5769 = vpop.f32.mrb[0].mxu0
      %v5770 = vadd.f32 0.0, %v5769
      %v5771 = vpop.f32.mrb[0].mxu0
      %v5772 = vpop.f32.mrb[0].mxu0
      %v5773 = vadd.f32 0.0, %v5772
      %v5774 = vpop.f32.mrb[0].mxu0
      %5775 = vmatprep.mubr.bf16.mxu0 0
      %5776 = vmatmul.mubr.bf16.gmra.mrb[0].mxu0 %v5607
      %v5777 = vpop.f32.mrb[0].mxu0
      %v5778 = vadd.f32 0.0, %v5777
      %v5779 = vpop.f32.mrb[0].mxu0
      %v5780 = vpop.f32.mrb[0].mxu0
      %v5781 = vadd.f32 0.0, %v5780
      %v5782 = vpop.f32.mrb[0].mxu0
      %5783 = vmatprep.mubr.bf16.mxu0 0
      %5784 = vmatmul.mubr.bf16.gmra.mrb[0].mxu0 %v5608
      %v5785 = vpop.f32.mrb[0].mxu0
      %v5786 = vadd.f32 0.0, %v5785
      %v5787 = vpop.f32.mrb[0].mxu0
      %v5788 = vpop.f32.mrb[0].mxu0
      %v5789 = vadd.f32 0.0, %v5788
      %v5790 = vpop.f32.mrb[0].mxu0
      %5791 = vmatprep.mubr.bf16.mxu0 0
      %5792 = vmatmul.mubr.bf16.gmra.mrb[0].mxu0 %v5609
      %v5793 = vpop.f32.mrb[0].mxu0
      %v5794 = vadd.f32 0.0, %v5793
      %v5795 = vpop.f32.mrb[0].mxu0
      %v5796 = vpop.f32.mrb[0].mxu0
      %v5797 = vadd.f32 0.0, %v5796
      %v5798 = vpop.f32.mrb[0].mxu0
      %5799 = vmatprep.mubr.bf16.mxu0 0
      %5800 = vmatmul.mubr.bf16.gmra.mrb[0].mxu0 %v5610
      %v5801 = vpop.f32.mrb[0].mxu0
      %v5802 = vadd.f32 0.0, %v5801
      %v5803 = vpop.f32.mrb[0].mxu0
      %v5804 = vpop.f32.mrb[0].mxu0
      %v5805 = vadd.f32 0.0, %v5804
      %v5806 = vpop.f32.mrb[0].mxu0
      %5807 = vmatprep.mubr.bf16.mxu0 0
      %5808 = vmatmul.mubr.bf16.gmra.mrb[0].mxu0 %v5611
      %v5809 = vpop.f32.mrb[0].mxu0
      %v5810 = vadd.f32 0.0, %v5809
      %v5811 = vpop.f32.mrb[0].mxu0
      %v5812 = vpop.f32.mrb[0].mxu0
      %v5813 = vadd.f32 0.0, %v5812
      %v5814 = vpop.f32.mrb[0].mxu0
      %5815 = vmatprep.mubr.bf16.mxu0 0
      %5816 = vmatmul.mubr.bf16.gmra.mrb[0].mxu0 %v5612
      %v5817 = vpop.f32.mrb[0].mxu0
      %v5818 = vadd.f32 0.0, %v5817
      %v5819 = vpop.f32.mrb[0].mxu0
      %v5820 = vpop.f32.mrb[0].mxu0
      %v5821 = vadd.f32 0.0, %v5820
      %v5822 = vpop.f32.mrb[0].mxu0
      %5823 = vmatprep.mubr.bf16.mxu0 0
      %5824 = vmatmul.mubr.bf16.gmra.mrb[0].mxu0 %v5613
      %v5825 = vpop.f32.mrb[0].mxu0
      %v5826 = vadd.f32 0.0, %v5825
      %v5827 = vpop.f32.mrb[0].mxu0
      %v5828 = vpop.f32.mrb[0].mxu0
      %v5829 = vadd.f32 0.0, %v5828
      %v5830 = vpop.f32.mrb[0].mxu0
      %5831 = vmatprep.mubr.bf16.mxu0 0
      %5832 = vmatmul.mubr.bf16.gmra.mrb[0].mxu0 %v5614
      %v5833 = vpop.f32.mrb[0].mxu0
      %v5834 = vadd.f32 0.0, %v5833
      %v5835 = vpop.f32.mrb[0].mxu0
      %v5836 = vpop.f32.mrb[0].mxu0
      %v5837 = vadd.f32 0.0, %v5836
      %v5838 = vpop.f32.mrb[0].mxu0
      %5839 = vdwg.mxu0
      %v5840 = vadd.f32 %v5342, %v5714
      %v5841 = vadd.f32 %v5343, %v5717
      %v5842 = vadd.f32 %v5344, %v5722
      %v5843 = vadd.f32 %v5345, %v5725
      %v5844 = vadd.f32 %v5346, %v5730
      %v5845 = vadd.f32 %v5347, %v5733
      %v5846 = vadd.f32 %v5348, %v5738
      %v5847 = vadd.f32 %v5349, %v5741
      %v5848 = vadd.f32 %v5350, %v5746
      %v5849 = vadd.f32 %v5351, %v5749
      %v5850 = vadd.f32 %v5352, %v5754
      %v5851 = vadd.f32 %v5353, %v5757
      %v5852 = vadd.f32 %v5354, %v5762
      %v5853 = vadd.f32 %v5355, %v5765
      %v5854 = vadd.f32 %v5356, %v5770
      %v5855 = vadd.f32 %v5357, %v5773
      %v5856 = vadd.f32 %v5358, %v5778
      %v5857 = vadd.f32 %v5359, %v5781
      %v5858 = vadd.f32 %v5360, %v5786
      %v5859 = vadd.f32 %v5361, %v5789
      %v5860 = vadd.f32 %v5362, %v5794
      %v5861 = vadd.f32 %v5363, %v5797
      %v5862 = vadd.f32 %v5364, %v5802
      %v5863 = vadd.f32 %v5365, %v5805
      %v5864 = vadd.f32 %v5366, %v5810
      %v5865 = vadd.f32 %v5367, %v5813
      %v5866 = vadd.f32 %v5368, %v5818
      %v5867 = vadd.f32 %v5369, %v5821
      %v5868 = vadd.f32 %v5370, %v5826
      %v5869 = vadd.f32 %v5371, %v5829
      %v5870 = vadd.f32 %v5372, %v5834
      %v5871 = vadd.f32 %v5373, %v5837
      %v5872 = vpack.c.bf16 %v5841, %v5840
      %v5873 = vpack.c.bf16 %v5843, %v5842
      %v5874 = vpack.c.bf16 %v5845, %v5844
      %v5875 = vpack.c.bf16 %v5847, %v5846
      %v5876 = vpack.c.bf16 %v5849, %v5848
      %v5877 = vpack.c.bf16 %v5851, %v5850
      %v5878 = vpack.c.bf16 %v5853, %v5852
      %v5879 = vpack.c.bf16 %v5855, %v5854
      %v5880 = vpack.c.bf16 %v5857, %v5856
      %v5881 = vpack.c.bf16 %v5859, %v5858
      %v5882 = vpack.c.bf16 %v5861, %v5860
      %v5883 = vpack.c.bf16 %v5863, %v5862
      %v5884 = vpack.c.bf16 %v5865, %v5864
      %v5885 = vpack.c.bf16 %v5867, %v5866
      %v5886 = vpack.c.bf16 %v5869, %v5868
      %v5887 = vpack.c.bf16 %v5871, %v5870
      %v5904 = vunpack.c.l.b16 %v5872
      %v5905 = vunpack.c.h.b16 %v5872
      %v5906 = vunpack.c.l.b16 %v5873
      %v5907 = vunpack.c.h.b16 %v5873
      %v5908 = vunpack.c.l.b16 %v5874
      %v5909 = vunpack.c.h.b16 %v5874
      %v5910 = vunpack.c.l.b16 %v5875
      %v5911 = vunpack.c.h.b16 %v5875
      %v5912 = vunpack.c.l.b16 %v5876
      %v5913 = vunpack.c.h.b16 %v5876
      %v5914 = vunpack.c.l.b16 %v5877
      %v5915 = vunpack.c.h.b16 %v5877
      %v5916 = vunpack.c.l.b16 %v5878
      %v5917 = vunpack.c.h.b16 %v5878
      %v5918 = vunpack.c.l.b16 %v5879
      %v5919 = vunpack.c.h.b16 %v5879
      %v5920 = vunpack.c.l.b16 %v5880
      %v5921 = vunpack.c.h.b16 %v5880
      %v5922 = vunpack.c.l.b16 %v5881
      %v5923 = vunpack.c.h.b16 %v5881
      %v5924 = vunpack.c.l.b16 %v5882
      %v5925 = vunpack.c.h.b16 %v5882
      %v5926 = vunpack.c.l.b16 %v5883
      %v5927 = vunpack.c.h.b16 %v5883
      %v5928 = vunpack.c.l.b16 %v5884
      %v5929 = vunpack.c.h.b16 %v5884
      %v5930 = vunpack.c.l.b16 %v5885
      %v5931 = vunpack.c.h.b16 %v5885
      %v5932 = vunpack.c.l.b16 %v5886
      %v5933 = vunpack.c.h.b16 %v5886
      %v5934 = vunpack.c.l.b16 %v5887
      %v5935 = vunpack.c.h.b16 %v5887
      %v5936 = vpack.c.b16 %v5904, %v5904
      %v5937 = vpack.c.b16 %v5905, %v5905
      %v5938 = vpack.c.b16 %v5906, %v5906
      %v5939 = vpack.c.b16 %v5907, %v5907
      %v5940 = vpack.c.b16 %v5908, %v5908
      %v5941 = vpack.c.b16 %v5909, %v5909
      %v5942 = vpack.c.b16 %v5910, %v5910
      %v5943 = vpack.c.b16 %v5911, %v5911
      %v5944 = vpack.c.b16 %v5912, %v5912
      %v5945 = vpack.c.b16 %v5913, %v5913
      %v5946 = vpack.c.b16 %v5914, %v5914
      %v5947 = vpack.c.b16 %v5915, %v5915
      %v5948 = vpack.c.b16 %v5916, %v5916
      %v5949 = vpack.c.b16 %v5917, %v5917
      %v5950 = vpack.c.b16 %v5918, %v5918
      %v5951 = vpack.c.b16 %v5919, %v5919
      %v5952 = vpack.c.b16 %v5920, %v5920
      %v5953 = vpack.c.b16 %v5921, %v5921
      %v5954 = vpack.c.b16 %v5922, %v5922
      %v5955 = vpack.c.b16 %v5923, %v5923
      %v5956 = vpack.c.b16 %v5924, %v5924
      %v5957 = vpack.c.b16 %v5925, %v5925
      %v5958 = vpack.c.b16 %v5926, %v5926
      %v5959 = vpack.c.b16 %v5927, %v5927
      %v5960 = vpack.c.b16 %v5928, %v5928
      %v5961 = vpack.c.b16 %v5929, %v5929
      %v5962 = vpack.c.b16 %v5930, %v5930
      %v5963 = vpack.c.b16 %v5931, %v5931
      %v5964 = vpack.c.b16 %v5932, %v5932
      %v5965 = vpack.c.b16 %v5933, %v5933
      %v5966 = vpack.c.b16 %v5934, %v5934
      %v5967 = vpack.c.b16 %v5935, %v5935
      %6000 = vst [vmem:[%s231] sm:$0xf] %v5936
      %6001 = vst [vmem:[%s231 + $0x4] sm:$0xf] %v5937
      %6002 = vst [vmem:[%s231 + $0x8] sm:$0xf] %v5938
      %6003 = vst [vmem:[%s231 + $0xc] sm:$0xf] %v5939
      %6004 = vst [vmem:[%s231 + $0x10] sm:$0xf] %v5940
      %6005 = vst [vmem:[%s231 + $0x14] sm:$0xf] %v5941
      %6006 = vst [vmem:[%s231 + $0x18] sm:$0xf] %v5942
      %6007 = vst [vmem:[%s231 + $0x1c] sm:$0xf] %v5943
      %6008 = vst [vmem:[%s231 + $0x20] sm:$0xf] %v5944
      %6009 = vst [vmem:[%s231 + $0x24] sm:$0xf] %v5945
      %6010 = vst [vmem:[%s231 + $0x28] sm:$0xf] %v5946
      %6011 = vst [vmem:[%s231 + $0x2c] sm:$0xf] %v5947
      %6012 = vst [vmem:[%s231 + $0x30] sm:$0xf] %v5948
      %6013 = vst [vmem:[%s231 + $0x34] sm:$0xf] %v5949
      %6014 = vst [vmem:[%s231 + $0x38] sm:$0xf] %v5950
      %6015 = vst [vmem:[%s231 + $0x3c] sm:$0xf] %v5951
      %6016 = vst [vmem:[%s231 + $0x40] sm:$0xf] %v5952
      %6017 = vst [vmem:[%s231 + $0x44] sm:$0xf] %v5953
      %6018 = vst [vmem:[%s231 + $0x48] sm:$0xf] %v5954
      %6019 = vst [vmem:[%s231 + $0x4c] sm:$0xf] %v5955
      %6020 = vst [vmem:[%s231 + $0x50] sm:$0xf] %v5956
      %6021 = vst [vmem:[%s231 + $0x54] sm:$0xf] %v5957
      %6022 = vst [vmem:[%s231 + $0x58] sm:$0xf] %v5958
      %6023 = vst [vmem:[%s231 + $0x5c] sm:$0xf] %v5959
      %6024 = vst [vmem:[%s231 + $0x60] sm:$0xf] %v5960
      %6025 = vst [vmem:[%s231 + $0x64] sm:$0xf] %v5961
      %6026 = vst [vmem:[%s231 + $0x68] sm:$0xf] %v5962
      %6027 = vst [vmem:[%s231 + $0x6c] sm:$0xf] %v5963
      %6028 = vst [vmem:[%s231 + $0x70] sm:$0xf] %v5964
      %6029 = vst [vmem:[%s231 + $0x74] sm:$0xf] %v5965
      %6030 = vst [vmem:[%s231 + $0x78] sm:$0xf] %v5966
      %6031 = vst [vmem:[%s231 + $0x7c] sm:$0xf] %v5967
      %v6032 = vadd.f32 %v5840, %v5841
      %v6033 = vadd.f32 %v6032, %v5842
      %v6034 = vadd.f32 %v6033, %v5843
      %v6035 = vadd.f32 %v6034, %v5844
      %v6036 = vadd.f32 %v6035, %v5845
      %v6037 = vadd.f32 %v6036, %v5846
      %v6038 = vadd.f32 %v6037, %v5847
      %v6039 = vadd.f32 %v6038, %v5848
      %v6040 = vadd.f32 %v6039, %v5849
      %v6041 = vadd.f32 %v6040, %v5850
      %v6042 = vadd.f32 %v6041, %v5851
      %v6043 = vadd.f32 %v6042, %v5852
      %v6044 = vadd.f32 %v6043, %v5853
      %v6045 = vadd.f32 %v6044, %v5854
      %v6046 = vadd.f32 %v6045, %v5855
      %v6047 = vadd.f32 %v6046, %v5856
      %v6048 = vadd.f32 %v6047, %v5857
      %v6049 = vadd.f32 %v6048, %v5858
      %v6050 = vadd.f32 %v6049, %v5859
      %v6051 = vadd.f32 %v6050, %v5860
      %v6052 = vadd.f32 %v6051, %v5861
      %v6053 = vadd.f32 %v6052, %v5862
      %v6054 = vadd.f32 %v6053, %v5863
      %v6055 = vadd.f32 %v6054, %v5864
      %v6056 = vadd.f32 %v6055, %v5865
      %v6057 = vadd.f32 %v6056, %v5866
      %v6058 = vadd.f32 %v6057, %v5867
      %v6059 = vadd.f32 %v6058, %v5868
      %v6060 = vadd.f32 %v6059, %v5869
      %v6061 = vadd.f32 %v6060, %v5870
      %v6062 = vadd.f32 %v6061, %v5871
      %v6063 = vrot.slane %v6062, 4
      %v6064 = vadd.f32 %v6062, %v6063
      %v6065 = vrot.slane %v6064, 2
      %v6066 = vadd.f32 %v6064, %v6065
      %v6067 = vrot.slane %v6066, 1
      %v6068 = vadd.f32 %v6066, %v6067
      %v6069 = vmul.f32 %v6068, 0.00390625
      %v6070 = vsub.f32 %v5840, %v6069
      %v6071 = vsub.f32 %v5841, %v6069
      %v6072 = vsub.f32 %v5842, %v6069
      %v6073 = vsub.f32 %v5843, %v6069
      %v6074 = vsub.f32 %v5844, %v6069
      %v6075 = vsub.f32 %v5845, %v6069
      %v6076 = vsub.f32 %v5846, %v6069
      %v6077 = vsub.f32 %v5847, %v6069
      %v6078 = vsub.f32 %v5848, %v6069
      %v6079 = vsub.f32 %v5849, %v6069
      %v6080 = vsub.f32 %v5850, %v6069
      %v6081 = vsub.f32 %v5851, %v6069
      %v6082 = vsub.f32 %v5852, %v6069
      %v6083 = vsub.f32 %v5853, %v6069
      %v6084 = vsub.f32 %v5854, %v6069
      %v6085 = vsub.f32 %v5855, %v6069
      %v6086 = vsub.f32 %v5856, %v6069
      %v6087 = vsub.f32 %v5857, %v6069
      %v6088 = vsub.f32 %v5858, %v6069
      %v6089 = vsub.f32 %v5859, %v6069
      %v6090 = vsub.f32 %v5860, %v6069
      %v6091 = vsub.f32 %v5861, %v6069
      %v6092 = vsub.f32 %v5862, %v6069
      %v6093 = vsub.f32 %v5863, %v6069
      %v6094 = vsub.f32 %v5864, %v6069
      %v6095 = vsub.f32 %v5865, %v6069
      %v6096 = vsub.f32 %v5866, %v6069
      %v6097 = vsub.f32 %v5867, %v6069
      %v6098 = vsub.f32 %v5868, %v6069
      %v6099 = vsub.f32 %v5869, %v6069
      %v6100 = vsub.f32 %v5870, %v6069
      %v6101 = vsub.f32 %v5871, %v6069
      %v6102 = vmul.f32 %v6070, %v6070
      %v6103 = vmul.f32 %v6071, %v6071
      %v6104 = vmul.f32 %v6072, %v6072
      %v6105 = vmul.f32 %v6073, %v6073
      %v6106 = vmul.f32 %v6074, %v6074
      %v6107 = vmul.f32 %v6075, %v6075
      %v6108 = vmul.f32 %v6076, %v6076
      %v6109 = vmul.f32 %v6077, %v6077
      %v6110 = vmul.f32 %v6078, %v6078
      %v6111 = vmul.f32 %v6079, %v6079
      %v6112 = vmul.f32 %v6080, %v6080
      %v6113 = vmul.f32 %v6081, %v6081
      %v6114 = vmul.f32 %v6082, %v6082
      %v6115 = vmul.f32 %v6083, %v6083
      %v6116 = vmul.f32 %v6084, %v6084
      %v6117 = vmul.f32 %v6085, %v6085
      %v6118 = vmul.f32 %v6086, %v6086
      %v6119 = vmul.f32 %v6087, %v6087
      %v6120 = vmul.f32 %v6088, %v6088
      %v6121 = vmul.f32 %v6089, %v6089
      %v6122 = vmul.f32 %v6090, %v6090
      %v6123 = vmul.f32 %v6091, %v6091
      %v6124 = vmul.f32 %v6092, %v6092
      %v6125 = vmul.f32 %v6093, %v6093
      %v6126 = vmul.f32 %v6094, %v6094
      %v6127 = vmul.f32 %v6095, %v6095
      %v6128 = vmul.f32 %v6096, %v6096
      %v6129 = vmul.f32 %v6097, %v6097
      %v6130 = vmul.f32 %v6098, %v6098
      %v6131 = vmul.f32 %v6099, %v6099
      %v6132 = vmul.f32 %v6100, %v6100
      %v6133 = vmul.f32 %v6101, %v6101
      %v6134 = vadd.f32 %v6102, %v6103
      %v6135 = vadd.f32 %v6134, %v6104
      %v6136 = vadd.f32 %v6135, %v6105
      %v6137 = vadd.f32 %v6136, %v6106
      %v6138 = vadd.f32 %v6137, %v6107
      %v6139 = vadd.f32 %v6138, %v6108
      %v6140 = vadd.f32 %v6139, %v6109
      %v6141 = vadd.f32 %v6140, %v6110
      %v6142 = vadd.f32 %v6141, %v6111
      %v6143 = vadd.f32 %v6142, %v6112
      %v6144 = vadd.f32 %v6143, %v6113
      %v6145 = vadd.f32 %v6144, %v6114
      %v6146 = vadd.f32 %v6145, %v6115
      %v6147 = vadd.f32 %v6146, %v6116
      %v6148 = vadd.f32 %v6147, %v6117
      %v6149 = vadd.f32 %v6148, %v6118
      %v6150 = vadd.f32 %v6149, %v6119
      %v6151 = vadd.f32 %v6150, %v6120
      %v6152 = vadd.f32 %v6151, %v6121
      %v6153 = vadd.f32 %v6152, %v6122
      %v6154 = vadd.f32 %v6153, %v6123
      %v6155 = vadd.f32 %v6154, %v6124
      %v6156 = vadd.f32 %v6155, %v6125
      %v6157 = vadd.f32 %v6156, %v6126
      %v6158 = vadd.f32 %v6157, %v6127
      %v6159 = vadd.f32 %v6158, %v6128
      %v6160 = vadd.f32 %v6159, %v6129
      %v6161 = vadd.f32 %v6160, %v6130
      %v6162 = vadd.f32 %v6161, %v6131
      %v6163 = vadd.f32 %v6162, %v6132
      %v6164 = vadd.f32 %v6163, %v6133
      %v6165 = vrot.slane %v6164, 4
      %v6166 = vadd.f32 %v6164, %v6165
      %v6167 = vrot.slane %v6166, 2
      %v6168 = vadd.f32 %v6166, %v6167
      %v6169 = vrot.slane %v6168, 1
      %v6170 = vadd.f32 %v6168, %v6169
      %vm6171 = vcmask 1040384
      %v6172 = vsel %vm6171, %v6068, %v6170
      %6173 = vst [vmem:[%s235] sm:$0x3] %v6172
      %p6174 = scmp.lt.s32.totalorder %s17, 1
      %s6175 = scalar_select %p6174, %s17, 1
      %s6176 = smul.addr %s6175, 32
      %s6177 = smul.addr %s6176, 4
      %s6178 = scalar_lea.vmem %s4, %s6177
      %p6179 = scmp.lt.s32.totalorder %s17, 1
      %s6180 = scalar_select %p6179, %s17, 1
      %s6181 = smul.addr %s6180, 2
      %s6182 = scalar_lea.vmem %s5, %s6181
      // Predicated region
      $region37: #{preact_bottleneck_forward.6} parent=35 // pred_check
        %p6183 = pneg %p124
      $region38: #{preact_bottleneck_forward.6} parent=35 // pred_check_branch
        %6185 = sbr.rel (%p6183) target = $region40
      $region39: #{preact_bottleneck_forward.6} parent=35 // pred_region
        _
      $region40: #{preact_bottleneck_forward.6} parent=35 // pred_fallthru
        _
      // Predicated region
      $region41: #{preact_bottleneck_forward.6} parent=35 // pred_check
        %p6186 = pneg %p150
      $region42: #{preact_bottleneck_forward.6} parent=35 // pred_check_branch
        %6188 = sbr.rel (%p6186) target = $region44
      $region43: #{preact_bottleneck_forward.6} parent=35 // pred_region
        _
      $region44: #{preact_bottleneck_forward.6} parent=35 // pred_fallthru
        _
    $region36: #{preact_bottleneck_forward.6} parent=5 // pred_fallthru
      _
    %p6189 = scmp.le.s32.totalorder 2, %s12
    // Predicated region
    $region45: #{preact_bottleneck_forward.6} parent=5 // pred_check
      %p6190 = pneg %p6189
    $region46: #{preact_bottleneck_forward.6} parent=5 // pred_check_branch
      %6192 = sbr.rel (%p6190) target = $region48
    $region47: #{preact_bottleneck_forward.6} parent=5 // pred_region
      %s6193 = ssub.s32 %s12, 2
      // Predicated region
      $region49: #{preact_bottleneck_forward.6} parent=47 // pred_check
        %p6194 = pneg %p130
      $region50: #{preact_bottleneck_forward.6} parent=47 // pred_check_branch
        %6196 = sbr.rel (%p6194) target = $region52
      $region51: #{preact_bottleneck_forward.6} parent=47 // pred_region
        %p6197 = scmp.lt.s32.totalorder %s18, 1
        %s6198 = scalar_select %p6197, %s18, 1
        %s6199 = smul.addr %s6198, 32
        %s6200 = smul.addr %s6199, 4
        %s6201 = scalar_lea.vmem %s4, %s6200
      $region52: #{preact_bottleneck_forward.6} parent=47 // pred_fallthru
        _
      // Predicated region
      $region53: #{preact_bottleneck_forward.6} parent=47 // pred_check
        %p6202 = pneg %p156
      $region54: #{preact_bottleneck_forward.6} parent=47 // pred_check_branch
        %6204 = sbr.rel (%p6202) target = $region56
      $region55: #{preact_bottleneck_forward.6} parent=47 // pred_region
        %p6205 = scmp.lt.s32.totalorder %s18, 1
        %s6206 = scalar_select %p6205, %s18, 1
        %s6207 = smul.addr %s6206, 2
        %s6208 = scalar_lea.vmem %s5, %s6207
      $region56: #{preact_bottleneck_forward.6} parent=47 // pred_fallthru
        _
    $region48: #{preact_bottleneck_forward.6} parent=5 // pred_fallthru
      _
  $region6: #{preact_bottleneck_forward.6} parent=0 // loop_footer
    %s16 = sadd.s32 1, %s12
  $region7: #{preact_bottleneck_forward.6} parent=0 // loop_footer_branch
    %11 = sbr.rel target = $region3
  $region8: #{preact_bottleneck_forward.6} parent=0 // loop_exit
    _

</llo_original>
